<compile_context>
chip_gen: v7x
topology: tpu7x:2x2x1
jax: 0.10.0
libtpu: 0.0.40
codegen_flags: <defaults>
</compile_context>

<pallas_src>
import jax
import jax.numpy as jnp
from jax.experimental import pallas as pl
from jax.experimental.pallas import tpu as pltpu


_IN_FEATURES = 28 * 28      # 784  (natural input width; block == full dim)
_OUT_PAD = 896              # 7 * 128 (lane-dense output width)
_MIN_SPLIT_ROWS = 256       # keep MXU M-dim >= 256 when splitting for megacore


def _round_up(x, m):
    return (x + m - 1) // m * m


def _ae_kernel(x_ref,
               w1, b1, w2, b2, w3, b3,      # encoder 784->512->256->128
               w45, b45,                    # fused latent 128->L->128 (+ReLU)
               w6, b6, w7, b7,              # decoder 128->256->896p
               o_ref):
    """One batch tile: (TB, 784) bf16 -> (TB, 896) bf16."""
    h = x_ref[...]                                         # bf16 (no cast needed)

    def linear(h, w_ref, b_ref):
        # bf16 operands on the MXU, f32 accumulation, f32 bias add.
        return (jnp.dot(h.astype(jnp.bfloat16), w_ref[...],
                        preferred_element_type=jnp.float32)
                + b_ref[...])

    h = jnp.maximum(linear(h, w1, b1), 0.0)                # 784 -> 512, ReLU
    h = jnp.maximum(linear(h, w2, b2), 0.0)                # 512 -> 256, ReLU
    h = jnp.maximum(linear(h, w3, b3), 0.0)                # 256 -> 128, ReLU
    # Lin(128,L) [no act] + Lin(L,128)+ReLU fused into one 128x128 layer
    # (W45 = W4@W5, b45 = b4@W5 + b5 precomputed in the wrapper).
    h = jnp.maximum(linear(h, w45, b45), 0.0)              # 128 -> 128, ReLU
    h = jnp.maximum(linear(h, w6, b6), 0.0)                # 128 -> 256, ReLU
    h = jax.nn.sigmoid(linear(h, w7, b7))                  # 256 -> 896p, Sigmoid

    o_ref[...] = h.astype(o_ref.dtype)                     # bf16 writeback


def _prepare_params(params):
    """Fuse the latent matmul pair, pad only the OUTPUT side 784->896, cast
    weights bf16.

    params: 7 x (W_t, b) with W_t = (in, out) f32, b = (1, out) f32 in order
    784->512, 512->256, 256->128, 128->L, L->128, 128->256, 256->784.
    Returns a flat tuple (w1,b1,w2,b2,w3,b3,w45,b45,w6,b6,w7,b7).
    """
    (w1, b1), (w2, b2), (w3, b3), (w4, b4), (w5, b5), (w6, b6), (w7, b7) = params

    # Fuse encoder Lin(128,L) (no activation) with decoder Lin(L,128).
    w45 = w4.astype(jnp.float32) @ w5.astype(jnp.float32)          # (128, 128)
    b45 = b4.astype(jnp.float32) @ w5.astype(jnp.float32) + b5     # (1, 128)

    # Zero-pad only the output 784-wide dim to 896 (lane-dense vst); padded
    # columns give sigmoid(0)=0.5 and are sliced away in the wrapper.
    pad = _OUT_PAD - _IN_FEATURES
    w7p = jnp.pad(w7, ((0, 0), (0, pad)))
    b7p = jnp.pad(b7, ((0, 0), (0, pad)))

    weights = [w1, w2, w3, w45, w6, w7p]
    biases = [b1, b2, b3, b45, b6, b7p]
    flat = []
    for w, b in zip(weights, biases):
        flat.append(w.astype(jnp.bfloat16))
        flat.append(b.astype(jnp.float32))
    return tuple(flat)


def _pallas_forward(x_flat, flat_params, tb, grid_steps, *, single_buffer_weights):
    B = x_flat.shape[0]

    # Activations tile over the batch grid; weights/biases use constant block
    # indices so Pallas fetches them once and keeps them VMEM-resident.
    x_spec = pl.BlockSpec((tb, _IN_FEATURES), lambda i: (i, 0))
    o_spec = pl.BlockSpec((tb, _OUT_PAD), lambda i: (i, 0))
    if single_buffer_weights:
        # Constant blocks never change -> no point double-buffering them.
        param_specs = [pl.BlockSpec(p.shape, lambda i: (0, 0),
                                    pipeline_mode=pl.Buffered(1))
                       for p in flat_params]
    else:
        param_specs = [pl.BlockSpec(p.shape, lambda i: (0, 0))
                       for p in flat_params]

    rows = grid_steps * tb
    flops = 2 * rows * (784 * 512 + 512 * 256 + 256 * 128 + 128 * 128
                        + 128 * 256 + 256 * _OUT_PAD)
    bytes_w = sum(int(p.size) * p.dtype.itemsize for p in flat_params)
    bytes_accessed = (bytes_w
                      + int(x_flat.size) * x_flat.dtype.itemsize   # bf16 in
                      + rows * _OUT_PAD * 2)                       # bf16 out

    return pl.pallas_call(
        _ae_kernel,
        out_shape=jax.ShapeDtypeStruct((B, _OUT_PAD), jnp.bfloat16),
        grid=(grid_steps,),
        in_specs=[x_spec] + param_specs,
        out_specs=o_spec,
        compiler_params=pltpu.CompilerParams(
            dimension_semantics=("parallel",),      # batch axis -> megacore
            vmem_limit_bytes=40 << 20),             # covers TB<=1024 w/ headroom
        cost_estimate=pl.CostEstimate(
            flops=flops,
            transcendentals=rows * _OUT_PAD,        # sigmoid over padded width
            bytes_accessed=bytes_accessed),
    )(x_flat, *flat_params)


def autoencoder_forward(x, params, *, batch_tile=512):
    """x: (B, 28, 28) float32.  params: list of 7 (W_t=(in,out), b=(1,out)) f32.

    Returns (B, 28, 28) float32.  Intentional precision trade vs the f32
    PyTorch module: bf16 weights + bf16 activation streaming (output is
    rounded to bf16 before writeback, then cast back to f32).
    """
    B = x.shape[0]
    flat_params = _prepare_params(params)

    # Tile big enough to amortize per-grid-step overhead, but split so the
    # grid has >=2 steps (v7x megacore) whenever each half still fills the
    # MXU M dim (>=256 rows, v6e/v7x).
    tb = min(batch_tile, _round_up(B, 8))
    if pl.cdiv(B, tb) < 2 and B >= 2 * _MIN_SPLIT_ROWS:
        tb = _round_up(pl.cdiv(B, 2), 16)
    grid_steps = pl.cdiv(B, tb)

    # Prologue: one fused reshape+cast.  No feature pad, no batch pad (ragged
    # last tile handled by the grid).
    x_flat = x.reshape(B, _IN_FEATURES).astype(jnp.bfloat16)

    try:
        out_flat = _pallas_forward(x_flat, flat_params, tb, grid_steps,
                                   single_buffer_weights=True)
    except Exception:
        # pl.Buffered(1) not supported on this jax version -> default buffering.
        out_flat = _pallas_forward(x_flat, flat_params, tb, grid_steps,
                                   single_buffer_weights=False)

    return out_flat[:, :_IN_FEATURES].astype(jnp.float32).reshape(B, 28, 28)


def init_params(key, nb_latent):
    """Xavier-normal weights (matching nn.init.xavier_normal_), small random
    biases.  Weights returned pre-transposed as (in, out)."""
    dims = [(28 * 28, 512), (512, 256), (256, 128), (128, nb_latent),   # encoder
            (nb_latent, 128), (128, 256), (256, 28 * 28)]               # decoder
    params = []
    for (fan_in, fan_out) in dims:
        key, wk, bk = jax.random.split(key, 3)
        std = (2.0 / (fan_in + fan_out)) ** 0.5
        w_t = std * jax.random.normal(wk, (fan_in, fan_out), dtype=jnp.float32)
        b = 0.05 * jax.random.normal(bk, (1, fan_out), dtype=jnp.float32)
        params.append((w_t, b))
    return params


def reference_forward(x, params):
    """Pure-JAX f32 reference with the ORIGINAL module semantics (unfused)."""
    B = x.shape[0]
    h = x.reshape(B, _IN_FEATURES)
    acts = ["relu", "relu", "relu", None, "relu", "relu", "sigmoid"]
    for (w_t, b), act in zip(params, acts):
        h = h @ w_t + b
        if act == "relu":
            h = jnp.maximum(h, 0.0)
        elif act == "sigmoid":
            h = jax.nn.sigmoid(h)
    return h.reshape(B, 28, 28)


def reference_forward_bf16(x, params):
    """Pure-JAX reference mirroring the kernel numerics exactly (bf16 input &
    weights, fused latent, f32 accumulation, bf16 output rounding)."""
    (w1, b1), (w2, b2), (w3, b3), (w4, b4), (w5, b5), (w6, b6), (w7, b7) = params
    w45 = w4 @ w5
    b45 = b4 @ w5 + b5
    layers = [(w1, b1, "relu"), (w2, b2, "relu"), (w3, b3, "relu"),
              (w45, b45, "relu"), (w6, b6, "relu"), (w7, b7, "sigmoid")]
    B = x.shape[0]
    h = x.reshape(B, _IN_FEATURES).astype(jnp.bfloat16)
    for w, b, act in layers:
        h = jnp.dot(h.astype(jnp.bfloat16), w.astype(jnp.bfloat16),
                    preferred_element_type=jnp.float32) + b
        h = jnp.maximum(h, 0.0) if act == "relu" else jax.nn.sigmoid(h)
    h = h.astype(jnp.bfloat16).astype(jnp.float32)   # mirror bf16 writeback
    return h.reshape(B, 28, 28)


if __name__ == "__main__":
    NB_LATENT = 32
    BATCH = 8

    key = jax.random.PRNGKey(0)
    key, xkey = jax.random.split(key)
    x = jax.random.uniform(xkey, (BATCH, 28, 28), dtype=jnp.float32)

    params = init_params(key, NB_LATENT)

    out = jax.block_until_ready(autoencoder_forward(x, params))
    assert out.shape == (BATCH, 28, 28)
    assert out.dtype == jnp.float32

    # Tight check vs a reference that mirrors the kernel numerics exactly.
    ref_bf16 = reference_forward_bf16(x, params)
    assert jnp.allclose(out, ref_bf16, atol=1e-2, rtol=1e-2), \
        "mismatch vs precision-matched reference"

    # Looser check vs the original f32 module semantics (bf16 weights/IO and
    # the latent fusion change rounding slightly; stays within ~1e-2).
    ref_f32 = reference_forward(x, params)
    assert jnp.allclose(out, ref_f32, atol=5e-2, rtol=5e-2), \
        "mismatch vs f32 module reference"

    print("KERNEL_OK")
</pallas_src>

<mosaic_0001>
module attributes {stable_mosaic.version = 11 : i64} {
  func.func @_ae_kernel(%arg0: i32, %arg1: memref<8x784xbf16, #tpu.memory_space<vmem>>, %arg2: memref<784x512xbf16, #tpu.memory_space<vmem>>, %arg3: memref<1x512xf32, #tpu.memory_space<vmem>>, %arg4: memref<512x256xbf16, #tpu.memory_space<vmem>>, %arg5: memref<1x256xf32, #tpu.memory_space<vmem>>, %arg6: memref<256x128xbf16, #tpu.memory_space<vmem>>, %arg7: memref<1x128xf32, #tpu.memory_space<vmem>>, %arg8: memref<128x128xbf16, #tpu.memory_space<vmem>>, %arg9: memref<1x128xf32, #tpu.memory_space<vmem>>, %arg10: memref<128x256xbf16, #tpu.memory_space<vmem>>, %arg11: memref<1x256xf32, #tpu.memory_space<vmem>>, %arg12: memref<256x896xbf16, #tpu.memory_space<vmem>>, %arg13: memref<1x896xf32, #tpu.memory_space<vmem>>, %arg14: memref<8x896xbf16, #tpu.memory_space<vmem>>) attributes {dimension_semantics = [#tpu.dimension_semantics<parallel>], iteration_bounds = array<i64: 1>, scalar_prefetch = 0 : i64, scratch_operands = 0 : i64, tpu.core_type = #tpu.core_type<tc>, window_params = [{transform_indices = @transform_0, window_bounds = array<i64: 8, 784>}, {pipeline_mode = #tpu.pipeline_mode<synchronous>, transform_indices = @transform_1, window_bounds = array<i64: 784, 512>}, {pipeline_mode = #tpu.pipeline_mode<synchronous>, transform_indices = @transform_2, window_bounds = array<i64: 1, 512>}, {pipeline_mode = #tpu.pipeline_mode<synchronous>, transform_indices = @transform_3, window_bounds = array<i64: 512, 256>}, {pipeline_mode = #tpu.pipeline_mode<synchronous>, transform_indices = @transform_4, window_bounds = array<i64: 1, 256>}, {pipeline_mode = #tpu.pipeline_mode<synchronous>, transform_indices = @transform_5, window_bounds = array<i64: 256, 128>}, {pipeline_mode = #tpu.pipeline_mode<synchronous>, transform_indices = @transform_6, window_bounds = array<i64: 1, 128>}, {pipeline_mode = #tpu.pipeline_mode<synchronous>, transform_indices = @transform_7, window_bounds = array<i64: 128, 128>}, {pipeline_mode = #tpu.pipeline_mode<synchronous>, transform_indices = @transform_8, window_bounds = array<i64: 1, 128>}, {pipeline_mode = #tpu.pipeline_mode<synchronous>, transform_indices = @transform_9, window_bounds = array<i64: 128, 256>}, {pipeline_mode = #tpu.pipeline_mode<synchronous>, transform_indices = @transform_10, window_bounds = array<i64: 1, 256>}, {pipeline_mode = #tpu.pipeline_mode<synchronous>, transform_indices = @transform_11, window_bounds = array<i64: 256, 896>}, {pipeline_mode = #tpu.pipeline_mode<synchronous>, transform_indices = @transform_12, window_bounds = array<i64: 1, 896>}, {transform_indices = @transform_13, window_bounds = array<i64: 8, 896>}]} {
    %c0 = arith.constant 0 : index
    %c0_0 = arith.constant 0 : index
    %0 = vector.load %arg1[%c0, %c0_0] : memref<8x784xbf16, #tpu.memory_space<vmem>>, vector<8x784xbf16>
    %c0_1 = arith.constant 0 : index
    %c0_2 = arith.constant 0 : index
    %1 = vector.load %arg2[%c0_1, %c0_2] : memref<784x512xbf16, #tpu.memory_space<vmem>>, vector<784x512xbf16>
    %cst = arith.constant dense<0.000000e+00> : vector<8x512xf32>
    %2 = tpu.matmul %0, %1, %cst {dimension_numbers = #tpu.dot_dimension_numbers<[1], [0], [0], [1], [0, 0, 1, 1], [], []>} : vector<8x784xbf16>, vector<784x512xbf16>, vector<8x512xf32> -> vector<8x512xf32>
    %c0_3 = arith.constant 0 : index
    %c0_4 = arith.constant 0 : index
    %3 = vector.load %arg3[%c0_3, %c0_4] : memref<1x512xf32, #tpu.memory_space<vmem>>, vector<1x512xf32>
    %4 = vector.broadcast %3 : vector<1x512xf32> to vector<8x512xf32>
    %5 = arith.addf %2, %4 : vector<8x512xf32>
    %cst_5 = arith.constant 0.000000e+00 : f32
    %6 = vector.broadcast %cst_5 : f32 to vector<8x512xf32>
    %7 = arith.maximumf %5, %6 : vector<8x512xf32>
    %8 = arith.truncf %7 : vector<8x512xf32> to vector<8x512xbf16>
    %c0_6 = arith.constant 0 : index
    %c0_7 = arith.constant 0 : index
    %9 = vector.load %arg4[%c0_6, %c0_7] : memref<512x256xbf16, #tpu.memory_space<vmem>>, vector<512x256xbf16>
    %cst_8 = arith.constant dense<0.000000e+00> : vector<8x256xf32>
    %10 = tpu.matmul %8, %9, %cst_8 {dimension_numbers = #tpu.dot_dimension_numbers<[1], [0], [0], [1], [0, 0, 1, 1], [], []>} : vector<8x512xbf16>, vector<512x256xbf16>, vector<8x256xf32> -> vector<8x256xf32>
    %c0_9 = arith.constant 0 : index
    %c0_10 = arith.constant 0 : index
    %11 = vector.load %arg5[%c0_9, %c0_10] : memref<1x256xf32, #tpu.memory_space<vmem>>, vector<1x256xf32>
    %12 = vector.broadcast %11 : vector<1x256xf32> to vector<8x256xf32>
    %13 = arith.addf %10, %12 : vector<8x256xf32>
    %cst_11 = arith.constant 0.000000e+00 : f32
    %14 = vector.broadcast %cst_11 : f32 to vector<8x256xf32>
    %15 = arith.maximumf %13, %14 : vector<8x256xf32>
    %16 = arith.truncf %15 : vector<8x256xf32> to vector<8x256xbf16>
    %c0_12 = arith.constant 0 : index
    %c0_13 = arith.constant 0 : index
    %17 = vector.load %arg6[%c0_12, %c0_13] : memref<256x128xbf16, #tpu.memory_space<vmem>>, vector<256x128xbf16>
    %cst_14 = arith.constant dense<0.000000e+00> : vector<8x128xf32>
    %18 = tpu.matmul %16, %17, %cst_14 {dimension_numbers = #tpu.dot_dimension_numbers<[1], [0], [0], [1], [0, 0, 1, 1], [], []>} : vector<8x256xbf16>, vector<256x128xbf16>, vector<8x128xf32> -> vector<8x128xf32>
    %c0_15 = arith.constant 0 : index
    %c0_16 = arith.constant 0 : index
    %19 = vector.load %arg7[%c0_15, %c0_16] : memref<1x128xf32, #tpu.memory_space<vmem>>, vector<1x128xf32>
    %20 = vector.broadcast %19 : vector<1x128xf32> to vector<8x128xf32>
    %21 = arith.addf %18, %20 : vector<8x128xf32>
    %cst_17 = arith.constant 0.000000e+00 : f32
    %22 = vector.broadcast %cst_17 : f32 to vector<8x128xf32>
    %23 = arith.maximumf %21, %22 : vector<8x128xf32>
    %24 = arith.truncf %23 : vector<8x128xf32> to vector<8x128xbf16>
    %c0_18 = arith.constant 0 : index
    %c0_19 = arith.constant 0 : index
    %25 = vector.load %arg8[%c0_18, %c0_19] : memref<128x128xbf16, #tpu.memory_space<vmem>>, vector<128x128xbf16>
    %cst_20 = arith.constant dense<0.000000e+00> : vector<8x128xf32>
    %26 = tpu.matmul %24, %25, %cst_20 {dimension_numbers = #tpu.dot_dimension_numbers<[1], [0], [0], [1], [0, 0, 1, 1], [], []>} : vector<8x128xbf16>, vector<128x128xbf16>, vector<8x128xf32> -> vector<8x128xf32>
    %c0_21 = arith.constant 0 : index
    %c0_22 = arith.constant 0 : index
    %27 = vector.load %arg9[%c0_21, %c0_22] : memref<1x128xf32, #tpu.memory_space<vmem>>, vector<1x128xf32>
    %28 = vector.broadcast %27 : vector<1x128xf32> to vector<8x128xf32>
    %29 = arith.addf %26, %28 : vector<8x128xf32>
    %cst_23 = arith.constant 0.000000e+00 : f32
    %30 = vector.broadcast %cst_23 : f32 to vector<8x128xf32>
    %31 = arith.maximumf %29, %30 : vector<8x128xf32>
    %32 = arith.truncf %31 : vector<8x128xf32> to vector<8x128xbf16>
    %c0_24 = arith.constant 0 : index
    %c0_25 = arith.constant 0 : index
    %33 = vector.load %arg10[%c0_24, %c0_25] : memref<128x256xbf16, #tpu.memory_space<vmem>>, vector<128x256xbf16>
    %cst_26 = arith.constant dense<0.000000e+00> : vector<8x256xf32>
    %34 = tpu.matmul %32, %33, %cst_26 {dimension_numbers = #tpu.dot_dimension_numbers<[1], [0], [0], [1], [0, 0, 1, 1], [], []>} : vector<8x128xbf16>, vector<128x256xbf16>, vector<8x256xf32> -> vector<8x256xf32>
    %c0_27 = arith.constant 0 : index
    %c0_28 = arith.constant 0 : index
    %35 = vector.load %arg11[%c0_27, %c0_28] : memref<1x256xf32, #tpu.memory_space<vmem>>, vector<1x256xf32>
    %36 = vector.broadcast %35 : vector<1x256xf32> to vector<8x256xf32>
    %37 = arith.addf %34, %36 : vector<8x256xf32>
    %cst_29 = arith.constant 0.000000e+00 : f32
    %38 = vector.broadcast %cst_29 : f32 to vector<8x256xf32>
    %39 = arith.maximumf %37, %38 : vector<8x256xf32>
    %40 = arith.truncf %39 : vector<8x256xf32> to vector<8x256xbf16>
    %c0_30 = arith.constant 0 : index
    %c0_31 = arith.constant 0 : index
    %41 = vector.load %arg12[%c0_30, %c0_31] : memref<256x896xbf16, #tpu.memory_space<vmem>>, vector<256x896xbf16>
    %cst_32 = arith.constant dense<0.000000e+00> : vector<8x896xf32>
    %42 = tpu.matmul %40, %41, %cst_32 {dimension_numbers = #tpu.dot_dimension_numbers<[1], [0], [0], [1], [0, 0, 1, 1], [], []>} : vector<8x256xbf16>, vector<256x896xbf16>, vector<8x896xf32> -> vector<8x896xf32>
    %c0_33 = arith.constant 0 : index
    %c0_34 = arith.constant 0 : index
    %43 = vector.load %arg13[%c0_33, %c0_34] : memref<1x896xf32, #tpu.memory_space<vmem>>, vector<1x896xf32>
    %44 = vector.broadcast %43 : vector<1x896xf32> to vector<8x896xf32>
    %45 = arith.addf %42, %44 : vector<8x896xf32>
    %46 = arith.negf %45 : vector<8x896xf32>
    %47 = math.exp %46 : vector<8x896xf32>
    %cst_35 = arith.constant 1.000000e+00 : f32
    %48 = vector.broadcast %cst_35 : f32 to vector<8x896xf32>
    %49 = arith.addf %48, %47 : vector<8x896xf32>
    %50 = arith.divf %48, %49 : vector<8x896xf32>
    %51 = arith.truncf %50 : vector<8x896xf32> to vector<8x896xbf16>
    %c0_36 = arith.constant 0 : index
    %c0_37 = arith.constant 0 : index
    %52 = vector.load %arg14[%c0_36, %c0_37] : memref<8x896xbf16, #tpu.memory_space<vmem>>, vector<8x896xbf16>
    tpu.vector_store %arg14[%c0_36, %c0_37], %51 {strides = array<i32>} : memref<8x896xbf16, #tpu.memory_space<vmem>>, vector<8x896xbf16>,
    return
  }
  func.func @transform_0(%arg0: i32) -> (i32, i32) {
    %c0_i32 = arith.constant 0 : i32
    %c0_i32_0 = arith.constant 0 : i32
    return %arg0, %c0_i32 : i32, i32
  }
  func.func @transform_1(%arg0: i32) -> (i32, i32) {
    %c0_i32 = arith.constant 0 : i32
    %c0_i32_0 = arith.constant 0 : i32
    %c0_i32_1 = arith.constant 0 : i32
    return %c0_i32, %c0_i32_0 : i32, i32
  }
  func.func @transform_2(%arg0: i32) -> (i32, i32) {
    %c0_i32 = arith.constant 0 : i32
    %c0_i32_0 = arith.constant 0 : i32
    %c0_i32_1 = arith.constant 0 : i32
    return %c0_i32, %c0_i32_0 : i32, i32
  }
  func.func @transform_3(%arg0: i32) -> (i32, i32) {
    %c0_i32 = arith.constant 0 : i32
    %c0_i32_0 = arith.constant 0 : i32
    %c0_i32_1 = arith.constant 0 : i32
    return %c0_i32, %c0_i32_0 : i32, i32
  }
  func.func @transform_4(%arg0: i32) -> (i32, i32) {
    %c0_i32 = arith.constant 0 : i32
    %c0_i32_0 = arith.constant 0 : i32
    %c0_i32_1 = arith.constant 0 : i32
    return %c0_i32, %c0_i32_0 : i32, i32
  }
  func.func @transform_5(%arg0: i32) -> (i32, i32) {
    %c0_i32 = arith.constant 0 : i32
    %c0_i32_0 = arith.constant 0 : i32
    %c0_i32_1 = arith.constant 0 : i32
    return %c0_i32, %c0_i32_0 : i32, i32
  }
  func.func @transform_6(%arg0: i32) -> (i32, i32) {
    %c0_i32 = arith.constant 0 : i32
    %c0_i32_0 = arith.constant 0 : i32
    %c0_i32_1 = arith.constant 0 : i32
    return %c0_i32, %c0_i32_0 : i32, i32
  }
  func.func @transform_7(%arg0: i32) -> (i32, i32) {
    %c0_i32 = arith.constant 0 : i32
    %c0_i32_0 = arith.constant 0 : i32
    %c0_i32_1 = arith.constant 0 : i32
    return %c0_i32, %c0_i32_0 : i32, i32
  }
  func.func @transform_8(%arg0: i32) -> (i32, i32) {
    %c0_i32 = arith.constant 0 : i32
    %c0_i32_0 = arith.constant 0 : i32
    %c0_i32_1 = arith.constant 0 : i32
    return %c0_i32, %c0_i32_0 : i32, i32
  }
  func.func @transform_9(%arg0: i32) -> (i32, i32) {
    %c0_i32 = arith.constant 0 : i32
    %c0_i32_0 = arith.constant 0 : i32
    %c0_i32_1 = arith.constant 0 : i32
    return %c0_i32, %c0_i32_0 : i32, i32
  }
  func.func @transform_10(%arg0: i32) -> (i32, i32) {
    %c0_i32 = arith.constant 0 : i32
    %c0_i32_0 = arith.constant 0 : i32
    %c0_i32_1 = arith.constant 0 : i32
    return %c0_i32, %c0_i32_0 : i32, i32
  }
  func.func @transform_11(%arg0: i32) -> (i32, i32) {
    %c0_i32 = arith.constant 0 : i32
    %c0_i32_0 = arith.constant 0 : i32
    %c0_i32_1 = arith.constant 0 : i32
    return %c0_i32, %c0_i32_0 : i32, i32
  }
  func.func @transform_12(%arg0: i32) -> (i32, i32) {
    %c0_i32 = arith.constant 0 : i32
    %c0_i32_0 = arith.constant 0 : i32
    %c0_i32_1 = arith.constant 0 : i32
    return %c0_i32, %c0_i32_0 : i32, i32
  }
  func.func @transform_13(%arg0: i32) -> (i32, i32) {
    %c0_i32 = arith.constant 0 : i32
    %c0_i32_0 = arith.constant 0 : i32
    return %arg0, %c0_i32 : i32, i32
  }
}

module attributes {stable_mosaic.version = 11 : i64} {
  func.func @_ae_kernel(%arg0: i32, %arg1: memref<8x784xbf16, #tpu.memory_space<vmem>>, %arg2: memref<784x512xbf16, #tpu.memory_space<vmem>>, %arg3: memref<1x512xf32, #tpu.memory_space<vmem>>, %arg4: memref<512x256xbf16, #tpu.memory_space<vmem>>, %arg5: memref<1x256xf32, #tpu.memory_space<vmem>>, %arg6: memref<256x128xbf16, #tpu.memory_space<vmem>>, %arg7: memref<1x128xf32, #tpu.memory_space<vmem>>, %arg8: memref<128x128xbf16, #tpu.memory_space<vmem>>, %arg9: memref<1x128xf32, #tpu.memory_space<vmem>>, %arg10: memref<128x256xbf16, #tpu.memory_space<vmem>>, %arg11: memref<1x256xf32, #tpu.memory_space<vmem>>, %arg12: memref<256x896xbf16, #tpu.memory_space<vmem>>, %arg13: memref<1x896xf32, #tpu.memory_space<vmem>>, %arg14: memref<8x896xbf16, #tpu.memory_space<vmem>>) attributes {dimension_semantics = [#tpu.dimension_semantics<parallel>], iteration_bounds = array<i64: 1>, scalar_prefetch = 0 : i64, scratch_operands = 0 : i64, tpu.core_type = #tpu.core_type<tc>, window_params = [{transform_indices = @transform_0, window_bounds = array<i64: 8, 784>}, {pipeline_mode = #tpu.pipeline_mode<synchronous>, transform_indices = @transform_1, window_bounds = array<i64: 784, 512>}, {pipeline_mode = #tpu.pipeline_mode<synchronous>, transform_indices = @transform_2, window_bounds = array<i64: 1, 512>}, {pipeline_mode = #tpu.pipeline_mode<synchronous>, transform_indices = @transform_3, window_bounds = array<i64: 512, 256>}, {pipeline_mode = #tpu.pipeline_mode<synchronous>, transform_indices = @transform_4, window_bounds = array<i64: 1, 256>}, {pipeline_mode = #tpu.pipeline_mode<synchronous>, transform_indices = @transform_5, window_bounds = array<i64: 256, 128>}, {pipeline_mode = #tpu.pipeline_mode<synchronous>, transform_indices = @transform_6, window_bounds = array<i64: 1, 128>}, {pipeline_mode = #tpu.pipeline_mode<synchronous>, transform_indices = @transform_7, window_bounds = array<i64: 128, 128>}, {pipeline_mode = #tpu.pipeline_mode<synchronous>, transform_indices = @transform_8, window_bounds = array<i64: 1, 128>}, {pipeline_mode = #tpu.pipeline_mode<synchronous>, transform_indices = @transform_9, window_bounds = array<i64: 128, 256>}, {pipeline_mode = #tpu.pipeline_mode<synchronous>, transform_indices = @transform_10, window_bounds = array<i64: 1, 256>}, {pipeline_mode = #tpu.pipeline_mode<synchronous>, transform_indices = @transform_11, window_bounds = array<i64: 256, 896>}, {pipeline_mode = #tpu.pipeline_mode<synchronous>, transform_indices = @transform_12, window_bounds = array<i64: 1, 896>}, {transform_indices = @transform_13, window_bounds = array<i64: 8, 896>}]} {
    %c0 = arith.constant 0 : index
    %c0_0 = arith.constant 0 : index
    %0 = vector.load %arg1[%c0, %c0_0] : memref<8x784xbf16, #tpu.memory_space<vmem>>, vector<8x784xbf16>
    %c0_1 = arith.constant 0 : index
    %c0_2 = arith.constant 0 : index
    %1 = vector.load %arg2[%c0_1, %c0_2] : memref<784x512xbf16, #tpu.memory_space<vmem>>, vector<784x512xbf16>
    %cst = arith.constant dense<0.000000e+00> : vector<8x512xf32>
    %2 = tpu.matmul %0, %1, %cst {dimension_numbers = #tpu.dot_dimension_numbers<[1], [0], [0], [1], [0, 0, 1, 1], [], []>} : vector<8x784xbf16>, vector<784x512xbf16>, vector<8x512xf32> -> vector<8x512xf32>
    %c0_3 = arith.constant 0 : index
    %c0_4 = arith.constant 0 : index
    %3 = vector.load %arg3[%c0_3, %c0_4] : memref<1x512xf32, #tpu.memory_space<vmem>>, vector<1x512xf32>
    %4 = vector.broadcast %3 : vector<1x512xf32> to vector<8x512xf32>
    %5 = arith.addf %2, %4 : vector<8x512xf32>
    %cst_5 = arith.constant 0.000000e+00 : f32
    %6 = vector.broadcast %cst_5 : f32 to vector<8x512xf32>
    %7 = arith.maximumf %5, %6 : vector<8x512xf32>
    %8 = arith.truncf %7 : vector<8x512xf32> to vector<8x512xbf16>
    %c0_6 = arith.constant 0 : index
    %c0_7 = arith.constant 0 : index
    %9 = vector.load %arg4[%c0_6, %c0_7] : memref<512x256xbf16, #tpu.memory_space<vmem>>, vector<512x256xbf16>
    %cst_8 = arith.constant dense<0.000000e+00> : vector<8x256xf32>
    %10 = tpu.matmul %8, %9, %cst_8 {dimension_numbers = #tpu.dot_dimension_numbers<[1], [0], [0], [1], [0, 0, 1, 1], [], []>} : vector<8x512xbf16>, vector<512x256xbf16>, vector<8x256xf32> -> vector<8x256xf32>
    %c0_9 = arith.constant 0 : index
    %c0_10 = arith.constant 0 : index
    %11 = vector.load %arg5[%c0_9, %c0_10] : memref<1x256xf32, #tpu.memory_space<vmem>>, vector<1x256xf32>
    %12 = vector.broadcast %11 : vector<1x256xf32> to vector<8x256xf32>
    %13 = arith.addf %10, %12 : vector<8x256xf32>
    %cst_11 = arith.constant 0.000000e+00 : f32
    %14 = vector.broadcast %cst_11 : f32 to vector<8x256xf32>
    %15 = arith.maximumf %13, %14 : vector<8x256xf32>
    %16 = arith.truncf %15 : vector<8x256xf32> to vector<8x256xbf16>
    %c0_12 = arith.constant 0 : index
    %c0_13 = arith.constant 0 : index
    %17 = vector.load %arg6[%c0_12, %c0_13] : memref<256x128xbf16, #tpu.memory_space<vmem>>, vector<256x128xbf16>
    %cst_14 = arith.constant dense<0.000000e+00> : vector<8x128xf32>
    %18 = tpu.matmul %16, %17, %cst_14 {dimension_numbers = #tpu.dot_dimension_numbers<[1], [0], [0], [1], [0, 0, 1, 1], [], []>} : vector<8x256xbf16>, vector<256x128xbf16>, vector<8x128xf32> -> vector<8x128xf32>
    %c0_15 = arith.constant 0 : index
    %c0_16 = arith.constant 0 : index
    %19 = vector.load %arg7[%c0_15, %c0_16] : memref<1x128xf32, #tpu.memory_space<vmem>>, vector<1x128xf32>
    %20 = vector.broadcast %19 : vector<1x128xf32> to vector<8x128xf32>
    %21 = arith.addf %18, %20 : vector<8x128xf32>
    %cst_17 = arith.constant 0.000000e+00 : f32
    %22 = vector.broadcast %cst_17 : f32 to vector<8x128xf32>
    %23 = arith.maximumf %21, %22 : vector<8x128xf32>
    %24 = arith.truncf %23 : vector<8x128xf32> to vector<8x128xbf16>
    %c0_18 = arith.constant 0 : index
    %c0_19 = arith.constant 0 : index
    %25 = vector.load %arg8[%c0_18, %c0_19] : memref<128x128xbf16, #tpu.memory_space<vmem>>, vector<128x128xbf16>
    %cst_20 = arith.constant dense<0.000000e+00> : vector<8x128xf32>
    %26 = tpu.matmul %24, %25, %cst_20 {dimension_numbers = #tpu.dot_dimension_numbers<[1], [0], [0], [1], [0, 0, 1, 1], [], []>} : vector<8x128xbf16>, vector<128x128xbf16>, vector<8x128xf32> -> vector<8x128xf32>
    %c0_21 = arith.constant 0 : index
    %c0_22 = arith.constant 0 : index
    %27 = vector.load %arg9[%c0_21, %c0_22] : memref<1x128xf32, #tpu.memory_space<vmem>>, vector<1x128xf32>
    %28 = vector.broadcast %27 : vector<1x128xf32> to vector<8x128xf32>
    %29 = arith.addf %26, %28 : vector<8x128xf32>
    %cst_23 = arith.constant 0.000000e+00 : f32
    %30 = vector.broadcast %cst_23 : f32 to vector<8x128xf32>
    %31 = arith.maximumf %29, %30 : vector<8x128xf32>
    %32 = arith.truncf %31 : vector<8x128xf32> to vector<8x128xbf16>
    %c0_24 = arith.constant 0 : index
    %c0_25 = arith.constant 0 : index
    %33 = vector.load %arg10[%c0_24, %c0_25] : memref<128x256xbf16, #tpu.memory_space<vmem>>, vector<128x256xbf16>
    %cst_26 = arith.constant dense<0.000000e+00> : vector<8x256xf32>
    %34 = tpu.matmul %32, %33, %cst_26 {dimension_numbers = #tpu.dot_dimension_numbers<[1], [0], [0], [1], [0, 0, 1, 1], [], []>} : vector<8x128xbf16>, vector<128x256xbf16>, vector<8x256xf32> -> vector<8x256xf32>
    %c0_27 = arith.constant 0 : index
    %c0_28 = arith.constant 0 : index
    %35 = vector.load %arg11[%c0_27, %c0_28] : memref<1x256xf32, #tpu.memory_space<vmem>>, vector<1x256xf32>
    %36 = vector.broadcast %35 : vector<1x256xf32> to vector<8x256xf32>
    %37 = arith.addf %34, %36 : vector<8x256xf32>
    %cst_29 = arith.constant 0.000000e+00 : f32
    %38 = vector.broadcast %cst_29 : f32 to vector<8x256xf32>
    %39 = arith.maximumf %37, %38 : vector<8x256xf32>
    %40 = arith.truncf %39 : vector<8x256xf32> to vector<8x256xbf16>
    %c0_30 = arith.constant 0 : index
    %c0_31 = arith.constant 0 : index
    %41 = vector.load %arg12[%c0_30, %c0_31] : memref<256x896xbf16, #tpu.memory_space<vmem>>, vector<256x896xbf16>
    %cst_32 = arith.constant dense<0.000000e+00> : vector<8x896xf32>
    %42 = tpu.matmul %40, %41, %cst_32 {dimension_numbers = #tpu.dot_dimension_numbers<[1], [0], [0], [1], [0, 0, 1, 1], [], []>} : vector<8x256xbf16>, vector<256x896xbf16>, vector<8x896xf32> -> vector<8x896xf32>
    %c0_33 = arith.constant 0 : index
    %c0_34 = arith.constant 0 : index
    %43 = vector.load %arg13[%c0_33, %c0_34] : memref<1x896xf32, #tpu.memory_space<vmem>>, vector<1x896xf32>
    %44 = vector.broadcast %43 : vector<1x896xf32> to vector<8x896xf32>
    %45 = arith.addf %42, %44 : vector<8x896xf32>
    %46 = arith.negf %45 : vector<8x896xf32>
    %47 = math.exp %46 : vector<8x896xf32>
    %cst_35 = arith.constant 1.000000e+00 : f32
    %48 = vector.broadcast %cst_35 : f32 to vector<8x896xf32>
    %49 = arith.addf %48, %47 : vector<8x896xf32>
    %50 = arith.divf %48, %49 : vector<8x896xf32>
    %51 = arith.truncf %50 : vector<8x896xf32> to vector<8x896xbf16>
    %c0_36 = arith.constant 0 : index
    %c0_37 = arith.constant 0 : index
    %52 = vector.load %arg14[%c0_36, %c0_37] : memref<8x896xbf16, #tpu.memory_space<vmem>>, vector<8x896xbf16>
    tpu.vector_store %arg14[%c0_36, %c0_37], %51 {strides = array<i32>} : memref<8x896xbf16, #tpu.memory_space<vmem>>, vector<8x896xbf16>,
    return
  }
  func.func @transform_0(%arg0: i32) -> (i32, i32) {
    %c0_i32 = arith.constant 0 : i32
    %c0_i32_0 = arith.constant 0 : i32
    return %arg0, %c0_i32 : i32, i32
  }
  func.func @transform_1(%arg0: i32) -> (i32, i32) {
    %c0_i32 = arith.constant 0 : i32
    %c0_i32_0 = arith.constant 0 : i32
    %c0_i32_1 = arith.constant 0 : i32
    return %c0_i32, %c0_i32_0 : i32, i32
  }
  func.func @transform_2(%arg0: i32) -> (i32, i32) {
    %c0_i32 = arith.constant 0 : i32
    %c0_i32_0 = arith.constant 0 : i32
    %c0_i32_1 = arith.constant 0 : i32
    return %c0_i32, %c0_i32_0 : i32, i32
  }
  func.func @transform_3(%arg0: i32) -> (i32, i32) {
    %c0_i32 = arith.constant 0 : i32
    %c0_i32_0 = arith.constant 0 : i32
    %c0_i32_1 = arith.constant 0 : i32
    return %c0_i32, %c0_i32_0 : i32, i32
  }
  func.func @transform_4(%arg0: i32) -> (i32, i32) {
    %c0_i32 = arith.constant 0 : i32
    %c0_i32_0 = arith.constant 0 : i32
    %c0_i32_1 = arith.constant 0 : i32
    return %c0_i32, %c0_i32_0 : i32, i32
  }
  func.func @transform_5(%arg0: i32) -> (i32, i32) {
    %c0_i32 = arith.constant 0 : i32
    %c0_i32_0 = arith.constant 0 : i32
    %c0_i32_1 = arith.constant 0 : i32
    return %c0_i32, %c0_i32_0 : i32, i32
  }
  func.func @transform_6(%arg0: i32) -> (i32, i32) {
    %c0_i32 = arith.constant 0 : i32
    %c0_i32_0 = arith.constant 0 : i32
    %c0_i32_1 = arith.constant 0 : i32
    return %c0_i32, %c0_i32_0 : i32, i32
  }
  func.func @transform_7(%arg0: i32) -> (i32, i32) {
    %c0_i32 = arith.constant 0 : i32
    %c0_i32_0 = arith.constant 0 : i32
    %c0_i32_1 = arith.constant 0 : i32
    return %c0_i32, %c0_i32_0 : i32, i32
  }
  func.func @transform_8(%arg0: i32) -> (i32, i32) {
    %c0_i32 = arith.constant 0 : i32
    %c0_i32_0 = arith.constant 0 : i32
    %c0_i32_1 = arith.constant 0 : i32
    return %c0_i32, %c0_i32_0 : i32, i32
  }
  func.func @transform_9(%arg0: i32) -> (i32, i32) {
    %c0_i32 = arith.constant 0 : i32
    %c0_i32_0 = arith.constant 0 : i32
    %c0_i32_1 = arith.constant 0 : i32
    return %c0_i32, %c0_i32_0 : i32, i32
  }
  func.func @transform_10(%arg0: i32) -> (i32, i32) {
    %c0_i32 = arith.constant 0 : i32
    %c0_i32_0 = arith.constant 0 : i32
    %c0_i32_1 = arith.constant 0 : i32
    return %c0_i32, %c0_i32_0 : i32, i32
  }
  func.func @transform_11(%arg0: i32) -> (i32, i32) {
    %c0_i32 = arith.constant 0 : i32
    %c0_i32_0 = arith.constant 0 : i32
    %c0_i32_1 = arith.constant 0 : i32
    return %c0_i32, %c0_i32_0 : i32, i32
  }
  func.func @transform_12(%arg0: i32) -> (i32, i32) {
    %c0_i32 = arith.constant 0 : i32
    %c0_i32_0 = arith.constant 0 : i32
    %c0_i32_1 = arith.constant 0 : i32
    return %c0_i32, %c0_i32_0 : i32, i32
  }
  func.func @transform_13(%arg0: i32) -> (i32, i32) {
    %c0_i32 = arith.constant 0 : i32
    %c0_i32_0 = arith.constant 0 : i32
    return %arg0, %c0_i32 : i32, i32
  }
}

</mosaic_0001>

<llo_original>
// kernel: tpu_custom_call.1
$region0: #{tpu_custom_call.1}
  #allocation0 [shape = 'u32[]', space=smem, size = 0x4, offset = 0x4, fixed_abs, tag = 'smem constant byte address 0x4 - core index']
  #allocation1 [shape = 'u32[144,128]{1,0:T(1,128)}', space=vmem, size = 0x12000, scoped, tag = 'internal scratch']
  %s0 = inlined_call_operand.hbm [shape: bf16[8,784], index: 0, kind: input, shape index: {}]
  %s1 = inlined_call_operand.hbm [shape: bf16[784,512], index: 1, kind: input, shape index: {}]
  %s2 = inlined_call_operand.vmem [shape: f32[1,512], index: 2, kind: input, shape index: {}]
  %s3 = inlined_call_operand.hbm [shape: bf16[512,256], index: 3, kind: input, shape index: {}]
  %s4 = inlined_call_operand.vmem [shape: f32[1,256], index: 4, kind: input, shape index: {}]
  %s5 = inlined_call_operand.hbm [shape: bf16[256,128], index: 5, kind: input, shape index: {}]
  %s6 = inlined_call_operand.vmem [shape: f32[1,128], index: 6, kind: input, shape index: {}]
  %s7 = inlined_call_operand.hbm [shape: bf16[128,128], index: 7, kind: input, shape index: {}]
  %s8 = inlined_call_operand.vmem [shape: f32[1,128], index: 8, kind: input, shape index: {}]
  %s9 = inlined_call_operand.hbm [shape: bf16[128,256], index: 9, kind: input, shape index: {}]
  %s10 = inlined_call_operand.vmem [shape: f32[1,256], index: 10, kind: input, shape index: {}]
  %s11 = inlined_call_operand.hbm [shape: bf16[256,896], index: 11, kind: input, shape index: {}]
  %s12 = inlined_call_operand.vmem [shape: f32[1,896], index: 12, kind: input, shape index: {}]
  %s13 = inlined_call_operand.hbm [shape: bf16[8,896], index: 13, kind: output, shape index: {}]
  %s14 = sld [smem:[#allocation0]]
  $region90: #{tpu_custom_call.1} parent=0
    _
  %s16 = ssub.s32 1, %s14
  %s17 = scalar_select 0, %s16, %s14
  $region1: #{tpu_custom_call.1} parent=0
    #allocation2 [shape = 'u8[14336]{0}', space=vmem, size = 0x3800, scoped, tag = 'input window, operand 0, single buffered']
    #allocation3 [shape = 's32[1]{0}', space=sflag, size = 0x4, scoped, tag = 'scoped memory for tpu_custom_call.1']
    #allocation4 [shape = 's32[1]{0}', space=sflag, size = 0x4, scoped, tag = 'scoped memory for tpu_custom_call.1']
    #allocation5 [shape = 'u8[802816]{0}', space=vmem, size = 0xc4000, scoped, tag = 'input window, operand 1, single buffered']
    #allocation6 [shape = 's32[1]{0}', space=sflag, size = 0x4, scoped, tag = 'scoped memory for tpu_custom_call.1']
    #allocation7 [shape = 'u8[262144]{0}', space=vmem, size = 0x40000, scoped, tag = 'input window, operand 3, single buffered']
    #allocation8 [shape = 'u8[65536]{0}', space=vmem, size = 0x10000, scoped, tag = 'input window, operand 5, single buffered']
    #allocation9 [shape = 's32[1]{0}', space=sflag, size = 0x4, scoped, tag = 'scoped memory for tpu_custom_call.1']
    #allocation10 [shape = 'u8[32768]{0}', space=vmem, size = 0x8000, scoped, tag = 'input window, operand 7, single buffered']
    #allocation11 [shape = 'u8[65536]{0}', space=vmem, size = 0x10000, scoped, tag = 'input window, operand 9, single buffered']
    #allocation12 [shape = 's32[1]{0}', space=sflag, size = 0x4, scoped, tag = 'scoped memory for tpu_custom_call.1']
    #allocation13 [shape = 'u8[458752]{0}', space=vmem, size = 0x70000, scoped, tag = 'input window, operand 11, single buffered']
    #allocation14 [shape = 'u8[14336]{0}', space=vmem, size = 0x3800, scoped, tag = 'output window, operand 0, single buffered']
    %18 = vsyncpa [#allocation3], 0
    %19 = vsyncpa [#allocation6], 0
    %20 = vsyncpa [#allocation9], 0
    %21 = vsyncpa [#allocation12], 0
    %22 = vsyncpa [#allocation4], 0
    // Predicated region
    $region2: #{tpu_custom_call.1} parent=1 // pred_check
      _
    $region3: #{tpu_custom_call.1} parent=1 // pred_check_branch
      %24 = sbr.rel (0) target = $region5
    $region4: #{tpu_custom_call.1} parent=1 // pred_region
      %s26 = ssub.s32 448, 448
      %27 = vsyncadd [#allocation3], %s26
      %s29 = sshll.u32 [#allocation2], 4
      %s30 = int_to_ptr.vmem [resolvable:$true] %s29
      %32 = dma.hbm_to_vmem [thread:$0]  %s0, 448, %s30, [#allocation3]
    $region5: #{tpu_custom_call.1} parent=1 // pred_fallthru
      _
    // Predicated region
    $region6: #{tpu_custom_call.1} parent=1 // pred_check
      _
    $region7: #{tpu_custom_call.1} parent=1 // pred_check_branch
      %34 = sbr.rel (0) target = $region9
    $region8: #{tpu_custom_call.1} parent=1 // pred_region
      %s36 = ssub.s32 25088, 25088
      %37 = vsyncadd [#allocation6], %s36
      %s38 = sshll.u32 [#allocation5], 4
      %s39 = int_to_ptr.vmem [resolvable:$true] %s38
      %44 = dma.hbm_to_vmem [thread:$0]  %s1, 25088, %s39, [#allocation6], 256, 256, 16
    $region9: #{tpu_custom_call.1} parent=1 // pred_fallthru
      _
    // Predicated region
    $region10: #{tpu_custom_call.1} parent=1 // pred_check
      _
    $region11: #{tpu_custom_call.1} parent=1 // pred_check_branch
      %46 = sbr.rel (0) target = $region13
    $region12: #{tpu_custom_call.1} parent=1 // pred_region
      _
    $region13: #{tpu_custom_call.1} parent=1 // pred_fallthru
      _
    // Predicated region
    $region14: #{tpu_custom_call.1} parent=1 // pred_check
      _
    $region15: #{tpu_custom_call.1} parent=1 // pred_check_branch
      %48 = sbr.rel (0) target = $region17
    $region16: #{tpu_custom_call.1} parent=1 // pred_region
      %s50 = ssub.s32 8192, 8192
      %51 = vsyncadd [#allocation6], %s50
      %s52 = sshll.u32 [#allocation7], 4
      %s53 = int_to_ptr.vmem [resolvable:$true] %s52
      %58 = dma.hbm_to_vmem [thread:$0]  %s3, 8192, %s53, [#allocation6], 128, 128, 8
    $region17: #{tpu_custom_call.1} parent=1 // pred_fallthru
      _
    // Predicated region
    $region18: #{tpu_custom_call.1} parent=1 // pred_check
      _
    $region19: #{tpu_custom_call.1} parent=1 // pred_check_branch
      %60 = sbr.rel (0) target = $region21
    $region20: #{tpu_custom_call.1} parent=1 // pred_region
      _
    $region21: #{tpu_custom_call.1} parent=1 // pred_fallthru
      _
    // Predicated region
    $region22: #{tpu_custom_call.1} parent=1 // pred_check
      _
    $region23: #{tpu_custom_call.1} parent=1 // pred_check_branch
      %62 = sbr.rel (0) target = $region25
    $region24: #{tpu_custom_call.1} parent=1 // pred_region
      %s64 = ssub.s32 2048, 2048
      %65 = vsyncadd [#allocation9], %s64
      %s66 = sshll.u32 [#allocation8], 4
      %s67 = int_to_ptr.vmem [resolvable:$true] %s66
      %72 = dma.hbm_to_vmem [thread:$0]  %s5, 2048, %s67, [#allocation9], 64, 64, 4
    $region25: #{tpu_custom_call.1} parent=1 // pred_fallthru
      _
    // Predicated region
    $region26: #{tpu_custom_call.1} parent=1 // pred_check
      _
    $region27: #{tpu_custom_call.1} parent=1 // pred_check_branch
      %74 = sbr.rel (0) target = $region29
    $region28: #{tpu_custom_call.1} parent=1 // pred_region
      _
    $region29: #{tpu_custom_call.1} parent=1 // pred_fallthru
      _
    // Predicated region
    $region30: #{tpu_custom_call.1} parent=1 // pred_check
      _
    $region31: #{tpu_custom_call.1} parent=1 // pred_check_branch
      %76 = sbr.rel (0) target = $region33
    $region32: #{tpu_custom_call.1} parent=1 // pred_region
      %s78 = ssub.s32 1024, 1024
      %79 = vsyncadd [#allocation9], %s78
      %s80 = sshll.u32 [#allocation10], 4
      %s81 = int_to_ptr.vmem [resolvable:$true] %s80
      %86 = dma.hbm_to_vmem [thread:$0]  %s7, 1024, %s81, [#allocation9], 64, 64, 4
    $region33: #{tpu_custom_call.1} parent=1 // pred_fallthru
      _
    // Predicated region
    $region34: #{tpu_custom_call.1} parent=1 // pred_check
      _
    $region35: #{tpu_custom_call.1} parent=1 // pred_check_branch
      %88 = sbr.rel (0) target = $region37
    $region36: #{tpu_custom_call.1} parent=1 // pred_region
      _
    $region37: #{tpu_custom_call.1} parent=1 // pred_fallthru
      _
    // Predicated region
    $region38: #{tpu_custom_call.1} parent=1 // pred_check
      _
    $region39: #{tpu_custom_call.1} parent=1 // pred_check_branch
      %90 = sbr.rel (0) target = $region41
    $region40: #{tpu_custom_call.1} parent=1 // pred_region
      %s92 = ssub.s32 2048, 2048
      %93 = vsyncadd [#allocation12], %s92
      %s94 = sshll.u32 [#allocation11], 4
      %s95 = int_to_ptr.vmem [resolvable:$true] %s94
      %100 = dma.hbm_to_vmem [thread:$0]  %s9, 2048, %s95, [#allocation12], 128, 128, 8
    $region41: #{tpu_custom_call.1} parent=1 // pred_fallthru
      _
    // Predicated region
    $region42: #{tpu_custom_call.1} parent=1 // pred_check
      _
    $region43: #{tpu_custom_call.1} parent=1 // pred_check_branch
      %102 = sbr.rel (0) target = $region45
    $region44: #{tpu_custom_call.1} parent=1 // pred_region
      _
    $region45: #{tpu_custom_call.1} parent=1 // pred_fallthru
      _
    // Predicated region
    $region46: #{tpu_custom_call.1} parent=1 // pred_check
      _
    $region47: #{tpu_custom_call.1} parent=1 // pred_check_branch
      %104 = sbr.rel (0) target = $region49
    $region48: #{tpu_custom_call.1} parent=1 // pred_region
      %s106 = ssub.s32 14336, 14336
      %107 = vsyncadd [#allocation12], %s106
      %s108 = sshll.u32 [#allocation13], 4
      %s109 = int_to_ptr.vmem [resolvable:$true] %s108
      %114 = dma.hbm_to_vmem [thread:$0]  %s11, 14336, %s109, [#allocation12], 448, 448, 28
    $region49: #{tpu_custom_call.1} parent=1 // pred_fallthru
      _
    // Predicated region
    $region50: #{tpu_custom_call.1} parent=1 // pred_check
      _
    $region51: #{tpu_custom_call.1} parent=1 // pred_check_branch
      %116 = sbr.rel (0) target = $region53
    $region52: #{tpu_custom_call.1} parent=1 // pred_region
      _
    $region53: #{tpu_custom_call.1} parent=1 // pred_fallthru
      _
    // Predicated region
    $region54: #{tpu_custom_call.1} parent=1 // pred_check
      _
    $region55: #{tpu_custom_call.1} parent=1 // pred_check_branch
      %118 = sbr.rel (0) target = $region57
    $region56: #{tpu_custom_call.1} parent=1 // pred_region
      %119 = dma.done [#allocation3], 448
    $region57: #{tpu_custom_call.1} parent=1 // pred_fallthru
      _
    // Predicated region
    $region58: #{tpu_custom_call.1} parent=1 // pred_check
      _
    $region59: #{tpu_custom_call.1} parent=1 // pred_check_branch
      %121 = sbr.rel (0) target = $region61
    $region60: #{tpu_custom_call.1} parent=1 // pred_region
      %122 = dma.done [#allocation6], 25088
    $region61: #{tpu_custom_call.1} parent=1 // pred_fallthru
      _
    // Predicated region
    $region62: #{tpu_custom_call.1} parent=1 // pred_check
      _
    $region63: #{tpu_custom_call.1} parent=1 // pred_check_branch
      %124 = sbr.rel (0) target = $region65
    $region64: #{tpu_custom_call.1} parent=1 // pred_region
      %125 = dma.done [#allocation6], 8192
    $region65: #{tpu_custom_call.1} parent=1 // pred_fallthru
      _
    // Predicated region
    $region66: #{tpu_custom_call.1} parent=1 // pred_check
      _
    $region67: #{tpu_custom_call.1} parent=1 // pred_check_branch
      %127 = sbr.rel (0) target = $region69
    $region68: #{tpu_custom_call.1} parent=1 // pred_region
      %128 = dma.done [#allocation9], 2048
    $region69: #{tpu_custom_call.1} parent=1 // pred_fallthru
      _
    // Predicated region
    $region70: #{tpu_custom_call.1} parent=1 // pred_check
      _
    $region71: #{tpu_custom_call.1} parent=1 // pred_check_branch
      %130 = sbr.rel (0) target = $region73
    $region72: #{tpu_custom_call.1} parent=1 // pred_region
      %131 = dma.done [#allocation9], 1024
    $region73: #{tpu_custom_call.1} parent=1 // pred_fallthru
      _
    // Predicated region
    $region74: #{tpu_custom_call.1} parent=1 // pred_check
      _
    $region75: #{tpu_custom_call.1} parent=1 // pred_check_branch
      %133 = sbr.rel (0) target = $region77
    $region76: #{tpu_custom_call.1} parent=1 // pred_region
      %134 = dma.done [#allocation12], 2048
    $region77: #{tpu_custom_call.1} parent=1 // pred_fallthru
      _
    // Predicated region
    $region78: #{tpu_custom_call.1} parent=1 // pred_check
      _
    $region79: #{tpu_custom_call.1} parent=1 // pred_check_branch
      %136 = sbr.rel (0) target = $region81
    $region80: #{tpu_custom_call.1} parent=1 // pred_region
      %137 = dma.done [#allocation12], 14336
    $region81: #{tpu_custom_call.1} parent=1 // pred_fallthru
      _
    %v139 = vld [vmem:[#allocation2] sm:$0xff]
    %v140 = vld [vmem:[#allocation2 + $0x8] sm:$0xff]
    %v141 = vld [vmem:[#allocation2 + $0x10] sm:$0xff]
    %v142 = vld [vmem:[#allocation2 + $0x18] sm:$0xf]
    %v143 = vld [vmem:[#allocation5] sm:$0xff]
    %v144 = vld [vmem:[#allocation5 + $0x8] sm:$0xff]
    %v145 = vld [vmem:[#allocation5 + $0x10] sm:$0xff]
    %v146 = vld [vmem:[#allocation5 + $0x18] sm:$0xff]
    %v147 = vld [vmem:[#allocation5 + $0x20] sm:$0xff]
    %v148 = vld [vmem:[#allocation5 + $0x28] sm:$0xff]
    %v149 = vld [vmem:[#allocation5 + $0x30] sm:$0xff]
    %v150 = vld [vmem:[#allocation5 + $0x38] sm:$0xff]
    %v151 = vld [vmem:[#allocation5 + $0x40] sm:$0xff]
    %v152 = vld [vmem:[#allocation5 + $0x48] sm:$0xff]
    %v153 = vld [vmem:[#allocation5 + $0x50] sm:$0xff]
    %v154 = vld [vmem:[#allocation5 + $0x58] sm:$0xff]
    %v155 = vld [vmem:[#allocation5 + $0x60] sm:$0xff]
    %v156 = vld [vmem:[#allocation5 + $0x68] sm:$0xff]
    %v157 = vld [vmem:[#allocation5 + $0x70] sm:$0xff]
    %v158 = vld [vmem:[#allocation5 + $0x78] sm:$0xff]
    %v159 = vld [vmem:[#allocation5 + $0x80] sm:$0xff]
    %v160 = vld [vmem:[#allocation5 + $0x88] sm:$0xff]
    %v161 = vld [vmem:[#allocation5 + $0x90] sm:$0xff]
    %v162 = vld [vmem:[#allocation5 + $0x98] sm:$0xff]
    %v163 = vld [vmem:[#allocation5 + $0xa0] sm:$0xff]
    %v164 = vld [vmem:[#allocation5 + $0xa8] sm:$0xff]
    %v165 = vld [vmem:[#allocation5 + $0xb0] sm:$0xff]
    %v166 = vld [vmem:[#allocation5 + $0xb8] sm:$0xff]
    %v167 = vld [vmem:[#allocation5 + $0xc0] sm:$0xff]
    %v168 = vld [vmem:[#allocation5 + $0xc8] sm:$0xff]
    %v169 = vld [vmem:[#allocation5 + $0xd0] sm:$0xff]
    %v170 = vld [vmem:[#allocation5 + $0xd8] sm:$0xff]
    %v171 = vld [vmem:[#allocation5 + $0xe0] sm:$0xff]
    %v172 = vld [vmem:[#allocation5 + $0xe8] sm:$0xff]
    %v173 = vld [vmem:[#allocation5 + $0xf0] sm:$0xff]
    %v174 = vld [vmem:[#allocation5 + $0xf8] sm:$0xff]
    %v175 = vld [vmem:[#allocation5 + $0x100] sm:$0xff]
    %v176 = vld [vmem:[#allocation5 + $0x108] sm:$0xff]
    %v177 = vld [vmem:[#allocation5 + $0x110] sm:$0xff]
    %v178 = vld [vmem:[#allocation5 + $0x118] sm:$0xff]
    %v179 = vld [vmem:[#allocation5 + $0x120] sm:$0xff]
    %v180 = vld [vmem:[#allocation5 + $0x128] sm:$0xff]
    %v181 = vld [vmem:[#allocation5 + $0x130] sm:$0xff]
    %v182 = vld [vmem:[#allocation5 + $0x138] sm:$0xff]
    %v183 = vld [vmem:[#allocation5 + $0x140] sm:$0xff]
    %v184 = vld [vmem:[#allocation5 + $0x148] sm:$0xff]
    %v185 = vld [vmem:[#allocation5 + $0x150] sm:$0xff]
    %v186 = vld [vmem:[#allocation5 + $0x158] sm:$0xff]
    %v187 = vld [vmem:[#allocation5 + $0x160] sm:$0xff]
    %v188 = vld [vmem:[#allocation5 + $0x168] sm:$0xff]
    %v189 = vld [vmem:[#allocation5 + $0x170] sm:$0xff]
    %v190 = vld [vmem:[#allocation5 + $0x178] sm:$0xff]
    %v191 = vld [vmem:[#allocation5 + $0x180] sm:$0xff]
    %v192 = vld [vmem:[#allocation5 + $0x188] sm:$0xff]
    %v193 = vld [vmem:[#allocation5 + $0x190] sm:$0xff]
    %v194 = vld [vmem:[#allocation5 + $0x198] sm:$0xff]
    %v195 = vld [vmem:[#allocation5 + $0x1a0] sm:$0xff]
    %v196 = vld [vmem:[#allocation5 + $0x1a8] sm:$0xff]
    %v197 = vld [vmem:[#allocation5 + $0x1b0] sm:$0xff]
    %v198 = vld [vmem:[#allocation5 + $0x1b8] sm:$0xff]
    %v199 = vld [vmem:[#allocation5 + $0x1c0] sm:$0xff]
    %v200 = vld [vmem:[#allocation5 + $0x1c8] sm:$0xff]
    %v201 = vld [vmem:[#allocation5 + $0x1d0] sm:$0xff]
    %v202 = vld [vmem:[#allocation5 + $0x1d8] sm:$0xff]
    %v203 = vld [vmem:[#allocation5 + $0x1e0] sm:$0xff]
    %v204 = vld [vmem:[#allocation5 + $0x1e8] sm:$0xff]
    %v205 = vld [vmem:[#allocation5 + $0x1f0] sm:$0xff]
    %v206 = vld [vmem:[#allocation5 + $0x1f8] sm:$0xff]
    %v207 = vld [vmem:[#allocation5 + $0x200] sm:$0xff]
    %v208 = vld [vmem:[#allocation5 + $0x208] sm:$0xff]
    %v209 = vld [vmem:[#allocation5 + $0x210] sm:$0xff]
    %v210 = vld [vmem:[#allocation5 + $0x218] sm:$0xff]
    %v211 = vld [vmem:[#allocation5 + $0x220] sm:$0xff]
    %v212 = vld [vmem:[#allocation5 + $0x228] sm:$0xff]
    %v213 = vld [vmem:[#allocation5 + $0x230] sm:$0xff]
    %v214 = vld [vmem:[#allocation5 + $0x238] sm:$0xff]
    %v215 = vld [vmem:[#allocation5 + $0x240] sm:$0xff]
    %v216 = vld [vmem:[#allocation5 + $0x248] sm:$0xff]
    %v217 = vld [vmem:[#allocation5 + $0x250] sm:$0xff]
    %v218 = vld [vmem:[#allocation5 + $0x258] sm:$0xff]
    %v219 = vld [vmem:[#allocation5 + $0x260] sm:$0xff]
    %v220 = vld [vmem:[#allocation5 + $0x268] sm:$0xff]
    %v221 = vld [vmem:[#allocation5 + $0x270] sm:$0xff]
    %v222 = vld [vmem:[#allocation5 + $0x278] sm:$0xff]
    %v223 = vld [vmem:[#allocation5 + $0x280] sm:$0xff]
    %v224 = vld [vmem:[#allocation5 + $0x288] sm:$0xff]
    %v225 = vld [vmem:[#allocation5 + $0x290] sm:$0xff]
    %v226 = vld [vmem:[#allocation5 + $0x298] sm:$0xff]
    %v227 = vld [vmem:[#allocation5 + $0x2a0] sm:$0xff]
    %v228 = vld [vmem:[#allocation5 + $0x2a8] sm:$0xff]
    %v229 = vld [vmem:[#allocation5 + $0x2b0] sm:$0xff]
    %v230 = vld [vmem:[#allocation5 + $0x2b8] sm:$0xff]
    %v231 = vld [vmem:[#allocation5 + $0x2c0] sm:$0xff]
    %v232 = vld [vmem:[#allocation5 + $0x2c8] sm:$0xff]
    %v233 = vld [vmem:[#allocation5 + $0x2d0] sm:$0xff]
    %v234 = vld [vmem:[#allocation5 + $0x2d8] sm:$0xff]
    %v235 = vld [vmem:[#allocation5 + $0x2e0] sm:$0xff]
    %v236 = vld [vmem:[#allocation5 + $0x2e8] sm:$0xff]
    %v237 = vld [vmem:[#allocation5 + $0x2f0] sm:$0xff]
    %v238 = vld [vmem:[#allocation5 + $0x2f8] sm:$0xff]
    %v239 = vld [vmem:[#allocation5 + $0x300] sm:$0xff]
    %v240 = vld [vmem:[#allocation5 + $0x308] sm:$0xff]
    %v241 = vld [vmem:[#allocation5 + $0x310] sm:$0xff]
    %v242 = vld [vmem:[#allocation5 + $0x318] sm:$0xff]
    %v243 = vld [vmem:[#allocation5 + $0x320] sm:$0xff]
    %v244 = vld [vmem:[#allocation5 + $0x328] sm:$0xff]
    %v245 = vld [vmem:[#allocation5 + $0x330] sm:$0xff]
    %v246 = vld [vmem:[#allocation5 + $0x338] sm:$0xff]
    %v247 = vld [vmem:[#allocation5 + $0x340] sm:$0xff]
    %v248 = vld [vmem:[#allocation5 + $0x348] sm:$0xff]
    %v249 = vld [vmem:[#allocation5 + $0x350] sm:$0xff]
    %v250 = vld [vmem:[#allocation5 + $0x358] sm:$0xff]
    %v251 = vld [vmem:[#allocation5 + $0x360] sm:$0xff]
    %v252 = vld [vmem:[#allocation5 + $0x368] sm:$0xff]
    %v253 = vld [vmem:[#allocation5 + $0x370] sm:$0xff]
    %v254 = vld [vmem:[#allocation5 + $0x378] sm:$0xff]
    %v255 = vld [vmem:[#allocation5 + $0x380] sm:$0xff]
    %v256 = vld [vmem:[#allocation5 + $0x388] sm:$0xff]
    %v257 = vld [vmem:[#allocation5 + $0x390] sm:$0xff]
    %v258 = vld [vmem:[#allocation5 + $0x398] sm:$0xff]
    %v259 = vld [vmem:[#allocation5 + $0x3a0] sm:$0xff]
    %v260 = vld [vmem:[#allocation5 + $0x3a8] sm:$0xff]
    %v261 = vld [vmem:[#allocation5 + $0x3b0] sm:$0xff]
    %v262 = vld [vmem:[#allocation5 + $0x3b8] sm:$0xff]
    %v263 = vld [vmem:[#allocation5 + $0x3c0] sm:$0xff]
    %v264 = vld [vmem:[#allocation5 + $0x3c8] sm:$0xff]
    %v265 = vld [vmem:[#allocation5 + $0x3d0] sm:$0xff]
    %v266 = vld [vmem:[#allocation5 + $0x3d8] sm:$0xff]
    %v267 = vld [vmem:[#allocation5 + $0x3e0] sm:$0xff]
    %v268 = vld [vmem:[#allocation5 + $0x3e8] sm:$0xff]
    %v269 = vld [vmem:[#allocation5 + $0x3f0] sm:$0xff]
    %v270 = vld [vmem:[#allocation5 + $0x3f8] sm:$0xff]
    %v271 = vld [vmem:[#allocation5 + $0x400] sm:$0xff]
    %v272 = vld [vmem:[#allocation5 + $0x408] sm:$0xff]
    %v273 = vld [vmem:[#allocation5 + $0x410] sm:$0xff]
    %v274 = vld [vmem:[#allocation5 + $0x418] sm:$0xff]
    %v275 = vld [vmem:[#allocation5 + $0x420] sm:$0xff]
    %v276 = vld [vmem:[#allocation5 + $0x428] sm:$0xff]
    %v277 = vld [vmem:[#allocation5 + $0x430] sm:$0xff]
    %v278 = vld [vmem:[#allocation5 + $0x438] sm:$0xff]
    %v279 = vld [vmem:[#allocation5 + $0x440] sm:$0xff]
    %v280 = vld [vmem:[#allocation5 + $0x448] sm:$0xff]
    %v281 = vld [vmem:[#allocation5 + $0x450] sm:$0xff]
    %v282 = vld [vmem:[#allocation5 + $0x458] sm:$0xff]
    %v283 = vld [vmem:[#allocation5 + $0x460] sm:$0xff]
    %v284 = vld [vmem:[#allocation5 + $0x468] sm:$0xff]
    %v285 = vld [vmem:[#allocation5 + $0x470] sm:$0xff]
    %v286 = vld [vmem:[#allocation5 + $0x478] sm:$0xff]
    %v287 = vld [vmem:[#allocation5 + $0x480] sm:$0xff]
    %v288 = vld [vmem:[#allocation5 + $0x488] sm:$0xff]
    %v289 = vld [vmem:[#allocation5 + $0x490] sm:$0xff]
    %v290 = vld [vmem:[#allocation5 + $0x498] sm:$0xff]
    %v291 = vld [vmem:[#allocation5 + $0x4a0] sm:$0xff]
    %v292 = vld [vmem:[#allocation5 + $0x4a8] sm:$0xff]
    %v293 = vld [vmem:[#allocation5 + $0x4b0] sm:$0xff]
    %v294 = vld [vmem:[#allocation5 + $0x4b8] sm:$0xff]
    %v295 = vld [vmem:[#allocation5 + $0x4c0] sm:$0xff]
    %v296 = vld [vmem:[#allocation5 + $0x4c8] sm:$0xff]
    %v297 = vld [vmem:[#allocation5 + $0x4d0] sm:$0xff]
    %v298 = vld [vmem:[#allocation5 + $0x4d8] sm:$0xff]
    %v299 = vld [vmem:[#allocation5 + $0x4e0] sm:$0xff]
    %v300 = vld [vmem:[#allocation5 + $0x4e8] sm:$0xff]
    %v301 = vld [vmem:[#allocation5 + $0x4f0] sm:$0xff]
    %v302 = vld [vmem:[#allocation5 + $0x4f8] sm:$0xff]
    %v303 = vld [vmem:[#allocation5 + $0x500] sm:$0xff]
    %v304 = vld [vmem:[#allocation5 + $0x508] sm:$0xff]
    %v305 = vld [vmem:[#allocation5 + $0x510] sm:$0xff]
    %v306 = vld [vmem:[#allocation5 + $0x518] sm:$0xff]
    %v307 = vld [vmem:[#allocation5 + $0x520] sm:$0xff]
    %v308 = vld [vmem:[#allocation5 + $0x528] sm:$0xff]
    %v309 = vld [vmem:[#allocation5 + $0x530] sm:$0xff]
    %v310 = vld [vmem:[#allocation5 + $0x538] sm:$0xff]
    %v311 = vld [vmem:[#allocation5 + $0x540] sm:$0xff]
    %v312 = vld [vmem:[#allocation5 + $0x548] sm:$0xff]
    %v313 = vld [vmem:[#allocation5 + $0x550] sm:$0xff]
    %v314 = vld [vmem:[#allocation5 + $0x558] sm:$0xff]
    %v315 = vld [vmem:[#allocation5 + $0x560] sm:$0xff]
    %v316 = vld [vmem:[#allocation5 + $0x568] sm:$0xff]
    %v317 = vld [vmem:[#allocation5 + $0x570] sm:$0xff]
    %v318 = vld [vmem:[#allocation5 + $0x578] sm:$0xff]
    %v319 = vld [vmem:[#allocation5 + $0x580] sm:$0xff]
    %v320 = vld [vmem:[#allocation5 + $0x588] sm:$0xff]
    %v321 = vld [vmem:[#allocation5 + $0x590] sm:$0xff]
    %v322 = vld [vmem:[#allocation5 + $0x598] sm:$0xff]
    %v323 = vld [vmem:[#allocation5 + $0x5a0] sm:$0xff]
    %v324 = vld [vmem:[#allocation5 + $0x5a8] sm:$0xff]
    %v325 = vld [vmem:[#allocation5 + $0x5b0] sm:$0xff]
    %v326 = vld [vmem:[#allocation5 + $0x5b8] sm:$0xff]
    %v327 = vld [vmem:[#allocation5 + $0x5c0] sm:$0xff]
    %v328 = vld [vmem:[#allocation5 + $0x5c8] sm:$0xff]
    %v329 = vld [vmem:[#allocation5 + $0x5d0] sm:$0xff]
    %v330 = vld [vmem:[#allocation5 + $0x5d8] sm:$0xff]
    %v331 = vld [vmem:[#allocation5 + $0x5e0] sm:$0xff]
    %v332 = vld [vmem:[#allocation5 + $0x5e8] sm:$0xff]
    %v333 = vld [vmem:[#allocation5 + $0x5f0] sm:$0xff]
    %v334 = vld [vmem:[#allocation5 + $0x5f8] sm:$0xff]
    %v335 = vld [vmem:[#allocation5 + $0x600] sm:$0xff]
    %v336 = vld [vmem:[#allocation5 + $0x608] sm:$0xff]
    %v337 = vld [vmem:[#allocation5 + $0x610] sm:$0xff]
    %v338 = vld [vmem:[#allocation5 + $0x618] sm:$0xff]
    %v339 = vld [vmem:[%s2] sm:$0xf]
    %v341 = vlaneseq
    %v342 = vshrl.u32 %v341, 7
    %v343 = vsub.s32 0, %v342
    %v344 = vrot.slane %v339, %v343
    %v345 = vlaneseq
    %v346 = vshrl.u32 %v345, 7
    %v347 = vsub.s32 1, %v346
    %v348 = vrot.slane %v339, %v347
    %v349 = vlaneseq
    %v350 = vshrl.u32 %v349, 7
    %v351 = vsub.s32 2, %v350
    %v352 = vrot.slane %v339, %v351
    %v353 = vlaneseq
    %v354 = vshrl.u32 %v353, 7
    %v355 = vsub.s32 3, %v354
    %v356 = vrot.slane %v339, %v355
    %v365 = vunpack.c.l.b16 %v139
    %v366 = vunpack.c.h.b16 %v139
    %v367 = vunpack.c.l.b16 %v140
    %v368 = vunpack.c.h.b16 %v140
    %v369 = vunpack.c.l.b16 %v141
    %v370 = vunpack.c.h.b16 %v141
    %v371 = vunpack.c.l.b16 %v142
    %v372 = vpack.c.b16 %v365, %v365
    %v373 = vpack.c.b16 %v366, %v366
    %v374 = vpack.c.b16 %v367, %v367
    %v375 = vpack.c.b16 %v368, %v368
    %v376 = vpack.c.b16 %v369, %v369
    %v377 = vpack.c.b16 %v370, %v370
    %v378 = vpack.c.b16 %v371, %v371
    %v581 = vunpack.c.l.b16 %v143
    %v582 = vunpack.c.h.b16 %v143
    %v583 = vunpack.c.l.b16 %v144
    %v584 = vunpack.c.h.b16 %v144
    %v585 = vunpack.c.l.b16 %v145
    %v586 = vunpack.c.h.b16 %v145
    %v587 = vunpack.c.l.b16 %v146
    %v588 = vunpack.c.h.b16 %v146
    %v589 = vunpack.c.l.b16 %v147
    %v590 = vunpack.c.h.b16 %v147
    %v591 = vunpack.c.l.b16 %v148
    %v592 = vunpack.c.h.b16 %v148
    %v593 = vunpack.c.l.b16 %v149
    %v594 = vunpack.c.h.b16 %v149
    %v595 = vunpack.c.l.b16 %v150
    %v596 = vunpack.c.h.b16 %v150
    %v597 = vunpack.c.l.b16 %v151
    %v598 = vunpack.c.h.b16 %v151
    %v599 = vunpack.c.l.b16 %v152
    %v600 = vunpack.c.h.b16 %v152
    %v601 = vunpack.c.l.b16 %v153
    %v602 = vunpack.c.h.b16 %v153
    %v603 = vunpack.c.l.b16 %v154
    %v604 = vunpack.c.h.b16 %v154
    %v605 = vunpack.c.l.b16 %v155
    %v606 = vunpack.c.h.b16 %v155
    %v607 = vunpack.c.l.b16 %v156
    %v608 = vunpack.c.h.b16 %v156
    %v609 = vunpack.c.l.b16 %v157
    %v610 = vunpack.c.h.b16 %v157
    %v611 = vunpack.c.l.b16 %v158
    %v612 = vunpack.c.h.b16 %v158
    %v613 = vunpack.c.l.b16 %v159
    %v614 = vunpack.c.h.b16 %v159
    %v615 = vunpack.c.l.b16 %v160
    %v616 = vunpack.c.h.b16 %v160
    %v617 = vunpack.c.l.b16 %v161
    %v618 = vunpack.c.h.b16 %v161
    %v619 = vunpack.c.l.b16 %v162
    %v620 = vunpack.c.h.b16 %v162
    %v621 = vunpack.c.l.b16 %v163
    %v622 = vunpack.c.h.b16 %v163
    %v623 = vunpack.c.l.b16 %v164
    %v624 = vunpack.c.h.b16 %v164
    %v625 = vunpack.c.l.b16 %v165
    %v626 = vunpack.c.h.b16 %v165
    %v627 = vunpack.c.l.b16 %v166
    %v628 = vunpack.c.h.b16 %v166
    %v629 = vunpack.c.l.b16 %v167
    %v630 = vunpack.c.h.b16 %v167
    %v631 = vunpack.c.l.b16 %v168
    %v632 = vunpack.c.h.b16 %v168
    %v633 = vunpack.c.l.b16 %v169
    %v634 = vunpack.c.h.b16 %v169
    %v635 = vunpack.c.l.b16 %v170
    %v636 = vunpack.c.h.b16 %v170
    %v637 = vunpack.c.l.b16 %v171
    %v638 = vunpack.c.h.b16 %v171
    %v639 = vunpack.c.l.b16 %v172
    %v640 = vunpack.c.h.b16 %v172
    %v641 = vunpack.c.l.b16 %v173
    %v642 = vunpack.c.h.b16 %v173
    %v643 = vunpack.c.l.b16 %v174
    %v644 = vunpack.c.h.b16 %v174
    %v645 = vunpack.c.l.b16 %v175
    %v646 = vunpack.c.h.b16 %v175
    %v647 = vunpack.c.l.b16 %v176
    %v648 = vunpack.c.h.b16 %v176
    %v649 = vunpack.c.l.b16 %v177
    %v650 = vunpack.c.h.b16 %v177
    %v651 = vunpack.c.l.b16 %v178
    %v652 = vunpack.c.h.b16 %v178
    %v653 = vunpack.c.l.b16 %v179
    %v654 = vunpack.c.h.b16 %v179
    %v655 = vunpack.c.l.b16 %v180
    %v656 = vunpack.c.h.b16 %v180
    %v657 = vunpack.c.l.b16 %v181
    %v658 = vunpack.c.h.b16 %v181
    %v659 = vunpack.c.l.b16 %v182
    %v660 = vunpack.c.h.b16 %v182
    %v661 = vunpack.c.l.b16 %v183
    %v662 = vunpack.c.h.b16 %v183
    %v663 = vunpack.c.l.b16 %v184
    %v664 = vunpack.c.h.b16 %v184
    %v665 = vunpack.c.l.b16 %v185
    %v666 = vunpack.c.h.b16 %v185
    %v667 = vunpack.c.l.b16 %v186
    %v668 = vunpack.c.h.b16 %v186
    %v669 = vunpack.c.l.b16 %v187
    %v670 = vunpack.c.h.b16 %v187
    %v671 = vunpack.c.l.b16 %v188
    %v672 = vunpack.c.h.b16 %v188
    %v673 = vunpack.c.l.b16 %v189
    %v674 = vunpack.c.h.b16 %v189
    %v675 = vunpack.c.l.b16 %v190
    %v676 = vunpack.c.h.b16 %v190
    %v677 = vunpack.c.l.b16 %v191
    %v678 = vunpack.c.h.b16 %v191
    %v679 = vunpack.c.l.b16 %v192
    %v680 = vunpack.c.h.b16 %v192
    %v681 = vunpack.c.l.b16 %v193
    %v682 = vunpack.c.h.b16 %v193
    %v683 = vunpack.c.l.b16 %v194
    %v684 = vunpack.c.h.b16 %v194
    %v685 = vunpack.c.l.b16 %v195
    %v686 = vunpack.c.h.b16 %v195
    %v687 = vunpack.c.l.b16 %v196
    %v688 = vunpack.c.h.b16 %v196
    %v689 = vunpack.c.l.b16 %v197
    %v690 = vunpack.c.h.b16 %v197
    %v691 = vunpack.c.l.b16 %v198
    %v692 = vunpack.c.h.b16 %v198
    %v693 = vunpack.c.l.b16 %v199
    %v694 = vunpack.c.h.b16 %v199
    %v695 = vunpack.c.l.b16 %v200
    %v696 = vunpack.c.h.b16 %v200
    %v697 = vunpack.c.l.b16 %v201
    %v698 = vunpack.c.h.b16 %v201
    %v699 = vunpack.c.l.b16 %v202
    %v700 = vunpack.c.h.b16 %v202
    %v701 = vunpack.c.l.b16 %v203
    %v702 = vunpack.c.h.b16 %v203
    %v703 = vunpack.c.l.b16 %v204
    %v704 = vunpack.c.h.b16 %v204
    %v705 = vunpack.c.l.b16 %v205
    %v706 = vunpack.c.h.b16 %v205
    %v707 = vunpack.c.l.b16 %v206
    %v708 = vunpack.c.h.b16 %v206
    %v709 = vunpack.c.l.b16 %v207
    %v710 = vunpack.c.h.b16 %v207
    %v711 = vunpack.c.l.b16 %v208
    %v712 = vunpack.c.h.b16 %v208
    %v713 = vunpack.c.l.b16 %v209
    %v714 = vunpack.c.h.b16 %v209
    %v715 = vunpack.c.l.b16 %v210
    %v716 = vunpack.c.h.b16 %v210
    %v717 = vunpack.c.l.b16 %v211
    %v718 = vunpack.c.h.b16 %v211
    %v719 = vunpack.c.l.b16 %v212
    %v720 = vunpack.c.h.b16 %v212
    %v721 = vunpack.c.l.b16 %v213
    %v722 = vunpack.c.h.b16 %v213
    %v723 = vunpack.c.l.b16 %v214
    %v724 = vunpack.c.h.b16 %v214
    %v725 = vunpack.c.l.b16 %v215
    %v726 = vunpack.c.h.b16 %v215
    %v727 = vunpack.c.l.b16 %v216
    %v728 = vunpack.c.h.b16 %v216
    %v729 = vunpack.c.l.b16 %v217
    %v730 = vunpack.c.h.b16 %v217
    %v731 = vunpack.c.l.b16 %v218
    %v732 = vunpack.c.h.b16 %v218
    %v733 = vunpack.c.l.b16 %v219
    %v734 = vunpack.c.h.b16 %v219
    %v735 = vunpack.c.l.b16 %v220
    %v736 = vunpack.c.h.b16 %v220
    %v737 = vunpack.c.l.b16 %v221
    %v738 = vunpack.c.h.b16 %v221
    %v739 = vunpack.c.l.b16 %v222
    %v740 = vunpack.c.h.b16 %v222
    %v741 = vunpack.c.l.b16 %v223
    %v742 = vunpack.c.h.b16 %v223
    %v743 = vunpack.c.l.b16 %v224
    %v744 = vunpack.c.h.b16 %v224
    %v745 = vunpack.c.l.b16 %v225
    %v746 = vunpack.c.h.b16 %v225
    %v747 = vunpack.c.l.b16 %v226
    %v748 = vunpack.c.h.b16 %v226
    %v749 = vunpack.c.l.b16 %v227
    %v750 = vunpack.c.h.b16 %v227
    %v751 = vunpack.c.l.b16 %v228
    %v752 = vunpack.c.h.b16 %v228
    %v753 = vunpack.c.l.b16 %v229
    %v754 = vunpack.c.h.b16 %v229
    %v755 = vunpack.c.l.b16 %v230
    %v756 = vunpack.c.h.b16 %v230
    %v757 = vunpack.c.l.b16 %v231
    %v758 = vunpack.c.h.b16 %v231
    %v759 = vunpack.c.l.b16 %v232
    %v760 = vunpack.c.h.b16 %v232
    %v761 = vunpack.c.l.b16 %v233
    %v762 = vunpack.c.h.b16 %v233
    %v763 = vunpack.c.l.b16 %v234
    %v764 = vunpack.c.h.b16 %v234
    %v765 = vunpack.c.l.b16 %v235
    %v766 = vunpack.c.h.b16 %v235
    %v767 = vunpack.c.l.b16 %v236
    %v768 = vunpack.c.h.b16 %v236
    %v769 = vunpack.c.l.b16 %v237
    %v770 = vunpack.c.h.b16 %v237
    %v771 = vunpack.c.l.b16 %v238
    %v772 = vunpack.c.h.b16 %v238
    %v773 = vunpack.c.l.b16 %v239
    %v774 = vunpack.c.h.b16 %v239
    %v775 = vunpack.c.l.b16 %v240
    %v776 = vunpack.c.h.b16 %v240
    %v777 = vunpack.c.l.b16 %v241
    %v778 = vunpack.c.h.b16 %v241
    %v779 = vunpack.c.l.b16 %v242
    %v780 = vunpack.c.h.b16 %v242
    %v781 = vunpack.c.l.b16 %v243
    %v782 = vunpack.c.h.b16 %v243
    %v783 = vunpack.c.l.b16 %v244
    %v784 = vunpack.c.h.b16 %v244
    %v785 = vunpack.c.l.b16 %v245
    %v786 = vunpack.c.h.b16 %v245
    %v787 = vunpack.c.l.b16 %v246
    %v788 = vunpack.c.h.b16 %v246
    %v789 = vunpack.c.l.b16 %v247
    %v790 = vunpack.c.h.b16 %v247
    %v791 = vunpack.c.l.b16 %v248
    %v792 = vunpack.c.h.b16 %v248
    %v793 = vunpack.c.l.b16 %v249
    %v794 = vunpack.c.h.b16 %v249
    %v795 = vunpack.c.l.b16 %v250
    %v796 = vunpack.c.h.b16 %v250
    %v797 = vunpack.c.l.b16 %v251
    %v798 = vunpack.c.h.b16 %v251
    %v799 = vunpack.c.l.b16 %v252
    %v800 = vunpack.c.h.b16 %v252
    %v801 = vunpack.c.l.b16 %v253
    %v802 = vunpack.c.h.b16 %v253
    %v803 = vunpack.c.l.b16 %v254
    %v804 = vunpack.c.h.b16 %v254
    %v805 = vunpack.c.l.b16 %v255
    %v806 = vunpack.c.h.b16 %v255
    %v807 = vunpack.c.l.b16 %v256
    %v808 = vunpack.c.h.b16 %v256
    %v809 = vunpack.c.l.b16 %v257
    %v810 = vunpack.c.h.b16 %v257
    %v811 = vunpack.c.l.b16 %v258
    %v812 = vunpack.c.h.b16 %v258
    %v813 = vunpack.c.l.b16 %v259
    %v814 = vunpack.c.h.b16 %v259
    %v815 = vunpack.c.l.b16 %v260
    %v816 = vunpack.c.h.b16 %v260
    %v817 = vunpack.c.l.b16 %v261
    %v818 = vunpack.c.h.b16 %v261
    %v819 = vunpack.c.l.b16 %v262
    %v820 = vunpack.c.h.b16 %v262
    %v821 = vunpack.c.l.b16 %v263
    %v822 = vunpack.c.h.b16 %v263
    %v823 = vunpack.c.l.b16 %v264
    %v824 = vunpack.c.h.b16 %v264
    %v825 = vunpack.c.l.b16 %v265
    %v826 = vunpack.c.h.b16 %v265
    %v827 = vunpack.c.l.b16 %v266
    %v828 = vunpack.c.h.b16 %v266
    %v829 = vunpack.c.l.b16 %v267
    %v830 = vunpack.c.h.b16 %v267
    %v831 = vunpack.c.l.b16 %v268
    %v832 = vunpack.c.h.b16 %v268
    %v833 = vunpack.c.l.b16 %v269
    %v834 = vunpack.c.h.b16 %v269
    %v835 = vunpack.c.l.b16 %v270
    %v836 = vunpack.c.h.b16 %v270
    %v837 = vunpack.c.l.b16 %v271
    %v838 = vunpack.c.h.b16 %v271
    %v839 = vunpack.c.l.b16 %v272
    %v840 = vunpack.c.h.b16 %v272
    %v841 = vunpack.c.l.b16 %v273
    %v842 = vunpack.c.h.b16 %v273
    %v843 = vunpack.c.l.b16 %v274
    %v844 = vunpack.c.h.b16 %v274
    %v845 = vunpack.c.l.b16 %v275
    %v846 = vunpack.c.h.b16 %v275
    %v847 = vunpack.c.l.b16 %v276
    %v848 = vunpack.c.h.b16 %v276
    %v849 = vunpack.c.l.b16 %v277
    %v850 = vunpack.c.h.b16 %v277
    %v851 = vunpack.c.l.b16 %v278
    %v852 = vunpack.c.h.b16 %v278
    %v853 = vunpack.c.l.b16 %v279
    %v854 = vunpack.c.h.b16 %v279
    %v855 = vunpack.c.l.b16 %v280
    %v856 = vunpack.c.h.b16 %v280
    %v857 = vunpack.c.l.b16 %v281
    %v858 = vunpack.c.h.b16 %v281
    %v859 = vunpack.c.l.b16 %v282
    %v860 = vunpack.c.h.b16 %v282
    %v861 = vunpack.c.l.b16 %v283
    %v862 = vunpack.c.h.b16 %v283
    %v863 = vunpack.c.l.b16 %v284
    %v864 = vunpack.c.h.b16 %v284
    %v865 = vunpack.c.l.b16 %v285
    %v866 = vunpack.c.h.b16 %v285
    %v867 = vunpack.c.l.b16 %v286
    %v868 = vunpack.c.h.b16 %v286
    %v869 = vunpack.c.l.b16 %v287
    %v870 = vunpack.c.h.b16 %v287
    %v871 = vunpack.c.l.b16 %v288
    %v872 = vunpack.c.h.b16 %v288
    %v873 = vunpack.c.l.b16 %v289
    %v874 = vunpack.c.h.b16 %v289
    %v875 = vunpack.c.l.b16 %v290
    %v876 = vunpack.c.h.b16 %v290
    %v877 = vunpack.c.l.b16 %v291
    %v878 = vunpack.c.h.b16 %v291
    %v879 = vunpack.c.l.b16 %v292
    %v880 = vunpack.c.h.b16 %v292
    %v881 = vunpack.c.l.b16 %v293
    %v882 = vunpack.c.h.b16 %v293
    %v883 = vunpack.c.l.b16 %v294
    %v884 = vunpack.c.h.b16 %v294
    %v885 = vunpack.c.l.b16 %v295
    %v886 = vunpack.c.h.b16 %v295
    %v887 = vunpack.c.l.b16 %v296
    %v888 = vunpack.c.h.b16 %v296
    %v889 = vunpack.c.l.b16 %v297
    %v890 = vunpack.c.h.b16 %v297
    %v891 = vunpack.c.l.b16 %v298
    %v892 = vunpack.c.h.b16 %v298
    %v893 = vunpack.c.l.b16 %v299
    %v894 = vunpack.c.h.b16 %v299
    %v895 = vunpack.c.l.b16 %v300
    %v896 = vunpack.c.h.b16 %v300
    %v897 = vunpack.c.l.b16 %v301
    %v898 = vunpack.c.h.b16 %v301
    %v899 = vunpack.c.l.b16 %v302
    %v900 = vunpack.c.h.b16 %v302
    %v901 = vunpack.c.l.b16 %v303
    %v902 = vunpack.c.h.b16 %v303
    %v903 = vunpack.c.l.b16 %v304
    %v904 = vunpack.c.h.b16 %v304
    %v905 = vunpack.c.l.b16 %v305
    %v906 = vunpack.c.h.b16 %v305
    %v907 = vunpack.c.l.b16 %v306
    %v908 = vunpack.c.h.b16 %v306
    %v909 = vunpack.c.l.b16 %v307
    %v910 = vunpack.c.h.b16 %v307
    %v911 = vunpack.c.l.b16 %v308
    %v912 = vunpack.c.h.b16 %v308
    %v913 = vunpack.c.l.b16 %v309
    %v914 = vunpack.c.h.b16 %v309
    %v915 = vunpack.c.l.b16 %v310
    %v916 = vunpack.c.h.b16 %v310
    %v917 = vunpack.c.l.b16 %v311
    %v918 = vunpack.c.h.b16 %v311
    %v919 = vunpack.c.l.b16 %v312
    %v920 = vunpack.c.h.b16 %v312
    %v921 = vunpack.c.l.b16 %v313
    %v922 = vunpack.c.h.b16 %v313
    %v923 = vunpack.c.l.b16 %v314
    %v924 = vunpack.c.h.b16 %v314
    %v925 = vunpack.c.l.b16 %v315
    %v926 = vunpack.c.h.b16 %v315
    %v927 = vunpack.c.l.b16 %v316
    %v928 = vunpack.c.h.b16 %v316
    %v929 = vunpack.c.l.b16 %v317
    %v930 = vunpack.c.h.b16 %v317
    %v931 = vunpack.c.l.b16 %v318
    %v932 = vunpack.c.h.b16 %v318
    %v933 = vunpack.c.l.b16 %v319
    %v934 = vunpack.c.h.b16 %v319
    %v935 = vunpack.c.l.b16 %v320
    %v936 = vunpack.c.h.b16 %v320
    %v937 = vunpack.c.l.b16 %v321
    %v938 = vunpack.c.h.b16 %v321
    %v939 = vunpack.c.l.b16 %v322
    %v940 = vunpack.c.h.b16 %v322
    %v941 = vunpack.c.l.b16 %v323
    %v942 = vunpack.c.h.b16 %v323
    %v943 = vunpack.c.l.b16 %v324
    %v944 = vunpack.c.h.b16 %v324
    %v945 = vunpack.c.l.b16 %v325
    %v946 = vunpack.c.h.b16 %v325
    %v947 = vunpack.c.l.b16 %v326
    %v948 = vunpack.c.h.b16 %v326
    %v949 = vunpack.c.l.b16 %v327
    %v950 = vunpack.c.h.b16 %v327
    %v951 = vunpack.c.l.b16 %v328
    %v952 = vunpack.c.h.b16 %v328
    %v953 = vunpack.c.l.b16 %v329
    %v954 = vunpack.c.h.b16 %v329
    %v955 = vunpack.c.l.b16 %v330
    %v956 = vunpack.c.h.b16 %v330
    %v957 = vunpack.c.l.b16 %v331
    %v958 = vunpack.c.h.b16 %v331
    %v959 = vunpack.c.l.b16 %v332
    %v960 = vunpack.c.h.b16 %v332
    %v961 = vunpack.c.l.b16 %v333
    %v962 = vunpack.c.h.b16 %v333
    %v963 = vunpack.c.l.b16 %v334
    %v964 = vunpack.c.h.b16 %v334
    %v965 = vunpack.c.l.b16 %v335
    %v966 = vunpack.c.h.b16 %v335
    %v967 = vunpack.c.l.b16 %v336
    %v968 = vunpack.c.h.b16 %v336
    %v969 = vunpack.c.l.b16 %v337
    %v970 = vunpack.c.h.b16 %v337
    %v971 = vunpack.c.l.b16 %v338
    %v972 = vunpack.c.h.b16 %v338
    %v973 = vpack.c.b16 %v585, %v581
    %v974 = vpack.c.b16 %v586, %v582
    %v975 = vpack.c.b16 %v587, %v583
    %v976 = vpack.c.b16 %v588, %v584
    %v977 = vpack.c.b16 %v593, %v589
    %v978 = vpack.c.b16 %v594, %v590
    %v979 = vpack.c.b16 %v595, %v591
    %v980 = vpack.c.b16 %v596, %v592
    %v981 = vpack.c.b16 %v601, %v597
    %v982 = vpack.c.b16 %v602, %v598
    %v983 = vpack.c.b16 %v603, %v599
    %v984 = vpack.c.b16 %v604, %v600
    %v985 = vpack.c.b16 %v609, %v605
    %v986 = vpack.c.b16 %v610, %v606
    %v987 = vpack.c.b16 %v611, %v607
    %v988 = vpack.c.b16 %v612, %v608
    %v989 = vpack.c.b16 %v617, %v613
    %v990 = vpack.c.b16 %v618, %v614
    %v991 = vpack.c.b16 %v619, %v615
    %v992 = vpack.c.b16 %v620, %v616
    %v993 = vpack.c.b16 %v625, %v621
    %v994 = vpack.c.b16 %v626, %v622
    %v995 = vpack.c.b16 %v627, %v623
    %v996 = vpack.c.b16 %v628, %v624
    %v997 = vpack.c.b16 %v633, %v629
    %v998 = vpack.c.b16 %v634, %v630
    %v999 = vpack.c.b16 %v635, %v631
    %v1000 = vpack.c.b16 %v636, %v632
    %v1001 = vpack.c.b16 %v641, %v637
    %v1002 = vpack.c.b16 %v642, %v638
    %v1003 = vpack.c.b16 %v643, %v639
    %v1004 = vpack.c.b16 %v644, %v640
    %v1005 = vpack.c.b16 %v649, %v645
    %v1006 = vpack.c.b16 %v650, %v646
    %v1007 = vpack.c.b16 %v651, %v647
    %v1008 = vpack.c.b16 %v652, %v648
    %v1009 = vpack.c.b16 %v657, %v653
    %v1010 = vpack.c.b16 %v658, %v654
    %v1011 = vpack.c.b16 %v659, %v655
    %v1012 = vpack.c.b16 %v660, %v656
    %v1013 = vpack.c.b16 %v665, %v661
    %v1014 = vpack.c.b16 %v666, %v662
    %v1015 = vpack.c.b16 %v667, %v663
    %v1016 = vpack.c.b16 %v668, %v664
    %v1017 = vpack.c.b16 %v673, %v669
    %v1018 = vpack.c.b16 %v674, %v670
    %v1019 = vpack.c.b16 %v675, %v671
    %v1020 = vpack.c.b16 %v676, %v672
    %v1021 = vpack.c.b16 %v681, %v677
    %v1022 = vpack.c.b16 %v682, %v678
    %v1023 = vpack.c.b16 %v683, %v679
    %v1024 = vpack.c.b16 %v684, %v680
    %v1025 = vpack.c.b16 %v689, %v685
    %v1026 = vpack.c.b16 %v690, %v686
    %v1027 = vpack.c.b16 %v691, %v687
    %v1028 = vpack.c.b16 %v692, %v688
    %v1029 = vpack.c.b16 %v697, %v693
    %v1030 = vpack.c.b16 %v698, %v694
    %v1031 = vpack.c.b16 %v699, %v695
    %v1032 = vpack.c.b16 %v700, %v696
    %v1033 = vpack.c.b16 %v705, %v701
    %v1034 = vpack.c.b16 %v706, %v702
    %v1035 = vpack.c.b16 %v707, %v703
    %v1036 = vpack.c.b16 %v708, %v704
    %v1037 = vpack.c.b16 %v713, %v709
    %v1038 = vpack.c.b16 %v714, %v710
    %v1039 = vpack.c.b16 %v715, %v711
    %v1040 = vpack.c.b16 %v716, %v712
    %v1041 = vpack.c.b16 %v721, %v717
    %v1042 = vpack.c.b16 %v722, %v718
    %v1043 = vpack.c.b16 %v723, %v719
    %v1044 = vpack.c.b16 %v724, %v720
    %v1045 = vpack.c.b16 %v729, %v725
    %v1046 = vpack.c.b16 %v730, %v726
    %v1047 = vpack.c.b16 %v731, %v727
    %v1048 = vpack.c.b16 %v732, %v728
    %v1049 = vpack.c.b16 %v737, %v733
    %v1050 = vpack.c.b16 %v738, %v734
    %v1051 = vpack.c.b16 %v739, %v735
    %v1052 = vpack.c.b16 %v740, %v736
    %v1053 = vpack.c.b16 %v745, %v741
    %v1054 = vpack.c.b16 %v746, %v742
    %v1055 = vpack.c.b16 %v747, %v743
    %v1056 = vpack.c.b16 %v748, %v744
    %v1057 = vpack.c.b16 %v753, %v749
    %v1058 = vpack.c.b16 %v754, %v750
    %v1059 = vpack.c.b16 %v755, %v751
    %v1060 = vpack.c.b16 %v756, %v752
    %v1061 = vpack.c.b16 %v761, %v757
    %v1062 = vpack.c.b16 %v762, %v758
    %v1063 = vpack.c.b16 %v763, %v759
    %v1064 = vpack.c.b16 %v764, %v760
    %v1065 = vpack.c.b16 %v769, %v765
    %v1066 = vpack.c.b16 %v770, %v766
    %v1067 = vpack.c.b16 %v771, %v767
    %v1068 = vpack.c.b16 %v772, %v768
    %v1069 = vpack.c.b16 %v777, %v773
    %v1070 = vpack.c.b16 %v778, %v774
    %v1071 = vpack.c.b16 %v779, %v775
    %v1072 = vpack.c.b16 %v780, %v776
    %v1073 = vpack.c.b16 %v785, %v781
    %v1074 = vpack.c.b16 %v786, %v782
    %v1075 = vpack.c.b16 %v787, %v783
    %v1076 = vpack.c.b16 %v788, %v784
    %v1077 = vpack.c.b16 %v793, %v789
    %v1078 = vpack.c.b16 %v794, %v790
    %v1079 = vpack.c.b16 %v795, %v791
    %v1080 = vpack.c.b16 %v796, %v792
    %v1081 = vpack.c.b16 %v801, %v797
    %v1082 = vpack.c.b16 %v802, %v798
    %v1083 = vpack.c.b16 %v803, %v799
    %v1084 = vpack.c.b16 %v804, %v800
    %v1085 = vpack.c.b16 %v809, %v805
    %v1086 = vpack.c.b16 %v810, %v806
    %v1087 = vpack.c.b16 %v811, %v807
    %v1088 = vpack.c.b16 %v812, %v808
    %v1089 = vpack.c.b16 %v817, %v813
    %v1090 = vpack.c.b16 %v818, %v814
    %v1091 = vpack.c.b16 %v819, %v815
    %v1092 = vpack.c.b16 %v820, %v816
    %v1093 = vpack.c.b16 %v825, %v821
    %v1094 = vpack.c.b16 %v826, %v822
    %v1095 = vpack.c.b16 %v827, %v823
    %v1096 = vpack.c.b16 %v828, %v824
    %v1097 = vpack.c.b16 %v833, %v829
    %v1098 = vpack.c.b16 %v834, %v830
    %v1099 = vpack.c.b16 %v835, %v831
    %v1100 = vpack.c.b16 %v836, %v832
    %v1101 = vpack.c.b16 %v841, %v837
    %v1102 = vpack.c.b16 %v842, %v838
    %v1103 = vpack.c.b16 %v843, %v839
    %v1104 = vpack.c.b16 %v844, %v840
    %v1105 = vpack.c.b16 %v849, %v845
    %v1106 = vpack.c.b16 %v850, %v846
    %v1107 = vpack.c.b16 %v851, %v847
    %v1108 = vpack.c.b16 %v852, %v848
    %v1109 = vpack.c.b16 %v857, %v853
    %v1110 = vpack.c.b16 %v858, %v854
    %v1111 = vpack.c.b16 %v859, %v855
    %v1112 = vpack.c.b16 %v860, %v856
    %v1113 = vpack.c.b16 %v865, %v861
    %v1114 = vpack.c.b16 %v866, %v862
    %v1115 = vpack.c.b16 %v867, %v863
    %v1116 = vpack.c.b16 %v868, %v864
    %v1117 = vpack.c.b16 %v873, %v869
    %v1118 = vpack.c.b16 %v874, %v870
    %v1119 = vpack.c.b16 %v875, %v871
    %v1120 = vpack.c.b16 %v876, %v872
    %v1121 = vpack.c.b16 %v881, %v877
    %v1122 = vpack.c.b16 %v882, %v878
    %v1123 = vpack.c.b16 %v883, %v879
    %v1124 = vpack.c.b16 %v884, %v880
    %v1125 = vpack.c.b16 %v889, %v885
    %v1126 = vpack.c.b16 %v890, %v886
    %v1127 = vpack.c.b16 %v891, %v887
    %v1128 = vpack.c.b16 %v892, %v888
    %v1129 = vpack.c.b16 %v897, %v893
    %v1130 = vpack.c.b16 %v898, %v894
    %v1131 = vpack.c.b16 %v899, %v895
    %v1132 = vpack.c.b16 %v900, %v896
    %v1133 = vpack.c.b16 %v905, %v901
    %v1134 = vpack.c.b16 %v906, %v902
    %v1135 = vpack.c.b16 %v907, %v903
    %v1136 = vpack.c.b16 %v908, %v904
    %v1137 = vpack.c.b16 %v913, %v909
    %v1138 = vpack.c.b16 %v914, %v910
    %v1139 = vpack.c.b16 %v915, %v911
    %v1140 = vpack.c.b16 %v916, %v912
    %v1141 = vpack.c.b16 %v921, %v917
    %v1142 = vpack.c.b16 %v922, %v918
    %v1143 = vpack.c.b16 %v923, %v919
    %v1144 = vpack.c.b16 %v924, %v920
    %v1145 = vpack.c.b16 %v929, %v925
    %v1146 = vpack.c.b16 %v930, %v926
    %v1147 = vpack.c.b16 %v931, %v927
    %v1148 = vpack.c.b16 %v932, %v928
    %v1149 = vpack.c.b16 %v937, %v933
    %v1150 = vpack.c.b16 %v938, %v934
    %v1151 = vpack.c.b16 %v939, %v935
    %v1152 = vpack.c.b16 %v940, %v936
    %v1153 = vpack.c.b16 %v945, %v941
    %v1154 = vpack.c.b16 %v946, %v942
    %v1155 = vpack.c.b16 %v947, %v943
    %v1156 = vpack.c.b16 %v948, %v944
    %v1157 = vpack.c.b16 %v953, %v949
    %v1158 = vpack.c.b16 %v954, %v950
    %v1159 = vpack.c.b16 %v955, %v951
    %v1160 = vpack.c.b16 %v956, %v952
    %v1161 = vpack.c.b16 %v961, %v957
    %v1162 = vpack.c.b16 %v962, %v958
    %v1163 = vpack.c.b16 %v963, %v959
    %v1164 = vpack.c.b16 %v964, %v960
    %v1165 = vpack.c.b16 %v969, %v965
    %v1166 = vpack.c.b16 %v970, %v966
    %v1167 = vpack.c.b16 %v971, %v967
    %v1168 = vpack.c.b16 %v972, %v968
    %vm1365 = vcmask 130048
    %v1367 = vsel %vm1365, %v378, 0
    %1369 = vmatprep.subr.bf16.mxu0 %v974
    %1370 = vmatpush1.bf16.msra.mxu0 %v973
    %1371 = vmatprep.subr.bf16.mxu0 %v978
    %1372 = vmatpush1.bf16.msra.mxu0 %v977
    %1373 = vmatprep.subr.bf16.mxu0 %v982
    %1374 = vmatpush1.bf16.msra.mxu0 %v981
    %1375 = vmatprep.subr.bf16.mxu0 %v986
    %1376 = vmatpush1.bf16.msra.mxu0 %v985
    %1377 = vmatprep.subr.bf16.mxu0 %v990
    %1378 = vmatpush1.bf16.msra.mxu0 %v989
    %1379 = vmatprep.subr.bf16.mxu0 %v994
    %1380 = vmatpush1.bf16.msra.mxu0 %v993
    %1381 = vmatprep.subr.bf16.mxu0 %v998
    %1382 = vmatpush1.bf16.msra.mxu0 %v997
    %1383 = vmatprep.subr.bf16.mxu0 %v1002
    %1384 = vmatpush1.bf16.msra.mxu0 %v1001
    %1385 = vmatprep.subr.bf16.mxu0 %v1006
    %1386 = vmatpush1.bf16.msra.mxu0 %v1005
    %1387 = vmatprep.subr.bf16.mxu0 %v1010
    %1388 = vmatpush1.bf16.msra.mxu0 %v1009
    %1389 = vmatprep.subr.bf16.mxu0 %v1014
    %1390 = vmatpush1.bf16.msra.mxu0 %v1013
    %1391 = vmatprep.subr.bf16.mxu0 %v1018
    %1392 = vmatpush1.bf16.msra.mxu0 %v1017
    %1393 = vmatprep.subr.bf16.mxu0 %v1022
    %1394 = vmatpush1.bf16.msra.mxu0 %v1021
    %1395 = vmatprep.subr.bf16.mxu0 %v1026
    %1396 = vmatpush1.bf16.msra.mxu0 %v1025
    %1397 = vmatprep.subr.bf16.mxu0 %v1030
    %1398 = vmatpush1.bf16.msra.mxu0 %v1029
    %1399 = vmatprep.subr.bf16.mxu0 %v1034
    %1400 = vmatpush1.bf16.msra.mxu0 %v1033
    %1401 = vmatprep.mubr.bf16.mxu0 %v373
    %1402 = vmatmul.mubr.bf16.gmra.mrb[0].mxu0 %v372
    %v1403 = vpop.f32.mrb[0].mxu0
    %v1404 = vadd.f32 %v344, %v1403
    %v1405 = vpop.f32.mrb[0].mxu0
    %v1406 = vadd.f32 %v348, %v1405
    %v1407 = vpop.f32.mrb[0].mxu0
    %v1408 = vpop.f32.mrb[0].mxu0
    %1409 = vdwg.mxu0
    %1410 = vmatprep.subr.bf16.mxu0 %v1038
    %1411 = vmatpush1.bf16.msra.mxu0 %v1037
    %1412 = vmatprep.subr.bf16.mxu0 %v1042
    %1413 = vmatpush1.bf16.msra.mxu0 %v1041
    %1414 = vmatprep.subr.bf16.mxu0 %v1046
    %1415 = vmatpush1.bf16.msra.mxu0 %v1045
    %1416 = vmatprep.subr.bf16.mxu0 %v1050
    %1417 = vmatpush1.bf16.msra.mxu0 %v1049
    %1418 = vmatprep.subr.bf16.mxu0 %v1054
    %1419 = vmatpush1.bf16.msra.mxu0 %v1053
    %1420 = vmatprep.subr.bf16.mxu0 %v1058
    %1421 = vmatpush1.bf16.msra.mxu0 %v1057
    %1422 = vmatprep.subr.bf16.mxu0 %v1062
    %1423 = vmatpush1.bf16.msra.mxu0 %v1061
    %1424 = vmatprep.subr.bf16.mxu0 %v1066
    %1425 = vmatpush1.bf16.msra.mxu0 %v1065
    %1426 = vmatprep.subr.bf16.mxu0 %v1070
    %1427 = vmatpush1.bf16.msra.mxu0 %v1069
    %1428 = vmatprep.subr.bf16.mxu0 %v1074
    %1429 = vmatpush1.bf16.msra.mxu0 %v1073
    %1430 = vmatprep.subr.bf16.mxu0 %v1078
    %1431 = vmatpush1.bf16.msra.mxu0 %v1077
    %1432 = vmatprep.subr.bf16.mxu0 %v1082
    %1433 = vmatpush1.bf16.msra.mxu0 %v1081
    %1434 = vmatprep.subr.bf16.mxu0 %v1086
    %1435 = vmatpush1.bf16.msra.mxu0 %v1085
    %1436 = vmatprep.subr.bf16.mxu0 %v1090
    %1437 = vmatpush1.bf16.msra.mxu0 %v1089
    %1438 = vmatprep.subr.bf16.mxu0 %v1094
    %1439 = vmatpush1.bf16.msra.mxu0 %v1093
    %1440 = vmatprep.subr.bf16.mxu0 %v1098
    %1441 = vmatpush1.bf16.msra.mxu0 %v1097
    %1442 = vmatprep.mubr.bf16.mxu0 %v375
    %1443 = vmatmul.mubr.bf16.gmra.mrb[0].mxu0 %v374
    %v1444 = vpop.f32.mrb[0].mxu0
    %v1445 = vadd.f32 %v1404, %v1444
    %v1446 = vpop.f32.mrb[0].mxu0
    %v1447 = vadd.f32 %v1406, %v1446
    %v1448 = vpop.f32.mrb[0].mxu0
    %v1449 = vpop.f32.mrb[0].mxu0
    %1450 = vdwg.mxu0
    %1451 = vmatprep.subr.bf16.mxu0 %v1102
    %1452 = vmatpush1.bf16.msra.mxu0 %v1101
    %1453 = vmatprep.subr.bf16.mxu0 %v1106
    %1454 = vmatpush1.bf16.msra.mxu0 %v1105
    %1455 = vmatprep.subr.bf16.mxu0 %v1110
    %1456 = vmatpush1.bf16.msra.mxu0 %v1109
    %1457 = vmatprep.subr.bf16.mxu0 %v1114
    %1458 = vmatpush1.bf16.msra.mxu0 %v1113
    %1459 = vmatprep.subr.bf16.mxu0 %v1118
    %1460 = vmatpush1.bf16.msra.mxu0 %v1117
    %1461 = vmatprep.subr.bf16.mxu0 %v1122
    %1462 = vmatpush1.bf16.msra.mxu0 %v1121
    %1463 = vmatprep.subr.bf16.mxu0 %v1126
    %1464 = vmatpush1.bf16.msra.mxu0 %v1125
    %1465 = vmatprep.subr.bf16.mxu0 %v1130
    %1466 = vmatpush1.bf16.msra.mxu0 %v1129
    %1467 = vmatprep.subr.bf16.mxu0 %v1134
    %1468 = vmatpush1.bf16.msra.mxu0 %v1133
    %1469 = vmatprep.subr.bf16.mxu0 %v1138
    %1470 = vmatpush1.bf16.msra.mxu0 %v1137
    %1471 = vmatprep.subr.bf16.mxu0 %v1142
    %1472 = vmatpush1.bf16.msra.mxu0 %v1141
    %1473 = vmatprep.subr.bf16.mxu0 %v1146
    %1474 = vmatpush1.bf16.msra.mxu0 %v1145
    %1475 = vmatprep.subr.bf16.mxu0 %v1150
    %1476 = vmatpush1.bf16.msra.mxu0 %v1149
    %1477 = vmatprep.subr.bf16.mxu0 %v1154
    %1478 = vmatpush1.bf16.msra.mxu0 %v1153
    %1479 = vmatprep.subr.bf16.mxu0 %v1158
    %1480 = vmatpush1.bf16.msra.mxu0 %v1157
    %1481 = vmatprep.subr.bf16.mxu0 %v1162
    %1482 = vmatpush1.bf16.msra.mxu0 %v1161
    %1483 = vmatprep.mubr.bf16.mxu0 %v377
    %1484 = vmatmul.mubr.bf16.gmra.mrb[0].mxu0 %v376
    %v1485 = vpop.f32.mrb[0].mxu0
    %v1486 = vadd.f32 %v1445, %v1485
    %v1487 = vpop.f32.mrb[0].mxu0
    %v1488 = vadd.f32 %v1447, %v1487
    %v1489 = vpop.f32.mrb[0].mxu0
    %v1490 = vpop.f32.mrb[0].mxu0
    %1491 = vdwg.mxu0
    %1492 = vmatprep.subr.bf16.mxu0 %v1166
    %1493 = vmatpush1.bf16.msra.mxu0 %v1165
    %1494 = vmatprep.subr.bf16.mxu0 0
    %1495 = vmatpush1.bf16.msra.mxu0 0
    %1496 = vmatprep.subr.bf16.mxu0 0
    %1497 = vmatpush1.bf16.msra.mxu0 0
    %1498 = vmatprep.subr.bf16.mxu0 0
    %1499 = vmatpush1.bf16.msra.mxu0 0
    %1500 = vmatprep.subr.bf16.mxu0 0
    %1501 = vmatpush1.bf16.msra.mxu0 0
    %1502 = vmatprep.subr.bf16.mxu0 0
    %1503 = vmatpush1.bf16.msra.mxu0 0
    %1504 = vmatprep.subr.bf16.mxu0 0
    %1505 = vmatpush1.bf16.msra.mxu0 0
    %1506 = vmatprep.subr.bf16.mxu0 0
    %1507 = vmatpush1.bf16.msra.mxu0 0
    %1508 = vmatprep.subr.bf16.mxu0 0
    %1509 = vmatpush1.bf16.msra.mxu0 0
    %1510 = vmatprep.subr.bf16.mxu0 0
    %1511 = vmatpush1.bf16.msra.mxu0 0
    %1512 = vmatprep.subr.bf16.mxu0 0
    %1513 = vmatpush1.bf16.msra.mxu0 0
    %1514 = vmatprep.subr.bf16.mxu0 0
    %1515 = vmatpush1.bf16.msra.mxu0 0
    %1516 = vmatprep.subr.bf16.mxu0 0
    %1517 = vmatpush1.bf16.msra.mxu0 0
    %1518 = vmatprep.subr.bf16.mxu0 0
    %1519 = vmatpush1.bf16.msra.mxu0 0
    %1520 = vmatprep.subr.bf16.mxu0 0
    %1521 = vmatpush1.bf16.msra.mxu0 0
    %1522 = vmatprep.subr.bf16.mxu0 0
    %1523 = vmatpush1.bf16.msra.mxu0 0
    %1524 = vmatprep.mubr.bf16.mxu0 0
    %1525 = vmatmul.mubr.bf16.gmra.mrb[0].mxu0 %v1367
    %v1526 = vpop.f32.mrb[0].mxu0
    %v1527 = vadd.f32 %v1486, %v1526
    %v1528 = vpop.f32.mrb[0].mxu0
    %v1529 = vadd.f32 %v1488, %v1528
    %v1530 = vpop.f32.mrb[0].mxu0
    %v1531 = vpop.f32.mrb[0].mxu0
    %1532 = vdwg.mxu0
    %1533 = vmatprep.subr.bf16.mxu0 %v976
    %1534 = vmatpush1.bf16.msra.mxu0 %v975
    %1535 = vmatprep.subr.bf16.mxu0 %v980
    %1536 = vmatpush1.bf16.msra.mxu0 %v979
    %1537 = vmatprep.subr.bf16.mxu0 %v984
    %1538 = vmatpush1.bf16.msra.mxu0 %v983
    %1539 = vmatprep.subr.bf16.mxu0 %v988
    %1540 = vmatpush1.bf16.msra.mxu0 %v987
    %1541 = vmatprep.subr.bf16.mxu0 %v992
    %1542 = vmatpush1.bf16.msra.mxu0 %v991
    %1543 = vmatprep.subr.bf16.mxu0 %v996
    %1544 = vmatpush1.bf16.msra.mxu0 %v995
    %1545 = vmatprep.subr.bf16.mxu0 %v1000
    %1546 = vmatpush1.bf16.msra.mxu0 %v999
    %1547 = vmatprep.subr.bf16.mxu0 %v1004
    %1548 = vmatpush1.bf16.msra.mxu0 %v1003
    %1549 = vmatprep.subr.bf16.mxu0 %v1008
    %1550 = vmatpush1.bf16.msra.mxu0 %v1007
    %1551 = vmatprep.subr.bf16.mxu0 %v1012
    %1552 = vmatpush1.bf16.msra.mxu0 %v1011
    %1553 = vmatprep.subr.bf16.mxu0 %v1016
    %1554 = vmatpush1.bf16.msra.mxu0 %v1015
    %1555 = vmatprep.subr.bf16.mxu0 %v1020
    %1556 = vmatpush1.bf16.msra.mxu0 %v1019
    %1557 = vmatprep.subr.bf16.mxu0 %v1024
    %1558 = vmatpush1.bf16.msra.mxu0 %v1023
    %1559 = vmatprep.subr.bf16.mxu0 %v1028
    %1560 = vmatpush1.bf16.msra.mxu0 %v1027
    %1561 = vmatprep.subr.bf16.mxu0 %v1032
    %1562 = vmatpush1.bf16.msra.mxu0 %v1031
    %1563 = vmatprep.subr.bf16.mxu0 %v1036
    %1564 = vmatpush1.bf16.msra.mxu0 %v1035
    %1565 = vmatprep.mubr.bf16.mxu0 %v373
    %1566 = vmatmul.mubr.bf16.gmra.mrb[0].mxu0 %v372
    %v1567 = vpop.f32.mrb[0].mxu0
    %v1568 = vadd.f32 %v352, %v1567
    %v1569 = vpop.f32.mrb[0].mxu0
    %v1570 = vadd.f32 %v356, %v1569
    %v1571 = vpop.f32.mrb[0].mxu0
    %v1572 = vpop.f32.mrb[0].mxu0
    %1573 = vdwg.mxu0
    %1574 = vmatprep.subr.bf16.mxu0 %v1040
    %1575 = vmatpush1.bf16.msra.mxu0 %v1039
    %1576 = vmatprep.subr.bf16.mxu0 %v1044
    %1577 = vmatpush1.bf16.msra.mxu0 %v1043
    %1578 = vmatprep.subr.bf16.mxu0 %v1048
    %1579 = vmatpush1.bf16.msra.mxu0 %v1047
    %1580 = vmatprep.subr.bf16.mxu0 %v1052
    %1581 = vmatpush1.bf16.msra.mxu0 %v1051
    %1582 = vmatprep.subr.bf16.mxu0 %v1056
    %1583 = vmatpush1.bf16.msra.mxu0 %v1055
    %1584 = vmatprep.subr.bf16.mxu0 %v1060
    %1585 = vmatpush1.bf16.msra.mxu0 %v1059
    %1586 = vmatprep.subr.bf16.mxu0 %v1064
    %1587 = vmatpush1.bf16.msra.mxu0 %v1063
    %1588 = vmatprep.subr.bf16.mxu0 %v1068
    %1589 = vmatpush1.bf16.msra.mxu0 %v1067
    %1590 = vmatprep.subr.bf16.mxu0 %v1072
    %1591 = vmatpush1.bf16.msra.mxu0 %v1071
    %1592 = vmatprep.subr.bf16.mxu0 %v1076
    %1593 = vmatpush1.bf16.msra.mxu0 %v1075
    %1594 = vmatprep.subr.bf16.mxu0 %v1080
    %1595 = vmatpush1.bf16.msra.mxu0 %v1079
    %1596 = vmatprep.subr.bf16.mxu0 %v1084
    %1597 = vmatpush1.bf16.msra.mxu0 %v1083
    %1598 = vmatprep.subr.bf16.mxu0 %v1088
    %1599 = vmatpush1.bf16.msra.mxu0 %v1087
    %1600 = vmatprep.subr.bf16.mxu0 %v1092
    %1601 = vmatpush1.bf16.msra.mxu0 %v1091
    %1602 = vmatprep.subr.bf16.mxu0 %v1096
    %1603 = vmatpush1.bf16.msra.mxu0 %v1095
    %1604 = vmatprep.subr.bf16.mxu0 %v1100
    %1605 = vmatpush1.bf16.msra.mxu0 %v1099
    %1606 = vmatprep.mubr.bf16.mxu0 %v375
    %1607 = vmatmul.mubr.bf16.gmra.mrb[0].mxu0 %v374
    %v1608 = vpop.f32.mrb[0].mxu0
    %v1609 = vadd.f32 %v1568, %v1608
    %v1610 = vpop.f32.mrb[0].mxu0
    %v1611 = vadd.f32 %v1570, %v1610
    %v1612 = vpop.f32.mrb[0].mxu0
    %v1613 = vpop.f32.mrb[0].mxu0
    %1614 = vdwg.mxu0
    %1615 = vmatprep.subr.bf16.mxu0 %v1104
    %1616 = vmatpush1.bf16.msra.mxu0 %v1103
    %1617 = vmatprep.subr.bf16.mxu0 %v1108
    %1618 = vmatpush1.bf16.msra.mxu0 %v1107
    %1619 = vmatprep.subr.bf16.mxu0 %v1112
    %1620 = vmatpush1.bf16.msra.mxu0 %v1111
    %1621 = vmatprep.subr.bf16.mxu0 %v1116
    %1622 = vmatpush1.bf16.msra.mxu0 %v1115
    %1623 = vmatprep.subr.bf16.mxu0 %v1120
    %1624 = vmatpush1.bf16.msra.mxu0 %v1119
    %1625 = vmatprep.subr.bf16.mxu0 %v1124
    %1626 = vmatpush1.bf16.msra.mxu0 %v1123
    %1627 = vmatprep.subr.bf16.mxu0 %v1128
    %1628 = vmatpush1.bf16.msra.mxu0 %v1127
    %1629 = vmatprep.subr.bf16.mxu0 %v1132
    %1630 = vmatpush1.bf16.msra.mxu0 %v1131
    %1631 = vmatprep.subr.bf16.mxu0 %v1136
    %1632 = vmatpush1.bf16.msra.mxu0 %v1135
    %1633 = vmatprep.subr.bf16.mxu0 %v1140
    %1634 = vmatpush1.bf16.msra.mxu0 %v1139
    %1635 = vmatprep.subr.bf16.mxu0 %v1144
    %1636 = vmatpush1.bf16.msra.mxu0 %v1143
    %1637 = vmatprep.subr.bf16.mxu0 %v1148
    %1638 = vmatpush1.bf16.msra.mxu0 %v1147
    %1639 = vmatprep.subr.bf16.mxu0 %v1152
    %1640 = vmatpush1.bf16.msra.mxu0 %v1151
    %1641 = vmatprep.subr.bf16.mxu0 %v1156
    %1642 = vmatpush1.bf16.msra.mxu0 %v1155
    %1643 = vmatprep.subr.bf16.mxu0 %v1160
    %1644 = vmatpush1.bf16.msra.mxu0 %v1159
    %1645 = vmatprep.subr.bf16.mxu0 %v1164
    %1646 = vmatpush1.bf16.msra.mxu0 %v1163
    %1647 = vmatprep.mubr.bf16.mxu0 %v377
    %1648 = vmatmul.mubr.bf16.gmra.mrb[0].mxu0 %v376
    %v1649 = vpop.f32.mrb[0].mxu0
    %v1650 = vadd.f32 %v1609, %v1649
    %v1651 = vpop.f32.mrb[0].mxu0
    %v1652 = vadd.f32 %v1611, %v1651
    %v1653 = vpop.f32.mrb[0].mxu0
    %v1654 = vpop.f32.mrb[0].mxu0
    %1655 = vdwg.mxu0
    %1656 = vmatprep.subr.bf16.mxu0 %v1168
    %1657 = vmatpush1.bf16.msra.mxu0 %v1167
    %1658 = vmatprep.subr.bf16.mxu0 0
    %1659 = vmatpush1.bf16.msra.mxu0 0
    %1660 = vmatprep.subr.bf16.mxu0 0
    %1661 = vmatpush1.bf16.msra.mxu0 0
    %1662 = vmatprep.subr.bf16.mxu0 0
    %1663 = vmatpush1.bf16.msra.mxu0 0
    %1664 = vmatprep.subr.bf16.mxu0 0
    %1665 = vmatpush1.bf16.msra.mxu0 0
    %1666 = vmatprep.subr.bf16.mxu0 0
    %1667 = vmatpush1.bf16.msra.mxu0 0
    %1668 = vmatprep.subr.bf16.mxu0 0
    %1669 = vmatpush1.bf16.msra.mxu0 0
    %1670 = vmatprep.subr.bf16.mxu0 0
    %1671 = vmatpush1.bf16.msra.mxu0 0
    %1672 = vmatprep.subr.bf16.mxu0 0
    %1673 = vmatpush1.bf16.msra.mxu0 0
    %1674 = vmatprep.subr.bf16.mxu0 0
    %1675 = vmatpush1.bf16.msra.mxu0 0
    %1676 = vmatprep.subr.bf16.mxu0 0
    %1677 = vmatpush1.bf16.msra.mxu0 0
    %1678 = vmatprep.subr.bf16.mxu0 0
    %1679 = vmatpush1.bf16.msra.mxu0 0
    %1680 = vmatprep.subr.bf16.mxu0 0
    %1681 = vmatpush1.bf16.msra.mxu0 0
    %1682 = vmatprep.subr.bf16.mxu0 0
    %1683 = vmatpush1.bf16.msra.mxu0 0
    %1684 = vmatprep.subr.bf16.mxu0 0
    %1685 = vmatpush1.bf16.msra.mxu0 0
    %1686 = vmatprep.subr.bf16.mxu0 0
    %1687 = vmatpush1.bf16.msra.mxu0 0
    %1688 = vmatprep.mubr.bf16.mxu0 0
    %1689 = vmatmul.mubr.bf16.gmra.mrb[0].mxu0 %v1367
    %v1690 = vpop.f32.mrb[0].mxu0
    %v1691 = vadd.f32 %v1650, %v1690
    %v1692 = vpop.f32.mrb[0].mxu0
    %v1693 = vadd.f32 %v1652, %v1692
    %v1694 = vpop.f32.mrb[0].mxu0
    %v1695 = vpop.f32.mrb[0].mxu0
    %1696 = vdwg.mxu0
    %v1697 = vmax.f32 %v1527, 0.0
    %v1698 = vmax.f32 %v1529, 0.0
    %v1699 = vmax.f32 %v1691, 0.0
    %v1700 = vmax.f32 %v1693, 0.0
    %v1701 = vpack.c.bf16 %v1697, %v1697
    %v1702 = vpack.c.bf16 %v1698, %v1698
    %v1703 = vpack.c.bf16 %v1699, %v1699
    %v1704 = vpack.c.bf16 %v1700, %v1700
    %v1705 = vld [vmem:[#allocation7] sm:$0xff]
    %v1706 = vld [vmem:[#allocation7 + $0x8] sm:$0xff]
    %v1707 = vld [vmem:[#allocation7 + $0x10] sm:$0xff]
    %v1708 = vld [vmem:[#allocation7 + $0x18] sm:$0xff]
    %v1709 = vld [vmem:[#allocation7 + $0x20] sm:$0xff]
    %v1710 = vld [vmem:[#allocation7 + $0x28] sm:$0xff]
    %v1711 = vld [vmem:[#allocation7 + $0x30] sm:$0xff]
    %v1712 = vld [vmem:[#allocation7 + $0x38] sm:$0xff]
    %v1713 = vld [vmem:[#allocation7 + $0x40] sm:$0xff]
    %v1714 = vld [vmem:[#allocation7 + $0x48] sm:$0xff]
    %v1715 = vld [vmem:[#allocation7 + $0x50] sm:$0xff]
    %v1716 = vld [vmem:[#allocation7 + $0x58] sm:$0xff]
    %v1717 = vld [vmem:[#allocation7 + $0x60] sm:$0xff]
    %v1718 = vld [vmem:[#allocation7 + $0x68] sm:$0xff]
    %v1719 = vld [vmem:[#allocation7 + $0x70] sm:$0xff]
    %v1720 = vld [vmem:[#allocation7 + $0x78] sm:$0xff]
    %v1721 = vld [vmem:[#allocation7 + $0x80] sm:$0xff]
    %v1722 = vld [vmem:[#allocation7 + $0x88] sm:$0xff]
    %v1723 = vld [vmem:[#allocation7 + $0x90] sm:$0xff]
    %v1724 = vld [vmem:[#allocation7 + $0x98] sm:$0xff]
    %v1725 = vld [vmem:[#allocation7 + $0xa0] sm:$0xff]
    %v1726 = vld [vmem:[#allocation7 + $0xa8] sm:$0xff]
    %v1727 = vld [vmem:[#allocation7 + $0xb0] sm:$0xff]
    %v1728 = vld [vmem:[#allocation7 + $0xb8] sm:$0xff]
    %v1729 = vld [vmem:[#allocation7 + $0xc0] sm:$0xff]
    %v1730 = vld [vmem:[#allocation7 + $0xc8] sm:$0xff]
    %v1731 = vld [vmem:[#allocation7 + $0xd0] sm:$0xff]
    %v1732 = vld [vmem:[#allocation7 + $0xd8] sm:$0xff]
    %v1733 = vld [vmem:[#allocation7 + $0xe0] sm:$0xff]
    %v1734 = vld [vmem:[#allocation7 + $0xe8] sm:$0xff]
    %v1735 = vld [vmem:[#allocation7 + $0xf0] sm:$0xff]
    %v1736 = vld [vmem:[#allocation7 + $0xf8] sm:$0xff]
    %v1737 = vld [vmem:[#allocation7 + $0x100] sm:$0xff]
    %v1738 = vld [vmem:[#allocation7 + $0x108] sm:$0xff]
    %v1739 = vld [vmem:[#allocation7 + $0x110] sm:$0xff]
    %v1740 = vld [vmem:[#allocation7 + $0x118] sm:$0xff]
    %v1741 = vld [vmem:[#allocation7 + $0x120] sm:$0xff]
    %v1742 = vld [vmem:[#allocation7 + $0x128] sm:$0xff]
    %v1743 = vld [vmem:[#allocation7 + $0x130] sm:$0xff]
    %v1744 = vld [vmem:[#allocation7 + $0x138] sm:$0xff]
    %v1745 = vld [vmem:[#allocation7 + $0x140] sm:$0xff]
    %v1746 = vld [vmem:[#allocation7 + $0x148] sm:$0xff]
    %v1747 = vld [vmem:[#allocation7 + $0x150] sm:$0xff]
    %v1748 = vld [vmem:[#allocation7 + $0x158] sm:$0xff]
    %v1749 = vld [vmem:[#allocation7 + $0x160] sm:$0xff]
    %v1750 = vld [vmem:[#allocation7 + $0x168] sm:$0xff]
    %v1751 = vld [vmem:[#allocation7 + $0x170] sm:$0xff]
    %v1752 = vld [vmem:[#allocation7 + $0x178] sm:$0xff]
    %v1753 = vld [vmem:[#allocation7 + $0x180] sm:$0xff]
    %v1754 = vld [vmem:[#allocation7 + $0x188] sm:$0xff]
    %v1755 = vld [vmem:[#allocation7 + $0x190] sm:$0xff]
    %v1756 = vld [vmem:[#allocation7 + $0x198] sm:$0xff]
    %v1757 = vld [vmem:[#allocation7 + $0x1a0] sm:$0xff]
    %v1758 = vld [vmem:[#allocation7 + $0x1a8] sm:$0xff]
    %v1759 = vld [vmem:[#allocation7 + $0x1b0] sm:$0xff]
    %v1760 = vld [vmem:[#allocation7 + $0x1b8] sm:$0xff]
    %v1761 = vld [vmem:[#allocation7 + $0x1c0] sm:$0xff]
    %v1762 = vld [vmem:[#allocation7 + $0x1c8] sm:$0xff]
    %v1763 = vld [vmem:[#allocation7 + $0x1d0] sm:$0xff]
    %v1764 = vld [vmem:[#allocation7 + $0x1d8] sm:$0xff]
    %v1765 = vld [vmem:[#allocation7 + $0x1e0] sm:$0xff]
    %v1766 = vld [vmem:[#allocation7 + $0x1e8] sm:$0xff]
    %v1767 = vld [vmem:[#allocation7 + $0x1f0] sm:$0xff]
    %v1768 = vld [vmem:[#allocation7 + $0x1f8] sm:$0xff]
    %v1769 = vld [vmem:[%s4] sm:$0x3]
    %v1771 = vlaneseq
    %v1772 = vshrl.u32 %v1771, 7
    %v1773 = vsub.s32 0, %v1772
    %v1774 = vrot.slane %v1769, %v1773
    %v1775 = vlaneseq
    %v1776 = vshrl.u32 %v1775, 7
    %v1777 = vsub.s32 1, %v1776
    %v1778 = vrot.slane %v1769, %v1777
    %v1845 = vunpack.c.l.b16 %v1705
    %v1846 = vunpack.c.h.b16 %v1705
    %v1847 = vunpack.c.l.b16 %v1706
    %v1848 = vunpack.c.h.b16 %v1706
    %v1849 = vunpack.c.l.b16 %v1707
    %v1850 = vunpack.c.h.b16 %v1707
    %v1851 = vunpack.c.l.b16 %v1708
    %v1852 = vunpack.c.h.b16 %v1708
    %v1853 = vunpack.c.l.b16 %v1709
    %v1854 = vunpack.c.h.b16 %v1709
    %v1855 = vunpack.c.l.b16 %v1710
    %v1856 = vunpack.c.h.b16 %v1710
    %v1857 = vunpack.c.l.b16 %v1711
    %v1858 = vunpack.c.h.b16 %v1711
    %v1859 = vunpack.c.l.b16 %v1712
    %v1860 = vunpack.c.h.b16 %v1712
    %v1861 = vunpack.c.l.b16 %v1713
    %v1862 = vunpack.c.h.b16 %v1713
    %v1863 = vunpack.c.l.b16 %v1714
    %v1864 = vunpack.c.h.b16 %v1714
    %v1865 = vunpack.c.l.b16 %v1715
    %v1866 = vunpack.c.h.b16 %v1715
    %v1867 = vunpack.c.l.b16 %v1716
    %v1868 = vunpack.c.h.b16 %v1716
    %v1869 = vunpack.c.l.b16 %v1717
    %v1870 = vunpack.c.h.b16 %v1717
    %v1871 = vunpack.c.l.b16 %v1718
    %v1872 = vunpack.c.h.b16 %v1718
    %v1873 = vunpack.c.l.b16 %v1719
    %v1874 = vunpack.c.h.b16 %v1719
    %v1875 = vunpack.c.l.b16 %v1720
    %v1876 = vunpack.c.h.b16 %v1720
    %v1877 = vunpack.c.l.b16 %v1721
    %v1878 = vunpack.c.h.b16 %v1721
    %v1879 = vunpack.c.l.b16 %v1722
    %v1880 = vunpack.c.h.b16 %v1722
    %v1881 = vunpack.c.l.b16 %v1723
    %v1882 = vunpack.c.h.b16 %v1723
    %v1883 = vunpack.c.l.b16 %v1724
    %v1884 = vunpack.c.h.b16 %v1724
    %v1885 = vunpack.c.l.b16 %v1725
    %v1886 = vunpack.c.h.b16 %v1725
    %v1887 = vunpack.c.l.b16 %v1726
    %v1888 = vunpack.c.h.b16 %v1726
    %v1889 = vunpack.c.l.b16 %v1727
    %v1890 = vunpack.c.h.b16 %v1727
    %v1891 = vunpack.c.l.b16 %v1728
    %v1892 = vunpack.c.h.b16 %v1728
    %v1893 = vunpack.c.l.b16 %v1729
    %v1894 = vunpack.c.h.b16 %v1729
    %v1895 = vunpack.c.l.b16 %v1730
    %v1896 = vunpack.c.h.b16 %v1730
    %v1897 = vunpack.c.l.b16 %v1731
    %v1898 = vunpack.c.h.b16 %v1731
    %v1899 = vunpack.c.l.b16 %v1732
    %v1900 = vunpack.c.h.b16 %v1732
    %v1901 = vunpack.c.l.b16 %v1733
    %v1902 = vunpack.c.h.b16 %v1733
    %v1903 = vunpack.c.l.b16 %v1734
    %v1904 = vunpack.c.h.b16 %v1734
    %v1905 = vunpack.c.l.b16 %v1735
    %v1906 = vunpack.c.h.b16 %v1735
    %v1907 = vunpack.c.l.b16 %v1736
    %v1908 = vunpack.c.h.b16 %v1736
    %v1909 = vunpack.c.l.b16 %v1737
    %v1910 = vunpack.c.h.b16 %v1737
    %v1911 = vunpack.c.l.b16 %v1738
    %v1912 = vunpack.c.h.b16 %v1738
    %v1913 = vunpack.c.l.b16 %v1739
    %v1914 = vunpack.c.h.b16 %v1739
    %v1915 = vunpack.c.l.b16 %v1740
    %v1916 = vunpack.c.h.b16 %v1740
    %v1917 = vunpack.c.l.b16 %v1741
    %v1918 = vunpack.c.h.b16 %v1741
    %v1919 = vunpack.c.l.b16 %v1742
    %v1920 = vunpack.c.h.b16 %v1742
    %v1921 = vunpack.c.l.b16 %v1743
    %v1922 = vunpack.c.h.b16 %v1743
    %v1923 = vunpack.c.l.b16 %v1744
    %v1924 = vunpack.c.h.b16 %v1744
    %v1925 = vunpack.c.l.b16 %v1745
    %v1926 = vunpack.c.h.b16 %v1745
    %v1927 = vunpack.c.l.b16 %v1746
    %v1928 = vunpack.c.h.b16 %v1746
    %v1929 = vunpack.c.l.b16 %v1747
    %v1930 = vunpack.c.h.b16 %v1747
    %v1931 = vunpack.c.l.b16 %v1748
    %v1932 = vunpack.c.h.b16 %v1748
    %v1933 = vunpack.c.l.b16 %v1749
    %v1934 = vunpack.c.h.b16 %v1749
    %v1935 = vunpack.c.l.b16 %v1750
    %v1936 = vunpack.c.h.b16 %v1750
    %v1937 = vunpack.c.l.b16 %v1751
    %v1938 = vunpack.c.h.b16 %v1751
    %v1939 = vunpack.c.l.b16 %v1752
    %v1940 = vunpack.c.h.b16 %v1752
    %v1941 = vunpack.c.l.b16 %v1753
    %v1942 = vunpack.c.h.b16 %v1753
    %v1943 = vunpack.c.l.b16 %v1754
    %v1944 = vunpack.c.h.b16 %v1754
    %v1945 = vunpack.c.l.b16 %v1755
    %v1946 = vunpack.c.h.b16 %v1755
    %v1947 = vunpack.c.l.b16 %v1756
    %v1948 = vunpack.c.h.b16 %v1756
    %v1949 = vunpack.c.l.b16 %v1757
    %v1950 = vunpack.c.h.b16 %v1757
    %v1951 = vunpack.c.l.b16 %v1758
    %v1952 = vunpack.c.h.b16 %v1758
    %v1953 = vunpack.c.l.b16 %v1759
    %v1954 = vunpack.c.h.b16 %v1759
    %v1955 = vunpack.c.l.b16 %v1760
    %v1956 = vunpack.c.h.b16 %v1760
    %v1957 = vunpack.c.l.b16 %v1761
    %v1958 = vunpack.c.h.b16 %v1761
    %v1959 = vunpack.c.l.b16 %v1762
    %v1960 = vunpack.c.h.b16 %v1762
    %v1961 = vunpack.c.l.b16 %v1763
    %v1962 = vunpack.c.h.b16 %v1763
    %v1963 = vunpack.c.l.b16 %v1764
    %v1964 = vunpack.c.h.b16 %v1764
    %v1965 = vunpack.c.l.b16 %v1765
    %v1966 = vunpack.c.h.b16 %v1765
    %v1967 = vunpack.c.l.b16 %v1766
    %v1968 = vunpack.c.h.b16 %v1766
    %v1969 = vunpack.c.l.b16 %v1767
    %v1970 = vunpack.c.h.b16 %v1767
    %v1971 = vunpack.c.l.b16 %v1768
    %v1972 = vunpack.c.h.b16 %v1768
    %v1973 = vpack.c.b16 %v1847, %v1845
    %v1974 = vpack.c.b16 %v1848, %v1846
    %v1975 = vpack.c.b16 %v1851, %v1849
    %v1976 = vpack.c.b16 %v1852, %v1850
    %v1977 = vpack.c.b16 %v1855, %v1853
    %v1978 = vpack.c.b16 %v1856, %v1854
    %v1979 = vpack.c.b16 %v1859, %v1857
    %v1980 = vpack.c.b16 %v1860, %v1858
    %v1981 = vpack.c.b16 %v1863, %v1861
    %v1982 = vpack.c.b16 %v1864, %v1862
    %v1983 = vpack.c.b16 %v1867, %v1865
    %v1984 = vpack.c.b16 %v1868, %v1866
    %v1985 = vpack.c.b16 %v1871, %v1869
    %v1986 = vpack.c.b16 %v1872, %v1870
    %v1987 = vpack.c.b16 %v1875, %v1873
    %v1988 = vpack.c.b16 %v1876, %v1874
    %v1989 = vpack.c.b16 %v1879, %v1877
    %v1990 = vpack.c.b16 %v1880, %v1878
    %v1991 = vpack.c.b16 %v1883, %v1881
    %v1992 = vpack.c.b16 %v1884, %v1882
    %v1993 = vpack.c.b16 %v1887, %v1885
    %v1994 = vpack.c.b16 %v1888, %v1886
    %v1995 = vpack.c.b16 %v1891, %v1889
    %v1996 = vpack.c.b16 %v1892, %v1890
    %v1997 = vpack.c.b16 %v1895, %v1893
    %v1998 = vpack.c.b16 %v1896, %v1894
    %v1999 = vpack.c.b16 %v1899, %v1897
    %v2000 = vpack.c.b16 %v1900, %v1898
    %v2001 = vpack.c.b16 %v1903, %v1901
    %v2002 = vpack.c.b16 %v1904, %v1902
    %v2003 = vpack.c.b16 %v1907, %v1905
    %v2004 = vpack.c.b16 %v1908, %v1906
    %v2005 = vpack.c.b16 %v1911, %v1909
    %v2006 = vpack.c.b16 %v1912, %v1910
    %v2007 = vpack.c.b16 %v1915, %v1913
    %v2008 = vpack.c.b16 %v1916, %v1914
    %v2009 = vpack.c.b16 %v1919, %v1917
    %v2010 = vpack.c.b16 %v1920, %v1918
    %v2011 = vpack.c.b16 %v1923, %v1921
    %v2012 = vpack.c.b16 %v1924, %v1922
    %v2013 = vpack.c.b16 %v1927, %v1925
    %v2014 = vpack.c.b16 %v1928, %v1926
    %v2015 = vpack.c.b16 %v1931, %v1929
    %v2016 = vpack.c.b16 %v1932, %v1930
    %v2017 = vpack.c.b16 %v1935, %v1933
    %v2018 = vpack.c.b16 %v1936, %v1934
    %v2019 = vpack.c.b16 %v1939, %v1937
    %v2020 = vpack.c.b16 %v1940, %v1938
    %v2021 = vpack.c.b16 %v1943, %v1941
    %v2022 = vpack.c.b16 %v1944, %v1942
    %v2023 = vpack.c.b16 %v1947, %v1945
    %v2024 = vpack.c.b16 %v1948, %v1946
    %v2025 = vpack.c.b16 %v1951, %v1949
    %v2026 = vpack.c.b16 %v1952, %v1950
    %v2027 = vpack.c.b16 %v1955, %v1953
    %v2028 = vpack.c.b16 %v1956, %v1954
    %v2029 = vpack.c.b16 %v1959, %v1957
    %v2030 = vpack.c.b16 %v1960, %v1958
    %v2031 = vpack.c.b16 %v1963, %v1961
    %v2032 = vpack.c.b16 %v1964, %v1962
    %v2033 = vpack.c.b16 %v1967, %v1965
    %v2034 = vpack.c.b16 %v1968, %v1966
    %v2035 = vpack.c.b16 %v1971, %v1969
    %v2036 = vpack.c.b16 %v1972, %v1970
    %2101 = vmatprep.subr.bf16.mxu0 %v1974
    %2102 = vmatpush1.bf16.msra.mxu0 %v1973
    %2103 = vmatprep.subr.bf16.mxu0 %v1976
    %2104 = vmatpush1.bf16.msra.mxu0 %v1975
    %2105 = vmatprep.subr.bf16.mxu0 %v1978
    %2106 = vmatpush1.bf16.msra.mxu0 %v1977
    %2107 = vmatprep.subr.bf16.mxu0 %v1980
    %2108 = vmatpush1.bf16.msra.mxu0 %v1979
    %2109 = vmatprep.subr.bf16.mxu0 %v1982
    %2110 = vmatpush1.bf16.msra.mxu0 %v1981
    %2111 = vmatprep.subr.bf16.mxu0 %v1984
    %2112 = vmatpush1.bf16.msra.mxu0 %v1983
    %2113 = vmatprep.subr.bf16.mxu0 %v1986
    %2114 = vmatpush1.bf16.msra.mxu0 %v1985
    %2115 = vmatprep.subr.bf16.mxu0 %v1988
    %2116 = vmatpush1.bf16.msra.mxu0 %v1987
    %2117 = vmatprep.subr.bf16.mxu0 %v1990
    %2118 = vmatpush1.bf16.msra.mxu0 %v1989
    %2119 = vmatprep.subr.bf16.mxu0 %v1992
    %2120 = vmatpush1.bf16.msra.mxu0 %v1991
    %2121 = vmatprep.subr.bf16.mxu0 %v1994
    %2122 = vmatpush1.bf16.msra.mxu0 %v1993
    %2123 = vmatprep.subr.bf16.mxu0 %v1996
    %2124 = vmatpush1.bf16.msra.mxu0 %v1995
    %2125 = vmatprep.subr.bf16.mxu0 %v1998
    %2126 = vmatpush1.bf16.msra.mxu0 %v1997
    %2127 = vmatprep.subr.bf16.mxu0 %v2000
    %2128 = vmatpush1.bf16.msra.mxu0 %v1999
    %2129 = vmatprep.subr.bf16.mxu0 %v2002
    %2130 = vmatpush1.bf16.msra.mxu0 %v2001
    %2131 = vmatprep.subr.bf16.mxu0 %v2004
    %2132 = vmatpush1.bf16.msra.mxu0 %v2003
    %2133 = vmatprep.mubr.bf16.mxu0 %v1702
    %2134 = vmatmul.mubr.bf16.gmra.mrb[0].mxu0 %v1701
    %v2135 = vpop.f32.mrb[0].mxu0
    %v2136 = vadd.f32 %v1774, %v2135
    %v2137 = vpop.f32.mrb[0].mxu0
    %v2138 = vadd.f32 %v1778, %v2137
    %v2139 = vpop.f32.mrb[0].mxu0
    %v2140 = vpop.f32.mrb[0].mxu0
    %2141 = vdwg.mxu0
    %2142 = vmatprep.subr.bf16.mxu0 %v2006
    %2143 = vmatpush1.bf16.msra.mxu0 %v2005
    %2144 = vmatprep.subr.bf16.mxu0 %v2008
    %2145 = vmatpush1.bf16.msra.mxu0 %v2007
    %2146 = vmatprep.subr.bf16.mxu0 %v2010
    %2147 = vmatpush1.bf16.msra.mxu0 %v2009
    %2148 = vmatprep.subr.bf16.mxu0 %v2012
    %2149 = vmatpush1.bf16.msra.mxu0 %v2011
    %2150 = vmatprep.subr.bf16.mxu0 %v2014
    %2151 = vmatpush1.bf16.msra.mxu0 %v2013
    %2152 = vmatprep.subr.bf16.mxu0 %v2016
    %2153 = vmatpush1.bf16.msra.mxu0 %v2015
    %2154 = vmatprep.subr.bf16.mxu0 %v2018
    %2155 = vmatpush1.bf16.msra.mxu0 %v2017
    %2156 = vmatprep.subr.bf16.mxu0 %v2020
    %2157 = vmatpush1.bf16.msra.mxu0 %v2019
    %2158 = vmatprep.subr.bf16.mxu0 %v2022
    %2159 = vmatpush1.bf16.msra.mxu0 %v2021
    %2160 = vmatprep.subr.bf16.mxu0 %v2024
    %2161 = vmatpush1.bf16.msra.mxu0 %v2023
    %2162 = vmatprep.subr.bf16.mxu0 %v2026
    %2163 = vmatpush1.bf16.msra.mxu0 %v2025
    %2164 = vmatprep.subr.bf16.mxu0 %v2028
    %2165 = vmatpush1.bf16.msra.mxu0 %v2027
    %2166 = vmatprep.subr.bf16.mxu0 %v2030
    %2167 = vmatpush1.bf16.msra.mxu0 %v2029
    %2168 = vmatprep.subr.bf16.mxu0 %v2032
    %2169 = vmatpush1.bf16.msra.mxu0 %v2031
    %2170 = vmatprep.subr.bf16.mxu0 %v2034
    %2171 = vmatpush1.bf16.msra.mxu0 %v2033
    %2172 = vmatprep.subr.bf16.mxu0 %v2036
    %2173 = vmatpush1.bf16.msra.mxu0 %v2035
    %2174 = vmatprep.mubr.bf16.mxu0 %v1704
    %2175 = vmatmul.mubr.bf16.gmra.mrb[0].mxu0 %v1703
    %v2176 = vpop.f32.mrb[0].mxu0
    %v2177 = vadd.f32 %v2136, %v2176
    %v2178 = vpop.f32.mrb[0].mxu0
    %v2179 = vadd.f32 %v2138, %v2178
    %v2180 = vpop.f32.mrb[0].mxu0
    %v2181 = vpop.f32.mrb[0].mxu0
    %2182 = vdwg.mxu0
    %v2183 = vmax.f32 %v2177, 0.0
    %v2184 = vmax.f32 %v2179, 0.0
    %v2185 = vpack.c.bf16 %v2183, %v2183
    %v2186 = vpack.c.bf16 %v2184, %v2184
    %v2187 = vld [vmem:[#allocation8] sm:$0xf]
    %v2188 = vld [vmem:[#allocation8 + $0x4] sm:$0xf]
    %v2189 = vld [vmem:[#allocation8 + $0x8] sm:$0xf]
    %v2190 = vld [vmem:[#allocation8 + $0xc] sm:$0xf]
    %v2191 = vld [vmem:[#allocation8 + $0x10] sm:$0xf]
    %v2192 = vld [vmem:[#allocation8 + $0x14] sm:$0xf]
    %v2193 = vld [vmem:[#allocation8 + $0x18] sm:$0xf]
    %v2194 = vld [vmem:[#allocation8 + $0x1c] sm:$0xf]
    %v2195 = vld [vmem:[#allocation8 + $0x20] sm:$0xf]
    %v2196 = vld [vmem:[#allocation8 + $0x24] sm:$0xf]
    %v2197 = vld [vmem:[#allocation8 + $0x28] sm:$0xf]
    %v2198 = vld [vmem:[#allocation8 + $0x2c] sm:$0xf]
    %v2199 = vld [vmem:[#allocation8 + $0x30] sm:$0xf]
    %v2200 = vld [vmem:[#allocation8 + $0x34] sm:$0xf]
    %v2201 = vld [vmem:[#allocation8 + $0x38] sm:$0xf]
    %v2202 = vld [vmem:[#allocation8 + $0x3c] sm:$0xf]
    %v2203 = vld [vmem:[#allocation8 + $0x40] sm:$0xf]
    %v2204 = vld [vmem:[#allocation8 + $0x44] sm:$0xf]
    %v2205 = vld [vmem:[#allocation8 + $0x48] sm:$0xf]
    %v2206 = vld [vmem:[#allocation8 + $0x4c] sm:$0xf]
    %v2207 = vld [vmem:[#allocation8 + $0x50] sm:$0xf]
    %v2208 = vld [vmem:[#allocation8 + $0x54] sm:$0xf]
    %v2209 = vld [vmem:[#allocation8 + $0x58] sm:$0xf]
    %v2210 = vld [vmem:[#allocation8 + $0x5c] sm:$0xf]
    %v2211 = vld [vmem:[#allocation8 + $0x60] sm:$0xf]
    %v2212 = vld [vmem:[#allocation8 + $0x64] sm:$0xf]
    %v2213 = vld [vmem:[#allocation8 + $0x68] sm:$0xf]
    %v2214 = vld [vmem:[#allocation8 + $0x6c] sm:$0xf]
    %v2215 = vld [vmem:[#allocation8 + $0x70] sm:$0xf]
    %v2216 = vld [vmem:[#allocation8 + $0x74] sm:$0xf]
    %v2217 = vld [vmem:[#allocation8 + $0x78] sm:$0xf]
    %v2218 = vld [vmem:[#allocation8 + $0x7c] sm:$0xf]
    %v2219 = vld [vmem:[%s6] sm:$0x1]
    %v2221 = vlaneseq
    %v2222 = vshrl.u32 %v2221, 7
    %v2223 = vsub.s32 0, %v2222
    %v2224 = vrot.slane %v2219, %v2223
    %v2258 = vunpack.c.l.b16 %v2187
    %v2259 = vunpack.c.l.b16 %v2188
    %v2260 = vunpack.c.l.b16 %v2189
    %v2261 = vunpack.c.l.b16 %v2190
    %v2262 = vunpack.c.l.b16 %v2191
    %v2263 = vunpack.c.l.b16 %v2192
    %v2264 = vunpack.c.l.b16 %v2193
    %v2265 = vunpack.c.l.b16 %v2194
    %v2266 = vunpack.c.l.b16 %v2195
    %v2267 = vunpack.c.l.b16 %v2196
    %v2268 = vunpack.c.l.b16 %v2197
    %v2269 = vunpack.c.l.b16 %v2198
    %v2270 = vunpack.c.l.b16 %v2199
    %v2271 = vunpack.c.l.b16 %v2200
    %v2272 = vunpack.c.l.b16 %v2201
    %v2273 = vunpack.c.l.b16 %v2202
    %v2274 = vunpack.c.l.b16 %v2203
    %v2275 = vunpack.c.l.b16 %v2204
    %v2276 = vunpack.c.l.b16 %v2205
    %v2277 = vunpack.c.l.b16 %v2206
    %v2278 = vunpack.c.l.b16 %v2207
    %v2279 = vunpack.c.l.b16 %v2208
    %v2280 = vunpack.c.l.b16 %v2209
    %v2281 = vunpack.c.l.b16 %v2210
    %v2282 = vunpack.c.l.b16 %v2211
    %v2283 = vunpack.c.l.b16 %v2212
    %v2284 = vunpack.c.l.b16 %v2213
    %v2285 = vunpack.c.l.b16 %v2214
    %v2286 = vunpack.c.l.b16 %v2215
    %v2287 = vunpack.c.l.b16 %v2216
    %v2288 = vunpack.c.l.b16 %v2217
    %v2289 = vunpack.c.l.b16 %v2218
    %v2290 = vpack.c.b16 %v2259, %v2258
    %v2291 = vpack.c.b16 %v2261, %v2260
    %v2292 = vpack.c.b16 %v2263, %v2262
    %v2293 = vpack.c.b16 %v2265, %v2264
    %v2294 = vpack.c.b16 %v2267, %v2266
    %v2295 = vpack.c.b16 %v2269, %v2268
    %v2296 = vpack.c.b16 %v2271, %v2270
    %v2297 = vpack.c.b16 %v2273, %v2272
    %v2298 = vpack.c.b16 %v2275, %v2274
    %v2299 = vpack.c.b16 %v2277, %v2276
    %v2300 = vpack.c.b16 %v2279, %v2278
    %v2301 = vpack.c.b16 %v2281, %v2280
    %v2302 = vpack.c.b16 %v2283, %v2282
    %v2303 = vpack.c.b16 %v2285, %v2284
    %v2304 = vpack.c.b16 %v2287, %v2286
    %v2305 = vpack.c.b16 %v2289, %v2288
    %2322 = vmatprep.subr.bf16.mxu0 0
    %2323 = vmatpush1.bf16.msra.mxu0 %v2290
    %2324 = vmatprep.subr.bf16.mxu0 0
    %2325 = vmatpush1.bf16.msra.mxu0 %v2291
    %2326 = vmatprep.subr.bf16.mxu0 0
    %2327 = vmatpush1.bf16.msra.mxu0 %v2292
    %2328 = vmatprep.subr.bf16.mxu0 0
    %2329 = vmatpush1.bf16.msra.mxu0 %v2293
    %2330 = vmatprep.subr.bf16.mxu0 0
    %2331 = vmatpush1.bf16.msra.mxu0 %v2294
    %2332 = vmatprep.subr.bf16.mxu0 0
    %2333 = vmatpush1.bf16.msra.mxu0 %v2295
    %2334 = vmatprep.subr.bf16.mxu0 0
    %2335 = vmatpush1.bf16.msra.mxu0 %v2296
    %2336 = vmatprep.subr.bf16.mxu0 0
    %2337 = vmatpush1.bf16.msra.mxu0 %v2297
    %2338 = vmatprep.subr.bf16.mxu0 0
    %2339 = vmatpush1.bf16.msra.mxu0 %v2298
    %2340 = vmatprep.subr.bf16.mxu0 0
    %2341 = vmatpush1.bf16.msra.mxu0 %v2299
    %2342 = vmatprep.subr.bf16.mxu0 0
    %2343 = vmatpush1.bf16.msra.mxu0 %v2300
    %2344 = vmatprep.subr.bf16.mxu0 0
    %2345 = vmatpush1.bf16.msra.mxu0 %v2301
    %2346 = vmatprep.subr.bf16.mxu0 0
    %2347 = vmatpush1.bf16.msra.mxu0 %v2302
    %2348 = vmatprep.subr.bf16.mxu0 0
    %2349 = vmatpush1.bf16.msra.mxu0 %v2303
    %2350 = vmatprep.subr.bf16.mxu0 0
    %2351 = vmatpush1.bf16.msra.mxu0 %v2304
    %2352 = vmatprep.subr.bf16.mxu0 0
    %2353 = vmatpush1.bf16.msra.mxu0 %v2305
    %2354 = vmatprep.mubr.bf16.mxu0 %v2186
    %2355 = vmatmul.mubr.bf16.gmra.mrb[0].mxu0 %v2185
    %v2356 = vpop.f32.mrb[0].mxu0
    %v2357 = vadd.f32 %v2224, %v2356
    %v2358 = vpop.f32.mrb[0].mxu0
    %v2359 = vpop.f32.mrb[0].mxu0
    %v2360 = vpop.f32.mrb[0].mxu0
    %2361 = vdwg.mxu0
    %v2362 = vmax.f32 %v2357, 0.0
    %v2363 = vpack.c.bf16 %v2362, %v2362
    %v2364 = vld [vmem:[#allocation10] sm:$0xf]
    %v2365 = vld [vmem:[#allocation10 + $0x4] sm:$0xf]
    %v2366 = vld [vmem:[#allocation10 + $0x8] sm:$0xf]
    %v2367 = vld [vmem:[#allocation10 + $0xc] sm:$0xf]
    %v2368 = vld [vmem:[#allocation10 + $0x10] sm:$0xf]
    %v2369 = vld [vmem:[#allocation10 + $0x14] sm:$0xf]
    %v2370 = vld [vmem:[#allocation10 + $0x18] sm:$0xf]
    %v2371 = vld [vmem:[#allocation10 + $0x1c] sm:$0xf]
    %v2372 = vld [vmem:[#allocation10 + $0x20] sm:$0xf]
    %v2373 = vld [vmem:[#allocation10 + $0x24] sm:$0xf]
    %v2374 = vld [vmem:[#allocation10 + $0x28] sm:$0xf]
    %v2375 = vld [vmem:[#allocation10 + $0x2c] sm:$0xf]
    %v2376 = vld [vmem:[#allocation10 + $0x30] sm:$0xf]
    %v2377 = vld [vmem:[#allocation10 + $0x34] sm:$0xf]
    %v2378 = vld [vmem:[#allocation10 + $0x38] sm:$0xf]
    %v2379 = vld [vmem:[#allocation10 + $0x3c] sm:$0xf]
    %v2380 = vld [vmem:[%s8] sm:$0x1]
    %v2382 = vlaneseq
    %v2383 = vshrl.u32 %v2382, 7
    %v2384 = vsub.s32 0, %v2383
    %v2385 = vrot.slane %v2380, %v2384
    %v2403 = vunpack.c.l.b16 %v2364
    %v2404 = vunpack.c.l.b16 %v2365
    %v2405 = vunpack.c.l.b16 %v2366
    %v2406 = vunpack.c.l.b16 %v2367
    %v2407 = vunpack.c.l.b16 %v2368
    %v2408 = vunpack.c.l.b16 %v2369
    %v2409 = vunpack.c.l.b16 %v2370
    %v2410 = vunpack.c.l.b16 %v2371
    %v2411 = vunpack.c.l.b16 %v2372
    %v2412 = vunpack.c.l.b16 %v2373
    %v2413 = vunpack.c.l.b16 %v2374
    %v2414 = vunpack.c.l.b16 %v2375
    %v2415 = vunpack.c.l.b16 %v2376
    %v2416 = vunpack.c.l.b16 %v2377
    %v2417 = vunpack.c.l.b16 %v2378
    %v2418 = vunpack.c.l.b16 %v2379
    %v2419 = vpack.c.b16 %v2404, %v2403
    %v2420 = vpack.c.b16 %v2406, %v2405
    %v2421 = vpack.c.b16 %v2408, %v2407
    %v2422 = vpack.c.b16 %v2410, %v2409
    %v2423 = vpack.c.b16 %v2412, %v2411
    %v2424 = vpack.c.b16 %v2414, %v2413
    %v2425 = vpack.c.b16 %v2416, %v2415
    %v2426 = vpack.c.b16 %v2418, %v2417
    %2435 = vmatprep.subr.bf16.mxu0 0
    %2436 = vmatpush1.bf16.msra.mxu0 %v2419
    %2437 = vmatprep.subr.bf16.mxu0 0
    %2438 = vmatpush1.bf16.msra.mxu0 %v2420
    %2439 = vmatprep.subr.bf16.mxu0 0
    %2440 = vmatpush1.bf16.msra.mxu0 %v2421
    %2441 = vmatprep.subr.bf16.mxu0 0
    %2442 = vmatpush1.bf16.msra.mxu0 %v2422
    %2443 = vmatprep.subr.bf16.mxu0 0
    %2444 = vmatpush1.bf16.msra.mxu0 %v2423
    %2445 = vmatprep.subr.bf16.mxu0 0
    %2446 = vmatpush1.bf16.msra.mxu0 %v2424
    %2447 = vmatprep.subr.bf16.mxu0 0
    %2448 = vmatpush1.bf16.msra.mxu0 %v2425
    %2449 = vmatprep.subr.bf16.mxu0 0
    %2450 = vmatpush1.bf16.msra.mxu0 %v2426
    %2451 = vmatprep.subr.bf16.mxu0 0
    %2452 = vmatpush1.bf16.msra.mxu0 0
    %2453 = vmatprep.subr.bf16.mxu0 0
    %2454 = vmatpush1.bf16.msra.mxu0 0
    %2455 = vmatprep.subr.bf16.mxu0 0
    %2456 = vmatpush1.bf16.msra.mxu0 0
    %2457 = vmatprep.subr.bf16.mxu0 0
    %2458 = vmatpush1.bf16.msra.mxu0 0
    %2459 = vmatprep.subr.bf16.mxu0 0
    %2460 = vmatpush1.bf16.msra.mxu0 0
    %2461 = vmatprep.subr.bf16.mxu0 0
    %2462 = vmatpush1.bf16.msra.mxu0 0
    %2463 = vmatprep.subr.bf16.mxu0 0
    %2464 = vmatpush1.bf16.msra.mxu0 0
    %2465 = vmatprep.subr.bf16.mxu0 0
    %2466 = vmatpush1.bf16.msra.mxu0 0
    %2467 = vmatprep.mubr.bf16.mxu0 0
    %2468 = vmatmul.mubr.bf16.gmra.mrb[0].mxu0 %v2363
    %v2469 = vpop.f32.mrb[0].mxu0
    %v2470 = vadd.f32 %v2385, %v2469
    %v2471 = vpop.f32.mrb[0].mxu0
    %v2472 = vpop.f32.mrb[0].mxu0
    %v2473 = vpop.f32.mrb[0].mxu0
    %2474 = vdwg.mxu0
    %v2475 = vmax.f32 %v2470, 0.0
    %v2476 = vpack.c.bf16 %v2475, %v2475
    %v2477 = vld [vmem:[#allocation11] sm:$0xff]
    %v2478 = vld [vmem:[#allocation11 + $0x8] sm:$0xff]
    %v2479 = vld [vmem:[#allocation11 + $0x10] sm:$0xff]
    %v2480 = vld [vmem:[#allocation11 + $0x18] sm:$0xff]
    %v2481 = vld [vmem:[#allocation11 + $0x20] sm:$0xff]
    %v2482 = vld [vmem:[#allocation11 + $0x28] sm:$0xff]
    %v2483 = vld [vmem:[#allocation11 + $0x30] sm:$0xff]
    %v2484 = vld [vmem:[#allocation11 + $0x38] sm:$0xff]
    %v2485 = vld [vmem:[#allocation11 + $0x40] sm:$0xff]
    %v2486 = vld [vmem:[#allocation11 + $0x48] sm:$0xff]
    %v2487 = vld [vmem:[#allocation11 + $0x50] sm:$0xff]
    %v2488 = vld [vmem:[#allocation11 + $0x58] sm:$0xff]
    %v2489 = vld [vmem:[#allocation11 + $0x60] sm:$0xff]
    %v2490 = vld [vmem:[#allocation11 + $0x68] sm:$0xff]
    %v2491 = vld [vmem:[#allocation11 + $0x70] sm:$0xff]
    %v2492 = vld [vmem:[#allocation11 + $0x78] sm:$0xff]
    %v2493 = vld [vmem:[%s10] sm:$0x3]
    %v2495 = vlaneseq
    %v2496 = vshrl.u32 %v2495, 7
    %v2497 = vsub.s32 0, %v2496
    %v2498 = vrot.slane %v2493, %v2497
    %v2499 = vlaneseq
    %v2500 = vshrl.u32 %v2499, 7
    %v2501 = vsub.s32 1, %v2500
    %v2502 = vrot.slane %v2493, %v2501
    %v2521 = vunpack.c.l.b16 %v2477
    %v2522 = vunpack.c.h.b16 %v2477
    %v2523 = vunpack.c.l.b16 %v2478
    %v2524 = vunpack.c.h.b16 %v2478
    %v2525 = vunpack.c.l.b16 %v2479
    %v2526 = vunpack.c.h.b16 %v2479
    %v2527 = vunpack.c.l.b16 %v2480
    %v2528 = vunpack.c.h.b16 %v2480
    %v2529 = vunpack.c.l.b16 %v2481
    %v2530 = vunpack.c.h.b16 %v2481
    %v2531 = vunpack.c.l.b16 %v2482
    %v2532 = vunpack.c.h.b16 %v2482
    %v2533 = vunpack.c.l.b16 %v2483
    %v2534 = vunpack.c.h.b16 %v2483
    %v2535 = vunpack.c.l.b16 %v2484
    %v2536 = vunpack.c.h.b16 %v2484
    %v2537 = vunpack.c.l.b16 %v2485
    %v2538 = vunpack.c.h.b16 %v2485
    %v2539 = vunpack.c.l.b16 %v2486
    %v2540 = vunpack.c.h.b16 %v2486
    %v2541 = vunpack.c.l.b16 %v2487
    %v2542 = vunpack.c.h.b16 %v2487
    %v2543 = vunpack.c.l.b16 %v2488
    %v2544 = vunpack.c.h.b16 %v2488
    %v2545 = vunpack.c.l.b16 %v2489
    %v2546 = vunpack.c.h.b16 %v2489
    %v2547 = vunpack.c.l.b16 %v2490
    %v2548 = vunpack.c.h.b16 %v2490
    %v2549 = vunpack.c.l.b16 %v2491
    %v2550 = vunpack.c.h.b16 %v2491
    %v2551 = vunpack.c.l.b16 %v2492
    %v2552 = vunpack.c.h.b16 %v2492
    %v2553 = vpack.c.b16 %v2523, %v2521
    %v2554 = vpack.c.b16 %v2524, %v2522
    %v2555 = vpack.c.b16 %v2527, %v2525
    %v2556 = vpack.c.b16 %v2528, %v2526
    %v2557 = vpack.c.b16 %v2531, %v2529
    %v2558 = vpack.c.b16 %v2532, %v2530
    %v2559 = vpack.c.b16 %v2535, %v2533
    %v2560 = vpack.c.b16 %v2536, %v2534
    %v2561 = vpack.c.b16 %v2539, %v2537
    %v2562 = vpack.c.b16 %v2540, %v2538
    %v2563 = vpack.c.b16 %v2543, %v2541
    %v2564 = vpack.c.b16 %v2544, %v2542
    %v2565 = vpack.c.b16 %v2547, %v2545
    %v2566 = vpack.c.b16 %v2548, %v2546
    %v2567 = vpack.c.b16 %v2551, %v2549
    %v2568 = vpack.c.b16 %v2552, %v2550
    %2585 = vmatprep.subr.bf16.mxu0 %v2554
    %2586 = vmatpush1.bf16.msra.mxu0 %v2553
    %2587 = vmatprep.subr.bf16.mxu0 %v2556
    %2588 = vmatpush1.bf16.msra.mxu0 %v2555
    %2589 = vmatprep.subr.bf16.mxu0 %v2558
    %2590 = vmatpush1.bf16.msra.mxu0 %v2557
    %2591 = vmatprep.subr.bf16.mxu0 %v2560
    %2592 = vmatpush1.bf16.msra.mxu0 %v2559
    %2593 = vmatprep.subr.bf16.mxu0 %v2562
    %2594 = vmatpush1.bf16.msra.mxu0 %v2561
    %2595 = vmatprep.subr.bf16.mxu0 %v2564
    %2596 = vmatpush1.bf16.msra.mxu0 %v2563
    %2597 = vmatprep.subr.bf16.mxu0 %v2566
    %2598 = vmatpush1.bf16.msra.mxu0 %v2565
    %2599 = vmatprep.subr.bf16.mxu0 %v2568
    %2600 = vmatpush1.bf16.msra.mxu0 %v2567
    %2601 = vmatprep.subr.bf16.mxu0 0
    %2602 = vmatpush1.bf16.msra.mxu0 0
    %2603 = vmatprep.subr.bf16.mxu0 0
    %2604 = vmatpush1.bf16.msra.mxu0 0
    %2605 = vmatprep.subr.bf16.mxu0 0
    %2606 = vmatpush1.bf16.msra.mxu0 0
    %2607 = vmatprep.subr.bf16.mxu0 0
    %2608 = vmatpush1.bf16.msra.mxu0 0
    %2609 = vmatprep.subr.bf16.mxu0 0
    %2610 = vmatpush1.bf16.msra.mxu0 0
    %2611 = vmatprep.subr.bf16.mxu0 0
    %2612 = vmatpush1.bf16.msra.mxu0 0
    %2613 = vmatprep.subr.bf16.mxu0 0
    %2614 = vmatpush1.bf16.msra.mxu0 0
    %2615 = vmatprep.subr.bf16.mxu0 0
    %2616 = vmatpush1.bf16.msra.mxu0 0
    %2617 = vmatprep.mubr.bf16.mxu0 0
    %2618 = vmatmul.mubr.bf16.gmra.mrb[0].mxu0 %v2476
    %v2619 = vpop.f32.mrb[0].mxu0
    %v2620 = vadd.f32 %v2498, %v2619
    %v2621 = vpop.f32.mrb[0].mxu0
    %v2622 = vadd.f32 %v2502, %v2621
    %v2623 = vpop.f32.mrb[0].mxu0
    %v2624 = vpop.f32.mrb[0].mxu0
    %2625 = vdwg.mxu0
    %v2626 = vmax.f32 %v2620, 0.0
    %v2627 = vmax.f32 %v2622, 0.0
    %v2628 = vpack.c.bf16 %v2626, %v2626
    %v2629 = vpack.c.bf16 %v2627, %v2627
    %v2630 = vld [vmem:[#allocation13] sm:$0xff]
    %v2631 = vld [vmem:[#allocation13 + $0x8] sm:$0xff]
    %v2632 = vld [vmem:[#allocation13 + $0x10] sm:$0xff]
    %v2633 = vld [vmem:[#allocation13 + $0x18] sm:$0xf]
    %v2634 = vld [vmem:[#allocation13 + $0x1c] sm:$0xff]
    %v2635 = vld [vmem:[#allocation13 + $0x24] sm:$0xff]
    %v2636 = vld [vmem:[#allocation13 + $0x2c] sm:$0xff]
    %v2637 = vld [vmem:[#allocation13 + $0x34] sm:$0xf]
    %v2638 = vld [vmem:[#allocation13 + $0x38] sm:$0xff]
    %v2639 = vld [vmem:[#allocation13 + $0x40] sm:$0xff]
    %v2640 = vld [vmem:[#allocation13 + $0x48] sm:$0xff]
    %v2641 = vld [vmem:[#allocation13 + $0x50] sm:$0xf]
    %v2642 = vld [vmem:[#allocation13 + $0x54] sm:$0xff]
    %v2643 = vld [vmem:[#allocation13 + $0x5c] sm:$0xff]
    %v2644 = vld [vmem:[#allocation13 + $0x64] sm:$0xff]
    %v2645 = vld [vmem:[#allocation13 + $0x6c] sm:$0xf]
    %v2646 = vld [vmem:[#allocation13 + $0x70] sm:$0xff]
    %v2647 = vld [vmem:[#allocation13 + $0x78] sm:$0xff]
    %v2648 = vld [vmem:[#allocation13 + $0x80] sm:$0xff]
    %v2649 = vld [vmem:[#allocation13 + $0x88] sm:$0xf]
    %v2650 = vld [vmem:[#allocation13 + $0x8c] sm:$0xff]
    %v2651 = vld [vmem:[#allocation13 + $0x94] sm:$0xff]
    %v2652 = vld [vmem:[#allocation13 + $0x9c] sm:$0xff]
    %v2653 = vld [vmem:[#allocation13 + $0xa4] sm:$0xf]
    %v2654 = vld [vmem:[#allocation13 + $0xa8] sm:$0xff]
    %v2655 = vld [vmem:[#allocation13 + $0xb0] sm:$0xff]
    %v2656 = vld [vmem:[#allocation13 + $0xb8] sm:$0xff]
    %v2657 = vld [vmem:[#allocation13 + $0xc0] sm:$0xf]
    %v2658 = vld [vmem:[#allocation13 + $0xc4] sm:$0xff]
    %v2659 = vld [vmem:[#allocation13 + $0xcc] sm:$0xff]
    %v2660 = vld [vmem:[#allocation13 + $0xd4] sm:$0xff]
    %v2661 = vld [vmem:[#allocation13 + $0xdc] sm:$0xf]
    %v2662 = vld [vmem:[#allocation13 + $0xe0] sm:$0xff]
    %v2663 = vld [vmem:[#allocation13 + $0xe8] sm:$0xff]
    %v2664 = vld [vmem:[#allocation13 + $0xf0] sm:$0xff]
    %v2665 = vld [vmem:[#allocation13 + $0xf8] sm:$0xf]
    %v2666 = vld [vmem:[#allocation13 + $0xfc] sm:$0xff]
    %v2667 = vld [vmem:[#allocation13 + $0x104] sm:$0xff]
    %v2668 = vld [vmem:[#allocation13 + $0x10c] sm:$0xff]
    %v2669 = vld [vmem:[#allocation13 + $0x114] sm:$0xf]
    %v2670 = vld [vmem:[#allocation13 + $0x118] sm:$0xff]
    %v2671 = vld [vmem:[#allocation13 + $0x120] sm:$0xff]
    %v2672 = vld [vmem:[#allocation13 + $0x128] sm:$0xff]
    %v2673 = vld [vmem:[#allocation13 + $0x130] sm:$0xf]
    %v2674 = vld [vmem:[#allocation13 + $0x134] sm:$0xff]
    %v2675 = vld [vmem:[#allocation13 + $0x13c] sm:$0xff]
    %v2676 = vld [vmem:[#allocation13 + $0x144] sm:$0xff]
    %v2677 = vld [vmem:[#allocation13 + $0x14c] sm:$0xf]
    %v2678 = vld [vmem:[#allocation13 + $0x150] sm:$0xff]
    %v2679 = vld [vmem:[#allocation13 + $0x158] sm:$0xff]
    %v2680 = vld [vmem:[#allocation13 + $0x160] sm:$0xff]
    %v2681 = vld [vmem:[#allocation13 + $0x168] sm:$0xf]
    %v2682 = vld [vmem:[#allocation13 + $0x16c] sm:$0xff]
    %v2683 = vld [vmem:[#allocation13 + $0x174] sm:$0xff]
    %v2684 = vld [vmem:[#allocation13 + $0x17c] sm:$0xff]
    %v2685 = vld [vmem:[#allocation13 + $0x184] sm:$0xf]
    %v2686 = vld [vmem:[#allocation13 + $0x188] sm:$0xff]
    %v2687 = vld [vmem:[#allocation13 + $0x190] sm:$0xff]
    %v2688 = vld [vmem:[#allocation13 + $0x198] sm:$0xff]
    %v2689 = vld [vmem:[#allocation13 + $0x1a0] sm:$0xf]
    %v2690 = vld [vmem:[#allocation13 + $0x1a4] sm:$0xff]
    %v2691 = vld [vmem:[#allocation13 + $0x1ac] sm:$0xff]
    %v2692 = vld [vmem:[#allocation13 + $0x1b4] sm:$0xff]
    %v2693 = vld [vmem:[#allocation13 + $0x1bc] sm:$0xf]
    %v2694 = vld [vmem:[#allocation13 + $0x1c0] sm:$0xff]
    %v2695 = vld [vmem:[#allocation13 + $0x1c8] sm:$0xff]
    %v2696 = vld [vmem:[#allocation13 + $0x1d0] sm:$0xff]
    %v2697 = vld [vmem:[#allocation13 + $0x1d8] sm:$0xf]
    %v2698 = vld [vmem:[#allocation13 + $0x1dc] sm:$0xff]
    %v2699 = vld [vmem:[#allocation13 + $0x1e4] sm:$0xff]
    %v2700 = vld [vmem:[#allocation13 + $0x1ec] sm:$0xff]
    %v2701 = vld [vmem:[#allocation13 + $0x1f4] sm:$0xf]
    %v2702 = vld [vmem:[#allocation13 + $0x1f8] sm:$0xff]
    %v2703 = vld [vmem:[#allocation13 + $0x200] sm:$0xff]
    %v2704 = vld [vmem:[#allocation13 + $0x208] sm:$0xff]
    %v2705 = vld [vmem:[#allocation13 + $0x210] sm:$0xf]
    %v2706 = vld [vmem:[#allocation13 + $0x214] sm:$0xff]
    %v2707 = vld [vmem:[#allocation13 + $0x21c] sm:$0xff]
    %v2708 = vld [vmem:[#allocation13 + $0x224] sm:$0xff]
    %v2709 = vld [vmem:[#allocation13 + $0x22c] sm:$0xf]
    %v2710 = vld [vmem:[#allocation13 + $0x230] sm:$0xff]
    %v2711 = vld [vmem:[#allocation13 + $0x238] sm:$0xff]
    %v2712 = vld [vmem:[#allocation13 + $0x240] sm:$0xff]
    %v2713 = vld [vmem:[#allocation13 + $0x248] sm:$0xf]
    %v2714 = vld [vmem:[#allocation13 + $0x24c] sm:$0xff]
    %v2715 = vld [vmem:[#allocation13 + $0x254] sm:$0xff]
    %v2716 = vld [vmem:[#allocation13 + $0x25c] sm:$0xff]
    %v2717 = vld [vmem:[#allocation13 + $0x264] sm:$0xf]
    %v2718 = vld [vmem:[#allocation13 + $0x268] sm:$0xff]
    %v2719 = vld [vmem:[#allocation13 + $0x270] sm:$0xff]
    %v2720 = vld [vmem:[#allocation13 + $0x278] sm:$0xff]
    %v2721 = vld [vmem:[#allocation13 + $0x280] sm:$0xf]
    %v2722 = vld [vmem:[#allocation13 + $0x284] sm:$0xff]
    %v2723 = vld [vmem:[#allocation13 + $0x28c] sm:$0xff]
    %v2724 = vld [vmem:[#allocation13 + $0x294] sm:$0xff]
    %v2725 = vld [vmem:[#allocation13 + $0x29c] sm:$0xf]
    %v2726 = vld [vmem:[#allocation13 + $0x2a0] sm:$0xff]
    %v2727 = vld [vmem:[#allocation13 + $0x2a8] sm:$0xff]
    %v2728 = vld [vmem:[#allocation13 + $0x2b0] sm:$0xff]
    %v2729 = vld [vmem:[#allocation13 + $0x2b8] sm:$0xf]
    %v2730 = vld [vmem:[#allocation13 + $0x2bc] sm:$0xff]
    %v2731 = vld [vmem:[#allocation13 + $0x2c4] sm:$0xff]
    %v2732 = vld [vmem:[#allocation13 + $0x2cc] sm:$0xff]
    %v2733 = vld [vmem:[#allocation13 + $0x2d4] sm:$0xf]
    %v2734 = vld [vmem:[#allocation13 + $0x2d8] sm:$0xff]
    %v2735 = vld [vmem:[#allocation13 + $0x2e0] sm:$0xff]
    %v2736 = vld [vmem:[#allocation13 + $0x2e8] sm:$0xff]
    %v2737 = vld [vmem:[#allocation13 + $0x2f0] sm:$0xf]
    %v2738 = vld [vmem:[#allocation13 + $0x2f4] sm:$0xff]
    %v2739 = vld [vmem:[#allocation13 + $0x2fc] sm:$0xff]
    %v2740 = vld [vmem:[#allocation13 + $0x304] sm:$0xff]
    %v2741 = vld [vmem:[#allocation13 + $0x30c] sm:$0xf]
    %v2742 = vld [vmem:[#allocation13 + $0x310] sm:$0xff]
    %v2743 = vld [vmem:[#allocation13 + $0x318] sm:$0xff]
    %v2744 = vld [vmem:[#allocation13 + $0x320] sm:$0xff]
    %v2745 = vld [vmem:[#allocation13 + $0x328] sm:$0xf]
    %v2746 = vld [vmem:[#allocation13 + $0x32c] sm:$0xff]
    %v2747 = vld [vmem:[#allocation13 + $0x334] sm:$0xff]
    %v2748 = vld [vmem:[#allocation13 + $0x33c] sm:$0xff]
    %v2749 = vld [vmem:[#allocation13 + $0x344] sm:$0xf]
    %v2750 = vld [vmem:[#allocation13 + $0x348] sm:$0xff]
    %v2751 = vld [vmem:[#allocation13 + $0x350] sm:$0xff]
    %v2752 = vld [vmem:[#allocation13 + $0x358] sm:$0xff]
    %v2753 = vld [vmem:[#allocation13 + $0x360] sm:$0xf]
    %v2754 = vld [vmem:[#allocation13 + $0x364] sm:$0xff]
    %v2755 = vld [vmem:[#allocation13 + $0x36c] sm:$0xff]
    %v2756 = vld [vmem:[#allocation13 + $0x374] sm:$0xff]
    %v2757 = vld [vmem:[#allocation13 + $0x37c] sm:$0xf]
    %v2758 = vld [vmem:[%s12] sm:$0xff]
    %v2760 = vlaneseq
    %v2761 = vshrl.u32 %v2760, 7
    %v2762 = vsub.s32 0, %v2761
    %v2763 = vrot.slane %v2758, %v2762
    %v2764 = vlaneseq
    %v2765 = vshrl.u32 %v2764, 7
    %v2766 = vsub.s32 1, %v2765
    %v2767 = vrot.slane %v2758, %v2766
    %v2768 = vlaneseq
    %v2769 = vshrl.u32 %v2768, 7
    %v2770 = vsub.s32 2, %v2769
    %v2771 = vrot.slane %v2758, %v2770
    %v2772 = vlaneseq
    %v2773 = vshrl.u32 %v2772, 7
    %v2774 = vsub.s32 3, %v2773
    %v2775 = vrot.slane %v2758, %v2774
    %v2776 = vlaneseq
    %v2777 = vshrl.u32 %v2776, 7
    %v2778 = vsub.s32 4, %v2777
    %v2779 = vrot.slane %v2758, %v2778
    %v2780 = vlaneseq
    %v2781 = vshrl.u32 %v2780, 7
    %v2782 = vsub.s32 5, %v2781
    %v2783 = vrot.slane %v2758, %v2782
    %v2784 = vlaneseq
    %v2785 = vshrl.u32 %v2784, 7
    %v2786 = vsub.s32 6, %v2785
    %v2787 = vrot.slane %v2758, %v2786
    %v2923 = vunpack.c.l.b16 %v2630
    %v2924 = vunpack.c.h.b16 %v2630
    %v2925 = vunpack.c.l.b16 %v2631
    %v2926 = vunpack.c.h.b16 %v2631
    %v2927 = vunpack.c.l.b16 %v2632
    %v2928 = vunpack.c.h.b16 %v2632
    %v2929 = vunpack.c.l.b16 %v2633
    %v2930 = vunpack.c.l.b16 %v2634
    %v2931 = vunpack.c.h.b16 %v2634
    %v2932 = vunpack.c.l.b16 %v2635
    %v2933 = vunpack.c.h.b16 %v2635
    %v2934 = vunpack.c.l.b16 %v2636
    %v2935 = vunpack.c.h.b16 %v2636
    %v2936 = vunpack.c.l.b16 %v2637
    %v2937 = vunpack.c.l.b16 %v2638
    %v2938 = vunpack.c.h.b16 %v2638
    %v2939 = vunpack.c.l.b16 %v2639
    %v2940 = vunpack.c.h.b16 %v2639
    %v2941 = vunpack.c.l.b16 %v2640
    %v2942 = vunpack.c.h.b16 %v2640
    %v2943 = vunpack.c.l.b16 %v2641
    %v2944 = vunpack.c.l.b16 %v2642
    %v2945 = vunpack.c.h.b16 %v2642
    %v2946 = vunpack.c.l.b16 %v2643
    %v2947 = vunpack.c.h.b16 %v2643
    %v2948 = vunpack.c.l.b16 %v2644
    %v2949 = vunpack.c.h.b16 %v2644
    %v2950 = vunpack.c.l.b16 %v2645
    %v2951 = vunpack.c.l.b16 %v2646
    %v2952 = vunpack.c.h.b16 %v2646
    %v2953 = vunpack.c.l.b16 %v2647
    %v2954 = vunpack.c.h.b16 %v2647
    %v2955 = vunpack.c.l.b16 %v2648
    %v2956 = vunpack.c.h.b16 %v2648
    %v2957 = vunpack.c.l.b16 %v2649
    %v2958 = vunpack.c.l.b16 %v2650
    %v2959 = vunpack.c.h.b16 %v2650
    %v2960 = vunpack.c.l.b16 %v2651
    %v2961 = vunpack.c.h.b16 %v2651
    %v2962 = vunpack.c.l.b16 %v2652
    %v2963 = vunpack.c.h.b16 %v2652
    %v2964 = vunpack.c.l.b16 %v2653
    %v2965 = vunpack.c.l.b16 %v2654
    %v2966 = vunpack.c.h.b16 %v2654
    %v2967 = vunpack.c.l.b16 %v2655
    %v2968 = vunpack.c.h.b16 %v2655
    %v2969 = vunpack.c.l.b16 %v2656
    %v2970 = vunpack.c.h.b16 %v2656
    %v2971 = vunpack.c.l.b16 %v2657
    %v2972 = vunpack.c.l.b16 %v2658
    %v2973 = vunpack.c.h.b16 %v2658
    %v2974 = vunpack.c.l.b16 %v2659
    %v2975 = vunpack.c.h.b16 %v2659
    %v2976 = vunpack.c.l.b16 %v2660
    %v2977 = vunpack.c.h.b16 %v2660
    %v2978 = vunpack.c.l.b16 %v2661
    %v2979 = vunpack.c.l.b16 %v2662
    %v2980 = vunpack.c.h.b16 %v2662
    %v2981 = vunpack.c.l.b16 %v2663
    %v2982 = vunpack.c.h.b16 %v2663
    %v2983 = vunpack.c.l.b16 %v2664
    %v2984 = vunpack.c.h.b16 %v2664
    %v2985 = vunpack.c.l.b16 %v2665
    %v2986 = vunpack.c.l.b16 %v2666
    %v2987 = vunpack.c.h.b16 %v2666
    %v2988 = vunpack.c.l.b16 %v2667
    %v2989 = vunpack.c.h.b16 %v2667
    %v2990 = vunpack.c.l.b16 %v2668
    %v2991 = vunpack.c.h.b16 %v2668
    %v2992 = vunpack.c.l.b16 %v2669
    %v2993 = vunpack.c.l.b16 %v2670
    %v2994 = vunpack.c.h.b16 %v2670
    %v2995 = vunpack.c.l.b16 %v2671
    %v2996 = vunpack.c.h.b16 %v2671
    %v2997 = vunpack.c.l.b16 %v2672
    %v2998 = vunpack.c.h.b16 %v2672
    %v2999 = vunpack.c.l.b16 %v2673
    %v3000 = vunpack.c.l.b16 %v2674
    %v3001 = vunpack.c.h.b16 %v2674
    %v3002 = vunpack.c.l.b16 %v2675
    %v3003 = vunpack.c.h.b16 %v2675
    %v3004 = vunpack.c.l.b16 %v2676
    %v3005 = vunpack.c.h.b16 %v2676
    %v3006 = vunpack.c.l.b16 %v2677
    %v3007 = vunpack.c.l.b16 %v2678
    %v3008 = vunpack.c.h.b16 %v2678
    %v3009 = vunpack.c.l.b16 %v2679
    %v3010 = vunpack.c.h.b16 %v2679
    %v3011 = vunpack.c.l.b16 %v2680
    %v3012 = vunpack.c.h.b16 %v2680
    %v3013 = vunpack.c.l.b16 %v2681
    %v3014 = vunpack.c.l.b16 %v2682
    %v3015 = vunpack.c.h.b16 %v2682
    %v3016 = vunpack.c.l.b16 %v2683
    %v3017 = vunpack.c.h.b16 %v2683
    %v3018 = vunpack.c.l.b16 %v2684
    %v3019 = vunpack.c.h.b16 %v2684
    %v3020 = vunpack.c.l.b16 %v2685
    %v3021 = vunpack.c.l.b16 %v2686
    %v3022 = vunpack.c.h.b16 %v2686
    %v3023 = vunpack.c.l.b16 %v2687
    %v3024 = vunpack.c.h.b16 %v2687
    %v3025 = vunpack.c.l.b16 %v2688
    %v3026 = vunpack.c.h.b16 %v2688
    %v3027 = vunpack.c.l.b16 %v2689
    %v3028 = vunpack.c.l.b16 %v2690
    %v3029 = vunpack.c.h.b16 %v2690
    %v3030 = vunpack.c.l.b16 %v2691
    %v3031 = vunpack.c.h.b16 %v2691
    %v3032 = vunpack.c.l.b16 %v2692
    %v3033 = vunpack.c.h.b16 %v2692
    %v3034 = vunpack.c.l.b16 %v2693
    %v3035 = vunpack.c.l.b16 %v2694
    %v3036 = vunpack.c.h.b16 %v2694
    %v3037 = vunpack.c.l.b16 %v2695
    %v3038 = vunpack.c.h.b16 %v2695
    %v3039 = vunpack.c.l.b16 %v2696
    %v3040 = vunpack.c.h.b16 %v2696
    %v3041 = vunpack.c.l.b16 %v2697
    %v3042 = vunpack.c.l.b16 %v2698
    %v3043 = vunpack.c.h.b16 %v2698
    %v3044 = vunpack.c.l.b16 %v2699
    %v3045 = vunpack.c.h.b16 %v2699
    %v3046 = vunpack.c.l.b16 %v2700
    %v3047 = vunpack.c.h.b16 %v2700
    %v3048 = vunpack.c.l.b16 %v2701
    %v3049 = vunpack.c.l.b16 %v2702
    %v3050 = vunpack.c.h.b16 %v2702
    %v3051 = vunpack.c.l.b16 %v2703
    %v3052 = vunpack.c.h.b16 %v2703
    %v3053 = vunpack.c.l.b16 %v2704
    %v3054 = vunpack.c.h.b16 %v2704
    %v3055 = vunpack.c.l.b16 %v2705
    %v3056 = vunpack.c.l.b16 %v2706
    %v3057 = vunpack.c.h.b16 %v2706
    %v3058 = vunpack.c.l.b16 %v2707
    %v3059 = vunpack.c.h.b16 %v2707
    %v3060 = vunpack.c.l.b16 %v2708
    %v3061 = vunpack.c.h.b16 %v2708
    %v3062 = vunpack.c.l.b16 %v2709
    %v3063 = vunpack.c.l.b16 %v2710
    %v3064 = vunpack.c.h.b16 %v2710
    %v3065 = vunpack.c.l.b16 %v2711
    %v3066 = vunpack.c.h.b16 %v2711
    %v3067 = vunpack.c.l.b16 %v2712
    %v3068 = vunpack.c.h.b16 %v2712
    %v3069 = vunpack.c.l.b16 %v2713
    %v3070 = vunpack.c.l.b16 %v2714
    %v3071 = vunpack.c.h.b16 %v2714
    %v3072 = vunpack.c.l.b16 %v2715
    %v3073 = vunpack.c.h.b16 %v2715
    %v3074 = vunpack.c.l.b16 %v2716
    %v3075 = vunpack.c.h.b16 %v2716
    %v3076 = vunpack.c.l.b16 %v2717
    %v3077 = vunpack.c.l.b16 %v2718
    %v3078 = vunpack.c.h.b16 %v2718
    %v3079 = vunpack.c.l.b16 %v2719
    %v3080 = vunpack.c.h.b16 %v2719
    %v3081 = vunpack.c.l.b16 %v2720
    %v3082 = vunpack.c.h.b16 %v2720
    %v3083 = vunpack.c.l.b16 %v2721
    %v3084 = vunpack.c.l.b16 %v2722
    %v3085 = vunpack.c.h.b16 %v2722
    %v3086 = vunpack.c.l.b16 %v2723
    %v3087 = vunpack.c.h.b16 %v2723
    %v3088 = vunpack.c.l.b16 %v2724
    %v3089 = vunpack.c.h.b16 %v2724
    %v3090 = vunpack.c.l.b16 %v2725
    %v3091 = vunpack.c.l.b16 %v2726
    %v3092 = vunpack.c.h.b16 %v2726
    %v3093 = vunpack.c.l.b16 %v2727
    %v3094 = vunpack.c.h.b16 %v2727
    %v3095 = vunpack.c.l.b16 %v2728
    %v3096 = vunpack.c.h.b16 %v2728
    %v3097 = vunpack.c.l.b16 %v2729
    %v3098 = vunpack.c.l.b16 %v2730
    %v3099 = vunpack.c.h.b16 %v2730
    %v3100 = vunpack.c.l.b16 %v2731
    %v3101 = vunpack.c.h.b16 %v2731
    %v3102 = vunpack.c.l.b16 %v2732
    %v3103 = vunpack.c.h.b16 %v2732
    %v3104 = vunpack.c.l.b16 %v2733
    %v3105 = vunpack.c.l.b16 %v2734
    %v3106 = vunpack.c.h.b16 %v2734
    %v3107 = vunpack.c.l.b16 %v2735
    %v3108 = vunpack.c.h.b16 %v2735
    %v3109 = vunpack.c.l.b16 %v2736
    %v3110 = vunpack.c.h.b16 %v2736
    %v3111 = vunpack.c.l.b16 %v2737
    %v3112 = vunpack.c.l.b16 %v2738
    %v3113 = vunpack.c.h.b16 %v2738
    %v3114 = vunpack.c.l.b16 %v2739
    %v3115 = vunpack.c.h.b16 %v2739
    %v3116 = vunpack.c.l.b16 %v2740
    %v3117 = vunpack.c.h.b16 %v2740
    %v3118 = vunpack.c.l.b16 %v2741
    %v3119 = vunpack.c.l.b16 %v2742
    %v3120 = vunpack.c.h.b16 %v2742
    %v3121 = vunpack.c.l.b16 %v2743
    %v3122 = vunpack.c.h.b16 %v2743
    %v3123 = vunpack.c.l.b16 %v2744
    %v3124 = vunpack.c.h.b16 %v2744
    %v3125 = vunpack.c.l.b16 %v2745
    %v3126 = vunpack.c.l.b16 %v2746
    %v3127 = vunpack.c.h.b16 %v2746
    %v3128 = vunpack.c.l.b16 %v2747
    %v3129 = vunpack.c.h.b16 %v2747
    %v3130 = vunpack.c.l.b16 %v2748
    %v3131 = vunpack.c.h.b16 %v2748
    %v3132 = vunpack.c.l.b16 %v2749
    %v3133 = vunpack.c.l.b16 %v2750
    %v3134 = vunpack.c.h.b16 %v2750
    %v3135 = vunpack.c.l.b16 %v2751
    %v3136 = vunpack.c.h.b16 %v2751
    %v3137 = vunpack.c.l.b16 %v2752
    %v3138 = vunpack.c.h.b16 %v2752
    %v3139 = vunpack.c.l.b16 %v2753
    %v3140 = vunpack.c.l.b16 %v2754
    %v3141 = vunpack.c.h.b16 %v2754
    %v3142 = vunpack.c.l.b16 %v2755
    %v3143 = vunpack.c.h.b16 %v2755
    %v3144 = vunpack.c.l.b16 %v2756
    %v3145 = vunpack.c.h.b16 %v2756
    %v3146 = vunpack.c.l.b16 %v2757
    %v3147 = vpack.c.b16 %v2930, %v2923
    %v3148 = vpack.c.b16 %v2931, %v2924
    %v3149 = vpack.c.b16 %v2932, %v2925
    %v3150 = vpack.c.b16 %v2933, %v2926
    %v3151 = vpack.c.b16 %v2934, %v2927
    %v3152 = vpack.c.b16 %v2935, %v2928
    %v3153 = vpack.c.b16 %v2936, %v2929
    %v3154 = vpack.c.b16 %v2944, %v2937
    %v3155 = vpack.c.b16 %v2945, %v2938
    %v3156 = vpack.c.b16 %v2946, %v2939
    %v3157 = vpack.c.b16 %v2947, %v2940
    %v3158 = vpack.c.b16 %v2948, %v2941
    %v3159 = vpack.c.b16 %v2949, %v2942
    %v3160 = vpack.c.b16 %v2950, %v2943
    %v3161 = vpack.c.b16 %v2958, %v2951
    %v3162 = vpack.c.b16 %v2959, %v2952
    %v3163 = vpack.c.b16 %v2960, %v2953
    %v3164 = vpack.c.b16 %v2961, %v2954
    %v3165 = vpack.c.b16 %v2962, %v2955
    %v3166 = vpack.c.b16 %v2963, %v2956
    %v3167 = vpack.c.b16 %v2964, %v2957
    %v3168 = vpack.c.b16 %v2972, %v2965
    %v3169 = vpack.c.b16 %v2973, %v2966
    %v3170 = vpack.c.b16 %v2974, %v2967
    %v3171 = vpack.c.b16 %v2975, %v2968
    %v3172 = vpack.c.b16 %v2976, %v2969
    %v3173 = vpack.c.b16 %v2977, %v2970
    %v3174 = vpack.c.b16 %v2978, %v2971
    %v3175 = vpack.c.b16 %v2986, %v2979
    %v3176 = vpack.c.b16 %v2987, %v2980
    %v3177 = vpack.c.b16 %v2988, %v2981
    %v3178 = vpack.c.b16 %v2989, %v2982
    %v3179 = vpack.c.b16 %v2990, %v2983
    %v3180 = vpack.c.b16 %v2991, %v2984
    %v3181 = vpack.c.b16 %v2992, %v2985
    %v3182 = vpack.c.b16 %v3000, %v2993
    %v3183 = vpack.c.b16 %v3001, %v2994
    %v3184 = vpack.c.b16 %v3002, %v2995
    %v3185 = vpack.c.b16 %v3003, %v2996
    %v3186 = vpack.c.b16 %v3004, %v2997
    %v3187 = vpack.c.b16 %v3005, %v2998
    %v3188 = vpack.c.b16 %v3006, %v2999
    %v3189 = vpack.c.b16 %v3014, %v3007
    %v3190 = vpack.c.b16 %v3015, %v3008
    %v3191 = vpack.c.b16 %v3016, %v3009
    %v3192 = vpack.c.b16 %v3017, %v3010
    %v3193 = vpack.c.b16 %v3018, %v3011
    %v3194 = vpack.c.b16 %v3019, %v3012
    %v3195 = vpack.c.b16 %v3020, %v3013
    %v3196 = vpack.c.b16 %v3028, %v3021
    %v3197 = vpack.c.b16 %v3029, %v3022
    %v3198 = vpack.c.b16 %v3030, %v3023
    %v3199 = vpack.c.b16 %v3031, %v3024
    %v3200 = vpack.c.b16 %v3032, %v3025
    %v3201 = vpack.c.b16 %v3033, %v3026
    %v3202 = vpack.c.b16 %v3034, %v3027
    %v3203 = vpack.c.b16 %v3042, %v3035
    %v3204 = vpack.c.b16 %v3043, %v3036
    %v3205 = vpack.c.b16 %v3044, %v3037
    %v3206 = vpack.c.b16 %v3045, %v3038
    %v3207 = vpack.c.b16 %v3046, %v3039
    %v3208 = vpack.c.b16 %v3047, %v3040
    %v3209 = vpack.c.b16 %v3048, %v3041
    %v3210 = vpack.c.b16 %v3056, %v3049
    %v3211 = vpack.c.b16 %v3057, %v3050
    %v3212 = vpack.c.b16 %v3058, %v3051
    %v3213 = vpack.c.b16 %v3059, %v3052
    %v3214 = vpack.c.b16 %v3060, %v3053
    %v3215 = vpack.c.b16 %v3061, %v3054
    %v3216 = vpack.c.b16 %v3062, %v3055
    %v3217 = vpack.c.b16 %v3070, %v3063
    %v3218 = vpack.c.b16 %v3071, %v3064
    %v3219 = vpack.c.b16 %v3072, %v3065
    %v3220 = vpack.c.b16 %v3073, %v3066
    %v3221 = vpack.c.b16 %v3074, %v3067
    %v3222 = vpack.c.b16 %v3075, %v3068
    %v3223 = vpack.c.b16 %v3076, %v3069
    %v3224 = vpack.c.b16 %v3084, %v3077
    %v3225 = vpack.c.b16 %v3085, %v3078
    %v3226 = vpack.c.b16 %v3086, %v3079
    %v3227 = vpack.c.b16 %v3087, %v3080
    %v3228 = vpack.c.b16 %v3088, %v3081
    %v3229 = vpack.c.b16 %v3089, %v3082
    %v3230 = vpack.c.b16 %v3090, %v3083
    %v3231 = vpack.c.b16 %v3098, %v3091
    %v3232 = vpack.c.b16 %v3099, %v3092
    %v3233 = vpack.c.b16 %v3100, %v3093
    %v3234 = vpack.c.b16 %v3101, %v3094
    %v3235 = vpack.c.b16 %v3102, %v3095
    %v3236 = vpack.c.b16 %v3103, %v3096
    %v3237 = vpack.c.b16 %v3104, %v3097
    %v3238 = vpack.c.b16 %v3112, %v3105
    %v3239 = vpack.c.b16 %v3113, %v3106
    %v3240 = vpack.c.b16 %v3114, %v3107
    %v3241 = vpack.c.b16 %v3115, %v3108
    %v3242 = vpack.c.b16 %v3116, %v3109
    %v3243 = vpack.c.b16 %v3117, %v3110
    %v3244 = vpack.c.b16 %v3118, %v3111
    %v3245 = vpack.c.b16 %v3126, %v3119
    %v3246 = vpack.c.b16 %v3127, %v3120
    %v3247 = vpack.c.b16 %v3128, %v3121
    %v3248 = vpack.c.b16 %v3129, %v3122
    %v3249 = vpack.c.b16 %v3130, %v3123
    %v3250 = vpack.c.b16 %v3131, %v3124
    %v3251 = vpack.c.b16 %v3132, %v3125
    %v3252 = vpack.c.b16 %v3140, %v3133
    %v3253 = vpack.c.b16 %v3141, %v3134
    %v3254 = vpack.c.b16 %v3142, %v3135
    %v3255 = vpack.c.b16 %v3143, %v3136
    %v3256 = vpack.c.b16 %v3144, %v3137
    %v3257 = vpack.c.b16 %v3145, %v3138
    %v3258 = vpack.c.b16 %v3146, %v3139
    %3371 = vmatprep.subr.bf16.mxu0 %v3148
    %3372 = vmatpush1.bf16.msra.mxu0 %v3147
    %3373 = vmatprep.subr.bf16.mxu0 %v3155
    %3374 = vmatpush1.bf16.msra.mxu0 %v3154
    %3375 = vmatprep.subr.bf16.mxu0 %v3162
    %3376 = vmatpush1.bf16.msra.mxu0 %v3161
    %3377 = vmatprep.subr.bf16.mxu0 %v3169
    %3378 = vmatpush1.bf16.msra.mxu0 %v3168
    %3379 = vmatprep.subr.bf16.mxu0 %v3176
    %3380 = vmatpush1.bf16.msra.mxu0 %v3175
    %3381 = vmatprep.subr.bf16.mxu0 %v3183
    %3382 = vmatpush1.bf16.msra.mxu0 %v3182
    %3383 = vmatprep.subr.bf16.mxu0 %v3190
    %3384 = vmatpush1.bf16.msra.mxu0 %v3189
    %3385 = vmatprep.subr.bf16.mxu0 %v3197
    %3386 = vmatpush1.bf16.msra.mxu0 %v3196
    %3387 = vmatprep.subr.bf16.mxu0 %v3204
    %3388 = vmatpush1.bf16.msra.mxu0 %v3203
    %3389 = vmatprep.subr.bf16.mxu0 %v3211
    %3390 = vmatpush1.bf16.msra.mxu0 %v3210
    %3391 = vmatprep.subr.bf16.mxu0 %v3218
    %3392 = vmatpush1.bf16.msra.mxu0 %v3217
    %3393 = vmatprep.subr.bf16.mxu0 %v3225
    %3394 = vmatpush1.bf16.msra.mxu0 %v3224
    %3395 = vmatprep.subr.bf16.mxu0 %v3232
    %3396 = vmatpush1.bf16.msra.mxu0 %v3231
    %3397 = vmatprep.subr.bf16.mxu0 %v3239
    %3398 = vmatpush1.bf16.msra.mxu0 %v3238
    %3399 = vmatprep.subr.bf16.mxu0 %v3246
    %3400 = vmatpush1.bf16.msra.mxu0 %v3245
    %3401 = vmatprep.subr.bf16.mxu0 %v3253
    %3402 = vmatpush1.bf16.msra.mxu0 %v3252
    %3403 = vmatprep.mubr.bf16.mxu0 %v2629
    %3404 = vmatmul.mubr.bf16.gmra.mrb[0].mxu0 %v2628
    %v3405 = vpop.f32.mrb[0].mxu0
    %v3406 = vadd.f32 %v2763, %v3405
    %v3407 = vpop.f32.mrb[0].mxu0
    %v3408 = vadd.f32 %v2767, %v3407
    %v3409 = vpop.f32.mrb[0].mxu0
    %v3410 = vpop.f32.mrb[0].mxu0
    %3411 = vdwg.mxu0
    %3412 = vmatprep.subr.bf16.mxu0 %v3150
    %3413 = vmatpush1.bf16.msra.mxu0 %v3149
    %3414 = vmatprep.subr.bf16.mxu0 %v3157
    %3415 = vmatpush1.bf16.msra.mxu0 %v3156
    %3416 = vmatprep.subr.bf16.mxu0 %v3164
    %3417 = vmatpush1.bf16.msra.mxu0 %v3163
    %3418 = vmatprep.subr.bf16.mxu0 %v3171
    %3419 = vmatpush1.bf16.msra.mxu0 %v3170
    %3420 = vmatprep.subr.bf16.mxu0 %v3178
    %3421 = vmatpush1.bf16.msra.mxu0 %v3177
    %3422 = vmatprep.subr.bf16.mxu0 %v3185
    %3423 = vmatpush1.bf16.msra.mxu0 %v3184
    %3424 = vmatprep.subr.bf16.mxu0 %v3192
    %3425 = vmatpush1.bf16.msra.mxu0 %v3191
    %3426 = vmatprep.subr.bf16.mxu0 %v3199
    %3427 = vmatpush1.bf16.msra.mxu0 %v3198
    %3428 = vmatprep.subr.bf16.mxu0 %v3206
    %3429 = vmatpush1.bf16.msra.mxu0 %v3205
    %3430 = vmatprep.subr.bf16.mxu0 %v3213
    %3431 = vmatpush1.bf16.msra.mxu0 %v3212
    %3432 = vmatprep.subr.bf16.mxu0 %v3220
    %3433 = vmatpush1.bf16.msra.mxu0 %v3219
    %3434 = vmatprep.subr.bf16.mxu0 %v3227
    %3435 = vmatpush1.bf16.msra.mxu0 %v3226
    %3436 = vmatprep.subr.bf16.mxu0 %v3234
    %3437 = vmatpush1.bf16.msra.mxu0 %v3233
    %3438 = vmatprep.subr.bf16.mxu0 %v3241
    %3439 = vmatpush1.bf16.msra.mxu0 %v3240
    %3440 = vmatprep.subr.bf16.mxu0 %v3248
    %3441 = vmatpush1.bf16.msra.mxu0 %v3247
    %3442 = vmatprep.subr.bf16.mxu0 %v3255
    %3443 = vmatpush1.bf16.msra.mxu0 %v3254
    %3444 = vmatprep.mubr.bf16.mxu0 %v2629
    %3445 = vmatmul.mubr.bf16.gmra.mrb[0].mxu0 %v2628
    %v3446 = vpop.f32.mrb[0].mxu0
    %v3447 = vadd.f32 %v2771, %v3446
    %v3448 = vpop.f32.mrb[0].mxu0
    %v3449 = vadd.f32 %v2775, %v3448
    %v3450 = vpop.f32.mrb[0].mxu0
    %v3451 = vpop.f32.mrb[0].mxu0
    %3452 = vdwg.mxu0
    %3453 = vmatprep.subr.bf16.mxu0 %v3152
    %3454 = vmatpush1.bf16.msra.mxu0 %v3151
    %3455 = vmatprep.subr.bf16.mxu0 %v3159
    %3456 = vmatpush1.bf16.msra.mxu0 %v3158
    %3457 = vmatprep.subr.bf16.mxu0 %v3166
    %3458 = vmatpush1.bf16.msra.mxu0 %v3165
    %3459 = vmatprep.subr.bf16.mxu0 %v3173
    %3460 = vmatpush1.bf16.msra.mxu0 %v3172
    %3461 = vmatprep.subr.bf16.mxu0 %v3180
    %3462 = vmatpush1.bf16.msra.mxu0 %v3179
    %3463 = vmatprep.subr.bf16.mxu0 %v3187
    %3464 = vmatpush1.bf16.msra.mxu0 %v3186
    %3465 = vmatprep.subr.bf16.mxu0 %v3194
    %3466 = vmatpush1.bf16.msra.mxu0 %v3193
    %3467 = vmatprep.subr.bf16.mxu0 %v3201
    %3468 = vmatpush1.bf16.msra.mxu0 %v3200
    %3469 = vmatprep.subr.bf16.mxu0 %v3208
    %3470 = vmatpush1.bf16.msra.mxu0 %v3207
    %3471 = vmatprep.subr.bf16.mxu0 %v3215
    %3472 = vmatpush1.bf16.msra.mxu0 %v3214
    %3473 = vmatprep.subr.bf16.mxu0 %v3222
    %3474 = vmatpush1.bf16.msra.mxu0 %v3221
    %3475 = vmatprep.subr.bf16.mxu0 %v3229
    %3476 = vmatpush1.bf16.msra.mxu0 %v3228
    %3477 = vmatprep.subr.bf16.mxu0 %v3236
    %3478 = vmatpush1.bf16.msra.mxu0 %v3235
    %3479 = vmatprep.subr.bf16.mxu0 %v3243
    %3480 = vmatpush1.bf16.msra.mxu0 %v3242
    %3481 = vmatprep.subr.bf16.mxu0 %v3250
    %3482 = vmatpush1.bf16.msra.mxu0 %v3249
    %3483 = vmatprep.subr.bf16.mxu0 %v3257
    %3484 = vmatpush1.bf16.msra.mxu0 %v3256
    %3485 = vmatprep.mubr.bf16.mxu0 %v2629
    %3486 = vmatmul.mubr.bf16.gmra.mrb[0].mxu0 %v2628
    %v3487 = vpop.f32.mrb[0].mxu0
    %v3488 = vadd.f32 %v2779, %v3487
    %v3489 = vpop.f32.mrb[0].mxu0
    %v3490 = vadd.f32 %v2783, %v3489
    %v3491 = vpop.f32.mrb[0].mxu0
    %v3492 = vpop.f32.mrb[0].mxu0
    %3493 = vdwg.mxu0
    %3494 = vmatprep.subr.bf16.mxu0 0
    %3495 = vmatpush1.bf16.msra.mxu0 %v3153
    %3496 = vmatprep.subr.bf16.mxu0 0
    %3497 = vmatpush1.bf16.msra.mxu0 %v3160
    %3498 = vmatprep.subr.bf16.mxu0 0
    %3499 = vmatpush1.bf16.msra.mxu0 %v3167
    %3500 = vmatprep.subr.bf16.mxu0 0
    %3501 = vmatpush1.bf16.msra.mxu0 %v3174
    %3502 = vmatprep.subr.bf16.mxu0 0
    %3503 = vmatpush1.bf16.msra.mxu0 %v3181
    %3504 = vmatprep.subr.bf16.mxu0 0
    %3505 = vmatpush1.bf16.msra.mxu0 %v3188
    %3506 = vmatprep.subr.bf16.mxu0 0
    %3507 = vmatpush1.bf16.msra.mxu0 %v3195
    %3508 = vmatprep.subr.bf16.mxu0 0
    %3509 = vmatpush1.bf16.msra.mxu0 %v3202
    %3510 = vmatprep.subr.bf16.mxu0 0
    %3511 = vmatpush1.bf16.msra.mxu0 %v3209
    %3512 = vmatprep.subr.bf16.mxu0 0
    %3513 = vmatpush1.bf16.msra.mxu0 %v3216
    %3514 = vmatprep.subr.bf16.mxu0 0
    %3515 = vmatpush1.bf16.msra.mxu0 %v3223
    %3516 = vmatprep.subr.bf16.mxu0 0
    %3517 = vmatpush1.bf16.msra.mxu0 %v3230
    %3518 = vmatprep.subr.bf16.mxu0 0
    %3519 = vmatpush1.bf16.msra.mxu0 %v3237
    %3520 = vmatprep.subr.bf16.mxu0 0
    %3521 = vmatpush1.bf16.msra.mxu0 %v3244
    %3522 = vmatprep.subr.bf16.mxu0 0
    %3523 = vmatpush1.bf16.msra.mxu0 %v3251
    %3524 = vmatprep.subr.bf16.mxu0 0
    %3525 = vmatpush1.bf16.msra.mxu0 %v3258
    %3526 = vmatprep.mubr.bf16.mxu0 %v2629
    %3527 = vmatmul.mubr.bf16.gmra.mrb[0].mxu0 %v2628
    %v3528 = vpop.f32.mrb[0].mxu0
    %v3529 = vadd.f32 %v2787, %v3528
    %v3530 = vpop.f32.mrb[0].mxu0
    %v3531 = vpop.f32.mrb[0].mxu0
    %v3532 = vpop.f32.mrb[0].mxu0
    %3533 = vdwg.mxu0
    %v3534 = vxor.u32 %v3406, 2147483648
    %v3535 = vxor.u32 %v3408, 2147483648
    %v3536 = vxor.u32 %v3447, 2147483648
    %v3537 = vxor.u32 %v3449, 2147483648
    %v3538 = vxor.u32 %v3488, 2147483648
    %v3539 = vxor.u32 %v3490, 2147483648
    %v3540 = vxor.u32 %v3529, 2147483648
    %v3541 = vmul.f32 %v3534, 1.442695
    %v3542 = vpow.pop %v3541
    %v3543 = vmul.f32 %v3535, 1.442695
    %v3544 = vpow.pop %v3543
    %v3545 = vmul.f32 %v3536, 1.442695
    %v3546 = vpow.pop %v3545
    %v3547 = vmul.f32 %v3537, 1.442695
    %v3548 = vpow.pop %v3547
    %v3549 = vmul.f32 %v3538, 1.442695
    %v3550 = vpow.pop %v3549
    %v3551 = vmul.f32 %v3539, 1.442695
    %v3552 = vpow.pop %v3551
    %v3553 = vmul.f32 %v3540, 1.442695
    %v3554 = vpow.pop %v3553
    %v3555 = vadd.f32 %v3542, 1.0
    %v3556 = vadd.f32 %v3544, 1.0
    %v3557 = vadd.f32 %v3546, 1.0
    %v3558 = vadd.f32 %v3548, 1.0
    %v3559 = vadd.f32 %v3550, 1.0
    %v3560 = vadd.f32 %v3552, 1.0
    %v3561 = vadd.f32 %v3554, 1.0
    %v3562 = vrcp.pop %v3555
    %v3563 = vmul.f32 1.0, %v3562
    %v3564 = vrcp.pop %v3556
    %v3565 = vmul.f32 1.0, %v3564
    %v3566 = vrcp.pop %v3557
    %v3567 = vmul.f32 1.0, %v3566
    %v3568 = vrcp.pop %v3558
    %v3569 = vmul.f32 1.0, %v3568
    %v3570 = vrcp.pop %v3559
    %v3571 = vmul.f32 1.0, %v3570
    %v3572 = vrcp.pop %v3560
    %v3573 = vmul.f32 1.0, %v3572
    %v3574 = vrcp.pop %v3561
    %v3575 = vmul.f32 1.0, %v3574
    %v3576 = vpack.c.bf16 %v3563, %v3563
    %v3577 = vpack.c.bf16 %v3565, %v3565
    %v3578 = vpack.c.bf16 %v3567, %v3567
    %v3579 = vpack.c.bf16 %v3569, %v3569
    %v3580 = vpack.c.bf16 %v3571, %v3571
    %v3581 = vpack.c.bf16 %v3573, %v3573
    %v3582 = vpack.c.bf16 %v3575, %v3575
    %v3590 = vunpack.c.l.b16 %v3576
    %v3591 = vunpack.c.l.b16 %v3577
    %v3592 = vunpack.c.l.b16 %v3578
    %v3593 = vunpack.c.l.b16 %v3579
    %v3594 = vunpack.c.l.b16 %v3580
    %v3595 = vunpack.c.l.b16 %v3581
    %v3596 = vunpack.c.l.b16 %v3582
    %v3597 = vpack.c.b16 %v3591, %v3590
    %v3598 = vpack.c.b16 %v3593, %v3592
    %v3599 = vpack.c.b16 %v3595, %v3594
    %v3600 = vpack.c.b16 %v3596, %v3596
    %3605 = vst [vmem:[#allocation14] sm:$0xff] %v3597
    %3606 = vst [vmem:[#allocation14 + $0x8] sm:$0xff] %v3598
    %3607 = vst [vmem:[#allocation14 + $0x10] sm:$0xff] %v3599
    %3608 = vst [vmem:[#allocation14 + $0x18] sm:$0xf] %v3600
    // Predicated region
    $region82: #{tpu_custom_call.1} parent=1 // pred_check
      _
    $region83: #{tpu_custom_call.1} parent=1 // pred_check_branch
      %3610 = sbr.rel (0) target = $region85
    $region84: #{tpu_custom_call.1} parent=1 // pred_region
      %s3612 = ssub.s32 448, 448
      %3613 = vsyncadd [#allocation4], %s3612
      %s3615 = sshll.u32 [#allocation14], 4
      %s3616 = int_to_ptr.vmem [resolvable:$true] %s3615
      %3618 = dma.vmem_to_hbm [thread:$0]  %s3616, 448, %s13, [#allocation4]
    $region85: #{tpu_custom_call.1} parent=1 // pred_fallthru
      _
    // Predicated region
    $region86: #{tpu_custom_call.1} parent=1 // pred_check
      _
    $region87: #{tpu_custom_call.1} parent=1 // pred_check_branch
      %3620 = sbr.rel (0) target = $region89
    $region88: #{tpu_custom_call.1} parent=1 // pred_region
      %3621 = dma.done [#allocation4], 448
    $region89: #{tpu_custom_call.1} parent=1 // pred_fallthru
      _
    %3622 = vsyncpa [#allocation3], 1
    %3623 = vsyncpa [#allocation6], 1
    %3624 = vsyncpa [#allocation9], 1
    %3625 = vsyncpa [#allocation12], 1
    %3626 = vsyncpa [#allocation4], 1

// kernel: tpu_custom_call.1
$region0: #{tpu_custom_call.1}
  #allocation0 [shape = 'u32[]', space=smem, size = 0x4, offset = 0x4, fixed_abs, tag = 'smem constant byte address 0x4 - core index']
  #allocation1 [shape = 'u32[144,128]{1,0:T(1,128)}', space=vmem, size = 0x12000, scoped, tag = 'internal scratch']
  %s0 = inlined_call_operand.hbm [shape: bf16[8,784], index: 0, kind: input, shape index: {}]
  %s1 = inlined_call_operand.hbm [shape: bf16[784,512], index: 1, kind: input, shape index: {}]
  %s2 = inlined_call_operand.vmem [shape: f32[1,512], index: 2, kind: input, shape index: {}]
  %s3 = inlined_call_operand.hbm [shape: bf16[512,256], index: 3, kind: input, shape index: {}]
  %s4 = inlined_call_operand.vmem [shape: f32[1,256], index: 4, kind: input, shape index: {}]
  %s5 = inlined_call_operand.hbm [shape: bf16[256,128], index: 5, kind: input, shape index: {}]
  %s6 = inlined_call_operand.vmem [shape: f32[1,128], index: 6, kind: input, shape index: {}]
  %s7 = inlined_call_operand.hbm [shape: bf16[128,128], index: 7, kind: input, shape index: {}]
  %s8 = inlined_call_operand.vmem [shape: f32[1,128], index: 8, kind: input, shape index: {}]
  %s9 = inlined_call_operand.hbm [shape: bf16[128,256], index: 9, kind: input, shape index: {}]
  %s10 = inlined_call_operand.vmem [shape: f32[1,256], index: 10, kind: input, shape index: {}]
  %s11 = inlined_call_operand.hbm [shape: bf16[256,896], index: 11, kind: input, shape index: {}]
  %s12 = inlined_call_operand.vmem [shape: f32[1,896], index: 12, kind: input, shape index: {}]
  %s13 = inlined_call_operand.hbm [shape: bf16[8,896], index: 13, kind: output, shape index: {}]
  %s14 = sld [smem:[#allocation0]]
  $region90: #{tpu_custom_call.1} parent=0
    _
  %s16 = ssub.s32 1, %s14
  %s17 = scalar_select 0, %s16, %s14
  $region1: #{tpu_custom_call.1} parent=0
    #allocation2 [shape = 'u8[14336]{0}', space=vmem, size = 0x3800, scoped, tag = 'input window, operand 0, single buffered']
    #allocation3 [shape = 's32[1]{0}', space=sflag, size = 0x4, scoped, tag = 'scoped memory for tpu_custom_call.1']
    #allocation4 [shape = 's32[1]{0}', space=sflag, size = 0x4, scoped, tag = 'scoped memory for tpu_custom_call.1']
    #allocation5 [shape = 'u8[802816]{0}', space=vmem, size = 0xc4000, scoped, tag = 'input window, operand 1, single buffered']
    #allocation6 [shape = 's32[1]{0}', space=sflag, size = 0x4, scoped, tag = 'scoped memory for tpu_custom_call.1']
    #allocation7 [shape = 'u8[262144]{0}', space=vmem, size = 0x40000, scoped, tag = 'input window, operand 3, single buffered']
    #allocation8 [shape = 'u8[65536]{0}', space=vmem, size = 0x10000, scoped, tag = 'input window, operand 5, single buffered']
    #allocation9 [shape = 's32[1]{0}', space=sflag, size = 0x4, scoped, tag = 'scoped memory for tpu_custom_call.1']
    #allocation10 [shape = 'u8[32768]{0}', space=vmem, size = 0x8000, scoped, tag = 'input window, operand 7, single buffered']
    #allocation11 [shape = 'u8[65536]{0}', space=vmem, size = 0x10000, scoped, tag = 'input window, operand 9, single buffered']
    #allocation12 [shape = 's32[1]{0}', space=sflag, size = 0x4, scoped, tag = 'scoped memory for tpu_custom_call.1']
    #allocation13 [shape = 'u8[458752]{0}', space=vmem, size = 0x70000, scoped, tag = 'input window, operand 11, single buffered']
    #allocation14 [shape = 'u8[14336]{0}', space=vmem, size = 0x3800, scoped, tag = 'output window, operand 0, single buffered']
    %18 = vsyncpa [#allocation3], 0
    %19 = vsyncpa [#allocation6], 0
    %20 = vsyncpa [#allocation9], 0
    %21 = vsyncpa [#allocation12], 0
    %22 = vsyncpa [#allocation4], 0
    // Predicated region
    $region2: #{tpu_custom_call.1} parent=1 // pred_check
      _
    $region3: #{tpu_custom_call.1} parent=1 // pred_check_branch
      %24 = sbr.rel (0) target = $region5
    $region4: #{tpu_custom_call.1} parent=1 // pred_region
      %s26 = ssub.s32 448, 448
      %27 = vsyncadd [#allocation3], %s26
      %s29 = sshll.u32 [#allocation2], 4
      %s30 = int_to_ptr.vmem [resolvable:$true] %s29
      %32 = dma.hbm_to_vmem [thread:$0]  %s0, 448, %s30, [#allocation3]
    $region5: #{tpu_custom_call.1} parent=1 // pred_fallthru
      _
    // Predicated region
    $region6: #{tpu_custom_call.1} parent=1 // pred_check
      _
    $region7: #{tpu_custom_call.1} parent=1 // pred_check_branch
      %34 = sbr.rel (0) target = $region9
    $region8: #{tpu_custom_call.1} parent=1 // pred_region
      %s36 = ssub.s32 25088, 25088
      %37 = vsyncadd [#allocation6], %s36
      %s38 = sshll.u32 [#allocation5], 4
      %s39 = int_to_ptr.vmem [resolvable:$true] %s38
      %44 = dma.hbm_to_vmem [thread:$0]  %s1, 25088, %s39, [#allocation6], 256, 256, 16
    $region9: #{tpu_custom_call.1} parent=1 // pred_fallthru
      _
    // Predicated region
    $region10: #{tpu_custom_call.1} parent=1 // pred_check
      _
    $region11: #{tpu_custom_call.1} parent=1 // pred_check_branch
      %46 = sbr.rel (0) target = $region13
    $region12: #{tpu_custom_call.1} parent=1 // pred_region
      _
    $region13: #{tpu_custom_call.1} parent=1 // pred_fallthru
      _
    // Predicated region
    $region14: #{tpu_custom_call.1} parent=1 // pred_check
      _
    $region15: #{tpu_custom_call.1} parent=1 // pred_check_branch
      %48 = sbr.rel (0) target = $region17
    $region16: #{tpu_custom_call.1} parent=1 // pred_region
      %s50 = ssub.s32 8192, 8192
      %51 = vsyncadd [#allocation6], %s50
      %s52 = sshll.u32 [#allocation7], 4
      %s53 = int_to_ptr.vmem [resolvable:$true] %s52
      %58 = dma.hbm_to_vmem [thread:$0]  %s3, 8192, %s53, [#allocation6], 128, 128, 8
    $region17: #{tpu_custom_call.1} parent=1 // pred_fallthru
      _
    // Predicated region
    $region18: #{tpu_custom_call.1} parent=1 // pred_check
      _
    $region19: #{tpu_custom_call.1} parent=1 // pred_check_branch
      %60 = sbr.rel (0) target = $region21
    $region20: #{tpu_custom_call.1} parent=1 // pred_region
      _
    $region21: #{tpu_custom_call.1} parent=1 // pred_fallthru
      _
    // Predicated region
    $region22: #{tpu_custom_call.1} parent=1 // pred_check
      _
    $region23: #{tpu_custom_call.1} parent=1 // pred_check_branch
      %62 = sbr.rel (0) target = $region25
    $region24: #{tpu_custom_call.1} parent=1 // pred_region
      %s64 = ssub.s32 2048, 2048
      %65 = vsyncadd [#allocation9], %s64
      %s66 = sshll.u32 [#allocation8], 4
      %s67 = int_to_ptr.vmem [resolvable:$true] %s66
      %72 = dma.hbm_to_vmem [thread:$0]  %s5, 2048, %s67, [#allocation9], 64, 64, 4
    $region25: #{tpu_custom_call.1} parent=1 // pred_fallthru
      _
    // Predicated region
    $region26: #{tpu_custom_call.1} parent=1 // pred_check
      _
    $region27: #{tpu_custom_call.1} parent=1 // pred_check_branch
      %74 = sbr.rel (0) target = $region29
    $region28: #{tpu_custom_call.1} parent=1 // pred_region
      _
    $region29: #{tpu_custom_call.1} parent=1 // pred_fallthru
      _
    // Predicated region
    $region30: #{tpu_custom_call.1} parent=1 // pred_check
      _
    $region31: #{tpu_custom_call.1} parent=1 // pred_check_branch
      %76 = sbr.rel (0) target = $region33
    $region32: #{tpu_custom_call.1} parent=1 // pred_region
      %s78 = ssub.s32 1024, 1024
      %79 = vsyncadd [#allocation9], %s78
      %s80 = sshll.u32 [#allocation10], 4
      %s81 = int_to_ptr.vmem [resolvable:$true] %s80
      %86 = dma.hbm_to_vmem [thread:$0]  %s7, 1024, %s81, [#allocation9], 64, 64, 4
    $region33: #{tpu_custom_call.1} parent=1 // pred_fallthru
      _
    // Predicated region
    $region34: #{tpu_custom_call.1} parent=1 // pred_check
      _
    $region35: #{tpu_custom_call.1} parent=1 // pred_check_branch
      %88 = sbr.rel (0) target = $region37
    $region36: #{tpu_custom_call.1} parent=1 // pred_region
      _
    $region37: #{tpu_custom_call.1} parent=1 // pred_fallthru
      _
    // Predicated region
    $region38: #{tpu_custom_call.1} parent=1 // pred_check
      _
    $region39: #{tpu_custom_call.1} parent=1 // pred_check_branch
      %90 = sbr.rel (0) target = $region41
    $region40: #{tpu_custom_call.1} parent=1 // pred_region
      %s92 = ssub.s32 2048, 2048
      %93 = vsyncadd [#allocation12], %s92
      %s94 = sshll.u32 [#allocation11], 4
      %s95 = int_to_ptr.vmem [resolvable:$true] %s94
      %100 = dma.hbm_to_vmem [thread:$0]  %s9, 2048, %s95, [#allocation12], 128, 128, 8
    $region41: #{tpu_custom_call.1} parent=1 // pred_fallthru
      _
    // Predicated region
    $region42: #{tpu_custom_call.1} parent=1 // pred_check
      _
    $region43: #{tpu_custom_call.1} parent=1 // pred_check_branch
      %102 = sbr.rel (0) target = $region45
    $region44: #{tpu_custom_call.1} parent=1 // pred_region
      _
    $region45: #{tpu_custom_call.1} parent=1 // pred_fallthru
      _
    // Predicated region
    $region46: #{tpu_custom_call.1} parent=1 // pred_check
      _
    $region47: #{tpu_custom_call.1} parent=1 // pred_check_branch
      %104 = sbr.rel (0) target = $region49
    $region48: #{tpu_custom_call.1} parent=1 // pred_region
      %s106 = ssub.s32 14336, 14336
      %107 = vsyncadd [#allocation12], %s106
      %s108 = sshll.u32 [#allocation13], 4
      %s109 = int_to_ptr.vmem [resolvable:$true] %s108
      %114 = dma.hbm_to_vmem [thread:$0]  %s11, 14336, %s109, [#allocation12], 448, 448, 28
    $region49: #{tpu_custom_call.1} parent=1 // pred_fallthru
      _
    // Predicated region
    $region50: #{tpu_custom_call.1} parent=1 // pred_check
      _
    $region51: #{tpu_custom_call.1} parent=1 // pred_check_branch
      %116 = sbr.rel (0) target = $region53
    $region52: #{tpu_custom_call.1} parent=1 // pred_region
      _
    $region53: #{tpu_custom_call.1} parent=1 // pred_fallthru
      _
    // Predicated region
    $region54: #{tpu_custom_call.1} parent=1 // pred_check
      _
    $region55: #{tpu_custom_call.1} parent=1 // pred_check_branch
      %118 = sbr.rel (0) target = $region57
    $region56: #{tpu_custom_call.1} parent=1 // pred_region
      %119 = dma.done [#allocation3], 448
    $region57: #{tpu_custom_call.1} parent=1 // pred_fallthru
      _
    // Predicated region
    $region58: #{tpu_custom_call.1} parent=1 // pred_check
      _
    $region59: #{tpu_custom_call.1} parent=1 // pred_check_branch
      %121 = sbr.rel (0) target = $region61
    $region60: #{tpu_custom_call.1} parent=1 // pred_region
      %122 = dma.done [#allocation6], 25088
    $region61: #{tpu_custom_call.1} parent=1 // pred_fallthru
      _
    // Predicated region
    $region62: #{tpu_custom_call.1} parent=1 // pred_check
      _
    $region63: #{tpu_custom_call.1} parent=1 // pred_check_branch
      %124 = sbr.rel (0) target = $region65
    $region64: #{tpu_custom_call.1} parent=1 // pred_region
      %125 = dma.done [#allocation6], 8192
    $region65: #{tpu_custom_call.1} parent=1 // pred_fallthru
      _
    // Predicated region
    $region66: #{tpu_custom_call.1} parent=1 // pred_check
      _
    $region67: #{tpu_custom_call.1} parent=1 // pred_check_branch
      %127 = sbr.rel (0) target = $region69
    $region68: #{tpu_custom_call.1} parent=1 // pred_region
      %128 = dma.done [#allocation9], 2048
    $region69: #{tpu_custom_call.1} parent=1 // pred_fallthru
      _
    // Predicated region
    $region70: #{tpu_custom_call.1} parent=1 // pred_check
      _
    $region71: #{tpu_custom_call.1} parent=1 // pred_check_branch
      %130 = sbr.rel (0) target = $region73
    $region72: #{tpu_custom_call.1} parent=1 // pred_region
      %131 = dma.done [#allocation9], 1024
    $region73: #{tpu_custom_call.1} parent=1 // pred_fallthru
      _
    // Predicated region
    $region74: #{tpu_custom_call.1} parent=1 // pred_check
      _
    $region75: #{tpu_custom_call.1} parent=1 // pred_check_branch
      %133 = sbr.rel (0) target = $region77
    $region76: #{tpu_custom_call.1} parent=1 // pred_region
      %134 = dma.done [#allocation12], 2048
    $region77: #{tpu_custom_call.1} parent=1 // pred_fallthru
      _
    // Predicated region
    $region78: #{tpu_custom_call.1} parent=1 // pred_check
      _
    $region79: #{tpu_custom_call.1} parent=1 // pred_check_branch
      %136 = sbr.rel (0) target = $region81
    $region80: #{tpu_custom_call.1} parent=1 // pred_region
      %137 = dma.done [#allocation12], 14336
    $region81: #{tpu_custom_call.1} parent=1 // pred_fallthru
      _
    %v139 = vld [vmem:[#allocation2] sm:$0xff]
    %v140 = vld [vmem:[#allocation2 + $0x8] sm:$0xff]
    %v141 = vld [vmem:[#allocation2 + $0x10] sm:$0xff]
    %v142 = vld [vmem:[#allocation2 + $0x18] sm:$0xf]
    %v143 = vld [vmem:[#allocation5] sm:$0xff]
    %v144 = vld [vmem:[#allocation5 + $0x8] sm:$0xff]
    %v145 = vld [vmem:[#allocation5 + $0x10] sm:$0xff]
    %v146 = vld [vmem:[#allocation5 + $0x18] sm:$0xff]
    %v147 = vld [vmem:[#allocation5 + $0x20] sm:$0xff]
    %v148 = vld [vmem:[#allocation5 + $0x28] sm:$0xff]
    %v149 = vld [vmem:[#allocation5 + $0x30] sm:$0xff]
    %v150 = vld [vmem:[#allocation5 + $0x38] sm:$0xff]
    %v151 = vld [vmem:[#allocation5 + $0x40] sm:$0xff]
    %v152 = vld [vmem:[#allocation5 + $0x48] sm:$0xff]
    %v153 = vld [vmem:[#allocation5 + $0x50] sm:$0xff]
    %v154 = vld [vmem:[#allocation5 + $0x58] sm:$0xff]
    %v155 = vld [vmem:[#allocation5 + $0x60] sm:$0xff]
    %v156 = vld [vmem:[#allocation5 + $0x68] sm:$0xff]
    %v157 = vld [vmem:[#allocation5 + $0x70] sm:$0xff]
    %v158 = vld [vmem:[#allocation5 + $0x78] sm:$0xff]
    %v159 = vld [vmem:[#allocation5 + $0x80] sm:$0xff]
    %v160 = vld [vmem:[#allocation5 + $0x88] sm:$0xff]
    %v161 = vld [vmem:[#allocation5 + $0x90] sm:$0xff]
    %v162 = vld [vmem:[#allocation5 + $0x98] sm:$0xff]
    %v163 = vld [vmem:[#allocation5 + $0xa0] sm:$0xff]
    %v164 = vld [vmem:[#allocation5 + $0xa8] sm:$0xff]
    %v165 = vld [vmem:[#allocation5 + $0xb0] sm:$0xff]
    %v166 = vld [vmem:[#allocation5 + $0xb8] sm:$0xff]
    %v167 = vld [vmem:[#allocation5 + $0xc0] sm:$0xff]
    %v168 = vld [vmem:[#allocation5 + $0xc8] sm:$0xff]
    %v169 = vld [vmem:[#allocation5 + $0xd0] sm:$0xff]
    %v170 = vld [vmem:[#allocation5 + $0xd8] sm:$0xff]
    %v171 = vld [vmem:[#allocation5 + $0xe0] sm:$0xff]
    %v172 = vld [vmem:[#allocation5 + $0xe8] sm:$0xff]
    %v173 = vld [vmem:[#allocation5 + $0xf0] sm:$0xff]
    %v174 = vld [vmem:[#allocation5 + $0xf8] sm:$0xff]
    %v175 = vld [vmem:[#allocation5 + $0x100] sm:$0xff]
    %v176 = vld [vmem:[#allocation5 + $0x108] sm:$0xff]
    %v177 = vld [vmem:[#allocation5 + $0x110] sm:$0xff]
    %v178 = vld [vmem:[#allocation5 + $0x118] sm:$0xff]
    %v179 = vld [vmem:[#allocation5 + $0x120] sm:$0xff]
    %v180 = vld [vmem:[#allocation5 + $0x128] sm:$0xff]
    %v181 = vld [vmem:[#allocation5 + $0x130] sm:$0xff]
    %v182 = vld [vmem:[#allocation5 + $0x138] sm:$0xff]
    %v183 = vld [vmem:[#allocation5 + $0x140] sm:$0xff]
    %v184 = vld [vmem:[#allocation5 + $0x148] sm:$0xff]
    %v185 = vld [vmem:[#allocation5 + $0x150] sm:$0xff]
    %v186 = vld [vmem:[#allocation5 + $0x158] sm:$0xff]
    %v187 = vld [vmem:[#allocation5 + $0x160] sm:$0xff]
    %v188 = vld [vmem:[#allocation5 + $0x168] sm:$0xff]
    %v189 = vld [vmem:[#allocation5 + $0x170] sm:$0xff]
    %v190 = vld [vmem:[#allocation5 + $0x178] sm:$0xff]
    %v191 = vld [vmem:[#allocation5 + $0x180] sm:$0xff]
    %v192 = vld [vmem:[#allocation5 + $0x188] sm:$0xff]
    %v193 = vld [vmem:[#allocation5 + $0x190] sm:$0xff]
    %v194 = vld [vmem:[#allocation5 + $0x198] sm:$0xff]
    %v195 = vld [vmem:[#allocation5 + $0x1a0] sm:$0xff]
    %v196 = vld [vmem:[#allocation5 + $0x1a8] sm:$0xff]
    %v197 = vld [vmem:[#allocation5 + $0x1b0] sm:$0xff]
    %v198 = vld [vmem:[#allocation5 + $0x1b8] sm:$0xff]
    %v199 = vld [vmem:[#allocation5 + $0x1c0] sm:$0xff]
    %v200 = vld [vmem:[#allocation5 + $0x1c8] sm:$0xff]
    %v201 = vld [vmem:[#allocation5 + $0x1d0] sm:$0xff]
    %v202 = vld [vmem:[#allocation5 + $0x1d8] sm:$0xff]
    %v203 = vld [vmem:[#allocation5 + $0x1e0] sm:$0xff]
    %v204 = vld [vmem:[#allocation5 + $0x1e8] sm:$0xff]
    %v205 = vld [vmem:[#allocation5 + $0x1f0] sm:$0xff]
    %v206 = vld [vmem:[#allocation5 + $0x1f8] sm:$0xff]
    %v207 = vld [vmem:[#allocation5 + $0x200] sm:$0xff]
    %v208 = vld [vmem:[#allocation5 + $0x208] sm:$0xff]
    %v209 = vld [vmem:[#allocation5 + $0x210] sm:$0xff]
    %v210 = vld [vmem:[#allocation5 + $0x218] sm:$0xff]
    %v211 = vld [vmem:[#allocation5 + $0x220] sm:$0xff]
    %v212 = vld [vmem:[#allocation5 + $0x228] sm:$0xff]
    %v213 = vld [vmem:[#allocation5 + $0x230] sm:$0xff]
    %v214 = vld [vmem:[#allocation5 + $0x238] sm:$0xff]
    %v215 = vld [vmem:[#allocation5 + $0x240] sm:$0xff]
    %v216 = vld [vmem:[#allocation5 + $0x248] sm:$0xff]
    %v217 = vld [vmem:[#allocation5 + $0x250] sm:$0xff]
    %v218 = vld [vmem:[#allocation5 + $0x258] sm:$0xff]
    %v219 = vld [vmem:[#allocation5 + $0x260] sm:$0xff]
    %v220 = vld [vmem:[#allocation5 + $0x268] sm:$0xff]
    %v221 = vld [vmem:[#allocation5 + $0x270] sm:$0xff]
    %v222 = vld [vmem:[#allocation5 + $0x278] sm:$0xff]
    %v223 = vld [vmem:[#allocation5 + $0x280] sm:$0xff]
    %v224 = vld [vmem:[#allocation5 + $0x288] sm:$0xff]
    %v225 = vld [vmem:[#allocation5 + $0x290] sm:$0xff]
    %v226 = vld [vmem:[#allocation5 + $0x298] sm:$0xff]
    %v227 = vld [vmem:[#allocation5 + $0x2a0] sm:$0xff]
    %v228 = vld [vmem:[#allocation5 + $0x2a8] sm:$0xff]
    %v229 = vld [vmem:[#allocation5 + $0x2b0] sm:$0xff]
    %v230 = vld [vmem:[#allocation5 + $0x2b8] sm:$0xff]
    %v231 = vld [vmem:[#allocation5 + $0x2c0] sm:$0xff]
    %v232 = vld [vmem:[#allocation5 + $0x2c8] sm:$0xff]
    %v233 = vld [vmem:[#allocation5 + $0x2d0] sm:$0xff]
    %v234 = vld [vmem:[#allocation5 + $0x2d8] sm:$0xff]
    %v235 = vld [vmem:[#allocation5 + $0x2e0] sm:$0xff]
    %v236 = vld [vmem:[#allocation5 + $0x2e8] sm:$0xff]
    %v237 = vld [vmem:[#allocation5 + $0x2f0] sm:$0xff]
    %v238 = vld [vmem:[#allocation5 + $0x2f8] sm:$0xff]
    %v239 = vld [vmem:[#allocation5 + $0x300] sm:$0xff]
    %v240 = vld [vmem:[#allocation5 + $0x308] sm:$0xff]
    %v241 = vld [vmem:[#allocation5 + $0x310] sm:$0xff]
    %v242 = vld [vmem:[#allocation5 + $0x318] sm:$0xff]
    %v243 = vld [vmem:[#allocation5 + $0x320] sm:$0xff]
    %v244 = vld [vmem:[#allocation5 + $0x328] sm:$0xff]
    %v245 = vld [vmem:[#allocation5 + $0x330] sm:$0xff]
    %v246 = vld [vmem:[#allocation5 + $0x338] sm:$0xff]
    %v247 = vld [vmem:[#allocation5 + $0x340] sm:$0xff]
    %v248 = vld [vmem:[#allocation5 + $0x348] sm:$0xff]
    %v249 = vld [vmem:[#allocation5 + $0x350] sm:$0xff]
    %v250 = vld [vmem:[#allocation5 + $0x358] sm:$0xff]
    %v251 = vld [vmem:[#allocation5 + $0x360] sm:$0xff]
    %v252 = vld [vmem:[#allocation5 + $0x368] sm:$0xff]
    %v253 = vld [vmem:[#allocation5 + $0x370] sm:$0xff]
    %v254 = vld [vmem:[#allocation5 + $0x378] sm:$0xff]
    %v255 = vld [vmem:[#allocation5 + $0x380] sm:$0xff]
    %v256 = vld [vmem:[#allocation5 + $0x388] sm:$0xff]
    %v257 = vld [vmem:[#allocation5 + $0x390] sm:$0xff]
    %v258 = vld [vmem:[#allocation5 + $0x398] sm:$0xff]
    %v259 = vld [vmem:[#allocation5 + $0x3a0] sm:$0xff]
    %v260 = vld [vmem:[#allocation5 + $0x3a8] sm:$0xff]
    %v261 = vld [vmem:[#allocation5 + $0x3b0] sm:$0xff]
    %v262 = vld [vmem:[#allocation5 + $0x3b8] sm:$0xff]
    %v263 = vld [vmem:[#allocation5 + $0x3c0] sm:$0xff]
    %v264 = vld [vmem:[#allocation5 + $0x3c8] sm:$0xff]
    %v265 = vld [vmem:[#allocation5 + $0x3d0] sm:$0xff]
    %v266 = vld [vmem:[#allocation5 + $0x3d8] sm:$0xff]
    %v267 = vld [vmem:[#allocation5 + $0x3e0] sm:$0xff]
    %v268 = vld [vmem:[#allocation5 + $0x3e8] sm:$0xff]
    %v269 = vld [vmem:[#allocation5 + $0x3f0] sm:$0xff]
    %v270 = vld [vmem:[#allocation5 + $0x3f8] sm:$0xff]
    %v271 = vld [vmem:[#allocation5 + $0x400] sm:$0xff]
    %v272 = vld [vmem:[#allocation5 + $0x408] sm:$0xff]
    %v273 = vld [vmem:[#allocation5 + $0x410] sm:$0xff]
    %v274 = vld [vmem:[#allocation5 + $0x418] sm:$0xff]
    %v275 = vld [vmem:[#allocation5 + $0x420] sm:$0xff]
    %v276 = vld [vmem:[#allocation5 + $0x428] sm:$0xff]
    %v277 = vld [vmem:[#allocation5 + $0x430] sm:$0xff]
    %v278 = vld [vmem:[#allocation5 + $0x438] sm:$0xff]
    %v279 = vld [vmem:[#allocation5 + $0x440] sm:$0xff]
    %v280 = vld [vmem:[#allocation5 + $0x448] sm:$0xff]
    %v281 = vld [vmem:[#allocation5 + $0x450] sm:$0xff]
    %v282 = vld [vmem:[#allocation5 + $0x458] sm:$0xff]
    %v283 = vld [vmem:[#allocation5 + $0x460] sm:$0xff]
    %v284 = vld [vmem:[#allocation5 + $0x468] sm:$0xff]
    %v285 = vld [vmem:[#allocation5 + $0x470] sm:$0xff]
    %v286 = vld [vmem:[#allocation5 + $0x478] sm:$0xff]
    %v287 = vld [vmem:[#allocation5 + $0x480] sm:$0xff]
    %v288 = vld [vmem:[#allocation5 + $0x488] sm:$0xff]
    %v289 = vld [vmem:[#allocation5 + $0x490] sm:$0xff]
    %v290 = vld [vmem:[#allocation5 + $0x498] sm:$0xff]
    %v291 = vld [vmem:[#allocation5 + $0x4a0] sm:$0xff]
    %v292 = vld [vmem:[#allocation5 + $0x4a8] sm:$0xff]
    %v293 = vld [vmem:[#allocation5 + $0x4b0] sm:$0xff]
    %v294 = vld [vmem:[#allocation5 + $0x4b8] sm:$0xff]
    %v295 = vld [vmem:[#allocation5 + $0x4c0] sm:$0xff]
    %v296 = vld [vmem:[#allocation5 + $0x4c8] sm:$0xff]
    %v297 = vld [vmem:[#allocation5 + $0x4d0] sm:$0xff]
    %v298 = vld [vmem:[#allocation5 + $0x4d8] sm:$0xff]
    %v299 = vld [vmem:[#allocation5 + $0x4e0] sm:$0xff]
    %v300 = vld [vmem:[#allocation5 + $0x4e8] sm:$0xff]
    %v301 = vld [vmem:[#allocation5 + $0x4f0] sm:$0xff]
    %v302 = vld [vmem:[#allocation5 + $0x4f8] sm:$0xff]
    %v303 = vld [vmem:[#allocation5 + $0x500] sm:$0xff]
    %v304 = vld [vmem:[#allocation5 + $0x508] sm:$0xff]
    %v305 = vld [vmem:[#allocation5 + $0x510] sm:$0xff]
    %v306 = vld [vmem:[#allocation5 + $0x518] sm:$0xff]
    %v307 = vld [vmem:[#allocation5 + $0x520] sm:$0xff]
    %v308 = vld [vmem:[#allocation5 + $0x528] sm:$0xff]
    %v309 = vld [vmem:[#allocation5 + $0x530] sm:$0xff]
    %v310 = vld [vmem:[#allocation5 + $0x538] sm:$0xff]
    %v311 = vld [vmem:[#allocation5 + $0x540] sm:$0xff]
    %v312 = vld [vmem:[#allocation5 + $0x548] sm:$0xff]
    %v313 = vld [vmem:[#allocation5 + $0x550] sm:$0xff]
    %v314 = vld [vmem:[#allocation5 + $0x558] sm:$0xff]
    %v315 = vld [vmem:[#allocation5 + $0x560] sm:$0xff]
    %v316 = vld [vmem:[#allocation5 + $0x568] sm:$0xff]
    %v317 = vld [vmem:[#allocation5 + $0x570] sm:$0xff]
    %v318 = vld [vmem:[#allocation5 + $0x578] sm:$0xff]
    %v319 = vld [vmem:[#allocation5 + $0x580] sm:$0xff]
    %v320 = vld [vmem:[#allocation5 + $0x588] sm:$0xff]
    %v321 = vld [vmem:[#allocation5 + $0x590] sm:$0xff]
    %v322 = vld [vmem:[#allocation5 + $0x598] sm:$0xff]
    %v323 = vld [vmem:[#allocation5 + $0x5a0] sm:$0xff]
    %v324 = vld [vmem:[#allocation5 + $0x5a8] sm:$0xff]
    %v325 = vld [vmem:[#allocation5 + $0x5b0] sm:$0xff]
    %v326 = vld [vmem:[#allocation5 + $0x5b8] sm:$0xff]
    %v327 = vld [vmem:[#allocation5 + $0x5c0] sm:$0xff]
    %v328 = vld [vmem:[#allocation5 + $0x5c8] sm:$0xff]
    %v329 = vld [vmem:[#allocation5 + $0x5d0] sm:$0xff]
    %v330 = vld [vmem:[#allocation5 + $0x5d8] sm:$0xff]
    %v331 = vld [vmem:[#allocation5 + $0x5e0] sm:$0xff]
    %v332 = vld [vmem:[#allocation5 + $0x5e8] sm:$0xff]
    %v333 = vld [vmem:[#allocation5 + $0x5f0] sm:$0xff]
    %v334 = vld [vmem:[#allocation5 + $0x5f8] sm:$0xff]
    %v335 = vld [vmem:[#allocation5 + $0x600] sm:$0xff]
    %v336 = vld [vmem:[#allocation5 + $0x608] sm:$0xff]
    %v337 = vld [vmem:[#allocation5 + $0x610] sm:$0xff]
    %v338 = vld [vmem:[#allocation5 + $0x618] sm:$0xff]
    %v339 = vld [vmem:[%s2] sm:$0xf]
    %v341 = vlaneseq
    %v342 = vshrl.u32 %v341, 7
    %v343 = vsub.s32 0, %v342
    %v344 = vrot.slane %v339, %v343
    %v345 = vlaneseq
    %v346 = vshrl.u32 %v345, 7
    %v347 = vsub.s32 1, %v346
    %v348 = vrot.slane %v339, %v347
    %v349 = vlaneseq
    %v350 = vshrl.u32 %v349, 7
    %v351 = vsub.s32 2, %v350
    %v352 = vrot.slane %v339, %v351
    %v353 = vlaneseq
    %v354 = vshrl.u32 %v353, 7
    %v355 = vsub.s32 3, %v354
    %v356 = vrot.slane %v339, %v355
    %v365 = vunpack.c.l.b16 %v139
    %v366 = vunpack.c.h.b16 %v139
    %v367 = vunpack.c.l.b16 %v140
    %v368 = vunpack.c.h.b16 %v140
    %v369 = vunpack.c.l.b16 %v141
    %v370 = vunpack.c.h.b16 %v141
    %v371 = vunpack.c.l.b16 %v142
    %v372 = vpack.c.b16 %v365, %v365
    %v373 = vpack.c.b16 %v366, %v366
    %v374 = vpack.c.b16 %v367, %v367
    %v375 = vpack.c.b16 %v368, %v368
    %v376 = vpack.c.b16 %v369, %v369
    %v377 = vpack.c.b16 %v370, %v370
    %v378 = vpack.c.b16 %v371, %v371
    %v581 = vunpack.c.l.b16 %v143
    %v582 = vunpack.c.h.b16 %v143
    %v583 = vunpack.c.l.b16 %v144
    %v584 = vunpack.c.h.b16 %v144
    %v585 = vunpack.c.l.b16 %v145
    %v586 = vunpack.c.h.b16 %v145
    %v587 = vunpack.c.l.b16 %v146
    %v588 = vunpack.c.h.b16 %v146
    %v589 = vunpack.c.l.b16 %v147
    %v590 = vunpack.c.h.b16 %v147
    %v591 = vunpack.c.l.b16 %v148
    %v592 = vunpack.c.h.b16 %v148
    %v593 = vunpack.c.l.b16 %v149
    %v594 = vunpack.c.h.b16 %v149
    %v595 = vunpack.c.l.b16 %v150
    %v596 = vunpack.c.h.b16 %v150
    %v597 = vunpack.c.l.b16 %v151
    %v598 = vunpack.c.h.b16 %v151
    %v599 = vunpack.c.l.b16 %v152
    %v600 = vunpack.c.h.b16 %v152
    %v601 = vunpack.c.l.b16 %v153
    %v602 = vunpack.c.h.b16 %v153
    %v603 = vunpack.c.l.b16 %v154
    %v604 = vunpack.c.h.b16 %v154
    %v605 = vunpack.c.l.b16 %v155
    %v606 = vunpack.c.h.b16 %v155
    %v607 = vunpack.c.l.b16 %v156
    %v608 = vunpack.c.h.b16 %v156
    %v609 = vunpack.c.l.b16 %v157
    %v610 = vunpack.c.h.b16 %v157
    %v611 = vunpack.c.l.b16 %v158
    %v612 = vunpack.c.h.b16 %v158
    %v613 = vunpack.c.l.b16 %v159
    %v614 = vunpack.c.h.b16 %v159
    %v615 = vunpack.c.l.b16 %v160
    %v616 = vunpack.c.h.b16 %v160
    %v617 = vunpack.c.l.b16 %v161
    %v618 = vunpack.c.h.b16 %v161
    %v619 = vunpack.c.l.b16 %v162
    %v620 = vunpack.c.h.b16 %v162
    %v621 = vunpack.c.l.b16 %v163
    %v622 = vunpack.c.h.b16 %v163
    %v623 = vunpack.c.l.b16 %v164
    %v624 = vunpack.c.h.b16 %v164
    %v625 = vunpack.c.l.b16 %v165
    %v626 = vunpack.c.h.b16 %v165
    %v627 = vunpack.c.l.b16 %v166
    %v628 = vunpack.c.h.b16 %v166
    %v629 = vunpack.c.l.b16 %v167
    %v630 = vunpack.c.h.b16 %v167
    %v631 = vunpack.c.l.b16 %v168
    %v632 = vunpack.c.h.b16 %v168
    %v633 = vunpack.c.l.b16 %v169
    %v634 = vunpack.c.h.b16 %v169
    %v635 = vunpack.c.l.b16 %v170
    %v636 = vunpack.c.h.b16 %v170
    %v637 = vunpack.c.l.b16 %v171
    %v638 = vunpack.c.h.b16 %v171
    %v639 = vunpack.c.l.b16 %v172
    %v640 = vunpack.c.h.b16 %v172
    %v641 = vunpack.c.l.b16 %v173
    %v642 = vunpack.c.h.b16 %v173
    %v643 = vunpack.c.l.b16 %v174
    %v644 = vunpack.c.h.b16 %v174
    %v645 = vunpack.c.l.b16 %v175
    %v646 = vunpack.c.h.b16 %v175
    %v647 = vunpack.c.l.b16 %v176
    %v648 = vunpack.c.h.b16 %v176
    %v649 = vunpack.c.l.b16 %v177
    %v650 = vunpack.c.h.b16 %v177
    %v651 = vunpack.c.l.b16 %v178
    %v652 = vunpack.c.h.b16 %v178
    %v653 = vunpack.c.l.b16 %v179
    %v654 = vunpack.c.h.b16 %v179
    %v655 = vunpack.c.l.b16 %v180
    %v656 = vunpack.c.h.b16 %v180
    %v657 = vunpack.c.l.b16 %v181
    %v658 = vunpack.c.h.b16 %v181
    %v659 = vunpack.c.l.b16 %v182
    %v660 = vunpack.c.h.b16 %v182
    %v661 = vunpack.c.l.b16 %v183
    %v662 = vunpack.c.h.b16 %v183
    %v663 = vunpack.c.l.b16 %v184
    %v664 = vunpack.c.h.b16 %v184
    %v665 = vunpack.c.l.b16 %v185
    %v666 = vunpack.c.h.b16 %v185
    %v667 = vunpack.c.l.b16 %v186
    %v668 = vunpack.c.h.b16 %v186
    %v669 = vunpack.c.l.b16 %v187
    %v670 = vunpack.c.h.b16 %v187
    %v671 = vunpack.c.l.b16 %v188
    %v672 = vunpack.c.h.b16 %v188
    %v673 = vunpack.c.l.b16 %v189
    %v674 = vunpack.c.h.b16 %v189
    %v675 = vunpack.c.l.b16 %v190
    %v676 = vunpack.c.h.b16 %v190
    %v677 = vunpack.c.l.b16 %v191
    %v678 = vunpack.c.h.b16 %v191
    %v679 = vunpack.c.l.b16 %v192
    %v680 = vunpack.c.h.b16 %v192
    %v681 = vunpack.c.l.b16 %v193
    %v682 = vunpack.c.h.b16 %v193
    %v683 = vunpack.c.l.b16 %v194
    %v684 = vunpack.c.h.b16 %v194
    %v685 = vunpack.c.l.b16 %v195
    %v686 = vunpack.c.h.b16 %v195
    %v687 = vunpack.c.l.b16 %v196
    %v688 = vunpack.c.h.b16 %v196
    %v689 = vunpack.c.l.b16 %v197
    %v690 = vunpack.c.h.b16 %v197
    %v691 = vunpack.c.l.b16 %v198
    %v692 = vunpack.c.h.b16 %v198
    %v693 = vunpack.c.l.b16 %v199
    %v694 = vunpack.c.h.b16 %v199
    %v695 = vunpack.c.l.b16 %v200
    %v696 = vunpack.c.h.b16 %v200
    %v697 = vunpack.c.l.b16 %v201
    %v698 = vunpack.c.h.b16 %v201
    %v699 = vunpack.c.l.b16 %v202
    %v700 = vunpack.c.h.b16 %v202
    %v701 = vunpack.c.l.b16 %v203
    %v702 = vunpack.c.h.b16 %v203
    %v703 = vunpack.c.l.b16 %v204
    %v704 = vunpack.c.h.b16 %v204
    %v705 = vunpack.c.l.b16 %v205
    %v706 = vunpack.c.h.b16 %v205
    %v707 = vunpack.c.l.b16 %v206
    %v708 = vunpack.c.h.b16 %v206
    %v709 = vunpack.c.l.b16 %v207
    %v710 = vunpack.c.h.b16 %v207
    %v711 = vunpack.c.l.b16 %v208
    %v712 = vunpack.c.h.b16 %v208
    %v713 = vunpack.c.l.b16 %v209
    %v714 = vunpack.c.h.b16 %v209
    %v715 = vunpack.c.l.b16 %v210
    %v716 = vunpack.c.h.b16 %v210
    %v717 = vunpack.c.l.b16 %v211
    %v718 = vunpack.c.h.b16 %v211
    %v719 = vunpack.c.l.b16 %v212
    %v720 = vunpack.c.h.b16 %v212
    %v721 = vunpack.c.l.b16 %v213
    %v722 = vunpack.c.h.b16 %v213
    %v723 = vunpack.c.l.b16 %v214
    %v724 = vunpack.c.h.b16 %v214
    %v725 = vunpack.c.l.b16 %v215
    %v726 = vunpack.c.h.b16 %v215
    %v727 = vunpack.c.l.b16 %v216
    %v728 = vunpack.c.h.b16 %v216
    %v729 = vunpack.c.l.b16 %v217
    %v730 = vunpack.c.h.b16 %v217
    %v731 = vunpack.c.l.b16 %v218
    %v732 = vunpack.c.h.b16 %v218
    %v733 = vunpack.c.l.b16 %v219
    %v734 = vunpack.c.h.b16 %v219
    %v735 = vunpack.c.l.b16 %v220
    %v736 = vunpack.c.h.b16 %v220
    %v737 = vunpack.c.l.b16 %v221
    %v738 = vunpack.c.h.b16 %v221
    %v739 = vunpack.c.l.b16 %v222
    %v740 = vunpack.c.h.b16 %v222
    %v741 = vunpack.c.l.b16 %v223
    %v742 = vunpack.c.h.b16 %v223
    %v743 = vunpack.c.l.b16 %v224
    %v744 = vunpack.c.h.b16 %v224
    %v745 = vunpack.c.l.b16 %v225
    %v746 = vunpack.c.h.b16 %v225
    %v747 = vunpack.c.l.b16 %v226
    %v748 = vunpack.c.h.b16 %v226
    %v749 = vunpack.c.l.b16 %v227
    %v750 = vunpack.c.h.b16 %v227
    %v751 = vunpack.c.l.b16 %v228
    %v752 = vunpack.c.h.b16 %v228
    %v753 = vunpack.c.l.b16 %v229
    %v754 = vunpack.c.h.b16 %v229
    %v755 = vunpack.c.l.b16 %v230
    %v756 = vunpack.c.h.b16 %v230
    %v757 = vunpack.c.l.b16 %v231
    %v758 = vunpack.c.h.b16 %v231
    %v759 = vunpack.c.l.b16 %v232
    %v760 = vunpack.c.h.b16 %v232
    %v761 = vunpack.c.l.b16 %v233
    %v762 = vunpack.c.h.b16 %v233
    %v763 = vunpack.c.l.b16 %v234
    %v764 = vunpack.c.h.b16 %v234
    %v765 = vunpack.c.l.b16 %v235
    %v766 = vunpack.c.h.b16 %v235
    %v767 = vunpack.c.l.b16 %v236
    %v768 = vunpack.c.h.b16 %v236
    %v769 = vunpack.c.l.b16 %v237
    %v770 = vunpack.c.h.b16 %v237
    %v771 = vunpack.c.l.b16 %v238
    %v772 = vunpack.c.h.b16 %v238
    %v773 = vunpack.c.l.b16 %v239
    %v774 = vunpack.c.h.b16 %v239
    %v775 = vunpack.c.l.b16 %v240
    %v776 = vunpack.c.h.b16 %v240
    %v777 = vunpack.c.l.b16 %v241
    %v778 = vunpack.c.h.b16 %v241
    %v779 = vunpack.c.l.b16 %v242
    %v780 = vunpack.c.h.b16 %v242
    %v781 = vunpack.c.l.b16 %v243
    %v782 = vunpack.c.h.b16 %v243
    %v783 = vunpack.c.l.b16 %v244
    %v784 = vunpack.c.h.b16 %v244
    %v785 = vunpack.c.l.b16 %v245
    %v786 = vunpack.c.h.b16 %v245
    %v787 = vunpack.c.l.b16 %v246
    %v788 = vunpack.c.h.b16 %v246
    %v789 = vunpack.c.l.b16 %v247
    %v790 = vunpack.c.h.b16 %v247
    %v791 = vunpack.c.l.b16 %v248
    %v792 = vunpack.c.h.b16 %v248
    %v793 = vunpack.c.l.b16 %v249
    %v794 = vunpack.c.h.b16 %v249
    %v795 = vunpack.c.l.b16 %v250
    %v796 = vunpack.c.h.b16 %v250
    %v797 = vunpack.c.l.b16 %v251
    %v798 = vunpack.c.h.b16 %v251
    %v799 = vunpack.c.l.b16 %v252
    %v800 = vunpack.c.h.b16 %v252
    %v801 = vunpack.c.l.b16 %v253
    %v802 = vunpack.c.h.b16 %v253
    %v803 = vunpack.c.l.b16 %v254
    %v804 = vunpack.c.h.b16 %v254
    %v805 = vunpack.c.l.b16 %v255
    %v806 = vunpack.c.h.b16 %v255
    %v807 = vunpack.c.l.b16 %v256
    %v808 = vunpack.c.h.b16 %v256
    %v809 = vunpack.c.l.b16 %v257
    %v810 = vunpack.c.h.b16 %v257
    %v811 = vunpack.c.l.b16 %v258
    %v812 = vunpack.c.h.b16 %v258
    %v813 = vunpack.c.l.b16 %v259
    %v814 = vunpack.c.h.b16 %v259
    %v815 = vunpack.c.l.b16 %v260
    %v816 = vunpack.c.h.b16 %v260
    %v817 = vunpack.c.l.b16 %v261
    %v818 = vunpack.c.h.b16 %v261
    %v819 = vunpack.c.l.b16 %v262
    %v820 = vunpack.c.h.b16 %v262
    %v821 = vunpack.c.l.b16 %v263
    %v822 = vunpack.c.h.b16 %v263
    %v823 = vunpack.c.l.b16 %v264
    %v824 = vunpack.c.h.b16 %v264
    %v825 = vunpack.c.l.b16 %v265
    %v826 = vunpack.c.h.b16 %v265
    %v827 = vunpack.c.l.b16 %v266
    %v828 = vunpack.c.h.b16 %v266
    %v829 = vunpack.c.l.b16 %v267
    %v830 = vunpack.c.h.b16 %v267
    %v831 = vunpack.c.l.b16 %v268
    %v832 = vunpack.c.h.b16 %v268
    %v833 = vunpack.c.l.b16 %v269
    %v834 = vunpack.c.h.b16 %v269
    %v835 = vunpack.c.l.b16 %v270
    %v836 = vunpack.c.h.b16 %v270
    %v837 = vunpack.c.l.b16 %v271
    %v838 = vunpack.c.h.b16 %v271
    %v839 = vunpack.c.l.b16 %v272
    %v840 = vunpack.c.h.b16 %v272
    %v841 = vunpack.c.l.b16 %v273
    %v842 = vunpack.c.h.b16 %v273
    %v843 = vunpack.c.l.b16 %v274
    %v844 = vunpack.c.h.b16 %v274
    %v845 = vunpack.c.l.b16 %v275
    %v846 = vunpack.c.h.b16 %v275
    %v847 = vunpack.c.l.b16 %v276
    %v848 = vunpack.c.h.b16 %v276
    %v849 = vunpack.c.l.b16 %v277
    %v850 = vunpack.c.h.b16 %v277
    %v851 = vunpack.c.l.b16 %v278
    %v852 = vunpack.c.h.b16 %v278
    %v853 = vunpack.c.l.b16 %v279
    %v854 = vunpack.c.h.b16 %v279
    %v855 = vunpack.c.l.b16 %v280
    %v856 = vunpack.c.h.b16 %v280
    %v857 = vunpack.c.l.b16 %v281
    %v858 = vunpack.c.h.b16 %v281
    %v859 = vunpack.c.l.b16 %v282
    %v860 = vunpack.c.h.b16 %v282
    %v861 = vunpack.c.l.b16 %v283
    %v862 = vunpack.c.h.b16 %v283
    %v863 = vunpack.c.l.b16 %v284
    %v864 = vunpack.c.h.b16 %v284
    %v865 = vunpack.c.l.b16 %v285
    %v866 = vunpack.c.h.b16 %v285
    %v867 = vunpack.c.l.b16 %v286
    %v868 = vunpack.c.h.b16 %v286
    %v869 = vunpack.c.l.b16 %v287
    %v870 = vunpack.c.h.b16 %v287
    %v871 = vunpack.c.l.b16 %v288
    %v872 = vunpack.c.h.b16 %v288
    %v873 = vunpack.c.l.b16 %v289
    %v874 = vunpack.c.h.b16 %v289
    %v875 = vunpack.c.l.b16 %v290
    %v876 = vunpack.c.h.b16 %v290
    %v877 = vunpack.c.l.b16 %v291
    %v878 = vunpack.c.h.b16 %v291
    %v879 = vunpack.c.l.b16 %v292
    %v880 = vunpack.c.h.b16 %v292
    %v881 = vunpack.c.l.b16 %v293
    %v882 = vunpack.c.h.b16 %v293
    %v883 = vunpack.c.l.b16 %v294
    %v884 = vunpack.c.h.b16 %v294
    %v885 = vunpack.c.l.b16 %v295
    %v886 = vunpack.c.h.b16 %v295
    %v887 = vunpack.c.l.b16 %v296
    %v888 = vunpack.c.h.b16 %v296
    %v889 = vunpack.c.l.b16 %v297
    %v890 = vunpack.c.h.b16 %v297
    %v891 = vunpack.c.l.b16 %v298
    %v892 = vunpack.c.h.b16 %v298
    %v893 = vunpack.c.l.b16 %v299
    %v894 = vunpack.c.h.b16 %v299
    %v895 = vunpack.c.l.b16 %v300
    %v896 = vunpack.c.h.b16 %v300
    %v897 = vunpack.c.l.b16 %v301
    %v898 = vunpack.c.h.b16 %v301
    %v899 = vunpack.c.l.b16 %v302
    %v900 = vunpack.c.h.b16 %v302
    %v901 = vunpack.c.l.b16 %v303
    %v902 = vunpack.c.h.b16 %v303
    %v903 = vunpack.c.l.b16 %v304
    %v904 = vunpack.c.h.b16 %v304
    %v905 = vunpack.c.l.b16 %v305
    %v906 = vunpack.c.h.b16 %v305
    %v907 = vunpack.c.l.b16 %v306
    %v908 = vunpack.c.h.b16 %v306
    %v909 = vunpack.c.l.b16 %v307
    %v910 = vunpack.c.h.b16 %v307
    %v911 = vunpack.c.l.b16 %v308
    %v912 = vunpack.c.h.b16 %v308
    %v913 = vunpack.c.l.b16 %v309
    %v914 = vunpack.c.h.b16 %v309
    %v915 = vunpack.c.l.b16 %v310
    %v916 = vunpack.c.h.b16 %v310
    %v917 = vunpack.c.l.b16 %v311
    %v918 = vunpack.c.h.b16 %v311
    %v919 = vunpack.c.l.b16 %v312
    %v920 = vunpack.c.h.b16 %v312
    %v921 = vunpack.c.l.b16 %v313
    %v922 = vunpack.c.h.b16 %v313
    %v923 = vunpack.c.l.b16 %v314
    %v924 = vunpack.c.h.b16 %v314
    %v925 = vunpack.c.l.b16 %v315
    %v926 = vunpack.c.h.b16 %v315
    %v927 = vunpack.c.l.b16 %v316
    %v928 = vunpack.c.h.b16 %v316
    %v929 = vunpack.c.l.b16 %v317
    %v930 = vunpack.c.h.b16 %v317
    %v931 = vunpack.c.l.b16 %v318
    %v932 = vunpack.c.h.b16 %v318
    %v933 = vunpack.c.l.b16 %v319
    %v934 = vunpack.c.h.b16 %v319
    %v935 = vunpack.c.l.b16 %v320
    %v936 = vunpack.c.h.b16 %v320
    %v937 = vunpack.c.l.b16 %v321
    %v938 = vunpack.c.h.b16 %v321
    %v939 = vunpack.c.l.b16 %v322
    %v940 = vunpack.c.h.b16 %v322
    %v941 = vunpack.c.l.b16 %v323
    %v942 = vunpack.c.h.b16 %v323
    %v943 = vunpack.c.l.b16 %v324
    %v944 = vunpack.c.h.b16 %v324
    %v945 = vunpack.c.l.b16 %v325
    %v946 = vunpack.c.h.b16 %v325
    %v947 = vunpack.c.l.b16 %v326
    %v948 = vunpack.c.h.b16 %v326
    %v949 = vunpack.c.l.b16 %v327
    %v950 = vunpack.c.h.b16 %v327
    %v951 = vunpack.c.l.b16 %v328
    %v952 = vunpack.c.h.b16 %v328
    %v953 = vunpack.c.l.b16 %v329
    %v954 = vunpack.c.h.b16 %v329
    %v955 = vunpack.c.l.b16 %v330
    %v956 = vunpack.c.h.b16 %v330
    %v957 = vunpack.c.l.b16 %v331
    %v958 = vunpack.c.h.b16 %v331
    %v959 = vunpack.c.l.b16 %v332
    %v960 = vunpack.c.h.b16 %v332
    %v961 = vunpack.c.l.b16 %v333
    %v962 = vunpack.c.h.b16 %v333
    %v963 = vunpack.c.l.b16 %v334
    %v964 = vunpack.c.h.b16 %v334
    %v965 = vunpack.c.l.b16 %v335
    %v966 = vunpack.c.h.b16 %v335
    %v967 = vunpack.c.l.b16 %v336
    %v968 = vunpack.c.h.b16 %v336
    %v969 = vunpack.c.l.b16 %v337
    %v970 = vunpack.c.h.b16 %v337
    %v971 = vunpack.c.l.b16 %v338
    %v972 = vunpack.c.h.b16 %v338
    %v973 = vpack.c.b16 %v585, %v581
    %v974 = vpack.c.b16 %v586, %v582
    %v975 = vpack.c.b16 %v587, %v583
    %v976 = vpack.c.b16 %v588, %v584
    %v977 = vpack.c.b16 %v593, %v589
    %v978 = vpack.c.b16 %v594, %v590
    %v979 = vpack.c.b16 %v595, %v591
    %v980 = vpack.c.b16 %v596, %v592
    %v981 = vpack.c.b16 %v601, %v597
    %v982 = vpack.c.b16 %v602, %v598
    %v983 = vpack.c.b16 %v603, %v599
    %v984 = vpack.c.b16 %v604, %v600
    %v985 = vpack.c.b16 %v609, %v605
    %v986 = vpack.c.b16 %v610, %v606
    %v987 = vpack.c.b16 %v611, %v607
    %v988 = vpack.c.b16 %v612, %v608
    %v989 = vpack.c.b16 %v617, %v613
    %v990 = vpack.c.b16 %v618, %v614
    %v991 = vpack.c.b16 %v619, %v615
    %v992 = vpack.c.b16 %v620, %v616
    %v993 = vpack.c.b16 %v625, %v621
    %v994 = vpack.c.b16 %v626, %v622
    %v995 = vpack.c.b16 %v627, %v623
    %v996 = vpack.c.b16 %v628, %v624
    %v997 = vpack.c.b16 %v633, %v629
    %v998 = vpack.c.b16 %v634, %v630
    %v999 = vpack.c.b16 %v635, %v631
    %v1000 = vpack.c.b16 %v636, %v632
    %v1001 = vpack.c.b16 %v641, %v637
    %v1002 = vpack.c.b16 %v642, %v638
    %v1003 = vpack.c.b16 %v643, %v639
    %v1004 = vpack.c.b16 %v644, %v640
    %v1005 = vpack.c.b16 %v649, %v645
    %v1006 = vpack.c.b16 %v650, %v646
    %v1007 = vpack.c.b16 %v651, %v647
    %v1008 = vpack.c.b16 %v652, %v648
    %v1009 = vpack.c.b16 %v657, %v653
    %v1010 = vpack.c.b16 %v658, %v654
    %v1011 = vpack.c.b16 %v659, %v655
    %v1012 = vpack.c.b16 %v660, %v656
    %v1013 = vpack.c.b16 %v665, %v661
    %v1014 = vpack.c.b16 %v666, %v662
    %v1015 = vpack.c.b16 %v667, %v663
    %v1016 = vpack.c.b16 %v668, %v664
    %v1017 = vpack.c.b16 %v673, %v669
    %v1018 = vpack.c.b16 %v674, %v670
    %v1019 = vpack.c.b16 %v675, %v671
    %v1020 = vpack.c.b16 %v676, %v672
    %v1021 = vpack.c.b16 %v681, %v677
    %v1022 = vpack.c.b16 %v682, %v678
    %v1023 = vpack.c.b16 %v683, %v679
    %v1024 = vpack.c.b16 %v684, %v680
    %v1025 = vpack.c.b16 %v689, %v685
    %v1026 = vpack.c.b16 %v690, %v686
    %v1027 = vpack.c.b16 %v691, %v687
    %v1028 = vpack.c.b16 %v692, %v688
    %v1029 = vpack.c.b16 %v697, %v693
    %v1030 = vpack.c.b16 %v698, %v694
    %v1031 = vpack.c.b16 %v699, %v695
    %v1032 = vpack.c.b16 %v700, %v696
    %v1033 = vpack.c.b16 %v705, %v701
    %v1034 = vpack.c.b16 %v706, %v702
    %v1035 = vpack.c.b16 %v707, %v703
    %v1036 = vpack.c.b16 %v708, %v704
    %v1037 = vpack.c.b16 %v713, %v709
    %v1038 = vpack.c.b16 %v714, %v710
    %v1039 = vpack.c.b16 %v715, %v711
    %v1040 = vpack.c.b16 %v716, %v712
    %v1041 = vpack.c.b16 %v721, %v717
    %v1042 = vpack.c.b16 %v722, %v718
    %v1043 = vpack.c.b16 %v723, %v719
    %v1044 = vpack.c.b16 %v724, %v720
    %v1045 = vpack.c.b16 %v729, %v725
    %v1046 = vpack.c.b16 %v730, %v726
    %v1047 = vpack.c.b16 %v731, %v727
    %v1048 = vpack.c.b16 %v732, %v728
    %v1049 = vpack.c.b16 %v737, %v733
    %v1050 = vpack.c.b16 %v738, %v734
    %v1051 = vpack.c.b16 %v739, %v735
    %v1052 = vpack.c.b16 %v740, %v736
    %v1053 = vpack.c.b16 %v745, %v741
    %v1054 = vpack.c.b16 %v746, %v742
    %v1055 = vpack.c.b16 %v747, %v743
    %v1056 = vpack.c.b16 %v748, %v744
    %v1057 = vpack.c.b16 %v753, %v749
    %v1058 = vpack.c.b16 %v754, %v750
    %v1059 = vpack.c.b16 %v755, %v751
    %v1060 = vpack.c.b16 %v756, %v752
    %v1061 = vpack.c.b16 %v761, %v757
    %v1062 = vpack.c.b16 %v762, %v758
    %v1063 = vpack.c.b16 %v763, %v759
    %v1064 = vpack.c.b16 %v764, %v760
    %v1065 = vpack.c.b16 %v769, %v765
    %v1066 = vpack.c.b16 %v770, %v766
    %v1067 = vpack.c.b16 %v771, %v767
    %v1068 = vpack.c.b16 %v772, %v768
    %v1069 = vpack.c.b16 %v777, %v773
    %v1070 = vpack.c.b16 %v778, %v774
    %v1071 = vpack.c.b16 %v779, %v775
    %v1072 = vpack.c.b16 %v780, %v776
    %v1073 = vpack.c.b16 %v785, %v781
    %v1074 = vpack.c.b16 %v786, %v782
    %v1075 = vpack.c.b16 %v787, %v783
    %v1076 = vpack.c.b16 %v788, %v784
    %v1077 = vpack.c.b16 %v793, %v789
    %v1078 = vpack.c.b16 %v794, %v790
    %v1079 = vpack.c.b16 %v795, %v791
    %v1080 = vpack.c.b16 %v796, %v792
    %v1081 = vpack.c.b16 %v801, %v797
    %v1082 = vpack.c.b16 %v802, %v798
    %v1083 = vpack.c.b16 %v803, %v799
    %v1084 = vpack.c.b16 %v804, %v800
    %v1085 = vpack.c.b16 %v809, %v805
    %v1086 = vpack.c.b16 %v810, %v806
    %v1087 = vpack.c.b16 %v811, %v807
    %v1088 = vpack.c.b16 %v812, %v808
    %v1089 = vpack.c.b16 %v817, %v813
    %v1090 = vpack.c.b16 %v818, %v814
    %v1091 = vpack.c.b16 %v819, %v815
    %v1092 = vpack.c.b16 %v820, %v816
    %v1093 = vpack.c.b16 %v825, %v821
    %v1094 = vpack.c.b16 %v826, %v822
    %v1095 = vpack.c.b16 %v827, %v823
    %v1096 = vpack.c.b16 %v828, %v824
    %v1097 = vpack.c.b16 %v833, %v829
    %v1098 = vpack.c.b16 %v834, %v830
    %v1099 = vpack.c.b16 %v835, %v831
    %v1100 = vpack.c.b16 %v836, %v832
    %v1101 = vpack.c.b16 %v841, %v837
    %v1102 = vpack.c.b16 %v842, %v838
    %v1103 = vpack.c.b16 %v843, %v839
    %v1104 = vpack.c.b16 %v844, %v840
    %v1105 = vpack.c.b16 %v849, %v845
    %v1106 = vpack.c.b16 %v850, %v846
    %v1107 = vpack.c.b16 %v851, %v847
    %v1108 = vpack.c.b16 %v852, %v848
    %v1109 = vpack.c.b16 %v857, %v853
    %v1110 = vpack.c.b16 %v858, %v854
    %v1111 = vpack.c.b16 %v859, %v855
    %v1112 = vpack.c.b16 %v860, %v856
    %v1113 = vpack.c.b16 %v865, %v861
    %v1114 = vpack.c.b16 %v866, %v862
    %v1115 = vpack.c.b16 %v867, %v863
    %v1116 = vpack.c.b16 %v868, %v864
    %v1117 = vpack.c.b16 %v873, %v869
    %v1118 = vpack.c.b16 %v874, %v870
    %v1119 = vpack.c.b16 %v875, %v871
    %v1120 = vpack.c.b16 %v876, %v872
    %v1121 = vpack.c.b16 %v881, %v877
    %v1122 = vpack.c.b16 %v882, %v878
    %v1123 = vpack.c.b16 %v883, %v879
    %v1124 = vpack.c.b16 %v884, %v880
    %v1125 = vpack.c.b16 %v889, %v885
    %v1126 = vpack.c.b16 %v890, %v886
    %v1127 = vpack.c.b16 %v891, %v887
    %v1128 = vpack.c.b16 %v892, %v888
    %v1129 = vpack.c.b16 %v897, %v893
    %v1130 = vpack.c.b16 %v898, %v894
    %v1131 = vpack.c.b16 %v899, %v895
    %v1132 = vpack.c.b16 %v900, %v896
    %v1133 = vpack.c.b16 %v905, %v901
    %v1134 = vpack.c.b16 %v906, %v902
    %v1135 = vpack.c.b16 %v907, %v903
    %v1136 = vpack.c.b16 %v908, %v904
    %v1137 = vpack.c.b16 %v913, %v909
    %v1138 = vpack.c.b16 %v914, %v910
    %v1139 = vpack.c.b16 %v915, %v911
    %v1140 = vpack.c.b16 %v916, %v912
    %v1141 = vpack.c.b16 %v921, %v917
    %v1142 = vpack.c.b16 %v922, %v918
    %v1143 = vpack.c.b16 %v923, %v919
    %v1144 = vpack.c.b16 %v924, %v920
    %v1145 = vpack.c.b16 %v929, %v925
    %v1146 = vpack.c.b16 %v930, %v926
    %v1147 = vpack.c.b16 %v931, %v927
    %v1148 = vpack.c.b16 %v932, %v928
    %v1149 = vpack.c.b16 %v937, %v933
    %v1150 = vpack.c.b16 %v938, %v934
    %v1151 = vpack.c.b16 %v939, %v935
    %v1152 = vpack.c.b16 %v940, %v936
    %v1153 = vpack.c.b16 %v945, %v941
    %v1154 = vpack.c.b16 %v946, %v942
    %v1155 = vpack.c.b16 %v947, %v943
    %v1156 = vpack.c.b16 %v948, %v944
    %v1157 = vpack.c.b16 %v953, %v949
    %v1158 = vpack.c.b16 %v954, %v950
    %v1159 = vpack.c.b16 %v955, %v951
    %v1160 = vpack.c.b16 %v956, %v952
    %v1161 = vpack.c.b16 %v961, %v957
    %v1162 = vpack.c.b16 %v962, %v958
    %v1163 = vpack.c.b16 %v963, %v959
    %v1164 = vpack.c.b16 %v964, %v960
    %v1165 = vpack.c.b16 %v969, %v965
    %v1166 = vpack.c.b16 %v970, %v966
    %v1167 = vpack.c.b16 %v971, %v967
    %v1168 = vpack.c.b16 %v972, %v968
    %vm1365 = vcmask 130048
    %v1367 = vsel %vm1365, %v378, 0
    %1369 = vmatprep.subr.bf16.mxu0 %v974
    %1370 = vmatpush1.bf16.msra.mxu0 %v973
    %1371 = vmatprep.subr.bf16.mxu0 %v978
    %1372 = vmatpush1.bf16.msra.mxu0 %v977
    %1373 = vmatprep.subr.bf16.mxu0 %v982
    %1374 = vmatpush1.bf16.msra.mxu0 %v981
    %1375 = vmatprep.subr.bf16.mxu0 %v986
    %1376 = vmatpush1.bf16.msra.mxu0 %v985
    %1377 = vmatprep.subr.bf16.mxu0 %v990
    %1378 = vmatpush1.bf16.msra.mxu0 %v989
    %1379 = vmatprep.subr.bf16.mxu0 %v994
    %1380 = vmatpush1.bf16.msra.mxu0 %v993
    %1381 = vmatprep.subr.bf16.mxu0 %v998
    %1382 = vmatpush1.bf16.msra.mxu0 %v997
    %1383 = vmatprep.subr.bf16.mxu0 %v1002
    %1384 = vmatpush1.bf16.msra.mxu0 %v1001
    %1385 = vmatprep.subr.bf16.mxu0 %v1006
    %1386 = vmatpush1.bf16.msra.mxu0 %v1005
    %1387 = vmatprep.subr.bf16.mxu0 %v1010
    %1388 = vmatpush1.bf16.msra.mxu0 %v1009
    %1389 = vmatprep.subr.bf16.mxu0 %v1014
    %1390 = vmatpush1.bf16.msra.mxu0 %v1013
    %1391 = vmatprep.subr.bf16.mxu0 %v1018
    %1392 = vmatpush1.bf16.msra.mxu0 %v1017
    %1393 = vmatprep.subr.bf16.mxu0 %v1022
    %1394 = vmatpush1.bf16.msra.mxu0 %v1021
    %1395 = vmatprep.subr.bf16.mxu0 %v1026
    %1396 = vmatpush1.bf16.msra.mxu0 %v1025
    %1397 = vmatprep.subr.bf16.mxu0 %v1030
    %1398 = vmatpush1.bf16.msra.mxu0 %v1029
    %1399 = vmatprep.subr.bf16.mxu0 %v1034
    %1400 = vmatpush1.bf16.msra.mxu0 %v1033
    %1401 = vmatprep.mubr.bf16.mxu0 %v373
    %1402 = vmatmul.mubr.bf16.gmra.mrb[0].mxu0 %v372
    %v1403 = vpop.f32.mrb[0].mxu0
    %v1404 = vadd.f32 %v344, %v1403
    %v1405 = vpop.f32.mrb[0].mxu0
    %v1406 = vadd.f32 %v348, %v1405
    %v1407 = vpop.f32.mrb[0].mxu0
    %v1408 = vpop.f32.mrb[0].mxu0
    %1409 = vdwg.mxu0
    %1410 = vmatprep.subr.bf16.mxu0 %v1038
    %1411 = vmatpush1.bf16.msra.mxu0 %v1037
    %1412 = vmatprep.subr.bf16.mxu0 %v1042
    %1413 = vmatpush1.bf16.msra.mxu0 %v1041
    %1414 = vmatprep.subr.bf16.mxu0 %v1046
    %1415 = vmatpush1.bf16.msra.mxu0 %v1045
    %1416 = vmatprep.subr.bf16.mxu0 %v1050
    %1417 = vmatpush1.bf16.msra.mxu0 %v1049
    %1418 = vmatprep.subr.bf16.mxu0 %v1054
    %1419 = vmatpush1.bf16.msra.mxu0 %v1053
    %1420 = vmatprep.subr.bf16.mxu0 %v1058
    %1421 = vmatpush1.bf16.msra.mxu0 %v1057
    %1422 = vmatprep.subr.bf16.mxu0 %v1062
    %1423 = vmatpush1.bf16.msra.mxu0 %v1061
    %1424 = vmatprep.subr.bf16.mxu0 %v1066
    %1425 = vmatpush1.bf16.msra.mxu0 %v1065
    %1426 = vmatprep.subr.bf16.mxu0 %v1070
    %1427 = vmatpush1.bf16.msra.mxu0 %v1069
    %1428 = vmatprep.subr.bf16.mxu0 %v1074
    %1429 = vmatpush1.bf16.msra.mxu0 %v1073
    %1430 = vmatprep.subr.bf16.mxu0 %v1078
    %1431 = vmatpush1.bf16.msra.mxu0 %v1077
    %1432 = vmatprep.subr.bf16.mxu0 %v1082
    %1433 = vmatpush1.bf16.msra.mxu0 %v1081
    %1434 = vmatprep.subr.bf16.mxu0 %v1086
    %1435 = vmatpush1.bf16.msra.mxu0 %v1085
    %1436 = vmatprep.subr.bf16.mxu0 %v1090
    %1437 = vmatpush1.bf16.msra.mxu0 %v1089
    %1438 = vmatprep.subr.bf16.mxu0 %v1094
    %1439 = vmatpush1.bf16.msra.mxu0 %v1093
    %1440 = vmatprep.subr.bf16.mxu0 %v1098
    %1441 = vmatpush1.bf16.msra.mxu0 %v1097
    %1442 = vmatprep.mubr.bf16.mxu0 %v375
    %1443 = vmatmul.mubr.bf16.gmra.mrb[0].mxu0 %v374
    %v1444 = vpop.f32.mrb[0].mxu0
    %v1445 = vadd.f32 %v1404, %v1444
    %v1446 = vpop.f32.mrb[0].mxu0
    %v1447 = vadd.f32 %v1406, %v1446
    %v1448 = vpop.f32.mrb[0].mxu0
    %v1449 = vpop.f32.mrb[0].mxu0
    %1450 = vdwg.mxu0
    %1451 = vmatprep.subr.bf16.mxu0 %v1102
    %1452 = vmatpush1.bf16.msra.mxu0 %v1101
    %1453 = vmatprep.subr.bf16.mxu0 %v1106
    %1454 = vmatpush1.bf16.msra.mxu0 %v1105
    %1455 = vmatprep.subr.bf16.mxu0 %v1110
    %1456 = vmatpush1.bf16.msra.mxu0 %v1109
    %1457 = vmatprep.subr.bf16.mxu0 %v1114
    %1458 = vmatpush1.bf16.msra.mxu0 %v1113
    %1459 = vmatprep.subr.bf16.mxu0 %v1118
    %1460 = vmatpush1.bf16.msra.mxu0 %v1117
    %1461 = vmatprep.subr.bf16.mxu0 %v1122
    %1462 = vmatpush1.bf16.msra.mxu0 %v1121
    %1463 = vmatprep.subr.bf16.mxu0 %v1126
    %1464 = vmatpush1.bf16.msra.mxu0 %v1125
    %1465 = vmatprep.subr.bf16.mxu0 %v1130
    %1466 = vmatpush1.bf16.msra.mxu0 %v1129
    %1467 = vmatprep.subr.bf16.mxu0 %v1134
    %1468 = vmatpush1.bf16.msra.mxu0 %v1133
    %1469 = vmatprep.subr.bf16.mxu0 %v1138
    %1470 = vmatpush1.bf16.msra.mxu0 %v1137
    %1471 = vmatprep.subr.bf16.mxu0 %v1142
    %1472 = vmatpush1.bf16.msra.mxu0 %v1141
    %1473 = vmatprep.subr.bf16.mxu0 %v1146
    %1474 = vmatpush1.bf16.msra.mxu0 %v1145
    %1475 = vmatprep.subr.bf16.mxu0 %v1150
    %1476 = vmatpush1.bf16.msra.mxu0 %v1149
    %1477 = vmatprep.subr.bf16.mxu0 %v1154
    %1478 = vmatpush1.bf16.msra.mxu0 %v1153
    %1479 = vmatprep.subr.bf16.mxu0 %v1158
    %1480 = vmatpush1.bf16.msra.mxu0 %v1157
    %1481 = vmatprep.subr.bf16.mxu0 %v1162
    %1482 = vmatpush1.bf16.msra.mxu0 %v1161
    %1483 = vmatprep.mubr.bf16.mxu0 %v377
    %1484 = vmatmul.mubr.bf16.gmra.mrb[0].mxu0 %v376
    %v1485 = vpop.f32.mrb[0].mxu0
    %v1486 = vadd.f32 %v1445, %v1485
    %v1487 = vpop.f32.mrb[0].mxu0
    %v1488 = vadd.f32 %v1447, %v1487
    %v1489 = vpop.f32.mrb[0].mxu0
    %v1490 = vpop.f32.mrb[0].mxu0
    %1491 = vdwg.mxu0
    %1492 = vmatprep.subr.bf16.mxu0 %v1166
    %1493 = vmatpush1.bf16.msra.mxu0 %v1165
    %1494 = vmatprep.subr.bf16.mxu0 0
    %1495 = vmatpush1.bf16.msra.mxu0 0
    %1496 = vmatprep.subr.bf16.mxu0 0
    %1497 = vmatpush1.bf16.msra.mxu0 0
    %1498 = vmatprep.subr.bf16.mxu0 0
    %1499 = vmatpush1.bf16.msra.mxu0 0
    %1500 = vmatprep.subr.bf16.mxu0 0
    %1501 = vmatpush1.bf16.msra.mxu0 0
    %1502 = vmatprep.subr.bf16.mxu0 0
    %1503 = vmatpush1.bf16.msra.mxu0 0
    %1504 = vmatprep.subr.bf16.mxu0 0
    %1505 = vmatpush1.bf16.msra.mxu0 0
    %1506 = vmatprep.subr.bf16.mxu0 0
    %1507 = vmatpush1.bf16.msra.mxu0 0
    %1508 = vmatprep.subr.bf16.mxu0 0
    %1509 = vmatpush1.bf16.msra.mxu0 0
    %1510 = vmatprep.subr.bf16.mxu0 0
    %1511 = vmatpush1.bf16.msra.mxu0 0
    %1512 = vmatprep.subr.bf16.mxu0 0
    %1513 = vmatpush1.bf16.msra.mxu0 0
    %1514 = vmatprep.subr.bf16.mxu0 0
    %1515 = vmatpush1.bf16.msra.mxu0 0
    %1516 = vmatprep.subr.bf16.mxu0 0
    %1517 = vmatpush1.bf16.msra.mxu0 0
    %1518 = vmatprep.subr.bf16.mxu0 0
    %1519 = vmatpush1.bf16.msra.mxu0 0
    %1520 = vmatprep.subr.bf16.mxu0 0
    %1521 = vmatpush1.bf16.msra.mxu0 0
    %1522 = vmatprep.subr.bf16.mxu0 0
    %1523 = vmatpush1.bf16.msra.mxu0 0
    %1524 = vmatprep.mubr.bf16.mxu0 0
    %1525 = vmatmul.mubr.bf16.gmra.mrb[0].mxu0 %v1367
    %v1526 = vpop.f32.mrb[0].mxu0
    %v1527 = vadd.f32 %v1486, %v1526
    %v1528 = vpop.f32.mrb[0].mxu0
    %v1529 = vadd.f32 %v1488, %v1528
    %v1530 = vpop.f32.mrb[0].mxu0
    %v1531 = vpop.f32.mrb[0].mxu0
    %1532 = vdwg.mxu0
    %1533 = vmatprep.subr.bf16.mxu0 %v976
    %1534 = vmatpush1.bf16.msra.mxu0 %v975
    %1535 = vmatprep.subr.bf16.mxu0 %v980
    %1536 = vmatpush1.bf16.msra.mxu0 %v979
    %1537 = vmatprep.subr.bf16.mxu0 %v984
    %1538 = vmatpush1.bf16.msra.mxu0 %v983
    %1539 = vmatprep.subr.bf16.mxu0 %v988
    %1540 = vmatpush1.bf16.msra.mxu0 %v987
    %1541 = vmatprep.subr.bf16.mxu0 %v992
    %1542 = vmatpush1.bf16.msra.mxu0 %v991
    %1543 = vmatprep.subr.bf16.mxu0 %v996
    %1544 = vmatpush1.bf16.msra.mxu0 %v995
    %1545 = vmatprep.subr.bf16.mxu0 %v1000
    %1546 = vmatpush1.bf16.msra.mxu0 %v999
    %1547 = vmatprep.subr.bf16.mxu0 %v1004
    %1548 = vmatpush1.bf16.msra.mxu0 %v1003
    %1549 = vmatprep.subr.bf16.mxu0 %v1008
    %1550 = vmatpush1.bf16.msra.mxu0 %v1007
    %1551 = vmatprep.subr.bf16.mxu0 %v1012
    %1552 = vmatpush1.bf16.msra.mxu0 %v1011
    %1553 = vmatprep.subr.bf16.mxu0 %v1016
    %1554 = vmatpush1.bf16.msra.mxu0 %v1015
    %1555 = vmatprep.subr.bf16.mxu0 %v1020
    %1556 = vmatpush1.bf16.msra.mxu0 %v1019
    %1557 = vmatprep.subr.bf16.mxu0 %v1024
    %1558 = vmatpush1.bf16.msra.mxu0 %v1023
    %1559 = vmatprep.subr.bf16.mxu0 %v1028
    %1560 = vmatpush1.bf16.msra.mxu0 %v1027
    %1561 = vmatprep.subr.bf16.mxu0 %v1032
    %1562 = vmatpush1.bf16.msra.mxu0 %v1031
    %1563 = vmatprep.subr.bf16.mxu0 %v1036
    %1564 = vmatpush1.bf16.msra.mxu0 %v1035
    %1565 = vmatprep.mubr.bf16.mxu0 %v373
    %1566 = vmatmul.mubr.bf16.gmra.mrb[0].mxu0 %v372
    %v1567 = vpop.f32.mrb[0].mxu0
    %v1568 = vadd.f32 %v352, %v1567
    %v1569 = vpop.f32.mrb[0].mxu0
    %v1570 = vadd.f32 %v356, %v1569
    %v1571 = vpop.f32.mrb[0].mxu0
    %v1572 = vpop.f32.mrb[0].mxu0
    %1573 = vdwg.mxu0
    %1574 = vmatprep.subr.bf16.mxu0 %v1040
    %1575 = vmatpush1.bf16.msra.mxu0 %v1039
    %1576 = vmatprep.subr.bf16.mxu0 %v1044
    %1577 = vmatpush1.bf16.msra.mxu0 %v1043
    %1578 = vmatprep.subr.bf16.mxu0 %v1048
    %1579 = vmatpush1.bf16.msra.mxu0 %v1047
    %1580 = vmatprep.subr.bf16.mxu0 %v1052
    %1581 = vmatpush1.bf16.msra.mxu0 %v1051
    %1582 = vmatprep.subr.bf16.mxu0 %v1056
    %1583 = vmatpush1.bf16.msra.mxu0 %v1055
    %1584 = vmatprep.subr.bf16.mxu0 %v1060
    %1585 = vmatpush1.bf16.msra.mxu0 %v1059
    %1586 = vmatprep.subr.bf16.mxu0 %v1064
    %1587 = vmatpush1.bf16.msra.mxu0 %v1063
    %1588 = vmatprep.subr.bf16.mxu0 %v1068
    %1589 = vmatpush1.bf16.msra.mxu0 %v1067
    %1590 = vmatprep.subr.bf16.mxu0 %v1072
    %1591 = vmatpush1.bf16.msra.mxu0 %v1071
    %1592 = vmatprep.subr.bf16.mxu0 %v1076
    %1593 = vmatpush1.bf16.msra.mxu0 %v1075
    %1594 = vmatprep.subr.bf16.mxu0 %v1080
    %1595 = vmatpush1.bf16.msra.mxu0 %v1079
    %1596 = vmatprep.subr.bf16.mxu0 %v1084
    %1597 = vmatpush1.bf16.msra.mxu0 %v1083
    %1598 = vmatprep.subr.bf16.mxu0 %v1088
    %1599 = vmatpush1.bf16.msra.mxu0 %v1087
    %1600 = vmatprep.subr.bf16.mxu0 %v1092
    %1601 = vmatpush1.bf16.msra.mxu0 %v1091
    %1602 = vmatprep.subr.bf16.mxu0 %v1096
    %1603 = vmatpush1.bf16.msra.mxu0 %v1095
    %1604 = vmatprep.subr.bf16.mxu0 %v1100
    %1605 = vmatpush1.bf16.msra.mxu0 %v1099
    %1606 = vmatprep.mubr.bf16.mxu0 %v375
    %1607 = vmatmul.mubr.bf16.gmra.mrb[0].mxu0 %v374
    %v1608 = vpop.f32.mrb[0].mxu0
    %v1609 = vadd.f32 %v1568, %v1608
    %v1610 = vpop.f32.mrb[0].mxu0
    %v1611 = vadd.f32 %v1570, %v1610
    %v1612 = vpop.f32.mrb[0].mxu0
    %v1613 = vpop.f32.mrb[0].mxu0
    %1614 = vdwg.mxu0
    %1615 = vmatprep.subr.bf16.mxu0 %v1104
    %1616 = vmatpush1.bf16.msra.mxu0 %v1103
    %1617 = vmatprep.subr.bf16.mxu0 %v1108
    %1618 = vmatpush1.bf16.msra.mxu0 %v1107
    %1619 = vmatprep.subr.bf16.mxu0 %v1112
    %1620 = vmatpush1.bf16.msra.mxu0 %v1111
    %1621 = vmatprep.subr.bf16.mxu0 %v1116
    %1622 = vmatpush1.bf16.msra.mxu0 %v1115
    %1623 = vmatprep.subr.bf16.mxu0 %v1120
    %1624 = vmatpush1.bf16.msra.mxu0 %v1119
    %1625 = vmatprep.subr.bf16.mxu0 %v1124
    %1626 = vmatpush1.bf16.msra.mxu0 %v1123
    %1627 = vmatprep.subr.bf16.mxu0 %v1128
    %1628 = vmatpush1.bf16.msra.mxu0 %v1127
    %1629 = vmatprep.subr.bf16.mxu0 %v1132
    %1630 = vmatpush1.bf16.msra.mxu0 %v1131
    %1631 = vmatprep.subr.bf16.mxu0 %v1136
    %1632 = vmatpush1.bf16.msra.mxu0 %v1135
    %1633 = vmatprep.subr.bf16.mxu0 %v1140
    %1634 = vmatpush1.bf16.msra.mxu0 %v1139
    %1635 = vmatprep.subr.bf16.mxu0 %v1144
    %1636 = vmatpush1.bf16.msra.mxu0 %v1143
    %1637 = vmatprep.subr.bf16.mxu0 %v1148
    %1638 = vmatpush1.bf16.msra.mxu0 %v1147
    %1639 = vmatprep.subr.bf16.mxu0 %v1152
    %1640 = vmatpush1.bf16.msra.mxu0 %v1151
    %1641 = vmatprep.subr.bf16.mxu0 %v1156
    %1642 = vmatpush1.bf16.msra.mxu0 %v1155
    %1643 = vmatprep.subr.bf16.mxu0 %v1160
    %1644 = vmatpush1.bf16.msra.mxu0 %v1159
    %1645 = vmatprep.subr.bf16.mxu0 %v1164
    %1646 = vmatpush1.bf16.msra.mxu0 %v1163
    %1647 = vmatprep.mubr.bf16.mxu0 %v377
    %1648 = vmatmul.mubr.bf16.gmra.mrb[0].mxu0 %v376
    %v1649 = vpop.f32.mrb[0].mxu0
    %v1650 = vadd.f32 %v1609, %v1649
    %v1651 = vpop.f32.mrb[0].mxu0
    %v1652 = vadd.f32 %v1611, %v1651
    %v1653 = vpop.f32.mrb[0].mxu0
    %v1654 = vpop.f32.mrb[0].mxu0
    %1655 = vdwg.mxu0
    %1656 = vmatprep.subr.bf16.mxu0 %v1168
    %1657 = vmatpush1.bf16.msra.mxu0 %v1167
    %1658 = vmatprep.subr.bf16.mxu0 0
    %1659 = vmatpush1.bf16.msra.mxu0 0
    %1660 = vmatprep.subr.bf16.mxu0 0
    %1661 = vmatpush1.bf16.msra.mxu0 0
    %1662 = vmatprep.subr.bf16.mxu0 0
    %1663 = vmatpush1.bf16.msra.mxu0 0
    %1664 = vmatprep.subr.bf16.mxu0 0
    %1665 = vmatpush1.bf16.msra.mxu0 0
    %1666 = vmatprep.subr.bf16.mxu0 0
    %1667 = vmatpush1.bf16.msra.mxu0 0
    %1668 = vmatprep.subr.bf16.mxu0 0
    %1669 = vmatpush1.bf16.msra.mxu0 0
    %1670 = vmatprep.subr.bf16.mxu0 0
    %1671 = vmatpush1.bf16.msra.mxu0 0
    %1672 = vmatprep.subr.bf16.mxu0 0
    %1673 = vmatpush1.bf16.msra.mxu0 0
    %1674 = vmatprep.subr.bf16.mxu0 0
    %1675 = vmatpush1.bf16.msra.mxu0 0
    %1676 = vmatprep.subr.bf16.mxu0 0
    %1677 = vmatpush1.bf16.msra.mxu0 0
    %1678 = vmatprep.subr.bf16.mxu0 0
    %1679 = vmatpush1.bf16.msra.mxu0 0
    %1680 = vmatprep.subr.bf16.mxu0 0
    %1681 = vmatpush1.bf16.msra.mxu0 0
    %1682 = vmatprep.subr.bf16.mxu0 0
    %1683 = vmatpush1.bf16.msra.mxu0 0
    %1684 = vmatprep.subr.bf16.mxu0 0
    %1685 = vmatpush1.bf16.msra.mxu0 0
    %1686 = vmatprep.subr.bf16.mxu0 0
    %1687 = vmatpush1.bf16.msra.mxu0 0
    %1688 = vmatprep.mubr.bf16.mxu0 0
    %1689 = vmatmul.mubr.bf16.gmra.mrb[0].mxu0 %v1367
    %v1690 = vpop.f32.mrb[0].mxu0
    %v1691 = vadd.f32 %v1650, %v1690
    %v1692 = vpop.f32.mrb[0].mxu0
    %v1693 = vadd.f32 %v1652, %v1692
    %v1694 = vpop.f32.mrb[0].mxu0
    %v1695 = vpop.f32.mrb[0].mxu0
    %1696 = vdwg.mxu0
    %v1697 = vmax.f32 %v1527, 0.0
    %v1698 = vmax.f32 %v1529, 0.0
    %v1699 = vmax.f32 %v1691, 0.0
    %v1700 = vmax.f32 %v1693, 0.0
    %v1701 = vpack.c.bf16 %v1697, %v1697
    %v1702 = vpack.c.bf16 %v1698, %v1698
    %v1703 = vpack.c.bf16 %v1699, %v1699
    %v1704 = vpack.c.bf16 %v1700, %v1700
    %v1705 = vld [vmem:[#allocation7] sm:$0xff]
    %v1706 = vld [vmem:[#allocation7 + $0x8] sm:$0xff]
    %v1707 = vld [vmem:[#allocation7 + $0x10] sm:$0xff]
    %v1708 = vld [vmem:[#allocation7 + $0x18] sm:$0xff]
    %v1709 = vld [vmem:[#allocation7 + $0x20] sm:$0xff]
    %v1710 = vld [vmem:[#allocation7 + $0x28] sm:$0xff]
    %v1711 = vld [vmem:[#allocation7 + $0x30] sm:$0xff]
    %v1712 = vld [vmem:[#allocation7 + $0x38] sm:$0xff]
    %v1713 = vld [vmem:[#allocation7 + $0x40] sm:$0xff]
    %v1714 = vld [vmem:[#allocation7 + $0x48] sm:$0xff]
    %v1715 = vld [vmem:[#allocation7 + $0x50] sm:$0xff]
    %v1716 = vld [vmem:[#allocation7 + $0x58] sm:$0xff]
    %v1717 = vld [vmem:[#allocation7 + $0x60] sm:$0xff]
    %v1718 = vld [vmem:[#allocation7 + $0x68] sm:$0xff]
    %v1719 = vld [vmem:[#allocation7 + $0x70] sm:$0xff]
    %v1720 = vld [vmem:[#allocation7 + $0x78] sm:$0xff]
    %v1721 = vld [vmem:[#allocation7 + $0x80] sm:$0xff]
    %v1722 = vld [vmem:[#allocation7 + $0x88] sm:$0xff]
    %v1723 = vld [vmem:[#allocation7 + $0x90] sm:$0xff]
    %v1724 = vld [vmem:[#allocation7 + $0x98] sm:$0xff]
    %v1725 = vld [vmem:[#allocation7 + $0xa0] sm:$0xff]
    %v1726 = vld [vmem:[#allocation7 + $0xa8] sm:$0xff]
    %v1727 = vld [vmem:[#allocation7 + $0xb0] sm:$0xff]
    %v1728 = vld [vmem:[#allocation7 + $0xb8] sm:$0xff]
    %v1729 = vld [vmem:[#allocation7 + $0xc0] sm:$0xff]
    %v1730 = vld [vmem:[#allocation7 + $0xc8] sm:$0xff]
    %v1731 = vld [vmem:[#allocation7 + $0xd0] sm:$0xff]
    %v1732 = vld [vmem:[#allocation7 + $0xd8] sm:$0xff]
    %v1733 = vld [vmem:[#allocation7 + $0xe0] sm:$0xff]
    %v1734 = vld [vmem:[#allocation7 + $0xe8] sm:$0xff]
    %v1735 = vld [vmem:[#allocation7 + $0xf0] sm:$0xff]
    %v1736 = vld [vmem:[#allocation7 + $0xf8] sm:$0xff]
    %v1737 = vld [vmem:[#allocation7 + $0x100] sm:$0xff]
    %v1738 = vld [vmem:[#allocation7 + $0x108] sm:$0xff]
    %v1739 = vld [vmem:[#allocation7 + $0x110] sm:$0xff]
    %v1740 = vld [vmem:[#allocation7 + $0x118] sm:$0xff]
    %v1741 = vld [vmem:[#allocation7 + $0x120] sm:$0xff]
    %v1742 = vld [vmem:[#allocation7 + $0x128] sm:$0xff]
    %v1743 = vld [vmem:[#allocation7 + $0x130] sm:$0xff]
    %v1744 = vld [vmem:[#allocation7 + $0x138] sm:$0xff]
    %v1745 = vld [vmem:[#allocation7 + $0x140] sm:$0xff]
    %v1746 = vld [vmem:[#allocation7 + $0x148] sm:$0xff]
    %v1747 = vld [vmem:[#allocation7 + $0x150] sm:$0xff]
    %v1748 = vld [vmem:[#allocation7 + $0x158] sm:$0xff]
    %v1749 = vld [vmem:[#allocation7 + $0x160] sm:$0xff]
    %v1750 = vld [vmem:[#allocation7 + $0x168] sm:$0xff]
    %v1751 = vld [vmem:[#allocation7 + $0x170] sm:$0xff]
    %v1752 = vld [vmem:[#allocation7 + $0x178] sm:$0xff]
    %v1753 = vld [vmem:[#allocation7 + $0x180] sm:$0xff]
    %v1754 = vld [vmem:[#allocation7 + $0x188] sm:$0xff]
    %v1755 = vld [vmem:[#allocation7 + $0x190] sm:$0xff]
    %v1756 = vld [vmem:[#allocation7 + $0x198] sm:$0xff]
    %v1757 = vld [vmem:[#allocation7 + $0x1a0] sm:$0xff]
    %v1758 = vld [vmem:[#allocation7 + $0x1a8] sm:$0xff]
    %v1759 = vld [vmem:[#allocation7 + $0x1b0] sm:$0xff]
    %v1760 = vld [vmem:[#allocation7 + $0x1b8] sm:$0xff]
    %v1761 = vld [vmem:[#allocation7 + $0x1c0] sm:$0xff]
    %v1762 = vld [vmem:[#allocation7 + $0x1c8] sm:$0xff]
    %v1763 = vld [vmem:[#allocation7 + $0x1d0] sm:$0xff]
    %v1764 = vld [vmem:[#allocation7 + $0x1d8] sm:$0xff]
    %v1765 = vld [vmem:[#allocation7 + $0x1e0] sm:$0xff]
    %v1766 = vld [vmem:[#allocation7 + $0x1e8] sm:$0xff]
    %v1767 = vld [vmem:[#allocation7 + $0x1f0] sm:$0xff]
    %v1768 = vld [vmem:[#allocation7 + $0x1f8] sm:$0xff]
    %v1769 = vld [vmem:[%s4] sm:$0x3]
    %v1771 = vlaneseq
    %v1772 = vshrl.u32 %v1771, 7
    %v1773 = vsub.s32 0, %v1772
    %v1774 = vrot.slane %v1769, %v1773
    %v1775 = vlaneseq
    %v1776 = vshrl.u32 %v1775, 7
    %v1777 = vsub.s32 1, %v1776
    %v1778 = vrot.slane %v1769, %v1777
    %v1845 = vunpack.c.l.b16 %v1705
    %v1846 = vunpack.c.h.b16 %v1705
    %v1847 = vunpack.c.l.b16 %v1706
    %v1848 = vunpack.c.h.b16 %v1706
    %v1849 = vunpack.c.l.b16 %v1707
    %v1850 = vunpack.c.h.b16 %v1707
    %v1851 = vunpack.c.l.b16 %v1708
    %v1852 = vunpack.c.h.b16 %v1708
    %v1853 = vunpack.c.l.b16 %v1709
    %v1854 = vunpack.c.h.b16 %v1709
    %v1855 = vunpack.c.l.b16 %v1710
    %v1856 = vunpack.c.h.b16 %v1710
    %v1857 = vunpack.c.l.b16 %v1711
    %v1858 = vunpack.c.h.b16 %v1711
    %v1859 = vunpack.c.l.b16 %v1712
    %v1860 = vunpack.c.h.b16 %v1712
    %v1861 = vunpack.c.l.b16 %v1713
    %v1862 = vunpack.c.h.b16 %v1713
    %v1863 = vunpack.c.l.b16 %v1714
    %v1864 = vunpack.c.h.b16 %v1714
    %v1865 = vunpack.c.l.b16 %v1715
    %v1866 = vunpack.c.h.b16 %v1715
    %v1867 = vunpack.c.l.b16 %v1716
    %v1868 = vunpack.c.h.b16 %v1716
    %v1869 = vunpack.c.l.b16 %v1717
    %v1870 = vunpack.c.h.b16 %v1717
    %v1871 = vunpack.c.l.b16 %v1718
    %v1872 = vunpack.c.h.b16 %v1718
    %v1873 = vunpack.c.l.b16 %v1719
    %v1874 = vunpack.c.h.b16 %v1719
    %v1875 = vunpack.c.l.b16 %v1720
    %v1876 = vunpack.c.h.b16 %v1720
    %v1877 = vunpack.c.l.b16 %v1721
    %v1878 = vunpack.c.h.b16 %v1721
    %v1879 = vunpack.c.l.b16 %v1722
    %v1880 = vunpack.c.h.b16 %v1722
    %v1881 = vunpack.c.l.b16 %v1723
    %v1882 = vunpack.c.h.b16 %v1723
    %v1883 = vunpack.c.l.b16 %v1724
    %v1884 = vunpack.c.h.b16 %v1724
    %v1885 = vunpack.c.l.b16 %v1725
    %v1886 = vunpack.c.h.b16 %v1725
    %v1887 = vunpack.c.l.b16 %v1726
    %v1888 = vunpack.c.h.b16 %v1726
    %v1889 = vunpack.c.l.b16 %v1727
    %v1890 = vunpack.c.h.b16 %v1727
    %v1891 = vunpack.c.l.b16 %v1728
    %v1892 = vunpack.c.h.b16 %v1728
    %v1893 = vunpack.c.l.b16 %v1729
    %v1894 = vunpack.c.h.b16 %v1729
    %v1895 = vunpack.c.l.b16 %v1730
    %v1896 = vunpack.c.h.b16 %v1730
    %v1897 = vunpack.c.l.b16 %v1731
    %v1898 = vunpack.c.h.b16 %v1731
    %v1899 = vunpack.c.l.b16 %v1732
    %v1900 = vunpack.c.h.b16 %v1732
    %v1901 = vunpack.c.l.b16 %v1733
    %v1902 = vunpack.c.h.b16 %v1733
    %v1903 = vunpack.c.l.b16 %v1734
    %v1904 = vunpack.c.h.b16 %v1734
    %v1905 = vunpack.c.l.b16 %v1735
    %v1906 = vunpack.c.h.b16 %v1735
    %v1907 = vunpack.c.l.b16 %v1736
    %v1908 = vunpack.c.h.b16 %v1736
    %v1909 = vunpack.c.l.b16 %v1737
    %v1910 = vunpack.c.h.b16 %v1737
    %v1911 = vunpack.c.l.b16 %v1738
    %v1912 = vunpack.c.h.b16 %v1738
    %v1913 = vunpack.c.l.b16 %v1739
    %v1914 = vunpack.c.h.b16 %v1739
    %v1915 = vunpack.c.l.b16 %v1740
    %v1916 = vunpack.c.h.b16 %v1740
    %v1917 = vunpack.c.l.b16 %v1741
    %v1918 = vunpack.c.h.b16 %v1741
    %v1919 = vunpack.c.l.b16 %v1742
    %v1920 = vunpack.c.h.b16 %v1742
    %v1921 = vunpack.c.l.b16 %v1743
    %v1922 = vunpack.c.h.b16 %v1743
    %v1923 = vunpack.c.l.b16 %v1744
    %v1924 = vunpack.c.h.b16 %v1744
    %v1925 = vunpack.c.l.b16 %v1745
    %v1926 = vunpack.c.h.b16 %v1745
    %v1927 = vunpack.c.l.b16 %v1746
    %v1928 = vunpack.c.h.b16 %v1746
    %v1929 = vunpack.c.l.b16 %v1747
    %v1930 = vunpack.c.h.b16 %v1747
    %v1931 = vunpack.c.l.b16 %v1748
    %v1932 = vunpack.c.h.b16 %v1748
    %v1933 = vunpack.c.l.b16 %v1749
    %v1934 = vunpack.c.h.b16 %v1749
    %v1935 = vunpack.c.l.b16 %v1750
    %v1936 = vunpack.c.h.b16 %v1750
    %v1937 = vunpack.c.l.b16 %v1751
    %v1938 = vunpack.c.h.b16 %v1751
    %v1939 = vunpack.c.l.b16 %v1752
    %v1940 = vunpack.c.h.b16 %v1752
    %v1941 = vunpack.c.l.b16 %v1753
    %v1942 = vunpack.c.h.b16 %v1753
    %v1943 = vunpack.c.l.b16 %v1754
    %v1944 = vunpack.c.h.b16 %v1754
    %v1945 = vunpack.c.l.b16 %v1755
    %v1946 = vunpack.c.h.b16 %v1755
    %v1947 = vunpack.c.l.b16 %v1756
    %v1948 = vunpack.c.h.b16 %v1756
    %v1949 = vunpack.c.l.b16 %v1757
    %v1950 = vunpack.c.h.b16 %v1757
    %v1951 = vunpack.c.l.b16 %v1758
    %v1952 = vunpack.c.h.b16 %v1758
    %v1953 = vunpack.c.l.b16 %v1759
    %v1954 = vunpack.c.h.b16 %v1759
    %v1955 = vunpack.c.l.b16 %v1760
    %v1956 = vunpack.c.h.b16 %v1760
    %v1957 = vunpack.c.l.b16 %v1761
    %v1958 = vunpack.c.h.b16 %v1761
    %v1959 = vunpack.c.l.b16 %v1762
    %v1960 = vunpack.c.h.b16 %v1762
    %v1961 = vunpack.c.l.b16 %v1763
    %v1962 = vunpack.c.h.b16 %v1763
    %v1963 = vunpack.c.l.b16 %v1764
    %v1964 = vunpack.c.h.b16 %v1764
    %v1965 = vunpack.c.l.b16 %v1765
    %v1966 = vunpack.c.h.b16 %v1765
    %v1967 = vunpack.c.l.b16 %v1766
    %v1968 = vunpack.c.h.b16 %v1766
    %v1969 = vunpack.c.l.b16 %v1767
    %v1970 = vunpack.c.h.b16 %v1767
    %v1971 = vunpack.c.l.b16 %v1768
    %v1972 = vunpack.c.h.b16 %v1768
    %v1973 = vpack.c.b16 %v1847, %v1845
    %v1974 = vpack.c.b16 %v1848, %v1846
    %v1975 = vpack.c.b16 %v1851, %v1849
    %v1976 = vpack.c.b16 %v1852, %v1850
    %v1977 = vpack.c.b16 %v1855, %v1853
    %v1978 = vpack.c.b16 %v1856, %v1854
    %v1979 = vpack.c.b16 %v1859, %v1857
    %v1980 = vpack.c.b16 %v1860, %v1858
    %v1981 = vpack.c.b16 %v1863, %v1861
    %v1982 = vpack.c.b16 %v1864, %v1862
    %v1983 = vpack.c.b16 %v1867, %v1865
    %v1984 = vpack.c.b16 %v1868, %v1866
    %v1985 = vpack.c.b16 %v1871, %v1869
    %v1986 = vpack.c.b16 %v1872, %v1870
    %v1987 = vpack.c.b16 %v1875, %v1873
    %v1988 = vpack.c.b16 %v1876, %v1874
    %v1989 = vpack.c.b16 %v1879, %v1877
    %v1990 = vpack.c.b16 %v1880, %v1878
    %v1991 = vpack.c.b16 %v1883, %v1881
    %v1992 = vpack.c.b16 %v1884, %v1882
    %v1993 = vpack.c.b16 %v1887, %v1885
    %v1994 = vpack.c.b16 %v1888, %v1886
    %v1995 = vpack.c.b16 %v1891, %v1889
    %v1996 = vpack.c.b16 %v1892, %v1890
    %v1997 = vpack.c.b16 %v1895, %v1893
    %v1998 = vpack.c.b16 %v1896, %v1894
    %v1999 = vpack.c.b16 %v1899, %v1897
    %v2000 = vpack.c.b16 %v1900, %v1898
    %v2001 = vpack.c.b16 %v1903, %v1901
    %v2002 = vpack.c.b16 %v1904, %v1902
    %v2003 = vpack.c.b16 %v1907, %v1905
    %v2004 = vpack.c.b16 %v1908, %v1906
    %v2005 = vpack.c.b16 %v1911, %v1909
    %v2006 = vpack.c.b16 %v1912, %v1910
    %v2007 = vpack.c.b16 %v1915, %v1913
    %v2008 = vpack.c.b16 %v1916, %v1914
    %v2009 = vpack.c.b16 %v1919, %v1917
    %v2010 = vpack.c.b16 %v1920, %v1918
    %v2011 = vpack.c.b16 %v1923, %v1921
    %v2012 = vpack.c.b16 %v1924, %v1922
    %v2013 = vpack.c.b16 %v1927, %v1925
    %v2014 = vpack.c.b16 %v1928, %v1926
    %v2015 = vpack.c.b16 %v1931, %v1929
    %v2016 = vpack.c.b16 %v1932, %v1930
    %v2017 = vpack.c.b16 %v1935, %v1933
    %v2018 = vpack.c.b16 %v1936, %v1934
    %v2019 = vpack.c.b16 %v1939, %v1937
    %v2020 = vpack.c.b16 %v1940, %v1938
    %v2021 = vpack.c.b16 %v1943, %v1941
    %v2022 = vpack.c.b16 %v1944, %v1942
    %v2023 = vpack.c.b16 %v1947, %v1945
    %v2024 = vpack.c.b16 %v1948, %v1946
    %v2025 = vpack.c.b16 %v1951, %v1949
    %v2026 = vpack.c.b16 %v1952, %v1950
    %v2027 = vpack.c.b16 %v1955, %v1953
    %v2028 = vpack.c.b16 %v1956, %v1954
    %v2029 = vpack.c.b16 %v1959, %v1957
    %v2030 = vpack.c.b16 %v1960, %v1958
    %v2031 = vpack.c.b16 %v1963, %v1961
    %v2032 = vpack.c.b16 %v1964, %v1962
    %v2033 = vpack.c.b16 %v1967, %v1965
    %v2034 = vpack.c.b16 %v1968, %v1966
    %v2035 = vpack.c.b16 %v1971, %v1969
    %v2036 = vpack.c.b16 %v1972, %v1970
    %2101 = vmatprep.subr.bf16.mxu0 %v1974
    %2102 = vmatpush1.bf16.msra.mxu0 %v1973
    %2103 = vmatprep.subr.bf16.mxu0 %v1976
    %2104 = vmatpush1.bf16.msra.mxu0 %v1975
    %2105 = vmatprep.subr.bf16.mxu0 %v1978
    %2106 = vmatpush1.bf16.msra.mxu0 %v1977
    %2107 = vmatprep.subr.bf16.mxu0 %v1980
    %2108 = vmatpush1.bf16.msra.mxu0 %v1979
    %2109 = vmatprep.subr.bf16.mxu0 %v1982
    %2110 = vmatpush1.bf16.msra.mxu0 %v1981
    %2111 = vmatprep.subr.bf16.mxu0 %v1984
    %2112 = vmatpush1.bf16.msra.mxu0 %v1983
    %2113 = vmatprep.subr.bf16.mxu0 %v1986
    %2114 = vmatpush1.bf16.msra.mxu0 %v1985
    %2115 = vmatprep.subr.bf16.mxu0 %v1988
    %2116 = vmatpush1.bf16.msra.mxu0 %v1987
    %2117 = vmatprep.subr.bf16.mxu0 %v1990
    %2118 = vmatpush1.bf16.msra.mxu0 %v1989
    %2119 = vmatprep.subr.bf16.mxu0 %v1992
    %2120 = vmatpush1.bf16.msra.mxu0 %v1991
    %2121 = vmatprep.subr.bf16.mxu0 %v1994
    %2122 = vmatpush1.bf16.msra.mxu0 %v1993
    %2123 = vmatprep.subr.bf16.mxu0 %v1996
    %2124 = vmatpush1.bf16.msra.mxu0 %v1995
    %2125 = vmatprep.subr.bf16.mxu0 %v1998
    %2126 = vmatpush1.bf16.msra.mxu0 %v1997
    %2127 = vmatprep.subr.bf16.mxu0 %v2000
    %2128 = vmatpush1.bf16.msra.mxu0 %v1999
    %2129 = vmatprep.subr.bf16.mxu0 %v2002
    %2130 = vmatpush1.bf16.msra.mxu0 %v2001
    %2131 = vmatprep.subr.bf16.mxu0 %v2004
    %2132 = vmatpush1.bf16.msra.mxu0 %v2003
    %2133 = vmatprep.mubr.bf16.mxu0 %v1702
    %2134 = vmatmul.mubr.bf16.gmra.mrb[0].mxu0 %v1701
    %v2135 = vpop.f32.mrb[0].mxu0
    %v2136 = vadd.f32 %v1774, %v2135
    %v2137 = vpop.f32.mrb[0].mxu0
    %v2138 = vadd.f32 %v1778, %v2137
    %v2139 = vpop.f32.mrb[0].mxu0
    %v2140 = vpop.f32.mrb[0].mxu0
    %2141 = vdwg.mxu0
    %2142 = vmatprep.subr.bf16.mxu0 %v2006
    %2143 = vmatpush1.bf16.msra.mxu0 %v2005
    %2144 = vmatprep.subr.bf16.mxu0 %v2008
    %2145 = vmatpush1.bf16.msra.mxu0 %v2007
    %2146 = vmatprep.subr.bf16.mxu0 %v2010
    %2147 = vmatpush1.bf16.msra.mxu0 %v2009
    %2148 = vmatprep.subr.bf16.mxu0 %v2012
    %2149 = vmatpush1.bf16.msra.mxu0 %v2011
    %2150 = vmatprep.subr.bf16.mxu0 %v2014
    %2151 = vmatpush1.bf16.msra.mxu0 %v2013
    %2152 = vmatprep.subr.bf16.mxu0 %v2016
    %2153 = vmatpush1.bf16.msra.mxu0 %v2015
    %2154 = vmatprep.subr.bf16.mxu0 %v2018
    %2155 = vmatpush1.bf16.msra.mxu0 %v2017
    %2156 = vmatprep.subr.bf16.mxu0 %v2020
    %2157 = vmatpush1.bf16.msra.mxu0 %v2019
    %2158 = vmatprep.subr.bf16.mxu0 %v2022
    %2159 = vmatpush1.bf16.msra.mxu0 %v2021
    %2160 = vmatprep.subr.bf16.mxu0 %v2024
    %2161 = vmatpush1.bf16.msra.mxu0 %v2023
    %2162 = vmatprep.subr.bf16.mxu0 %v2026
    %2163 = vmatpush1.bf16.msra.mxu0 %v2025
    %2164 = vmatprep.subr.bf16.mxu0 %v2028
    %2165 = vmatpush1.bf16.msra.mxu0 %v2027
    %2166 = vmatprep.subr.bf16.mxu0 %v2030
    %2167 = vmatpush1.bf16.msra.mxu0 %v2029
    %2168 = vmatprep.subr.bf16.mxu0 %v2032
    %2169 = vmatpush1.bf16.msra.mxu0 %v2031
    %2170 = vmatprep.subr.bf16.mxu0 %v2034
    %2171 = vmatpush1.bf16.msra.mxu0 %v2033
    %2172 = vmatprep.subr.bf16.mxu0 %v2036
    %2173 = vmatpush1.bf16.msra.mxu0 %v2035
    %2174 = vmatprep.mubr.bf16.mxu0 %v1704
    %2175 = vmatmul.mubr.bf16.gmra.mrb[0].mxu0 %v1703
    %v2176 = vpop.f32.mrb[0].mxu0
    %v2177 = vadd.f32 %v2136, %v2176
    %v2178 = vpop.f32.mrb[0].mxu0
    %v2179 = vadd.f32 %v2138, %v2178
    %v2180 = vpop.f32.mrb[0].mxu0
    %v2181 = vpop.f32.mrb[0].mxu0
    %2182 = vdwg.mxu0
    %v2183 = vmax.f32 %v2177, 0.0
    %v2184 = vmax.f32 %v2179, 0.0
    %v2185 = vpack.c.bf16 %v2183, %v2183
    %v2186 = vpack.c.bf16 %v2184, %v2184
    %v2187 = vld [vmem:[#allocation8] sm:$0xf]
    %v2188 = vld [vmem:[#allocation8 + $0x4] sm:$0xf]
    %v2189 = vld [vmem:[#allocation8 + $0x8] sm:$0xf]
    %v2190 = vld [vmem:[#allocation8 + $0xc] sm:$0xf]
    %v2191 = vld [vmem:[#allocation8 + $0x10] sm:$0xf]
    %v2192 = vld [vmem:[#allocation8 + $0x14] sm:$0xf]
    %v2193 = vld [vmem:[#allocation8 + $0x18] sm:$0xf]
    %v2194 = vld [vmem:[#allocation8 + $0x1c] sm:$0xf]
    %v2195 = vld [vmem:[#allocation8 + $0x20] sm:$0xf]
    %v2196 = vld [vmem:[#allocation8 + $0x24] sm:$0xf]
    %v2197 = vld [vmem:[#allocation8 + $0x28] sm:$0xf]
    %v2198 = vld [vmem:[#allocation8 + $0x2c] sm:$0xf]
    %v2199 = vld [vmem:[#allocation8 + $0x30] sm:$0xf]
    %v2200 = vld [vmem:[#allocation8 + $0x34] sm:$0xf]
    %v2201 = vld [vmem:[#allocation8 + $0x38] sm:$0xf]
    %v2202 = vld [vmem:[#allocation8 + $0x3c] sm:$0xf]
    %v2203 = vld [vmem:[#allocation8 + $0x40] sm:$0xf]
    %v2204 = vld [vmem:[#allocation8 + $0x44] sm:$0xf]
    %v2205 = vld [vmem:[#allocation8 + $0x48] sm:$0xf]
    %v2206 = vld [vmem:[#allocation8 + $0x4c] sm:$0xf]
    %v2207 = vld [vmem:[#allocation8 + $0x50] sm:$0xf]
    %v2208 = vld [vmem:[#allocation8 + $0x54] sm:$0xf]
    %v2209 = vld [vmem:[#allocation8 + $0x58] sm:$0xf]
    %v2210 = vld [vmem:[#allocation8 + $0x5c] sm:$0xf]
    %v2211 = vld [vmem:[#allocation8 + $0x60] sm:$0xf]
    %v2212 = vld [vmem:[#allocation8 + $0x64] sm:$0xf]
    %v2213 = vld [vmem:[#allocation8 + $0x68] sm:$0xf]
    %v2214 = vld [vmem:[#allocation8 + $0x6c] sm:$0xf]
    %v2215 = vld [vmem:[#allocation8 + $0x70] sm:$0xf]
    %v2216 = vld [vmem:[#allocation8 + $0x74] sm:$0xf]
    %v2217 = vld [vmem:[#allocation8 + $0x78] sm:$0xf]
    %v2218 = vld [vmem:[#allocation8 + $0x7c] sm:$0xf]
    %v2219 = vld [vmem:[%s6] sm:$0x1]
    %v2221 = vlaneseq
    %v2222 = vshrl.u32 %v2221, 7
    %v2223 = vsub.s32 0, %v2222
    %v2224 = vrot.slane %v2219, %v2223
    %v2258 = vunpack.c.l.b16 %v2187
    %v2259 = vunpack.c.l.b16 %v2188
    %v2260 = vunpack.c.l.b16 %v2189
    %v2261 = vunpack.c.l.b16 %v2190
    %v2262 = vunpack.c.l.b16 %v2191
    %v2263 = vunpack.c.l.b16 %v2192
    %v2264 = vunpack.c.l.b16 %v2193
    %v2265 = vunpack.c.l.b16 %v2194
    %v2266 = vunpack.c.l.b16 %v2195
    %v2267 = vunpack.c.l.b16 %v2196
    %v2268 = vunpack.c.l.b16 %v2197
    %v2269 = vunpack.c.l.b16 %v2198
    %v2270 = vunpack.c.l.b16 %v2199
    %v2271 = vunpack.c.l.b16 %v2200
    %v2272 = vunpack.c.l.b16 %v2201
    %v2273 = vunpack.c.l.b16 %v2202
    %v2274 = vunpack.c.l.b16 %v2203
    %v2275 = vunpack.c.l.b16 %v2204
    %v2276 = vunpack.c.l.b16 %v2205
    %v2277 = vunpack.c.l.b16 %v2206
    %v2278 = vunpack.c.l.b16 %v2207
    %v2279 = vunpack.c.l.b16 %v2208
    %v2280 = vunpack.c.l.b16 %v2209
    %v2281 = vunpack.c.l.b16 %v2210
    %v2282 = vunpack.c.l.b16 %v2211
    %v2283 = vunpack.c.l.b16 %v2212
    %v2284 = vunpack.c.l.b16 %v2213
    %v2285 = vunpack.c.l.b16 %v2214
    %v2286 = vunpack.c.l.b16 %v2215
    %v2287 = vunpack.c.l.b16 %v2216
    %v2288 = vunpack.c.l.b16 %v2217
    %v2289 = vunpack.c.l.b16 %v2218
    %v2290 = vpack.c.b16 %v2259, %v2258
    %v2291 = vpack.c.b16 %v2261, %v2260
    %v2292 = vpack.c.b16 %v2263, %v2262
    %v2293 = vpack.c.b16 %v2265, %v2264
    %v2294 = vpack.c.b16 %v2267, %v2266
    %v2295 = vpack.c.b16 %v2269, %v2268
    %v2296 = vpack.c.b16 %v2271, %v2270
    %v2297 = vpack.c.b16 %v2273, %v2272
    %v2298 = vpack.c.b16 %v2275, %v2274
    %v2299 = vpack.c.b16 %v2277, %v2276
    %v2300 = vpack.c.b16 %v2279, %v2278
    %v2301 = vpack.c.b16 %v2281, %v2280
    %v2302 = vpack.c.b16 %v2283, %v2282
    %v2303 = vpack.c.b16 %v2285, %v2284
    %v2304 = vpack.c.b16 %v2287, %v2286
    %v2305 = vpack.c.b16 %v2289, %v2288
    %2322 = vmatprep.subr.bf16.mxu0 0
    %2323 = vmatpush1.bf16.msra.mxu0 %v2290
    %2324 = vmatprep.subr.bf16.mxu0 0
    %2325 = vmatpush1.bf16.msra.mxu0 %v2291
    %2326 = vmatprep.subr.bf16.mxu0 0
    %2327 = vmatpush1.bf16.msra.mxu0 %v2292
    %2328 = vmatprep.subr.bf16.mxu0 0
    %2329 = vmatpush1.bf16.msra.mxu0 %v2293
    %2330 = vmatprep.subr.bf16.mxu0 0
    %2331 = vmatpush1.bf16.msra.mxu0 %v2294
    %2332 = vmatprep.subr.bf16.mxu0 0
    %2333 = vmatpush1.bf16.msra.mxu0 %v2295
    %2334 = vmatprep.subr.bf16.mxu0 0
    %2335 = vmatpush1.bf16.msra.mxu0 %v2296
    %2336 = vmatprep.subr.bf16.mxu0 0
    %2337 = vmatpush1.bf16.msra.mxu0 %v2297
    %2338 = vmatprep.subr.bf16.mxu0 0
    %2339 = vmatpush1.bf16.msra.mxu0 %v2298
    %2340 = vmatprep.subr.bf16.mxu0 0
    %2341 = vmatpush1.bf16.msra.mxu0 %v2299
    %2342 = vmatprep.subr.bf16.mxu0 0
    %2343 = vmatpush1.bf16.msra.mxu0 %v2300
    %2344 = vmatprep.subr.bf16.mxu0 0
    %2345 = vmatpush1.bf16.msra.mxu0 %v2301
    %2346 = vmatprep.subr.bf16.mxu0 0
    %2347 = vmatpush1.bf16.msra.mxu0 %v2302
    %2348 = vmatprep.subr.bf16.mxu0 0
    %2349 = vmatpush1.bf16.msra.mxu0 %v2303
    %2350 = vmatprep.subr.bf16.mxu0 0
    %2351 = vmatpush1.bf16.msra.mxu0 %v2304
    %2352 = vmatprep.subr.bf16.mxu0 0
    %2353 = vmatpush1.bf16.msra.mxu0 %v2305
    %2354 = vmatprep.mubr.bf16.mxu0 %v2186
    %2355 = vmatmul.mubr.bf16.gmra.mrb[0].mxu0 %v2185
    %v2356 = vpop.f32.mrb[0].mxu0
    %v2357 = vadd.f32 %v2224, %v2356
    %v2358 = vpop.f32.mrb[0].mxu0
    %v2359 = vpop.f32.mrb[0].mxu0
    %v2360 = vpop.f32.mrb[0].mxu0
    %2361 = vdwg.mxu0
    %v2362 = vmax.f32 %v2357, 0.0
    %v2363 = vpack.c.bf16 %v2362, %v2362
    %v2364 = vld [vmem:[#allocation10] sm:$0xf]
    %v2365 = vld [vmem:[#allocation10 + $0x4] sm:$0xf]
    %v2366 = vld [vmem:[#allocation10 + $0x8] sm:$0xf]
    %v2367 = vld [vmem:[#allocation10 + $0xc] sm:$0xf]
    %v2368 = vld [vmem:[#allocation10 + $0x10] sm:$0xf]
    %v2369 = vld [vmem:[#allocation10 + $0x14] sm:$0xf]
    %v2370 = vld [vmem:[#allocation10 + $0x18] sm:$0xf]
    %v2371 = vld [vmem:[#allocation10 + $0x1c] sm:$0xf]
    %v2372 = vld [vmem:[#allocation10 + $0x20] sm:$0xf]
    %v2373 = vld [vmem:[#allocation10 + $0x24] sm:$0xf]
    %v2374 = vld [vmem:[#allocation10 + $0x28] sm:$0xf]
    %v2375 = vld [vmem:[#allocation10 + $0x2c] sm:$0xf]
    %v2376 = vld [vmem:[#allocation10 + $0x30] sm:$0xf]
    %v2377 = vld [vmem:[#allocation10 + $0x34] sm:$0xf]
    %v2378 = vld [vmem:[#allocation10 + $0x38] sm:$0xf]
    %v2379 = vld [vmem:[#allocation10 + $0x3c] sm:$0xf]
    %v2380 = vld [vmem:[%s8] sm:$0x1]
    %v2382 = vlaneseq
    %v2383 = vshrl.u32 %v2382, 7
    %v2384 = vsub.s32 0, %v2383
    %v2385 = vrot.slane %v2380, %v2384
    %v2403 = vunpack.c.l.b16 %v2364
    %v2404 = vunpack.c.l.b16 %v2365
    %v2405 = vunpack.c.l.b16 %v2366
    %v2406 = vunpack.c.l.b16 %v2367
    %v2407 = vunpack.c.l.b16 %v2368
    %v2408 = vunpack.c.l.b16 %v2369
    %v2409 = vunpack.c.l.b16 %v2370
    %v2410 = vunpack.c.l.b16 %v2371
    %v2411 = vunpack.c.l.b16 %v2372
    %v2412 = vunpack.c.l.b16 %v2373
    %v2413 = vunpack.c.l.b16 %v2374
    %v2414 = vunpack.c.l.b16 %v2375
    %v2415 = vunpack.c.l.b16 %v2376
    %v2416 = vunpack.c.l.b16 %v2377
    %v2417 = vunpack.c.l.b16 %v2378
    %v2418 = vunpack.c.l.b16 %v2379
    %v2419 = vpack.c.b16 %v2404, %v2403
    %v2420 = vpack.c.b16 %v2406, %v2405
    %v2421 = vpack.c.b16 %v2408, %v2407
    %v2422 = vpack.c.b16 %v2410, %v2409
    %v2423 = vpack.c.b16 %v2412, %v2411
    %v2424 = vpack.c.b16 %v2414, %v2413
    %v2425 = vpack.c.b16 %v2416, %v2415
    %v2426 = vpack.c.b16 %v2418, %v2417
    %2435 = vmatprep.subr.bf16.mxu0 0
    %2436 = vmatpush1.bf16.msra.mxu0 %v2419
    %2437 = vmatprep.subr.bf16.mxu0 0
    %2438 = vmatpush1.bf16.msra.mxu0 %v2420
    %2439 = vmatprep.subr.bf16.mxu0 0
    %2440 = vmatpush1.bf16.msra.mxu0 %v2421
    %2441 = vmatprep.subr.bf16.mxu0 0
    %2442 = vmatpush1.bf16.msra.mxu0 %v2422
    %2443 = vmatprep.subr.bf16.mxu0 0
    %2444 = vmatpush1.bf16.msra.mxu0 %v2423
    %2445 = vmatprep.subr.bf16.mxu0 0
    %2446 = vmatpush1.bf16.msra.mxu0 %v2424
    %2447 = vmatprep.subr.bf16.mxu0 0
    %2448 = vmatpush1.bf16.msra.mxu0 %v2425
    %2449 = vmatprep.subr.bf16.mxu0 0
    %2450 = vmatpush1.bf16.msra.mxu0 %v2426
    %2451 = vmatprep.subr.bf16.mxu0 0
    %2452 = vmatpush1.bf16.msra.mxu0 0
    %2453 = vmatprep.subr.bf16.mxu0 0
    %2454 = vmatpush1.bf16.msra.mxu0 0
    %2455 = vmatprep.subr.bf16.mxu0 0
    %2456 = vmatpush1.bf16.msra.mxu0 0
    %2457 = vmatprep.subr.bf16.mxu0 0
    %2458 = vmatpush1.bf16.msra.mxu0 0
    %2459 = vmatprep.subr.bf16.mxu0 0
    %2460 = vmatpush1.bf16.msra.mxu0 0
    %2461 = vmatprep.subr.bf16.mxu0 0
    %2462 = vmatpush1.bf16.msra.mxu0 0
    %2463 = vmatprep.subr.bf16.mxu0 0
    %2464 = vmatpush1.bf16.msra.mxu0 0
    %2465 = vmatprep.subr.bf16.mxu0 0
    %2466 = vmatpush1.bf16.msra.mxu0 0
    %2467 = vmatprep.mubr.bf16.mxu0 0
    %2468 = vmatmul.mubr.bf16.gmra.mrb[0].mxu0 %v2363
    %v2469 = vpop.f32.mrb[0].mxu0
    %v2470 = vadd.f32 %v2385, %v2469
    %v2471 = vpop.f32.mrb[0].mxu0
    %v2472 = vpop.f32.mrb[0].mxu0
    %v2473 = vpop.f32.mrb[0].mxu0
    %2474 = vdwg.mxu0
    %v2475 = vmax.f32 %v2470, 0.0
    %v2476 = vpack.c.bf16 %v2475, %v2475
    %v2477 = vld [vmem:[#allocation11] sm:$0xff]
    %v2478 = vld [vmem:[#allocation11 + $0x8] sm:$0xff]
    %v2479 = vld [vmem:[#allocation11 + $0x10] sm:$0xff]
    %v2480 = vld [vmem:[#allocation11 + $0x18] sm:$0xff]
    %v2481 = vld [vmem:[#allocation11 + $0x20] sm:$0xff]
    %v2482 = vld [vmem:[#allocation11 + $0x28] sm:$0xff]
    %v2483 = vld [vmem:[#allocation11 + $0x30] sm:$0xff]
    %v2484 = vld [vmem:[#allocation11 + $0x38] sm:$0xff]
    %v2485 = vld [vmem:[#allocation11 + $0x40] sm:$0xff]
    %v2486 = vld [vmem:[#allocation11 + $0x48] sm:$0xff]
    %v2487 = vld [vmem:[#allocation11 + $0x50] sm:$0xff]
    %v2488 = vld [vmem:[#allocation11 + $0x58] sm:$0xff]
    %v2489 = vld [vmem:[#allocation11 + $0x60] sm:$0xff]
    %v2490 = vld [vmem:[#allocation11 + $0x68] sm:$0xff]
    %v2491 = vld [vmem:[#allocation11 + $0x70] sm:$0xff]
    %v2492 = vld [vmem:[#allocation11 + $0x78] sm:$0xff]
    %v2493 = vld [vmem:[%s10] sm:$0x3]
    %v2495 = vlaneseq
    %v2496 = vshrl.u32 %v2495, 7
    %v2497 = vsub.s32 0, %v2496
    %v2498 = vrot.slane %v2493, %v2497
    %v2499 = vlaneseq
    %v2500 = vshrl.u32 %v2499, 7
    %v2501 = vsub.s32 1, %v2500
    %v2502 = vrot.slane %v2493, %v2501
    %v2521 = vunpack.c.l.b16 %v2477
    %v2522 = vunpack.c.h.b16 %v2477
    %v2523 = vunpack.c.l.b16 %v2478
    %v2524 = vunpack.c.h.b16 %v2478
    %v2525 = vunpack.c.l.b16 %v2479
    %v2526 = vunpack.c.h.b16 %v2479
    %v2527 = vunpack.c.l.b16 %v2480
    %v2528 = vunpack.c.h.b16 %v2480
    %v2529 = vunpack.c.l.b16 %v2481
    %v2530 = vunpack.c.h.b16 %v2481
    %v2531 = vunpack.c.l.b16 %v2482
    %v2532 = vunpack.c.h.b16 %v2482
    %v2533 = vunpack.c.l.b16 %v2483
    %v2534 = vunpack.c.h.b16 %v2483
    %v2535 = vunpack.c.l.b16 %v2484
    %v2536 = vunpack.c.h.b16 %v2484
    %v2537 = vunpack.c.l.b16 %v2485
    %v2538 = vunpack.c.h.b16 %v2485
    %v2539 = vunpack.c.l.b16 %v2486
    %v2540 = vunpack.c.h.b16 %v2486
    %v2541 = vunpack.c.l.b16 %v2487
    %v2542 = vunpack.c.h.b16 %v2487
    %v2543 = vunpack.c.l.b16 %v2488
    %v2544 = vunpack.c.h.b16 %v2488
    %v2545 = vunpack.c.l.b16 %v2489
    %v2546 = vunpack.c.h.b16 %v2489
    %v2547 = vunpack.c.l.b16 %v2490
    %v2548 = vunpack.c.h.b16 %v2490
    %v2549 = vunpack.c.l.b16 %v2491
    %v2550 = vunpack.c.h.b16 %v2491
    %v2551 = vunpack.c.l.b16 %v2492
    %v2552 = vunpack.c.h.b16 %v2492
    %v2553 = vpack.c.b16 %v2523, %v2521
    %v2554 = vpack.c.b16 %v2524, %v2522
    %v2555 = vpack.c.b16 %v2527, %v2525
    %v2556 = vpack.c.b16 %v2528, %v2526
    %v2557 = vpack.c.b16 %v2531, %v2529
    %v2558 = vpack.c.b16 %v2532, %v2530
    %v2559 = vpack.c.b16 %v2535, %v2533
    %v2560 = vpack.c.b16 %v2536, %v2534
    %v2561 = vpack.c.b16 %v2539, %v2537
    %v2562 = vpack.c.b16 %v2540, %v2538
    %v2563 = vpack.c.b16 %v2543, %v2541
    %v2564 = vpack.c.b16 %v2544, %v2542
    %v2565 = vpack.c.b16 %v2547, %v2545
    %v2566 = vpack.c.b16 %v2548, %v2546
    %v2567 = vpack.c.b16 %v2551, %v2549
    %v2568 = vpack.c.b16 %v2552, %v2550
    %2585 = vmatprep.subr.bf16.mxu0 %v2554
    %2586 = vmatpush1.bf16.msra.mxu0 %v2553
    %2587 = vmatprep.subr.bf16.mxu0 %v2556
    %2588 = vmatpush1.bf16.msra.mxu0 %v2555
    %2589 = vmatprep.subr.bf16.mxu0 %v2558
    %2590 = vmatpush1.bf16.msra.mxu0 %v2557
    %2591 = vmatprep.subr.bf16.mxu0 %v2560
    %2592 = vmatpush1.bf16.msra.mxu0 %v2559
    %2593 = vmatprep.subr.bf16.mxu0 %v2562
    %2594 = vmatpush1.bf16.msra.mxu0 %v2561
    %2595 = vmatprep.subr.bf16.mxu0 %v2564
    %2596 = vmatpush1.bf16.msra.mxu0 %v2563
    %2597 = vmatprep.subr.bf16.mxu0 %v2566
    %2598 = vmatpush1.bf16.msra.mxu0 %v2565
    %2599 = vmatprep.subr.bf16.mxu0 %v2568
    %2600 = vmatpush1.bf16.msra.mxu0 %v2567
    %2601 = vmatprep.subr.bf16.mxu0 0
    %2602 = vmatpush1.bf16.msra.mxu0 0
    %2603 = vmatprep.subr.bf16.mxu0 0
    %2604 = vmatpush1.bf16.msra.mxu0 0
    %2605 = vmatprep.subr.bf16.mxu0 0
    %2606 = vmatpush1.bf16.msra.mxu0 0
    %2607 = vmatprep.subr.bf16.mxu0 0
    %2608 = vmatpush1.bf16.msra.mxu0 0
    %2609 = vmatprep.subr.bf16.mxu0 0
    %2610 = vmatpush1.bf16.msra.mxu0 0
    %2611 = vmatprep.subr.bf16.mxu0 0
    %2612 = vmatpush1.bf16.msra.mxu0 0
    %2613 = vmatprep.subr.bf16.mxu0 0
    %2614 = vmatpush1.bf16.msra.mxu0 0
    %2615 = vmatprep.subr.bf16.mxu0 0
    %2616 = vmatpush1.bf16.msra.mxu0 0
    %2617 = vmatprep.mubr.bf16.mxu0 0
    %2618 = vmatmul.mubr.bf16.gmra.mrb[0].mxu0 %v2476
    %v2619 = vpop.f32.mrb[0].mxu0
    %v2620 = vadd.f32 %v2498, %v2619
    %v2621 = vpop.f32.mrb[0].mxu0
    %v2622 = vadd.f32 %v2502, %v2621
    %v2623 = vpop.f32.mrb[0].mxu0
    %v2624 = vpop.f32.mrb[0].mxu0
    %2625 = vdwg.mxu0
    %v2626 = vmax.f32 %v2620, 0.0
    %v2627 = vmax.f32 %v2622, 0.0
    %v2628 = vpack.c.bf16 %v2626, %v2626
    %v2629 = vpack.c.bf16 %v2627, %v2627
    %v2630 = vld [vmem:[#allocation13] sm:$0xff]
    %v2631 = vld [vmem:[#allocation13 + $0x8] sm:$0xff]
    %v2632 = vld [vmem:[#allocation13 + $0x10] sm:$0xff]
    %v2633 = vld [vmem:[#allocation13 + $0x18] sm:$0xf]
    %v2634 = vld [vmem:[#allocation13 + $0x1c] sm:$0xff]
    %v2635 = vld [vmem:[#allocation13 + $0x24] sm:$0xff]
    %v2636 = vld [vmem:[#allocation13 + $0x2c] sm:$0xff]
    %v2637 = vld [vmem:[#allocation13 + $0x34] sm:$0xf]
    %v2638 = vld [vmem:[#allocation13 + $0x38] sm:$0xff]
    %v2639 = vld [vmem:[#allocation13 + $0x40] sm:$0xff]
    %v2640 = vld [vmem:[#allocation13 + $0x48] sm:$0xff]
    %v2641 = vld [vmem:[#allocation13 + $0x50] sm:$0xf]
    %v2642 = vld [vmem:[#allocation13 + $0x54] sm:$0xff]
    %v2643 = vld [vmem:[#allocation13 + $0x5c] sm:$0xff]
    %v2644 = vld [vmem:[#allocation13 + $0x64] sm:$0xff]
    %v2645 = vld [vmem:[#allocation13 + $0x6c] sm:$0xf]
    %v2646 = vld [vmem:[#allocation13 + $0x70] sm:$0xff]
    %v2647 = vld [vmem:[#allocation13 + $0x78] sm:$0xff]
    %v2648 = vld [vmem:[#allocation13 + $0x80] sm:$0xff]
    %v2649 = vld [vmem:[#allocation13 + $0x88] sm:$0xf]
    %v2650 = vld [vmem:[#allocation13 + $0x8c] sm:$0xff]
    %v2651 = vld [vmem:[#allocation13 + $0x94] sm:$0xff]
    %v2652 = vld [vmem:[#allocation13 + $0x9c] sm:$0xff]
    %v2653 = vld [vmem:[#allocation13 + $0xa4] sm:$0xf]
    %v2654 = vld [vmem:[#allocation13 + $0xa8] sm:$0xff]
    %v2655 = vld [vmem:[#allocation13 + $0xb0] sm:$0xff]
    %v2656 = vld [vmem:[#allocation13 + $0xb8] sm:$0xff]
    %v2657 = vld [vmem:[#allocation13 + $0xc0] sm:$0xf]
    %v2658 = vld [vmem:[#allocation13 + $0xc4] sm:$0xff]
    %v2659 = vld [vmem:[#allocation13 + $0xcc] sm:$0xff]
    %v2660 = vld [vmem:[#allocation13 + $0xd4] sm:$0xff]
    %v2661 = vld [vmem:[#allocation13 + $0xdc] sm:$0xf]
    %v2662 = vld [vmem:[#allocation13 + $0xe0] sm:$0xff]
    %v2663 = vld [vmem:[#allocation13 + $0xe8] sm:$0xff]
    %v2664 = vld [vmem:[#allocation13 + $0xf0] sm:$0xff]
    %v2665 = vld [vmem:[#allocation13 + $0xf8] sm:$0xf]
    %v2666 = vld [vmem:[#allocation13 + $0xfc] sm:$0xff]
    %v2667 = vld [vmem:[#allocation13 + $0x104] sm:$0xff]
    %v2668 = vld [vmem:[#allocation13 + $0x10c] sm:$0xff]
    %v2669 = vld [vmem:[#allocation13 + $0x114] sm:$0xf]
    %v2670 = vld [vmem:[#allocation13 + $0x118] sm:$0xff]
    %v2671 = vld [vmem:[#allocation13 + $0x120] sm:$0xff]
    %v2672 = vld [vmem:[#allocation13 + $0x128] sm:$0xff]
    %v2673 = vld [vmem:[#allocation13 + $0x130] sm:$0xf]
    %v2674 = vld [vmem:[#allocation13 + $0x134] sm:$0xff]
    %v2675 = vld [vmem:[#allocation13 + $0x13c] sm:$0xff]
    %v2676 = vld [vmem:[#allocation13 + $0x144] sm:$0xff]
    %v2677 = vld [vmem:[#allocation13 + $0x14c] sm:$0xf]
    %v2678 = vld [vmem:[#allocation13 + $0x150] sm:$0xff]
    %v2679 = vld [vmem:[#allocation13 + $0x158] sm:$0xff]
    %v2680 = vld [vmem:[#allocation13 + $0x160] sm:$0xff]
    %v2681 = vld [vmem:[#allocation13 + $0x168] sm:$0xf]
    %v2682 = vld [vmem:[#allocation13 + $0x16c] sm:$0xff]
    %v2683 = vld [vmem:[#allocation13 + $0x174] sm:$0xff]
    %v2684 = vld [vmem:[#allocation13 + $0x17c] sm:$0xff]
    %v2685 = vld [vmem:[#allocation13 + $0x184] sm:$0xf]
    %v2686 = vld [vmem:[#allocation13 + $0x188] sm:$0xff]
    %v2687 = vld [vmem:[#allocation13 + $0x190] sm:$0xff]
    %v2688 = vld [vmem:[#allocation13 + $0x198] sm:$0xff]
    %v2689 = vld [vmem:[#allocation13 + $0x1a0] sm:$0xf]
    %v2690 = vld [vmem:[#allocation13 + $0x1a4] sm:$0xff]
    %v2691 = vld [vmem:[#allocation13 + $0x1ac] sm:$0xff]
    %v2692 = vld [vmem:[#allocation13 + $0x1b4] sm:$0xff]
    %v2693 = vld [vmem:[#allocation13 + $0x1bc] sm:$0xf]
    %v2694 = vld [vmem:[#allocation13 + $0x1c0] sm:$0xff]
    %v2695 = vld [vmem:[#allocation13 + $0x1c8] sm:$0xff]
    %v2696 = vld [vmem:[#allocation13 + $0x1d0] sm:$0xff]
    %v2697 = vld [vmem:[#allocation13 + $0x1d8] sm:$0xf]
    %v2698 = vld [vmem:[#allocation13 + $0x1dc] sm:$0xff]
    %v2699 = vld [vmem:[#allocation13 + $0x1e4] sm:$0xff]
    %v2700 = vld [vmem:[#allocation13 + $0x1ec] sm:$0xff]
    %v2701 = vld [vmem:[#allocation13 + $0x1f4] sm:$0xf]
    %v2702 = vld [vmem:[#allocation13 + $0x1f8] sm:$0xff]
    %v2703 = vld [vmem:[#allocation13 + $0x200] sm:$0xff]
    %v2704 = vld [vmem:[#allocation13 + $0x208] sm:$0xff]
    %v2705 = vld [vmem:[#allocation13 + $0x210] sm:$0xf]
    %v2706 = vld [vmem:[#allocation13 + $0x214] sm:$0xff]
    %v2707 = vld [vmem:[#allocation13 + $0x21c] sm:$0xff]
    %v2708 = vld [vmem:[#allocation13 + $0x224] sm:$0xff]
    %v2709 = vld [vmem:[#allocation13 + $0x22c] sm:$0xf]
    %v2710 = vld [vmem:[#allocation13 + $0x230] sm:$0xff]
    %v2711 = vld [vmem:[#allocation13 + $0x238] sm:$0xff]
    %v2712 = vld [vmem:[#allocation13 + $0x240] sm:$0xff]
    %v2713 = vld [vmem:[#allocation13 + $0x248] sm:$0xf]
    %v2714 = vld [vmem:[#allocation13 + $0x24c] sm:$0xff]
    %v2715 = vld [vmem:[#allocation13 + $0x254] sm:$0xff]
    %v2716 = vld [vmem:[#allocation13 + $0x25c] sm:$0xff]
    %v2717 = vld [vmem:[#allocation13 + $0x264] sm:$0xf]
    %v2718 = vld [vmem:[#allocation13 + $0x268] sm:$0xff]
    %v2719 = vld [vmem:[#allocation13 + $0x270] sm:$0xff]
    %v2720 = vld [vmem:[#allocation13 + $0x278] sm:$0xff]
    %v2721 = vld [vmem:[#allocation13 + $0x280] sm:$0xf]
    %v2722 = vld [vmem:[#allocation13 + $0x284] sm:$0xff]
    %v2723 = vld [vmem:[#allocation13 + $0x28c] sm:$0xff]
    %v2724 = vld [vmem:[#allocation13 + $0x294] sm:$0xff]
    %v2725 = vld [vmem:[#allocation13 + $0x29c] sm:$0xf]
    %v2726 = vld [vmem:[#allocation13 + $0x2a0] sm:$0xff]
    %v2727 = vld [vmem:[#allocation13 + $0x2a8] sm:$0xff]
    %v2728 = vld [vmem:[#allocation13 + $0x2b0] sm:$0xff]
    %v2729 = vld [vmem:[#allocation13 + $0x2b8] sm:$0xf]
    %v2730 = vld [vmem:[#allocation13 + $0x2bc] sm:$0xff]
    %v2731 = vld [vmem:[#allocation13 + $0x2c4] sm:$0xff]
    %v2732 = vld [vmem:[#allocation13 + $0x2cc] sm:$0xff]
    %v2733 = vld [vmem:[#allocation13 + $0x2d4] sm:$0xf]
    %v2734 = vld [vmem:[#allocation13 + $0x2d8] sm:$0xff]
    %v2735 = vld [vmem:[#allocation13 + $0x2e0] sm:$0xff]
    %v2736 = vld [vmem:[#allocation13 + $0x2e8] sm:$0xff]
    %v2737 = vld [vmem:[#allocation13 + $0x2f0] sm:$0xf]
    %v2738 = vld [vmem:[#allocation13 + $0x2f4] sm:$0xff]
    %v2739 = vld [vmem:[#allocation13 + $0x2fc] sm:$0xff]
    %v2740 = vld [vmem:[#allocation13 + $0x304] sm:$0xff]
    %v2741 = vld [vmem:[#allocation13 + $0x30c] sm:$0xf]
    %v2742 = vld [vmem:[#allocation13 + $0x310] sm:$0xff]
    %v2743 = vld [vmem:[#allocation13 + $0x318] sm:$0xff]
    %v2744 = vld [vmem:[#allocation13 + $0x320] sm:$0xff]
    %v2745 = vld [vmem:[#allocation13 + $0x328] sm:$0xf]
    %v2746 = vld [vmem:[#allocation13 + $0x32c] sm:$0xff]
    %v2747 = vld [vmem:[#allocation13 + $0x334] sm:$0xff]
    %v2748 = vld [vmem:[#allocation13 + $0x33c] sm:$0xff]
    %v2749 = vld [vmem:[#allocation13 + $0x344] sm:$0xf]
    %v2750 = vld [vmem:[#allocation13 + $0x348] sm:$0xff]
    %v2751 = vld [vmem:[#allocation13 + $0x350] sm:$0xff]
    %v2752 = vld [vmem:[#allocation13 + $0x358] sm:$0xff]
    %v2753 = vld [vmem:[#allocation13 + $0x360] sm:$0xf]
    %v2754 = vld [vmem:[#allocation13 + $0x364] sm:$0xff]
    %v2755 = vld [vmem:[#allocation13 + $0x36c] sm:$0xff]
    %v2756 = vld [vmem:[#allocation13 + $0x374] sm:$0xff]
    %v2757 = vld [vmem:[#allocation13 + $0x37c] sm:$0xf]
    %v2758 = vld [vmem:[%s12] sm:$0xff]
    %v2760 = vlaneseq
    %v2761 = vshrl.u32 %v2760, 7
    %v2762 = vsub.s32 0, %v2761
    %v2763 = vrot.slane %v2758, %v2762
    %v2764 = vlaneseq
    %v2765 = vshrl.u32 %v2764, 7
    %v2766 = vsub.s32 1, %v2765
    %v2767 = vrot.slane %v2758, %v2766
    %v2768 = vlaneseq
    %v2769 = vshrl.u32 %v2768, 7
    %v2770 = vsub.s32 2, %v2769
    %v2771 = vrot.slane %v2758, %v2770
    %v2772 = vlaneseq
    %v2773 = vshrl.u32 %v2772, 7
    %v2774 = vsub.s32 3, %v2773
    %v2775 = vrot.slane %v2758, %v2774
    %v2776 = vlaneseq
    %v2777 = vshrl.u32 %v2776, 7
    %v2778 = vsub.s32 4, %v2777
    %v2779 = vrot.slane %v2758, %v2778
    %v2780 = vlaneseq
    %v2781 = vshrl.u32 %v2780, 7
    %v2782 = vsub.s32 5, %v2781
    %v2783 = vrot.slane %v2758, %v2782
    %v2784 = vlaneseq
    %v2785 = vshrl.u32 %v2784, 7
    %v2786 = vsub.s32 6, %v2785
    %v2787 = vrot.slane %v2758, %v2786
    %v2923 = vunpack.c.l.b16 %v2630
    %v2924 = vunpack.c.h.b16 %v2630
    %v2925 = vunpack.c.l.b16 %v2631
    %v2926 = vunpack.c.h.b16 %v2631
    %v2927 = vunpack.c.l.b16 %v2632
    %v2928 = vunpack.c.h.b16 %v2632
    %v2929 = vunpack.c.l.b16 %v2633
    %v2930 = vunpack.c.l.b16 %v2634
    %v2931 = vunpack.c.h.b16 %v2634
    %v2932 = vunpack.c.l.b16 %v2635
    %v2933 = vunpack.c.h.b16 %v2635
    %v2934 = vunpack.c.l.b16 %v2636
    %v2935 = vunpack.c.h.b16 %v2636
    %v2936 = vunpack.c.l.b16 %v2637
    %v2937 = vunpack.c.l.b16 %v2638
    %v2938 = vunpack.c.h.b16 %v2638
    %v2939 = vunpack.c.l.b16 %v2639
    %v2940 = vunpack.c.h.b16 %v2639
    %v2941 = vunpack.c.l.b16 %v2640
    %v2942 = vunpack.c.h.b16 %v2640
    %v2943 = vunpack.c.l.b16 %v2641
    %v2944 = vunpack.c.l.b16 %v2642
    %v2945 = vunpack.c.h.b16 %v2642
    %v2946 = vunpack.c.l.b16 %v2643
    %v2947 = vunpack.c.h.b16 %v2643
    %v2948 = vunpack.c.l.b16 %v2644
    %v2949 = vunpack.c.h.b16 %v2644
    %v2950 = vunpack.c.l.b16 %v2645
    %v2951 = vunpack.c.l.b16 %v2646
    %v2952 = vunpack.c.h.b16 %v2646
    %v2953 = vunpack.c.l.b16 %v2647
    %v2954 = vunpack.c.h.b16 %v2647
    %v2955 = vunpack.c.l.b16 %v2648
    %v2956 = vunpack.c.h.b16 %v2648
    %v2957 = vunpack.c.l.b16 %v2649
    %v2958 = vunpack.c.l.b16 %v2650
    %v2959 = vunpack.c.h.b16 %v2650
    %v2960 = vunpack.c.l.b16 %v2651
    %v2961 = vunpack.c.h.b16 %v2651
    %v2962 = vunpack.c.l.b16 %v2652
    %v2963 = vunpack.c.h.b16 %v2652
    %v2964 = vunpack.c.l.b16 %v2653
    %v2965 = vunpack.c.l.b16 %v2654
    %v2966 = vunpack.c.h.b16 %v2654
    %v2967 = vunpack.c.l.b16 %v2655
    %v2968 = vunpack.c.h.b16 %v2655
    %v2969 = vunpack.c.l.b16 %v2656
    %v2970 = vunpack.c.h.b16 %v2656
    %v2971 = vunpack.c.l.b16 %v2657
    %v2972 = vunpack.c.l.b16 %v2658
    %v2973 = vunpack.c.h.b16 %v2658
    %v2974 = vunpack.c.l.b16 %v2659
    %v2975 = vunpack.c.h.b16 %v2659
    %v2976 = vunpack.c.l.b16 %v2660
    %v2977 = vunpack.c.h.b16 %v2660
    %v2978 = vunpack.c.l.b16 %v2661
    %v2979 = vunpack.c.l.b16 %v2662
    %v2980 = vunpack.c.h.b16 %v2662
    %v2981 = vunpack.c.l.b16 %v2663
    %v2982 = vunpack.c.h.b16 %v2663
    %v2983 = vunpack.c.l.b16 %v2664
    %v2984 = vunpack.c.h.b16 %v2664
    %v2985 = vunpack.c.l.b16 %v2665
    %v2986 = vunpack.c.l.b16 %v2666
    %v2987 = vunpack.c.h.b16 %v2666
    %v2988 = vunpack.c.l.b16 %v2667
    %v2989 = vunpack.c.h.b16 %v2667
    %v2990 = vunpack.c.l.b16 %v2668
    %v2991 = vunpack.c.h.b16 %v2668
    %v2992 = vunpack.c.l.b16 %v2669
    %v2993 = vunpack.c.l.b16 %v2670
    %v2994 = vunpack.c.h.b16 %v2670
    %v2995 = vunpack.c.l.b16 %v2671
    %v2996 = vunpack.c.h.b16 %v2671
    %v2997 = vunpack.c.l.b16 %v2672
    %v2998 = vunpack.c.h.b16 %v2672
    %v2999 = vunpack.c.l.b16 %v2673
    %v3000 = vunpack.c.l.b16 %v2674
    %v3001 = vunpack.c.h.b16 %v2674
    %v3002 = vunpack.c.l.b16 %v2675
    %v3003 = vunpack.c.h.b16 %v2675
    %v3004 = vunpack.c.l.b16 %v2676
    %v3005 = vunpack.c.h.b16 %v2676
    %v3006 = vunpack.c.l.b16 %v2677
    %v3007 = vunpack.c.l.b16 %v2678
    %v3008 = vunpack.c.h.b16 %v2678
    %v3009 = vunpack.c.l.b16 %v2679
    %v3010 = vunpack.c.h.b16 %v2679
    %v3011 = vunpack.c.l.b16 %v2680
    %v3012 = vunpack.c.h.b16 %v2680
    %v3013 = vunpack.c.l.b16 %v2681
    %v3014 = vunpack.c.l.b16 %v2682
    %v3015 = vunpack.c.h.b16 %v2682
    %v3016 = vunpack.c.l.b16 %v2683
    %v3017 = vunpack.c.h.b16 %v2683
    %v3018 = vunpack.c.l.b16 %v2684
    %v3019 = vunpack.c.h.b16 %v2684
    %v3020 = vunpack.c.l.b16 %v2685
    %v3021 = vunpack.c.l.b16 %v2686
    %v3022 = vunpack.c.h.b16 %v2686
    %v3023 = vunpack.c.l.b16 %v2687
    %v3024 = vunpack.c.h.b16 %v2687
    %v3025 = vunpack.c.l.b16 %v2688
    %v3026 = vunpack.c.h.b16 %v2688
    %v3027 = vunpack.c.l.b16 %v2689
    %v3028 = vunpack.c.l.b16 %v2690
    %v3029 = vunpack.c.h.b16 %v2690
    %v3030 = vunpack.c.l.b16 %v2691
    %v3031 = vunpack.c.h.b16 %v2691
    %v3032 = vunpack.c.l.b16 %v2692
    %v3033 = vunpack.c.h.b16 %v2692
    %v3034 = vunpack.c.l.b16 %v2693
    %v3035 = vunpack.c.l.b16 %v2694
    %v3036 = vunpack.c.h.b16 %v2694
    %v3037 = vunpack.c.l.b16 %v2695
    %v3038 = vunpack.c.h.b16 %v2695
    %v3039 = vunpack.c.l.b16 %v2696
    %v3040 = vunpack.c.h.b16 %v2696
    %v3041 = vunpack.c.l.b16 %v2697
    %v3042 = vunpack.c.l.b16 %v2698
    %v3043 = vunpack.c.h.b16 %v2698
    %v3044 = vunpack.c.l.b16 %v2699
    %v3045 = vunpack.c.h.b16 %v2699
    %v3046 = vunpack.c.l.b16 %v2700
    %v3047 = vunpack.c.h.b16 %v2700
    %v3048 = vunpack.c.l.b16 %v2701
    %v3049 = vunpack.c.l.b16 %v2702
    %v3050 = vunpack.c.h.b16 %v2702
    %v3051 = vunpack.c.l.b16 %v2703
    %v3052 = vunpack.c.h.b16 %v2703
    %v3053 = vunpack.c.l.b16 %v2704
    %v3054 = vunpack.c.h.b16 %v2704
    %v3055 = vunpack.c.l.b16 %v2705
    %v3056 = vunpack.c.l.b16 %v2706
    %v3057 = vunpack.c.h.b16 %v2706
    %v3058 = vunpack.c.l.b16 %v2707
    %v3059 = vunpack.c.h.b16 %v2707
    %v3060 = vunpack.c.l.b16 %v2708
    %v3061 = vunpack.c.h.b16 %v2708
    %v3062 = vunpack.c.l.b16 %v2709
    %v3063 = vunpack.c.l.b16 %v2710
    %v3064 = vunpack.c.h.b16 %v2710
    %v3065 = vunpack.c.l.b16 %v2711
    %v3066 = vunpack.c.h.b16 %v2711
    %v3067 = vunpack.c.l.b16 %v2712
    %v3068 = vunpack.c.h.b16 %v2712
    %v3069 = vunpack.c.l.b16 %v2713
    %v3070 = vunpack.c.l.b16 %v2714
    %v3071 = vunpack.c.h.b16 %v2714
    %v3072 = vunpack.c.l.b16 %v2715
    %v3073 = vunpack.c.h.b16 %v2715
    %v3074 = vunpack.c.l.b16 %v2716
    %v3075 = vunpack.c.h.b16 %v2716
    %v3076 = vunpack.c.l.b16 %v2717
    %v3077 = vunpack.c.l.b16 %v2718
    %v3078 = vunpack.c.h.b16 %v2718
    %v3079 = vunpack.c.l.b16 %v2719
    %v3080 = vunpack.c.h.b16 %v2719
    %v3081 = vunpack.c.l.b16 %v2720
    %v3082 = vunpack.c.h.b16 %v2720
    %v3083 = vunpack.c.l.b16 %v2721
    %v3084 = vunpack.c.l.b16 %v2722
    %v3085 = vunpack.c.h.b16 %v2722
    %v3086 = vunpack.c.l.b16 %v2723
    %v3087 = vunpack.c.h.b16 %v2723
    %v3088 = vunpack.c.l.b16 %v2724
    %v3089 = vunpack.c.h.b16 %v2724
    %v3090 = vunpack.c.l.b16 %v2725
    %v3091 = vunpack.c.l.b16 %v2726
    %v3092 = vunpack.c.h.b16 %v2726
    %v3093 = vunpack.c.l.b16 %v2727
    %v3094 = vunpack.c.h.b16 %v2727
    %v3095 = vunpack.c.l.b16 %v2728
    %v3096 = vunpack.c.h.b16 %v2728
    %v3097 = vunpack.c.l.b16 %v2729
    %v3098 = vunpack.c.l.b16 %v2730
    %v3099 = vunpack.c.h.b16 %v2730
    %v3100 = vunpack.c.l.b16 %v2731
    %v3101 = vunpack.c.h.b16 %v2731
    %v3102 = vunpack.c.l.b16 %v2732
    %v3103 = vunpack.c.h.b16 %v2732
    %v3104 = vunpack.c.l.b16 %v2733
    %v3105 = vunpack.c.l.b16 %v2734
    %v3106 = vunpack.c.h.b16 %v2734
    %v3107 = vunpack.c.l.b16 %v2735
    %v3108 = vunpack.c.h.b16 %v2735
    %v3109 = vunpack.c.l.b16 %v2736
    %v3110 = vunpack.c.h.b16 %v2736
    %v3111 = vunpack.c.l.b16 %v2737
    %v3112 = vunpack.c.l.b16 %v2738
    %v3113 = vunpack.c.h.b16 %v2738
    %v3114 = vunpack.c.l.b16 %v2739
    %v3115 = vunpack.c.h.b16 %v2739
    %v3116 = vunpack.c.l.b16 %v2740
    %v3117 = vunpack.c.h.b16 %v2740
    %v3118 = vunpack.c.l.b16 %v2741
    %v3119 = vunpack.c.l.b16 %v2742
    %v3120 = vunpack.c.h.b16 %v2742
    %v3121 = vunpack.c.l.b16 %v2743
    %v3122 = vunpack.c.h.b16 %v2743
    %v3123 = vunpack.c.l.b16 %v2744
    %v3124 = vunpack.c.h.b16 %v2744
    %v3125 = vunpack.c.l.b16 %v2745
    %v3126 = vunpack.c.l.b16 %v2746
    %v3127 = vunpack.c.h.b16 %v2746
    %v3128 = vunpack.c.l.b16 %v2747
    %v3129 = vunpack.c.h.b16 %v2747
    %v3130 = vunpack.c.l.b16 %v2748
    %v3131 = vunpack.c.h.b16 %v2748
    %v3132 = vunpack.c.l.b16 %v2749
    %v3133 = vunpack.c.l.b16 %v2750
    %v3134 = vunpack.c.h.b16 %v2750
    %v3135 = vunpack.c.l.b16 %v2751
    %v3136 = vunpack.c.h.b16 %v2751
    %v3137 = vunpack.c.l.b16 %v2752
    %v3138 = vunpack.c.h.b16 %v2752
    %v3139 = vunpack.c.l.b16 %v2753
    %v3140 = vunpack.c.l.b16 %v2754
    %v3141 = vunpack.c.h.b16 %v2754
    %v3142 = vunpack.c.l.b16 %v2755
    %v3143 = vunpack.c.h.b16 %v2755
    %v3144 = vunpack.c.l.b16 %v2756
    %v3145 = vunpack.c.h.b16 %v2756
    %v3146 = vunpack.c.l.b16 %v2757
    %v3147 = vpack.c.b16 %v2930, %v2923
    %v3148 = vpack.c.b16 %v2931, %v2924
    %v3149 = vpack.c.b16 %v2932, %v2925
    %v3150 = vpack.c.b16 %v2933, %v2926
    %v3151 = vpack.c.b16 %v2934, %v2927
    %v3152 = vpack.c.b16 %v2935, %v2928
    %v3153 = vpack.c.b16 %v2936, %v2929
    %v3154 = vpack.c.b16 %v2944, %v2937
    %v3155 = vpack.c.b16 %v2945, %v2938
    %v3156 = vpack.c.b16 %v2946, %v2939
    %v3157 = vpack.c.b16 %v2947, %v2940
    %v3158 = vpack.c.b16 %v2948, %v2941
    %v3159 = vpack.c.b16 %v2949, %v2942
    %v3160 = vpack.c.b16 %v2950, %v2943
    %v3161 = vpack.c.b16 %v2958, %v2951
    %v3162 = vpack.c.b16 %v2959, %v2952
    %v3163 = vpack.c.b16 %v2960, %v2953
    %v3164 = vpack.c.b16 %v2961, %v2954
    %v3165 = vpack.c.b16 %v2962, %v2955
    %v3166 = vpack.c.b16 %v2963, %v2956
    %v3167 = vpack.c.b16 %v2964, %v2957
    %v3168 = vpack.c.b16 %v2972, %v2965
    %v3169 = vpack.c.b16 %v2973, %v2966
    %v3170 = vpack.c.b16 %v2974, %v2967
    %v3171 = vpack.c.b16 %v2975, %v2968
    %v3172 = vpack.c.b16 %v2976, %v2969
    %v3173 = vpack.c.b16 %v2977, %v2970
    %v3174 = vpack.c.b16 %v2978, %v2971
    %v3175 = vpack.c.b16 %v2986, %v2979
    %v3176 = vpack.c.b16 %v2987, %v2980
    %v3177 = vpack.c.b16 %v2988, %v2981
    %v3178 = vpack.c.b16 %v2989, %v2982
    %v3179 = vpack.c.b16 %v2990, %v2983
    %v3180 = vpack.c.b16 %v2991, %v2984
    %v3181 = vpack.c.b16 %v2992, %v2985
    %v3182 = vpack.c.b16 %v3000, %v2993
    %v3183 = vpack.c.b16 %v3001, %v2994
    %v3184 = vpack.c.b16 %v3002, %v2995
    %v3185 = vpack.c.b16 %v3003, %v2996
    %v3186 = vpack.c.b16 %v3004, %v2997
    %v3187 = vpack.c.b16 %v3005, %v2998
    %v3188 = vpack.c.b16 %v3006, %v2999
    %v3189 = vpack.c.b16 %v3014, %v3007
    %v3190 = vpack.c.b16 %v3015, %v3008
    %v3191 = vpack.c.b16 %v3016, %v3009
    %v3192 = vpack.c.b16 %v3017, %v3010
    %v3193 = vpack.c.b16 %v3018, %v3011
    %v3194 = vpack.c.b16 %v3019, %v3012
    %v3195 = vpack.c.b16 %v3020, %v3013
    %v3196 = vpack.c.b16 %v3028, %v3021
    %v3197 = vpack.c.b16 %v3029, %v3022
    %v3198 = vpack.c.b16 %v3030, %v3023
    %v3199 = vpack.c.b16 %v3031, %v3024
    %v3200 = vpack.c.b16 %v3032, %v3025
    %v3201 = vpack.c.b16 %v3033, %v3026
    %v3202 = vpack.c.b16 %v3034, %v3027
    %v3203 = vpack.c.b16 %v3042, %v3035
    %v3204 = vpack.c.b16 %v3043, %v3036
    %v3205 = vpack.c.b16 %v3044, %v3037
    %v3206 = vpack.c.b16 %v3045, %v3038
    %v3207 = vpack.c.b16 %v3046, %v3039
    %v3208 = vpack.c.b16 %v3047, %v3040
    %v3209 = vpack.c.b16 %v3048, %v3041
    %v3210 = vpack.c.b16 %v3056, %v3049
    %v3211 = vpack.c.b16 %v3057, %v3050
    %v3212 = vpack.c.b16 %v3058, %v3051
    %v3213 = vpack.c.b16 %v3059, %v3052
    %v3214 = vpack.c.b16 %v3060, %v3053
    %v3215 = vpack.c.b16 %v3061, %v3054
    %v3216 = vpack.c.b16 %v3062, %v3055
    %v3217 = vpack.c.b16 %v3070, %v3063
    %v3218 = vpack.c.b16 %v3071, %v3064
    %v3219 = vpack.c.b16 %v3072, %v3065
    %v3220 = vpack.c.b16 %v3073, %v3066
    %v3221 = vpack.c.b16 %v3074, %v3067
    %v3222 = vpack.c.b16 %v3075, %v3068
    %v3223 = vpack.c.b16 %v3076, %v3069
    %v3224 = vpack.c.b16 %v3084, %v3077
    %v3225 = vpack.c.b16 %v3085, %v3078
    %v3226 = vpack.c.b16 %v3086, %v3079
    %v3227 = vpack.c.b16 %v3087, %v3080
    %v3228 = vpack.c.b16 %v3088, %v3081
    %v3229 = vpack.c.b16 %v3089, %v3082
    %v3230 = vpack.c.b16 %v3090, %v3083
    %v3231 = vpack.c.b16 %v3098, %v3091
    %v3232 = vpack.c.b16 %v3099, %v3092
    %v3233 = vpack.c.b16 %v3100, %v3093
    %v3234 = vpack.c.b16 %v3101, %v3094
    %v3235 = vpack.c.b16 %v3102, %v3095
    %v3236 = vpack.c.b16 %v3103, %v3096
    %v3237 = vpack.c.b16 %v3104, %v3097
    %v3238 = vpack.c.b16 %v3112, %v3105
    %v3239 = vpack.c.b16 %v3113, %v3106
    %v3240 = vpack.c.b16 %v3114, %v3107
    %v3241 = vpack.c.b16 %v3115, %v3108
    %v3242 = vpack.c.b16 %v3116, %v3109
    %v3243 = vpack.c.b16 %v3117, %v3110
    %v3244 = vpack.c.b16 %v3118, %v3111
    %v3245 = vpack.c.b16 %v3126, %v3119
    %v3246 = vpack.c.b16 %v3127, %v3120
    %v3247 = vpack.c.b16 %v3128, %v3121
    %v3248 = vpack.c.b16 %v3129, %v3122
    %v3249 = vpack.c.b16 %v3130, %v3123
    %v3250 = vpack.c.b16 %v3131, %v3124
    %v3251 = vpack.c.b16 %v3132, %v3125
    %v3252 = vpack.c.b16 %v3140, %v3133
    %v3253 = vpack.c.b16 %v3141, %v3134
    %v3254 = vpack.c.b16 %v3142, %v3135
    %v3255 = vpack.c.b16 %v3143, %v3136
    %v3256 = vpack.c.b16 %v3144, %v3137
    %v3257 = vpack.c.b16 %v3145, %v3138
    %v3258 = vpack.c.b16 %v3146, %v3139
    %3371 = vmatprep.subr.bf16.mxu0 %v3148
    %3372 = vmatpush1.bf16.msra.mxu0 %v3147
    %3373 = vmatprep.subr.bf16.mxu0 %v3155
    %3374 = vmatpush1.bf16.msra.mxu0 %v3154
    %3375 = vmatprep.subr.bf16.mxu0 %v3162
    %3376 = vmatpush1.bf16.msra.mxu0 %v3161
    %3377 = vmatprep.subr.bf16.mxu0 %v3169
    %3378 = vmatpush1.bf16.msra.mxu0 %v3168
    %3379 = vmatprep.subr.bf16.mxu0 %v3176
    %3380 = vmatpush1.bf16.msra.mxu0 %v3175
    %3381 = vmatprep.subr.bf16.mxu0 %v3183
    %3382 = vmatpush1.bf16.msra.mxu0 %v3182
    %3383 = vmatprep.subr.bf16.mxu0 %v3190
    %3384 = vmatpush1.bf16.msra.mxu0 %v3189
    %3385 = vmatprep.subr.bf16.mxu0 %v3197
    %3386 = vmatpush1.bf16.msra.mxu0 %v3196
    %3387 = vmatprep.subr.bf16.mxu0 %v3204
    %3388 = vmatpush1.bf16.msra.mxu0 %v3203
    %3389 = vmatprep.subr.bf16.mxu0 %v3211
    %3390 = vmatpush1.bf16.msra.mxu0 %v3210
    %3391 = vmatprep.subr.bf16.mxu0 %v3218
    %3392 = vmatpush1.bf16.msra.mxu0 %v3217
    %3393 = vmatprep.subr.bf16.mxu0 %v3225
    %3394 = vmatpush1.bf16.msra.mxu0 %v3224
    %3395 = vmatprep.subr.bf16.mxu0 %v3232
    %3396 = vmatpush1.bf16.msra.mxu0 %v3231
    %3397 = vmatprep.subr.bf16.mxu0 %v3239
    %3398 = vmatpush1.bf16.msra.mxu0 %v3238
    %3399 = vmatprep.subr.bf16.mxu0 %v3246
    %3400 = vmatpush1.bf16.msra.mxu0 %v3245
    %3401 = vmatprep.subr.bf16.mxu0 %v3253
    %3402 = vmatpush1.bf16.msra.mxu0 %v3252
    %3403 = vmatprep.mubr.bf16.mxu0 %v2629
    %3404 = vmatmul.mubr.bf16.gmra.mrb[0].mxu0 %v2628
    %v3405 = vpop.f32.mrb[0].mxu0
    %v3406 = vadd.f32 %v2763, %v3405
    %v3407 = vpop.f32.mrb[0].mxu0
    %v3408 = vadd.f32 %v2767, %v3407
    %v3409 = vpop.f32.mrb[0].mxu0
    %v3410 = vpop.f32.mrb[0].mxu0
    %3411 = vdwg.mxu0
    %3412 = vmatprep.subr.bf16.mxu0 %v3150
    %3413 = vmatpush1.bf16.msra.mxu0 %v3149
    %3414 = vmatprep.subr.bf16.mxu0 %v3157
    %3415 = vmatpush1.bf16.msra.mxu0 %v3156
    %3416 = vmatprep.subr.bf16.mxu0 %v3164
    %3417 = vmatpush1.bf16.msra.mxu0 %v3163
    %3418 = vmatprep.subr.bf16.mxu0 %v3171
    %3419 = vmatpush1.bf16.msra.mxu0 %v3170
    %3420 = vmatprep.subr.bf16.mxu0 %v3178
    %3421 = vmatpush1.bf16.msra.mxu0 %v3177
    %3422 = vmatprep.subr.bf16.mxu0 %v3185
    %3423 = vmatpush1.bf16.msra.mxu0 %v3184
    %3424 = vmatprep.subr.bf16.mxu0 %v3192
    %3425 = vmatpush1.bf16.msra.mxu0 %v3191
    %3426 = vmatprep.subr.bf16.mxu0 %v3199
    %3427 = vmatpush1.bf16.msra.mxu0 %v3198
    %3428 = vmatprep.subr.bf16.mxu0 %v3206
    %3429 = vmatpush1.bf16.msra.mxu0 %v3205
    %3430 = vmatprep.subr.bf16.mxu0 %v3213
    %3431 = vmatpush1.bf16.msra.mxu0 %v3212
    %3432 = vmatprep.subr.bf16.mxu0 %v3220
    %3433 = vmatpush1.bf16.msra.mxu0 %v3219
    %3434 = vmatprep.subr.bf16.mxu0 %v3227
    %3435 = vmatpush1.bf16.msra.mxu0 %v3226
    %3436 = vmatprep.subr.bf16.mxu0 %v3234
    %3437 = vmatpush1.bf16.msra.mxu0 %v3233
    %3438 = vmatprep.subr.bf16.mxu0 %v3241
    %3439 = vmatpush1.bf16.msra.mxu0 %v3240
    %3440 = vmatprep.subr.bf16.mxu0 %v3248
    %3441 = vmatpush1.bf16.msra.mxu0 %v3247
    %3442 = vmatprep.subr.bf16.mxu0 %v3255
    %3443 = vmatpush1.bf16.msra.mxu0 %v3254
    %3444 = vmatprep.mubr.bf16.mxu0 %v2629
    %3445 = vmatmul.mubr.bf16.gmra.mrb[0].mxu0 %v2628
    %v3446 = vpop.f32.mrb[0].mxu0
    %v3447 = vadd.f32 %v2771, %v3446
    %v3448 = vpop.f32.mrb[0].mxu0
    %v3449 = vadd.f32 %v2775, %v3448
    %v3450 = vpop.f32.mrb[0].mxu0
    %v3451 = vpop.f32.mrb[0].mxu0
    %3452 = vdwg.mxu0
    %3453 = vmatprep.subr.bf16.mxu0 %v3152
    %3454 = vmatpush1.bf16.msra.mxu0 %v3151
    %3455 = vmatprep.subr.bf16.mxu0 %v3159
    %3456 = vmatpush1.bf16.msra.mxu0 %v3158
    %3457 = vmatprep.subr.bf16.mxu0 %v3166
    %3458 = vmatpush1.bf16.msra.mxu0 %v3165
    %3459 = vmatprep.subr.bf16.mxu0 %v3173
    %3460 = vmatpush1.bf16.msra.mxu0 %v3172
    %3461 = vmatprep.subr.bf16.mxu0 %v3180
    %3462 = vmatpush1.bf16.msra.mxu0 %v3179
    %3463 = vmatprep.subr.bf16.mxu0 %v3187
    %3464 = vmatpush1.bf16.msra.mxu0 %v3186
    %3465 = vmatprep.subr.bf16.mxu0 %v3194
    %3466 = vmatpush1.bf16.msra.mxu0 %v3193
    %3467 = vmatprep.subr.bf16.mxu0 %v3201
    %3468 = vmatpush1.bf16.msra.mxu0 %v3200
    %3469 = vmatprep.subr.bf16.mxu0 %v3208
    %3470 = vmatpush1.bf16.msra.mxu0 %v3207
    %3471 = vmatprep.subr.bf16.mxu0 %v3215
    %3472 = vmatpush1.bf16.msra.mxu0 %v3214
    %3473 = vmatprep.subr.bf16.mxu0 %v3222
    %3474 = vmatpush1.bf16.msra.mxu0 %v3221
    %3475 = vmatprep.subr.bf16.mxu0 %v3229
    %3476 = vmatpush1.bf16.msra.mxu0 %v3228
    %3477 = vmatprep.subr.bf16.mxu0 %v3236
    %3478 = vmatpush1.bf16.msra.mxu0 %v3235
    %3479 = vmatprep.subr.bf16.mxu0 %v3243
    %3480 = vmatpush1.bf16.msra.mxu0 %v3242
    %3481 = vmatprep.subr.bf16.mxu0 %v3250
    %3482 = vmatpush1.bf16.msra.mxu0 %v3249
    %3483 = vmatprep.subr.bf16.mxu0 %v3257
    %3484 = vmatpush1.bf16.msra.mxu0 %v3256
    %3485 = vmatprep.mubr.bf16.mxu0 %v2629
    %3486 = vmatmul.mubr.bf16.gmra.mrb[0].mxu0 %v2628
    %v3487 = vpop.f32.mrb[0].mxu0
    %v3488 = vadd.f32 %v2779, %v3487
    %v3489 = vpop.f32.mrb[0].mxu0
    %v3490 = vadd.f32 %v2783, %v3489
    %v3491 = vpop.f32.mrb[0].mxu0
    %v3492 = vpop.f32.mrb[0].mxu0
    %3493 = vdwg.mxu0
    %3494 = vmatprep.subr.bf16.mxu0 0
    %3495 = vmatpush1.bf16.msra.mxu0 %v3153
    %3496 = vmatprep.subr.bf16.mxu0 0
    %3497 = vmatpush1.bf16.msra.mxu0 %v3160
    %3498 = vmatprep.subr.bf16.mxu0 0
    %3499 = vmatpush1.bf16.msra.mxu0 %v3167
    %3500 = vmatprep.subr.bf16.mxu0 0
    %3501 = vmatpush1.bf16.msra.mxu0 %v3174
    %3502 = vmatprep.subr.bf16.mxu0 0
    %3503 = vmatpush1.bf16.msra.mxu0 %v3181
    %3504 = vmatprep.subr.bf16.mxu0 0
    %3505 = vmatpush1.bf16.msra.mxu0 %v3188
    %3506 = vmatprep.subr.bf16.mxu0 0
    %3507 = vmatpush1.bf16.msra.mxu0 %v3195
    %3508 = vmatprep.subr.bf16.mxu0 0
    %3509 = vmatpush1.bf16.msra.mxu0 %v3202
    %3510 = vmatprep.subr.bf16.mxu0 0
    %3511 = vmatpush1.bf16.msra.mxu0 %v3209
    %3512 = vmatprep.subr.bf16.mxu0 0
    %3513 = vmatpush1.bf16.msra.mxu0 %v3216
    %3514 = vmatprep.subr.bf16.mxu0 0
    %3515 = vmatpush1.bf16.msra.mxu0 %v3223
    %3516 = vmatprep.subr.bf16.mxu0 0
    %3517 = vmatpush1.bf16.msra.mxu0 %v3230
    %3518 = vmatprep.subr.bf16.mxu0 0
    %3519 = vmatpush1.bf16.msra.mxu0 %v3237
    %3520 = vmatprep.subr.bf16.mxu0 0
    %3521 = vmatpush1.bf16.msra.mxu0 %v3244
    %3522 = vmatprep.subr.bf16.mxu0 0
    %3523 = vmatpush1.bf16.msra.mxu0 %v3251
    %3524 = vmatprep.subr.bf16.mxu0 0
    %3525 = vmatpush1.bf16.msra.mxu0 %v3258
    %3526 = vmatprep.mubr.bf16.mxu0 %v2629
    %3527 = vmatmul.mubr.bf16.gmra.mrb[0].mxu0 %v2628
    %v3528 = vpop.f32.mrb[0].mxu0
    %v3529 = vadd.f32 %v2787, %v3528
    %v3530 = vpop.f32.mrb[0].mxu0
    %v3531 = vpop.f32.mrb[0].mxu0
    %v3532 = vpop.f32.mrb[0].mxu0
    %3533 = vdwg.mxu0
    %v3534 = vxor.u32 %v3406, 2147483648
    %v3535 = vxor.u32 %v3408, 2147483648
    %v3536 = vxor.u32 %v3447, 2147483648
    %v3537 = vxor.u32 %v3449, 2147483648
    %v3538 = vxor.u32 %v3488, 2147483648
    %v3539 = vxor.u32 %v3490, 2147483648
    %v3540 = vxor.u32 %v3529, 2147483648
    %v3541 = vmul.f32 %v3534, 1.442695
    %v3542 = vpow.pop %v3541
    %v3543 = vmul.f32 %v3535, 1.442695
    %v3544 = vpow.pop %v3543
    %v3545 = vmul.f32 %v3536, 1.442695
    %v3546 = vpow.pop %v3545
    %v3547 = vmul.f32 %v3537, 1.442695
    %v3548 = vpow.pop %v3547
    %v3549 = vmul.f32 %v3538, 1.442695
    %v3550 = vpow.pop %v3549
    %v3551 = vmul.f32 %v3539, 1.442695
    %v3552 = vpow.pop %v3551
    %v3553 = vmul.f32 %v3540, 1.442695
    %v3554 = vpow.pop %v3553
    %v3555 = vadd.f32 %v3542, 1.0
    %v3556 = vadd.f32 %v3544, 1.0
    %v3557 = vadd.f32 %v3546, 1.0
    %v3558 = vadd.f32 %v3548, 1.0
    %v3559 = vadd.f32 %v3550, 1.0
    %v3560 = vadd.f32 %v3552, 1.0
    %v3561 = vadd.f32 %v3554, 1.0
    %v3562 = vrcp.pop %v3555
    %v3563 = vmul.f32 1.0, %v3562
    %v3564 = vrcp.pop %v3556
    %v3565 = vmul.f32 1.0, %v3564
    %v3566 = vrcp.pop %v3557
    %v3567 = vmul.f32 1.0, %v3566
    %v3568 = vrcp.pop %v3558
    %v3569 = vmul.f32 1.0, %v3568
    %v3570 = vrcp.pop %v3559
    %v3571 = vmul.f32 1.0, %v3570
    %v3572 = vrcp.pop %v3560
    %v3573 = vmul.f32 1.0, %v3572
    %v3574 = vrcp.pop %v3561
    %v3575 = vmul.f32 1.0, %v3574
    %v3576 = vpack.c.bf16 %v3563, %v3563
    %v3577 = vpack.c.bf16 %v3565, %v3565
    %v3578 = vpack.c.bf16 %v3567, %v3567
    %v3579 = vpack.c.bf16 %v3569, %v3569
    %v3580 = vpack.c.bf16 %v3571, %v3571
    %v3581 = vpack.c.bf16 %v3573, %v3573
    %v3582 = vpack.c.bf16 %v3575, %v3575
    %v3590 = vunpack.c.l.b16 %v3576
    %v3591 = vunpack.c.l.b16 %v3577
    %v3592 = vunpack.c.l.b16 %v3578
    %v3593 = vunpack.c.l.b16 %v3579
    %v3594 = vunpack.c.l.b16 %v3580
    %v3595 = vunpack.c.l.b16 %v3581
    %v3596 = vunpack.c.l.b16 %v3582
    %v3597 = vpack.c.b16 %v3591, %v3590
    %v3598 = vpack.c.b16 %v3593, %v3592
    %v3599 = vpack.c.b16 %v3595, %v3594
    %v3600 = vpack.c.b16 %v3596, %v3596
    %3605 = vst [vmem:[#allocation14] sm:$0xff] %v3597
    %3606 = vst [vmem:[#allocation14 + $0x8] sm:$0xff] %v3598
    %3607 = vst [vmem:[#allocation14 + $0x10] sm:$0xff] %v3599
    %3608 = vst [vmem:[#allocation14 + $0x18] sm:$0xf] %v3600
    // Predicated region
    $region82: #{tpu_custom_call.1} parent=1 // pred_check
      _
    $region83: #{tpu_custom_call.1} parent=1 // pred_check_branch
      %3610 = sbr.rel (0) target = $region85
    $region84: #{tpu_custom_call.1} parent=1 // pred_region
      %s3612 = ssub.s32 448, 448
      %3613 = vsyncadd [#allocation4], %s3612
      %s3615 = sshll.u32 [#allocation14], 4
      %s3616 = int_to_ptr.vmem [resolvable:$true] %s3615
      %3618 = dma.vmem_to_hbm [thread:$0]  %s3616, 448, %s13, [#allocation4]
    $region85: #{tpu_custom_call.1} parent=1 // pred_fallthru
      _
    // Predicated region
    $region86: #{tpu_custom_call.1} parent=1 // pred_check
      _
    $region87: #{tpu_custom_call.1} parent=1 // pred_check_branch
      %3620 = sbr.rel (0) target = $region89
    $region88: #{tpu_custom_call.1} parent=1 // pred_region
      %3621 = dma.done [#allocation4], 448
    $region89: #{tpu_custom_call.1} parent=1 // pred_fallthru
      _
    %3622 = vsyncpa [#allocation3], 1
    %3623 = vsyncpa [#allocation6], 1
    %3624 = vsyncpa [#allocation9], 1
    %3625 = vsyncpa [#allocation12], 1
    %3626 = vsyncpa [#allocation4], 1

</llo_original>
